<compile_context>
chip_gen: v6e
topology: v6e:2x2x1
jax: 0.10.0
libtpu: 0.0.40
codegen_flags: <defaults>
</compile_context>

<pallas_src>
import functools

import jax
import jax.numpy as jnp
from jax.experimental import pallas as pl
from jax.experimental.pallas import tpu as pltpu

FEAT2D_DIM = 32             # hyp.feat2D_dim (synthetic choice)
FEAT2D_SMOOTH_COEFF = 0.01  # hyp.feat2D_smooth_coeff (synthetic choice)
LEAKY_SLOPE = 0.01          # nn.LeakyReLU default
BN_EPS = 1e-5               # nn.BatchNorm2d default
L2_EPS = 1e-12              # F.normalize default


# --------------------------------------------------------------------------
# Pallas kernels
# --------------------------------------------------------------------------
def _conv_bn_stats_kernel(x_ref, w_ref, b_ref, y_ref, sum_ref, sq_ref):
    """One (g, m) grid step of y = LeakyReLU(x @ w + b) (full-K dot, f32 acc)
    plus this tile's per-channel partial sums of y and y^2 (BatchNorm batch
    statistics).  Every output block is written exactly once -> both grid axes
    can be 'parallel' (megacore)."""
    acc = jnp.dot(x_ref[...], w_ref[...], preferred_element_type=jnp.float32)
    act = acc + b_ref[...]                           # f32 epilogue
    act = jnp.maximum(act, LEAKY_SLOPE * act)        # LeakyReLU
    y_ref[...] = act.astype(y_ref.dtype)             # bf16 activation out
    sum_ref[...] = jnp.sum(act, axis=0, keepdims=True)
    sq_ref[...] = jnp.sum(act * act, axis=0, keepdims=True)


def _pick_tile(dim, candidates):
    for c in candidates:
        if dim % c == 0:
            return c
    return dim            # full dimension (always legal as a block size)


def conv_bn_stats(x, w, b):
    """x: [G, M, K] bf16, w: [G, K, N] bf16, b: [1, N] f32.
    Returns y = LeakyReLU(x @ w + b): [G, M, N] bf16 and per-(g, m-tile)
    channel partial sums / sums-of-squares of y: [G, n_m, 1, N] f32 each."""
    G, M, K = x.shape
    G2, K2, N = w.shape
    assert G == G2 and K == K2 and b.shape == (1, N)
    tm = _pick_tile(M, (1024, 512, 256, 128, 64, 32, 16, 8))
    n_m = M // tm
    return pl.pallas_call(
        _conv_bn_stats_kernel,
        out_shape=(
            jax.ShapeDtypeStruct((G, M, N), jnp.bfloat16),
            jax.ShapeDtypeStruct((G, n_m, 1, N), jnp.float32),
            jax.ShapeDtypeStruct((G, n_m, 1, N), jnp.float32),
        ),
        grid=(G, n_m),
        in_specs=[
            pl.BlockSpec((None, tm, K), lambda g, m: (g, m, 0)),
            pl.BlockSpec((None, K, N), lambda g, m: (g, 0, 0)),   # resident per g
            pl.BlockSpec((1, N), lambda g, m: (0, 0)),
        ],
        out_specs=(
            pl.BlockSpec((None, tm, N), lambda g, m: (g, m, 0)),
            pl.BlockSpec((None, None, 1, N), lambda g, m: (g, m, 0, 0)),
            pl.BlockSpec((None, None, 1, N), lambda g, m: (g, m, 0, 0)),
        ),
        compiler_params=pltpu.CompilerParams(
            # Phases (G) and M-tiles are fully independent -> both shardable
            # across TensorCores on v7x.
            dimension_semantics=("parallel", "parallel")),
    )(x, w, b)


def _head_kernel(x_ref, w_ref, b_ref, loss_ref, out_ref, *, B, H, W):
    """One batch element of the head: final 1x1 conv + smooth-loss partial
    (accumulated in a resident SMEM scalar) + channel-wise l2_normalize."""
    bi = pl.program_id(0)
    y = jnp.dot(x_ref[...], w_ref[...],
                preferred_element_type=jnp.float32) + b_ref[...]   # [H*W, C] f32
    C = y.shape[-1]
    f = y.reshape(H, W, C)
    # gradient2D(feat, absolute=True); zero-padded border rows/cols contribute 0.
    dh = jnp.abs(f[1:, :, :] - f[:-1, :, :])
    dw = jnp.abs(f[:, 1:, :] - f[:, :-1, :])
    partial = (jnp.sum(dh) + jnp.sum(dw)) * (
        FEAT2D_SMOOTH_COEFF / float(B * C * H * W))

    @pl.when(bi == 0)
    def _():
        loss_ref[0, 0] = 0.0

    loss_ref[0, 0] = loss_ref[0, 0] + partial        # add_loss with total=0
    # l2_normalize over channel dim (F.normalize, eps=1e-12)
    norm = jnp.sqrt(jnp.sum(f * f, axis=-1, keepdims=True))
    out_ref[...] = f / jnp.maximum(norm, L2_EPS)


def feat_head(x, w, b, B, H, W):
    """x: [B, H*W, K] bf16, w: [K, C] bf16, b: [1, C] f32.
    Returns (scalar smooth loss, l2-normalized features [B, H, W, C] f32)."""
    _, HW, K = x.shape
    K2, C = w.shape
    assert K == K2 and HW == H * W and b.shape == (1, C)
    loss, out = pl.pallas_call(
        functools.partial(_head_kernel, B=B, H=H, W=W),
        out_shape=(
            jax.ShapeDtypeStruct((1, 1), jnp.float32),
            jax.ShapeDtypeStruct((B, H, W, C), jnp.float32),
        ),
        grid=(B,),
        in_specs=[
            pl.BlockSpec((None, HW, K), lambda bi: (bi, 0, 0)),
            pl.BlockSpec((K, C), lambda bi: (0, 0)),
            pl.BlockSpec((1, C), lambda bi: (0, 0)),
        ],
        out_specs=(
            pl.BlockSpec(memory_space=pltpu.SMEM),   # resident scalar accumulator
            pl.BlockSpec((None, H, W, C), lambda bi: (bi, 0, 0, 0)),
        ),
        compiler_params=pltpu.CompilerParams(
            # the loss scalar accumulates across the batch axis -> arbitrary
            dimension_semantics=("arbitrary",)),
    )(x, w, b)
    return loss[0, 0], out


# --------------------------------------------------------------------------
# Patch extraction / phase decomposition (NHWC, plain-JAX glue fused by XLA)
# --------------------------------------------------------------------------
def conv_patches(x, k, stride, pad):
    """im2col in NHWC. x: [B, H, W, C] -> ([B*Ho*Wo, k*k*C], Ho, Wo).
    K ordering is (kh, kw, cin), matching the prepared [K, N] weights."""
    B, H, W, C = x.shape
    xp = jnp.pad(x, ((0, 0), (pad, pad), (pad, pad), (0, 0)))
    Ho = (H + 2 * pad - k) // stride + 1
    Wo = (W + 2 * pad - k) // stride + 1
    cols = []
    for ih in range(k):
        for iw in range(k):
            cols.append(xp[:, ih:ih + stride * Ho:stride,
                           iw:iw + stride * Wo:stride, :])
    col = jnp.concatenate(cols, axis=-1)
    return col.reshape(B * Ho * Wo, k * k * C), Ho, Wo


def phase_patches(x):
    """Patches for the 4-phase decomposition of ConvTranspose2d(k=4,s=2,p=1).
    x: [B, H, W, C] -> [4, B*H*W, 4*C]; phase g=2*ph+pw produces output pixels
    (2m+ph, 2n+pw)."""
    B, H, W, C = x.shape
    xp = jnp.pad(x, ((0, 0), (1, 1), (1, 1), (0, 0)))
    phases = []
    for ph in range(2):
        for pw in range(2):
            cols = []
            for d in range(2):
                for e in range(2):
                    cols.append(xp[:, ph + d:ph + d + H, pw + e:pw + e + W, :])
            phases.append(jnp.concatenate(cols, axis=-1).reshape(B * H * W, 4 * C))
    return jnp.stack(phases, axis=0)


def assemble_phases(y_ph, B, H, W, C):
    """[4, B*H*W, C] phase outputs -> [B, 2H, 2W, C] (bf16, half the traffic
    of the old f32 path)."""
    u = y_ph.reshape(2, 2, B, H, W, C)
    u = jnp.transpose(u, (2, 3, 0, 4, 1, 5))
    return u.reshape(B, 2 * H, 2 * W, C)


# --------------------------------------------------------------------------
# BatchNorm (training-mode batch stats) as a lazily-applied per-channel affine
# --------------------------------------------------------------------------
def _bn_scale_shift(ssum, ssq, count, gamma, beta):
    mean = ssum / count
    var = jnp.maximum(ssq / count - mean * mean, 0.0)    # biased (PyTorch train)
    scale = gamma * jax.lax.rsqrt(var + BN_EPS)
    shift = beta - mean * scale
    # batch stats of the normalized output (needed when this tensor later
    # re-enters a BatchNorm as part of a concatenated skip connection)
    out_mean = mean * scale + shift
    out_var = var * scale * scale
    return scale, shift, out_mean, out_var


def _down_layer(x_nhwc, w_kn, b_1n, gamma, beta):
    """Conv2d(k=4,s=2,p=1) -> LeakyReLU -> BatchNorm2d (NHWC in / NHWC out)."""
    B = x_nhwc.shape[0]
    patches, Ho, Wo = conv_patches(x_nhwc, 4, 2, 1)
    y, ssum, ssq = conv_bn_stats(patches.astype(jnp.bfloat16)[None], w_kn, b_1n)
    y = y[0]                                              # [M, N] bf16
    ssum = jnp.sum(ssum[0, :, 0, :], axis=0)              # [N] (reduce m-tiles)
    ssq = jnp.sum(ssq[0, :, 0, :], axis=0)
    scale, shift, out_mean, out_var = _bn_scale_shift(
        ssum, ssq, float(y.shape[0]), gamma, beta)
    a = (y.astype(jnp.float32) * scale + shift).reshape(B, Ho, Wo, -1)
    return a, out_mean, out_var                           # affine fused downstream


def _up_layer(x_nhwc, w_ph, b_1n, gamma, beta, skip, skip_mean, skip_var):
    """ConvTranspose2d(k=4,s=2,p=1) -> LeakyReLU -> concat skip -> BatchNorm2d.
    Returns the pre-BN concat and the BN affine (applied lazily downstream)."""
    B, H, W, _ = x_nhwc.shape
    Cout = w_ph.shape[-1]
    xph = phase_patches(x_nhwc.astype(jnp.bfloat16))
    y_ph, ssum, ssq = conv_bn_stats(xph, w_ph, b_1n)
    u = assemble_phases(y_ph, B, H, W, Cout)               # bf16
    count = float(4 * B * H * W)
    u_mean = jnp.sum(ssum[:, :, 0, :], axis=(0, 1)) / count
    u_var = jnp.maximum(
        jnp.sum(ssq[:, :, 0, :], axis=(0, 1)) / count - u_mean * u_mean, 0.0)
    cat = jnp.concatenate([u.astype(jnp.float32), skip], axis=-1)  # pre-BN concat
    mean_cat = jnp.concatenate([u_mean, skip_mean])
    var_cat = jnp.concatenate([u_var, skip_var])
    scale = gamma * jax.lax.rsqrt(var_cat + BN_EPS)
    shift = beta - mean_cat * scale
    return cat, scale, shift


# --------------------------------------------------------------------------
# Parameters (deterministic, synthetic, PyTorch layouts) + one-time prep
# --------------------------------------------------------------------------
def init_params(key, in_dim=3, mid=64, out_dim=FEAT2D_DIM):
    keys = jax.random.split(key, 20)
    ki = iter(range(20))

    def rnd_w(shape, fan_in):
        return (jax.random.normal(keys[next(ki)], shape, jnp.float32)
                / jnp.sqrt(float(fan_in)))

    def rnd_b(n):
        return 0.01 * jax.random.normal(keys[next(ki)], (n,), jnp.float32)

    p = {}
    down_in, down_out = [in_dim, mid, 2 * mid], [mid, 2 * mid, 4 * mid]
    for i in range(3):
        p[f'down{i}_w'] = rnd_w((down_out[i], down_in[i], 4, 4), down_in[i] * 16)
        p[f'down{i}_b'] = rnd_b(down_out[i])
        p[f'down{i}_gamma'] = jnp.ones((down_out[i],), jnp.float32)
        p[f'down{i}_beta'] = jnp.zeros((down_out[i],), jnp.float32)
    up_in, up_out, up_bn = [4 * mid, 6 * mid], [4 * mid, 2 * mid], [6 * mid, 3 * mid]
    for i in range(2):
        p[f'up{i}_w'] = rnd_w((up_in[i], up_out[i], 4, 4), up_in[i] * 16)
        p[f'up{i}_b'] = rnd_b(up_out[i])
        p[f'upbn{i}_gamma'] = jnp.ones((up_bn[i],), jnp.float32)
        p[f'upbn{i}_beta'] = jnp.zeros((up_bn[i],), jnp.float32)
    p['final_w'] = rnd_w((out_dim, 3 * mid, 1, 1), 3 * mid)
    p['final_b'] = rnd_b(out_dim)
    return p


def _phase_weights(w_t):
    """PyTorch ConvTranspose2d weight [Cin, Cout, 4, 4] -> 4 x (2x2 sub-kernel)
    reshaped to [4, 4*Cin, Cout], matching phase_patches' K ordering."""
    Cin, Cout = w_t.shape[0], w_t.shape[1]
    phases = []
    for ph in range(2):
        for pw in range(2):
            sub = jnp.stack(
                [jnp.stack([w_t[:, :, 3 - ph - 2 * d, 3 - pw - 2 * e]
                            for e in range(2)], axis=0) for d in range(2)],
                axis=0)                                   # [d, e, Cin, Cout]
            phases.append(sub.reshape(4 * Cin, Cout))
    return jnp.stack(phases, axis=0)


def prepare_params(p):
    """One-time conversion to kernel-ready layouts ([K, N] bf16 weights,
    (1, N) f32 biases), done once outside the jitted forward."""
    prep = {}
    for i in range(3):
        w = p[f'down{i}_w']                               # OIHW
        cout, cin, kh, kw = w.shape
        wk = jnp.transpose(w, (2, 3, 1, 0)).reshape(kh * kw * cin, cout)
        prep[f'down{i}_w'] = wk.astype(jnp.bfloat16)[None]          # [1, K, N]
        prep[f'down{i}_b'] = p[f'down{i}_b'].reshape(1, cout).astype(jnp.float32)
        prep[f'down{i}_gamma'] = p[f'down{i}_gamma']
        prep[f'down{i}_beta'] = p[f'down{i}_beta']
    for i in range(2):
        w_t = p[f'up{i}_w']                               # IOHW
        cout = w_t.shape[1]
        prep[f'up{i}_w'] = _phase_weights(w_t).astype(jnp.bfloat16)  # [4, K, N]
        prep[f'up{i}_b'] = p[f'up{i}_b'].reshape(1, cout).astype(jnp.float32)
        prep[f'upbn{i}_gamma'] = p[f'upbn{i}_gamma']
        prep[f'upbn{i}_beta'] = p[f'upbn{i}_beta']
    fw = p['final_w']
    prep['final_w'] = (fw.reshape(fw.shape[0], fw.shape[1]).T
                       .astype(jnp.bfloat16))                        # [K, C]
    prep['final_b'] = p['final_b'].reshape(1, -1).astype(jnp.float32)
    return prep


# --------------------------------------------------------------------------
# Forward pass
# --------------------------------------------------------------------------
def featnet2d_forward(prep, rgb):
    # TODO(synk): summ_writer tensorboard summaries have no compute; omitted.
    cur = jnp.transpose(rgb.astype(jnp.float32), (0, 2, 3, 1))  # NCHW -> NHWC (once)

    skips = []
    for i in range(3):     # Conv -> LeakyReLU -> BN (fused kernel + lazy affine)
        cur, out_mean, out_var = _down_layer(
            cur, prep[f'down{i}_w'], prep[f'down{i}_b'],
            prep[f'down{i}_gamma'], prep[f'down{i}_beta'])
        skips.append((cur, out_mean, out_var))
    skips.pop()            # innermost layer is not a skip connection

    # up0: ConvTranspose (4-phase) -> LeakyReLU -> concat skip -> BN
    cat, scale, shift = _up_layer(
        cur, prep['up0_w'], prep['up0_b'],
        prep['upbn0_gamma'], prep['upbn0_beta'], *skips.pop())
    cur = cat * scale + shift      # BN applied lazily; fused into next patches

    # up1
    cat, scale, shift = _up_layer(
        cur, prep['up1_w'], prep['up1_b'],
        prep['upbn1_gamma'], prep['upbn1_beta'], *skips.pop())

    # Head: apply the pending BN affine to the f32 activations (XLA fuses this
    # into the concat producer; avoids folding wide-range scales into bf16
    # weights), then 1x1 conv + smooth loss + l2_normalize in one tiled kernel.
    Bc, Hc, Wc, Cc = cat.shape
    x_head = ((cat * scale + shift)
              .reshape(Bc, Hc * Wc, Cc).astype(jnp.bfloat16))
    total_loss, feat_nhwc = feat_head(
        x_head, prep['final_w'], prep['final_b'], Bc, Hc, Wc)
    return total_loss, jnp.transpose(feat_nhwc, (0, 3, 1, 2))   # NHWC -> NCHW (once)


if __name__ == "__main__":
    key = jax.random.PRNGKey(0)
    pkey, xkey = jax.random.split(key)
    params = init_params(pkey, in_dim=3)
    prep = prepare_params(params)          # kernel-ready weights, once, outside jit
    rgb = jax.random.uniform(xkey, (2, 3, 16, 16), jnp.float32) - 0.5   # NCHW

    fwd = jax.jit(featnet2d_forward)
    total_loss, feat = fwd(prep, rgb)
    jax.block_until_ready((total_loss, feat))

    assert feat.shape == (2, FEAT2D_DIM, 8, 8)
    assert total_loss.shape == ()
    print("KERNEL_OK")
</pallas_src>

<mosaic_0001>
module attributes {stable_mosaic.version = 11 : i64} {
  func.func @_conv_bn_stats_kernel(%arg0: i32, %arg1: i32, %arg2: memref<1x128x48xbf16, #tpu.memory_space<vmem>>, %arg3: memref<1x48x64xbf16, #tpu.memory_space<vmem>>, %arg4: memref<1x64xf32, #tpu.memory_space<vmem>>, %arg5: memref<1x128x64xbf16, #tpu.memory_space<vmem>>, %arg6: memref<1x1x1x64xf32, #tpu.memory_space<vmem>>, %arg7: memref<1x1x1x64xf32, #tpu.memory_space<vmem>>) attributes {dimension_semantics = [#tpu.dimension_semantics<parallel>, #tpu.dimension_semantics<parallel>], iteration_bounds = array<i64: 1, 1>, scalar_prefetch = 0 : i64, scratch_operands = 0 : i64, tpu.core_type = #tpu.core_type<tc>, window_params = [{transform_indices = @transform_0, window_bounds = array<i64: 1, 128, 48>}, {transform_indices = @transform_1, window_bounds = array<i64: 1, 48, 64>}, {pipeline_mode = #tpu.pipeline_mode<synchronous>, transform_indices = @transform_2, window_bounds = array<i64: 1, 64>}, {transform_indices = @transform_3, window_bounds = array<i64: 1, 128, 64>}, {transform_indices = @transform_4, window_bounds = array<i64: 1, 1, 1, 64>}, {transform_indices = @transform_5, window_bounds = array<i64: 1, 1, 1, 64>}]} {
    %c0 = arith.constant 0 : index
    %c0_0 = arith.constant 0 : index
    %c0_1 = arith.constant 0 : index
    %0 = vector.load %arg2[%c0, %c0_0, %c0_1] : memref<1x128x48xbf16, #tpu.memory_space<vmem>>, vector<1x128x48xbf16>
    %1 = vector.shape_cast %0 : vector<1x128x48xbf16> to vector<128x48xbf16>
    %c0_2 = arith.constant 0 : index
    %c0_3 = arith.constant 0 : index
    %c0_4 = arith.constant 0 : index
    %2 = vector.load %arg3[%c0_2, %c0_3, %c0_4] : memref<1x48x64xbf16, #tpu.memory_space<vmem>>, vector<1x48x64xbf16>
    %3 = vector.shape_cast %2 : vector<1x48x64xbf16> to vector<48x64xbf16>
    %cst = arith.constant dense<0.000000e+00> : vector<128x64xf32>
    %4 = tpu.matmul %1, %3, %cst {dimension_numbers = #tpu.dot_dimension_numbers<[1], [0], [0], [1], [0, 0, 1, 1], [], []>} : vector<128x48xbf16>, vector<48x64xbf16>, vector<128x64xf32> -> vector<128x64xf32>
    %c0_5 = arith.constant 0 : index
    %c0_6 = arith.constant 0 : index
    %5 = vector.load %arg4[%c0_5, %c0_6] : memref<1x64xf32, #tpu.memory_space<vmem>>, vector<1x64xf32>
    %6 = vector.broadcast %5 : vector<1x64xf32> to vector<128x64xf32>
    %7 = arith.addf %4, %6 : vector<128x64xf32>
    %cst_7 = arith.constant 0.00999999977 : f32
    %8 = vector.broadcast %cst_7 : f32 to vector<128x64xf32>
    %9 = arith.mulf %8, %7 : vector<128x64xf32>
    %10 = arith.maximumf %7, %9 : vector<128x64xf32>
    %11 = arith.truncf %10 : vector<128x64xf32> to vector<128x64xbf16>
    %c0_8 = arith.constant 0 : index
    %c0_9 = arith.constant 0 : index
    %c0_10 = arith.constant 0 : index
    %12 = vector.load %arg5[%c0_8, %c0_9, %c0_10] : memref<1x128x64xbf16, #tpu.memory_space<vmem>>, vector<1x128x64xbf16>
    %13 = vector.shape_cast %12 : vector<1x128x64xbf16> to vector<128x64xbf16>
    %14 = vector.shape_cast %11 : vector<128x64xbf16> to vector<1x128x64xbf16>
    tpu.vector_store %arg5[%c0_8, %c0_9, %c0_10], %14 {strides = array<i32>} : memref<1x128x64xbf16, #tpu.memory_space<vmem>>, vector<1x128x64xbf16>,
    %cst_11 = arith.constant dense<0.000000e+00> : vector<64xf32>
    %15 = vector.multi_reduction <add>, %10, %cst_11 [0] : vector<128x64xf32> to vector<64xf32>
    %16 = vector.shape_cast %15 : vector<64xf32> to vector<1x64xf32>
    %c0_12 = arith.constant 0 : index
    %c0_13 = arith.constant 0 : index
    %c0_14 = arith.constant 0 : index
    %c0_15 = arith.constant 0 : index
    %17 = vector.load %arg6[%c0_12, %c0_13, %c0_14, %c0_15] : memref<1x1x1x64xf32, #tpu.memory_space<vmem>>, vector<1x1x1x64xf32>
    %18 = vector.shape_cast %17 : vector<1x1x1x64xf32> to vector<1x64xf32>
    %19 = vector.shape_cast %16 : vector<1x64xf32> to vector<1x1x1x64xf32>
    tpu.vector_store %arg6[%c0_12, %c0_13, %c0_14, %c0_15], %19 {strides = array<i32>} : memref<1x1x1x64xf32, #tpu.memory_space<vmem>>, vector<1x1x1x64xf32>,
    %20 = arith.mulf %10, %10 : vector<128x64xf32>
    %cst_16 = arith.constant dense<0.000000e+00> : vector<64xf32>
    %21 = vector.multi_reduction <add>, %20, %cst_16 [0] : vector<128x64xf32> to vector<64xf32>
    %22 = vector.shape_cast %21 : vector<64xf32> to vector<1x64xf32>
    %c0_17 = arith.constant 0 : index
    %c0_18 = arith.constant 0 : index
    %c0_19 = arith.constant 0 : index
    %c0_20 = arith.constant 0 : index
    %23 = vector.load %arg7[%c0_17, %c0_18, %c0_19, %c0_20] : memref<1x1x1x64xf32, #tpu.memory_space<vmem>>, vector<1x1x1x64xf32>
    %24 = vector.shape_cast %23 : vector<1x1x1x64xf32> to vector<1x64xf32>
    %25 = vector.shape_cast %22 : vector<1x64xf32> to vector<1x1x1x64xf32>
    tpu.vector_store %arg7[%c0_17, %c0_18, %c0_19, %c0_20], %25 {strides = array<i32>} : memref<1x1x1x64xf32, #tpu.memory_space<vmem>>, vector<1x1x1x64xf32>,
    return
  }
  func.func @transform_0(%arg0: i32, %arg1: i32) -> (i32, i32, i32) {
    %c0_i32 = arith.constant 0 : i32
    %c0_i32_0 = arith.constant 0 : i32
    return %arg0, %arg1, %c0_i32 : i32, i32, i32
  }
  func.func @transform_1(%arg0: i32, %arg1: i32) -> (i32, i32, i32) {
    %c0_i32 = arith.constant 0 : i32
    %c0_i32_0 = arith.constant 0 : i32
    %c0_i32_1 = arith.constant 0 : i32
    return %arg0, %c0_i32, %c0_i32_0 : i32, i32, i32
  }
  func.func @transform_2(%arg0: i32, %arg1: i32) -> (i32, i32) {
    %c0_i32 = arith.constant 0 : i32
    %c0_i32_0 = arith.constant 0 : i32
    %c0_i32_1 = arith.constant 0 : i32
    return %c0_i32, %c0_i32_0 : i32, i32
  }
  func.func @transform_3(%arg0: i32, %arg1: i32) -> (i32, i32, i32) {
    %c0_i32 = arith.constant 0 : i32
    %c0_i32_0 = arith.constant 0 : i32
    return %arg0, %arg1, %c0_i32 : i32, i32, i32
  }
  func.func @transform_4(%arg0: i32, %arg1: i32) -> (i32, i32, i32, i32) {
    %c0_i32 = arith.constant 0 : i32
    %c0_i32_0 = arith.constant 0 : i32
    %c0_i32_1 = arith.constant 0 : i32
    return %arg0, %arg1, %c0_i32, %c0_i32_0 : i32, i32, i32, i32
  }
  func.func @transform_5(%arg0: i32, %arg1: i32) -> (i32, i32, i32, i32) {
    %c0_i32 = arith.constant 0 : i32
    %c0_i32_0 = arith.constant 0 : i32
    %c0_i32_1 = arith.constant 0 : i32
    return %arg0, %arg1, %c0_i32, %c0_i32_0 : i32, i32, i32, i32
  }
}

module attributes {stable_mosaic.version = 11 : i64} {
  func.func @_conv_bn_stats_kernel(%arg0: i32, %arg1: i32, %arg2: memref<1x32x1024xbf16, #tpu.memory_space<vmem>>, %arg3: memref<1x1024x128xbf16, #tpu.memory_space<vmem>>, %arg4: memref<1x128xf32, #tpu.memory_space<vmem>>, %arg5: memref<1x32x128xbf16, #tpu.memory_space<vmem>>, %arg6: memref<1x1x1x128xf32, #tpu.memory_space<vmem>>, %arg7: memref<1x1x1x128xf32, #tpu.memory_space<vmem>>) attributes {dimension_semantics = [#tpu.dimension_semantics<parallel>, #tpu.dimension_semantics<parallel>], iteration_bounds = array<i64: 1, 1>, scalar_prefetch = 0 : i64, scratch_operands = 0 : i64, tpu.core_type = #tpu.core_type<tc>, window_params = [{transform_indices = @transform_0, window_bounds = array<i64: 1, 32, 1024>}, {transform_indices = @transform_1, window_bounds = array<i64: 1, 1024, 128>}, {pipeline_mode = #tpu.pipeline_mode<synchronous>, transform_indices = @transform_2, window_bounds = array<i64: 1, 128>}, {transform_indices = @transform_3, window_bounds = array<i64: 1, 32, 128>}, {transform_indices = @transform_4, window_bounds = array<i64: 1, 1, 1, 128>}, {transform_indices = @transform_5, window_bounds = array<i64: 1, 1, 1, 128>}]} {
    %c0 = arith.constant 0 : index
    %c0_0 = arith.constant 0 : index
    %c0_1 = arith.constant 0 : index
    %0 = vector.load %arg2[%c0, %c0_0, %c0_1] : memref<1x32x1024xbf16, #tpu.memory_space<vmem>>, vector<1x32x1024xbf16>
    %1 = vector.shape_cast %0 : vector<1x32x1024xbf16> to vector<32x1024xbf16>
    %c0_2 = arith.constant 0 : index
    %c0_3 = arith.constant 0 : index
    %c0_4 = arith.constant 0 : index
    %2 = vector.load %arg3[%c0_2, %c0_3, %c0_4] : memref<1x1024x128xbf16, #tpu.memory_space<vmem>>, vector<1x1024x128xbf16>
    %3 = vector.shape_cast %2 : vector<1x1024x128xbf16> to vector<1024x128xbf16>
    %cst = arith.constant dense<0.000000e+00> : vector<32x128xf32>
    %4 = tpu.matmul %1, %3, %cst {dimension_numbers = #tpu.dot_dimension_numbers<[1], [0], [0], [1], [0, 0, 1, 1], [], []>} : vector<32x1024xbf16>, vector<1024x128xbf16>, vector<32x128xf32> -> vector<32x128xf32>
    %c0_5 = arith.constant 0 : index
    %c0_6 = arith.constant 0 : index
    %5 = vector.load %arg4[%c0_5, %c0_6] : memref<1x128xf32, #tpu.memory_space<vmem>>, vector<1x128xf32>
    %6 = vector.broadcast %5 : vector<1x128xf32> to vector<32x128xf32>
    %7 = arith.addf %4, %6 : vector<32x128xf32>
    %cst_7 = arith.constant 0.00999999977 : f32
    %8 = vector.broadcast %cst_7 : f32 to vector<32x128xf32>
    %9 = arith.mulf %8, %7 : vector<32x128xf32>
    %10 = arith.maximumf %7, %9 : vector<32x128xf32>
    %11 = arith.truncf %10 : vector<32x128xf32> to vector<32x128xbf16>
    %c0_8 = arith.constant 0 : index
    %c0_9 = arith.constant 0 : index
    %c0_10 = arith.constant 0 : index
    %12 = vector.load %arg5[%c0_8, %c0_9, %c0_10] : memref<1x32x128xbf16, #tpu.memory_space<vmem>>, vector<1x32x128xbf16>
    %13 = vector.shape_cast %12 : vector<1x32x128xbf16> to vector<32x128xbf16>
    %14 = vector.shape_cast %11 : vector<32x128xbf16> to vector<1x32x128xbf16>
    tpu.vector_store %arg5[%c0_8, %c0_9, %c0_10], %14 {strides = array<i32>} : memref<1x32x128xbf16, #tpu.memory_space<vmem>>, vector<1x32x128xbf16>,
    %cst_11 = arith.constant dense<0.000000e+00> : vector<128xf32>
    %15 = vector.multi_reduction <add>, %10, %cst_11 [0] : vector<32x128xf32> to vector<128xf32>
    %16 = vector.shape_cast %15 : vector<128xf32> to vector<1x128xf32>
    %c0_12 = arith.constant 0 : index
    %c0_13 = arith.constant 0 : index
    %c0_14 = arith.constant 0 : index
    %c0_15 = arith.constant 0 : index
    %17 = vector.load %arg6[%c0_12, %c0_13, %c0_14, %c0_15] : memref<1x1x1x128xf32, #tpu.memory_space<vmem>>, vector<1x1x1x128xf32>
    %18 = vector.shape_cast %17 : vector<1x1x1x128xf32> to vector<1x128xf32>
    %19 = vector.shape_cast %16 : vector<1x128xf32> to vector<1x1x1x128xf32>
    tpu.vector_store %arg6[%c0_12, %c0_13, %c0_14, %c0_15], %19 {strides = array<i32>} : memref<1x1x1x128xf32, #tpu.memory_space<vmem>>, vector<1x1x1x128xf32>,
    %20 = arith.mulf %10, %10 : vector<32x128xf32>
    %cst_16 = arith.constant dense<0.000000e+00> : vector<128xf32>
    %21 = vector.multi_reduction <add>, %20, %cst_16 [0] : vector<32x128xf32> to vector<128xf32>
    %22 = vector.shape_cast %21 : vector<128xf32> to vector<1x128xf32>
    %c0_17 = arith.constant 0 : index
    %c0_18 = arith.constant 0 : index
    %c0_19 = arith.constant 0 : index
    %c0_20 = arith.constant 0 : index
    %23 = vector.load %arg7[%c0_17, %c0_18, %c0_19, %c0_20] : memref<1x1x1x128xf32, #tpu.memory_space<vmem>>, vector<1x1x1x128xf32>
    %24 = vector.shape_cast %23 : vector<1x1x1x128xf32> to vector<1x128xf32>
    %25 = vector.shape_cast %22 : vector<1x128xf32> to vector<1x1x1x128xf32>
    tpu.vector_store %arg7[%c0_17, %c0_18, %c0_19, %c0_20], %25 {strides = array<i32>} : memref<1x1x1x128xf32, #tpu.memory_space<vmem>>, vector<1x1x1x128xf32>,
    return
  }
  func.func @transform_0(%arg0: i32, %arg1: i32) -> (i32, i32, i32) {
    %c0_i32 = arith.constant 0 : i32
    %c0_i32_0 = arith.constant 0 : i32
    return %arg0, %arg1, %c0_i32 : i32, i32, i32
  }
  func.func @transform_1(%arg0: i32, %arg1: i32) -> (i32, i32, i32) {
    %c0_i32 = arith.constant 0 : i32
    %c0_i32_0 = arith.constant 0 : i32
    %c0_i32_1 = arith.constant 0 : i32
    return %arg0, %c0_i32, %c0_i32_0 : i32, i32, i32
  }
  func.func @transform_2(%arg0: i32, %arg1: i32) -> (i32, i32) {
    %c0_i32 = arith.constant 0 : i32
    %c0_i32_0 = arith.constant 0 : i32
    %c0_i32_1 = arith.constant 0 : i32
    return %c0_i32, %c0_i32_0 : i32, i32
  }
  func.func @transform_3(%arg0: i32, %arg1: i32) -> (i32, i32, i32) {
    %c0_i32 = arith.constant 0 : i32
    %c0_i32_0 = arith.constant 0 : i32
    return %arg0, %arg1, %c0_i32 : i32, i32, i32
  }
  func.func @transform_4(%arg0: i32, %arg1: i32) -> (i32, i32, i32, i32) {
    %c0_i32 = arith.constant 0 : i32
    %c0_i32_0 = arith.constant 0 : i32
    %c0_i32_1 = arith.constant 0 : i32
    return %arg0, %arg1, %c0_i32, %c0_i32_0 : i32, i32, i32, i32
  }
  func.func @transform_5(%arg0: i32, %arg1: i32) -> (i32, i32, i32, i32) {
    %c0_i32 = arith.constant 0 : i32
    %c0_i32_0 = arith.constant 0 : i32
    %c0_i32_1 = arith.constant 0 : i32
    return %arg0, %arg1, %c0_i32, %c0_i32_0 : i32, i32, i32, i32
  }
}

module attributes {stable_mosaic.version = 11 : i64} {
  func.func @_conv_bn_stats_kernel(%arg0: i32, %arg1: i32, %arg2: memref<1x8x2048xbf16, #tpu.memory_space<vmem>>, %arg3: memref<1x2048x256xbf16, #tpu.memory_space<vmem>>, %arg4: memref<1x256xf32, #tpu.memory_space<vmem>>, %arg5: memref<1x8x256xbf16, #tpu.memory_space<vmem>>, %arg6: memref<1x1x1x256xf32, #tpu.memory_space<vmem>>, %arg7: memref<1x1x1x256xf32, #tpu.memory_space<vmem>>) attributes {dimension_semantics = [#tpu.dimension_semantics<parallel>, #tpu.dimension_semantics<parallel>], iteration_bounds = array<i64: 1, 1>, scalar_prefetch = 0 : i64, scratch_operands = 0 : i64, tpu.core_type = #tpu.core_type<tc>, window_params = [{transform_indices = @transform_0, window_bounds = array<i64: 1, 8, 2048>}, {transform_indices = @transform_1, window_bounds = array<i64: 1, 2048, 256>}, {pipeline_mode = #tpu.pipeline_mode<synchronous>, transform_indices = @transform_2, window_bounds = array<i64: 1, 256>}, {transform_indices = @transform_3, window_bounds = array<i64: 1, 8, 256>}, {transform_indices = @transform_4, window_bounds = array<i64: 1, 1, 1, 256>}, {transform_indices = @transform_5, window_bounds = array<i64: 1, 1, 1, 256>}]} {
    %c0 = arith.constant 0 : index
    %c0_0 = arith.constant 0 : index
    %c0_1 = arith.constant 0 : index
    %0 = vector.load %arg2[%c0, %c0_0, %c0_1] : memref<1x8x2048xbf16, #tpu.memory_space<vmem>>, vector<1x8x2048xbf16>
    %1 = vector.shape_cast %0 : vector<1x8x2048xbf16> to vector<8x2048xbf16>
    %c0_2 = arith.constant 0 : index
    %c0_3 = arith.constant 0 : index
    %c0_4 = arith.constant 0 : index
    %2 = vector.load %arg3[%c0_2, %c0_3, %c0_4] : memref<1x2048x256xbf16, #tpu.memory_space<vmem>>, vector<1x2048x256xbf16>
    %3 = vector.shape_cast %2 : vector<1x2048x256xbf16> to vector<2048x256xbf16>
    %cst = arith.constant dense<0.000000e+00> : vector<8x256xf32>
    %4 = tpu.matmul %1, %3, %cst {dimension_numbers = #tpu.dot_dimension_numbers<[1], [0], [0], [1], [0, 0, 1, 1], [], []>} : vector<8x2048xbf16>, vector<2048x256xbf16>, vector<8x256xf32> -> vector<8x256xf32>
    %c0_5 = arith.constant 0 : index
    %c0_6 = arith.constant 0 : index
    %5 = vector.load %arg4[%c0_5, %c0_6] : memref<1x256xf32, #tpu.memory_space<vmem>>, vector<1x256xf32>
    %6 = vector.broadcast %5 : vector<1x256xf32> to vector<8x256xf32>
    %7 = arith.addf %4, %6 : vector<8x256xf32>
    %cst_7 = arith.constant 0.00999999977 : f32
    %8 = vector.broadcast %cst_7 : f32 to vector<8x256xf32>
    %9 = arith.mulf %8, %7 : vector<8x256xf32>
    %10 = arith.maximumf %7, %9 : vector<8x256xf32>
    %11 = arith.truncf %10 : vector<8x256xf32> to vector<8x256xbf16>
    %c0_8 = arith.constant 0 : index
    %c0_9 = arith.constant 0 : index
    %c0_10 = arith.constant 0 : index
    %12 = vector.load %arg5[%c0_8, %c0_9, %c0_10] : memref<1x8x256xbf16, #tpu.memory_space<vmem>>, vector<1x8x256xbf16>
    %13 = vector.shape_cast %12 : vector<1x8x256xbf16> to vector<8x256xbf16>
    %14 = vector.shape_cast %11 : vector<8x256xbf16> to vector<1x8x256xbf16>
    tpu.vector_store %arg5[%c0_8, %c0_9, %c0_10], %14 {strides = array<i32>} : memref<1x8x256xbf16, #tpu.memory_space<vmem>>, vector<1x8x256xbf16>,
    %cst_11 = arith.constant dense<0.000000e+00> : vector<256xf32>
    %15 = vector.multi_reduction <add>, %10, %cst_11 [0] : vector<8x256xf32> to vector<256xf32>
    %16 = vector.shape_cast %15 : vector<256xf32> to vector<1x256xf32>
    %c0_12 = arith.constant 0 : index
    %c0_13 = arith.constant 0 : index
    %c0_14 = arith.constant 0 : index
    %c0_15 = arith.constant 0 : index
    %17 = vector.load %arg6[%c0_12, %c0_13, %c0_14, %c0_15] : memref<1x1x1x256xf32, #tpu.memory_space<vmem>>, vector<1x1x1x256xf32>
    %18 = vector.shape_cast %17 : vector<1x1x1x256xf32> to vector<1x256xf32>
    %19 = vector.shape_cast %16 : vector<1x256xf32> to vector<1x1x1x256xf32>
    tpu.vector_store %arg6[%c0_12, %c0_13, %c0_14, %c0_15], %19 {strides = array<i32>} : memref<1x1x1x256xf32, #tpu.memory_space<vmem>>, vector<1x1x1x256xf32>,
    %20 = arith.mulf %10, %10 : vector<8x256xf32>
    %cst_16 = arith.constant dense<0.000000e+00> : vector<256xf32>
    %21 = vector.multi_reduction <add>, %20, %cst_16 [0] : vector<8x256xf32> to vector<256xf32>
    %22 = vector.shape_cast %21 : vector<256xf32> to vector<1x256xf32>
    %c0_17 = arith.constant 0 : index
    %c0_18 = arith.constant 0 : index
    %c0_19 = arith.constant 0 : index
    %c0_20 = arith.constant 0 : index
    %23 = vector.load %arg7[%c0_17, %c0_18, %c0_19, %c0_20] : memref<1x1x1x256xf32, #tpu.memory_space<vmem>>, vector<1x1x1x256xf32>
    %24 = vector.shape_cast %23 : vector<1x1x1x256xf32> to vector<1x256xf32>
    %25 = vector.shape_cast %22 : vector<1x256xf32> to vector<1x1x1x256xf32>
    tpu.vector_store %arg7[%c0_17, %c0_18, %c0_19, %c0_20], %25 {strides = array<i32>} : memref<1x1x1x256xf32, #tpu.memory_space<vmem>>, vector<1x1x1x256xf32>,
    return
  }
  func.func @transform_0(%arg0: i32, %arg1: i32) -> (i32, i32, i32) {
    %c0_i32 = arith.constant 0 : i32
    %c0_i32_0 = arith.constant 0 : i32
    return %arg0, %arg1, %c0_i32 : i32, i32, i32
  }
  func.func @transform_1(%arg0: i32, %arg1: i32) -> (i32, i32, i32) {
    %c0_i32 = arith.constant 0 : i32
    %c0_i32_0 = arith.constant 0 : i32
    %c0_i32_1 = arith.constant 0 : i32
    return %arg0, %c0_i32, %c0_i32_0 : i32, i32, i32
  }
  func.func @transform_2(%arg0: i32, %arg1: i32) -> (i32, i32) {
    %c0_i32 = arith.constant 0 : i32
    %c0_i32_0 = arith.constant 0 : i32
    %c0_i32_1 = arith.constant 0 : i32
    return %c0_i32, %c0_i32_0 : i32, i32
  }
  func.func @transform_3(%arg0: i32, %arg1: i32) -> (i32, i32, i32) {
    %c0_i32 = arith.constant 0 : i32
    %c0_i32_0 = arith.constant 0 : i32
    return %arg0, %arg1, %c0_i32 : i32, i32, i32
  }
  func.func @transform_4(%arg0: i32, %arg1: i32) -> (i32, i32, i32, i32) {
    %c0_i32 = arith.constant 0 : i32
    %c0_i32_0 = arith.constant 0 : i32
    %c0_i32_1 = arith.constant 0 : i32
    return %arg0, %arg1, %c0_i32, %c0_i32_0 : i32, i32, i32, i32
  }
  func.func @transform_5(%arg0: i32, %arg1: i32) -> (i32, i32, i32, i32) {
    %c0_i32 = arith.constant 0 : i32
    %c0_i32_0 = arith.constant 0 : i32
    %c0_i32_1 = arith.constant 0 : i32
    return %arg0, %arg1, %c0_i32, %c0_i32_0 : i32, i32, i32, i32
  }
}

module attributes {stable_mosaic.version = 11 : i64} {
  func.func @_conv_bn_stats_kernel(%arg0: i32, %arg1: i32, %arg2: memref<1x8x1024xbf16, #tpu.memory_space<vmem>>, %arg3: memref<1x1024x256xbf16, #tpu.memory_space<vmem>>, %arg4: memref<1x256xf32, #tpu.memory_space<vmem>>, %arg5: memref<1x8x256xbf16, #tpu.memory_space<vmem>>, %arg6: memref<1x1x1x256xf32, #tpu.memory_space<vmem>>, %arg7: memref<1x1x1x256xf32, #tpu.memory_space<vmem>>) attributes {dimension_semantics = [#tpu.dimension_semantics<parallel>, #tpu.dimension_semantics<parallel>], iteration_bounds = array<i64: 4, 1>, scalar_prefetch = 0 : i64, scratch_operands = 0 : i64, tpu.core_type = #tpu.core_type<tc>, window_params = [{transform_indices = @transform_0, window_bounds = array<i64: 1, 8, 1024>}, {transform_indices = @transform_1, window_bounds = array<i64: 1, 1024, 256>}, {pipeline_mode = #tpu.pipeline_mode<synchronous>, transform_indices = @transform_2, window_bounds = array<i64: 1, 256>}, {transform_indices = @transform_3, window_bounds = array<i64: 1, 8, 256>}, {transform_indices = @transform_4, window_bounds = array<i64: 1, 1, 1, 256>}, {transform_indices = @transform_5, window_bounds = array<i64: 1, 1, 1, 256>}]} {
    %c0 = arith.constant 0 : index
    %c0_0 = arith.constant 0 : index
    %c0_1 = arith.constant 0 : index
    %0 = vector.load %arg2[%c0, %c0_0, %c0_1] : memref<1x8x1024xbf16, #tpu.memory_space<vmem>>, vector<1x8x1024xbf16>
    %1 = vector.shape_cast %0 : vector<1x8x1024xbf16> to vector<8x1024xbf16>
    %c0_2 = arith.constant 0 : index
    %c0_3 = arith.constant 0 : index
    %c0_4 = arith.constant 0 : index
    %2 = vector.load %arg3[%c0_2, %c0_3, %c0_4] : memref<1x1024x256xbf16, #tpu.memory_space<vmem>>, vector<1x1024x256xbf16>
    %3 = vector.shape_cast %2 : vector<1x1024x256xbf16> to vector<1024x256xbf16>
    %cst = arith.constant dense<0.000000e+00> : vector<8x256xf32>
    %4 = tpu.matmul %1, %3, %cst {dimension_numbers = #tpu.dot_dimension_numbers<[1], [0], [0], [1], [0, 0, 1, 1], [], []>} : vector<8x1024xbf16>, vector<1024x256xbf16>, vector<8x256xf32> -> vector<8x256xf32>
    %c0_5 = arith.constant 0 : index
    %c0_6 = arith.constant 0 : index
    %5 = vector.load %arg4[%c0_5, %c0_6] : memref<1x256xf32, #tpu.memory_space<vmem>>, vector<1x256xf32>
    %6 = vector.broadcast %5 : vector<1x256xf32> to vector<8x256xf32>
    %7 = arith.addf %4, %6 : vector<8x256xf32>
    %cst_7 = arith.constant 0.00999999977 : f32
    %8 = vector.broadcast %cst_7 : f32 to vector<8x256xf32>
    %9 = arith.mulf %8, %7 : vector<8x256xf32>
    %10 = arith.maximumf %7, %9 : vector<8x256xf32>
    %11 = arith.truncf %10 : vector<8x256xf32> to vector<8x256xbf16>
    %c0_8 = arith.constant 0 : index
    %c0_9 = arith.constant 0 : index
    %c0_10 = arith.constant 0 : index
    %12 = vector.load %arg5[%c0_8, %c0_9, %c0_10] : memref<1x8x256xbf16, #tpu.memory_space<vmem>>, vector<1x8x256xbf16>
    %13 = vector.shape_cast %12 : vector<1x8x256xbf16> to vector<8x256xbf16>
    %14 = vector.shape_cast %11 : vector<8x256xbf16> to vector<1x8x256xbf16>
    tpu.vector_store %arg5[%c0_8, %c0_9, %c0_10], %14 {strides = array<i32>} : memref<1x8x256xbf16, #tpu.memory_space<vmem>>, vector<1x8x256xbf16>,
    %cst_11 = arith.constant dense<0.000000e+00> : vector<256xf32>
    %15 = vector.multi_reduction <add>, %10, %cst_11 [0] : vector<8x256xf32> to vector<256xf32>
    %16 = vector.shape_cast %15 : vector<256xf32> to vector<1x256xf32>
    %c0_12 = arith.constant 0 : index
    %c0_13 = arith.constant 0 : index
    %c0_14 = arith.constant 0 : index
    %c0_15 = arith.constant 0 : index
    %17 = vector.load %arg6[%c0_12, %c0_13, %c0_14, %c0_15] : memref<1x1x1x256xf32, #tpu.memory_space<vmem>>, vector<1x1x1x256xf32>
    %18 = vector.shape_cast %17 : vector<1x1x1x256xf32> to vector<1x256xf32>
    %19 = vector.shape_cast %16 : vector<1x256xf32> to vector<1x1x1x256xf32>
    tpu.vector_store %arg6[%c0_12, %c0_13, %c0_14, %c0_15], %19 {strides = array<i32>} : memref<1x1x1x256xf32, #tpu.memory_space<vmem>>, vector<1x1x1x256xf32>,
    %20 = arith.mulf %10, %10 : vector<8x256xf32>
    %cst_16 = arith.constant dense<0.000000e+00> : vector<256xf32>
    %21 = vector.multi_reduction <add>, %20, %cst_16 [0] : vector<8x256xf32> to vector<256xf32>
    %22 = vector.shape_cast %21 : vector<256xf32> to vector<1x256xf32>
    %c0_17 = arith.constant 0 : index
    %c0_18 = arith.constant 0 : index
    %c0_19 = arith.constant 0 : index
    %c0_20 = arith.constant 0 : index
    %23 = vector.load %arg7[%c0_17, %c0_18, %c0_19, %c0_20] : memref<1x1x1x256xf32, #tpu.memory_space<vmem>>, vector<1x1x1x256xf32>
    %24 = vector.shape_cast %23 : vector<1x1x1x256xf32> to vector<1x256xf32>
    %25 = vector.shape_cast %22 : vector<1x256xf32> to vector<1x1x1x256xf32>
    tpu.vector_store %arg7[%c0_17, %c0_18, %c0_19, %c0_20], %25 {strides = array<i32>} : memref<1x1x1x256xf32, #tpu.memory_space<vmem>>, vector<1x1x1x256xf32>,
    return
  }
  func.func @transform_0(%arg0: i32, %arg1: i32) -> (i32, i32, i32) {
    %c0_i32 = arith.constant 0 : i32
    %c0_i32_0 = arith.constant 0 : i32
    return %arg0, %arg1, %c0_i32 : i32, i32, i32
  }
  func.func @transform_1(%arg0: i32, %arg1: i32) -> (i32, i32, i32) {
    %c0_i32 = arith.constant 0 : i32
    %c0_i32_0 = arith.constant 0 : i32
    %c0_i32_1 = arith.constant 0 : i32
    return %arg0, %c0_i32, %c0_i32_0 : i32, i32, i32
  }
  func.func @transform_2(%arg0: i32, %arg1: i32) -> (i32, i32) {
    %c0_i32 = arith.constant 0 : i32
    %c0_i32_0 = arith.constant 0 : i32
    %c0_i32_1 = arith.constant 0 : i32
    return %c0_i32, %c0_i32_0 : i32, i32
  }
  func.func @transform_3(%arg0: i32, %arg1: i32) -> (i32, i32, i32) {
    %c0_i32 = arith.constant 0 : i32
    %c0_i32_0 = arith.constant 0 : i32
    return %arg0, %arg1, %c0_i32 : i32, i32, i32
  }
  func.func @transform_4(%arg0: i32, %arg1: i32) -> (i32, i32, i32, i32) {
    %c0_i32 = arith.constant 0 : i32
    %c0_i32_0 = arith.constant 0 : i32
    %c0_i32_1 = arith.constant 0 : i32
    return %arg0, %arg1, %c0_i32, %c0_i32_0 : i32, i32, i32, i32
  }
  func.func @transform_5(%arg0: i32, %arg1: i32) -> (i32, i32, i32, i32) {
    %c0_i32 = arith.constant 0 : i32
    %c0_i32_0 = arith.constant 0 : i32
    %c0_i32_1 = arith.constant 0 : i32
    return %arg0, %arg1, %c0_i32, %c0_i32_0 : i32, i32, i32, i32
  }
}

module attributes {stable_mosaic.version = 11 : i64} {
  func.func @_conv_bn_stats_kernel(%arg0: i32, %arg1: i32, %arg2: memref<1x32x1536xbf16, #tpu.memory_space<vmem>>, %arg3: memref<1x1536x128xbf16, #tpu.memory_space<vmem>>, %arg4: memref<1x128xf32, #tpu.memory_space<vmem>>, %arg5: memref<1x32x128xbf16, #tpu.memory_space<vmem>>, %arg6: memref<1x1x1x128xf32, #tpu.memory_space<vmem>>, %arg7: memref<1x1x1x128xf32, #tpu.memory_space<vmem>>) attributes {dimension_semantics = [#tpu.dimension_semantics<parallel>, #tpu.dimension_semantics<parallel>], iteration_bounds = array<i64: 4, 1>, scalar_prefetch = 0 : i64, scratch_operands = 0 : i64, tpu.core_type = #tpu.core_type<tc>, window_params = [{transform_indices = @transform_0, window_bounds = array<i64: 1, 32, 1536>}, {transform_indices = @transform_1, window_bounds = array<i64: 1, 1536, 128>}, {pipeline_mode = #tpu.pipeline_mode<synchronous>, transform_indices = @transform_2, window_bounds = array<i64: 1, 128>}, {transform_indices = @transform_3, window_bounds = array<i64: 1, 32, 128>}, {transform_indices = @transform_4, window_bounds = array<i64: 1, 1, 1, 128>}, {transform_indices = @transform_5, window_bounds = array<i64: 1, 1, 1, 128>}]} {
    %c0 = arith.constant 0 : index
    %c0_0 = arith.constant 0 : index
    %c0_1 = arith.constant 0 : index
    %0 = vector.load %arg2[%c0, %c0_0, %c0_1] : memref<1x32x1536xbf16, #tpu.memory_space<vmem>>, vector<1x32x1536xbf16>
    %1 = vector.shape_cast %0 : vector<1x32x1536xbf16> to vector<32x1536xbf16>
    %c0_2 = arith.constant 0 : index
    %c0_3 = arith.constant 0 : index
    %c0_4 = arith.constant 0 : index
    %2 = vector.load %arg3[%c0_2, %c0_3, %c0_4] : memref<1x1536x128xbf16, #tpu.memory_space<vmem>>, vector<1x1536x128xbf16>
    %3 = vector.shape_cast %2 : vector<1x1536x128xbf16> to vector<1536x128xbf16>
    %cst = arith.constant dense<0.000000e+00> : vector<32x128xf32>
    %4 = tpu.matmul %1, %3, %cst {dimension_numbers = #tpu.dot_dimension_numbers<[1], [0], [0], [1], [0, 0, 1, 1], [], []>} : vector<32x1536xbf16>, vector<1536x128xbf16>, vector<32x128xf32> -> vector<32x128xf32>
    %c0_5 = arith.constant 0 : index
    %c0_6 = arith.constant 0 : index
    %5 = vector.load %arg4[%c0_5, %c0_6] : memref<1x128xf32, #tpu.memory_space<vmem>>, vector<1x128xf32>
    %6 = vector.broadcast %5 : vector<1x128xf32> to vector<32x128xf32>
    %7 = arith.addf %4, %6 : vector<32x128xf32>
    %cst_7 = arith.constant 0.00999999977 : f32
    %8 = vector.broadcast %cst_7 : f32 to vector<32x128xf32>
    %9 = arith.mulf %8, %7 : vector<32x128xf32>
    %10 = arith.maximumf %7, %9 : vector<32x128xf32>
    %11 = arith.truncf %10 : vector<32x128xf32> to vector<32x128xbf16>
    %c0_8 = arith.constant 0 : index
    %c0_9 = arith.constant 0 : index
    %c0_10 = arith.constant 0 : index
    %12 = vector.load %arg5[%c0_8, %c0_9, %c0_10] : memref<1x32x128xbf16, #tpu.memory_space<vmem>>, vector<1x32x128xbf16>
    %13 = vector.shape_cast %12 : vector<1x32x128xbf16> to vector<32x128xbf16>
    %14 = vector.shape_cast %11 : vector<32x128xbf16> to vector<1x32x128xbf16>
    tpu.vector_store %arg5[%c0_8, %c0_9, %c0_10], %14 {strides = array<i32>} : memref<1x32x128xbf16, #tpu.memory_space<vmem>>, vector<1x32x128xbf16>,
    %cst_11 = arith.constant dense<0.000000e+00> : vector<128xf32>
    %15 = vector.multi_reduction <add>, %10, %cst_11 [0] : vector<32x128xf32> to vector<128xf32>
    %16 = vector.shape_cast %15 : vector<128xf32> to vector<1x128xf32>
    %c0_12 = arith.constant 0 : index
    %c0_13 = arith.constant 0 : index
    %c0_14 = arith.constant 0 : index
    %c0_15 = arith.constant 0 : index
    %17 = vector.load %arg6[%c0_12, %c0_13, %c0_14, %c0_15] : memref<1x1x1x128xf32, #tpu.memory_space<vmem>>, vector<1x1x1x128xf32>
    %18 = vector.shape_cast %17 : vector<1x1x1x128xf32> to vector<1x128xf32>
    %19 = vector.shape_cast %16 : vector<1x128xf32> to vector<1x1x1x128xf32>
    tpu.vector_store %arg6[%c0_12, %c0_13, %c0_14, %c0_15], %19 {strides = array<i32>} : memref<1x1x1x128xf32, #tpu.memory_space<vmem>>, vector<1x1x1x128xf32>,
    %20 = arith.mulf %10, %10 : vector<32x128xf32>
    %cst_16 = arith.constant dense<0.000000e+00> : vector<128xf32>
    %21 = vector.multi_reduction <add>, %20, %cst_16 [0] : vector<32x128xf32> to vector<128xf32>
    %22 = vector.shape_cast %21 : vector<128xf32> to vector<1x128xf32>
    %c0_17 = arith.constant 0 : index
    %c0_18 = arith.constant 0 : index
    %c0_19 = arith.constant 0 : index
    %c0_20 = arith.constant 0 : index
    %23 = vector.load %arg7[%c0_17, %c0_18, %c0_19, %c0_20] : memref<1x1x1x128xf32, #tpu.memory_space<vmem>>, vector<1x1x1x128xf32>
    %24 = vector.shape_cast %23 : vector<1x1x1x128xf32> to vector<1x128xf32>
    %25 = vector.shape_cast %22 : vector<1x128xf32> to vector<1x1x1x128xf32>
    tpu.vector_store %arg7[%c0_17, %c0_18, %c0_19, %c0_20], %25 {strides = array<i32>} : memref<1x1x1x128xf32, #tpu.memory_space<vmem>>, vector<1x1x1x128xf32>,
    return
  }
  func.func @transform_0(%arg0: i32, %arg1: i32) -> (i32, i32, i32) {
    %c0_i32 = arith.constant 0 : i32
    %c0_i32_0 = arith.constant 0 : i32
    return %arg0, %arg1, %c0_i32 : i32, i32, i32
  }
  func.func @transform_1(%arg0: i32, %arg1: i32) -> (i32, i32, i32) {
    %c0_i32 = arith.constant 0 : i32
    %c0_i32_0 = arith.constant 0 : i32
    %c0_i32_1 = arith.constant 0 : i32
    return %arg0, %c0_i32, %c0_i32_0 : i32, i32, i32
  }
  func.func @transform_2(%arg0: i32, %arg1: i32) -> (i32, i32) {
    %c0_i32 = arith.constant 0 : i32
    %c0_i32_0 = arith.constant 0 : i32
    %c0_i32_1 = arith.constant 0 : i32
    return %c0_i32, %c0_i32_0 : i32, i32
  }
  func.func @transform_3(%arg0: i32, %arg1: i32) -> (i32, i32, i32) {
    %c0_i32 = arith.constant 0 : i32
    %c0_i32_0 = arith.constant 0 : i32
    return %arg0, %arg1, %c0_i32 : i32, i32, i32
  }
  func.func @transform_4(%arg0: i32, %arg1: i32) -> (i32, i32, i32, i32) {
    %c0_i32 = arith.constant 0 : i32
    %c0_i32_0 = arith.constant 0 : i32
    %c0_i32_1 = arith.constant 0 : i32
    return %arg0, %arg1, %c0_i32, %c0_i32_0 : i32, i32, i32, i32
  }
  func.func @transform_5(%arg0: i32, %arg1: i32) -> (i32, i32, i32, i32) {
    %c0_i32 = arith.constant 0 : i32
    %c0_i32_0 = arith.constant 0 : i32
    %c0_i32_1 = arith.constant 0 : i32
    return %arg0, %arg1, %c0_i32, %c0_i32_0 : i32, i32, i32, i32
  }
}

module attributes {stable_mosaic.version = 11 : i64} {
  func.func @_head_kernel(%arg0: i32, %arg1: memref<1x64x192xbf16, #tpu.memory_space<vmem>>, %arg2: memref<192x32xbf16, #tpu.memory_space<vmem>>, %arg3: memref<1x32xf32, #tpu.memory_space<vmem>>, %arg4: memref<1x1xf32, #tpu.memory_space<smem>>, %arg5: memref<1x8x8x32xf32, #tpu.memory_space<vmem>>) attributes {dimension_semantics = [#tpu.dimension_semantics<arbitrary>], iteration_bounds = array<i64: 2>, scalar_prefetch = 0 : i64, scratch_operands = 0 : i64, tpu.core_type = #tpu.core_type<tc>, window_params = [{transform_indices = @transform_0, window_bounds = array<i64: 1, 64, 192>}, {pipeline_mode = #tpu.pipeline_mode<synchronous>, transform_indices = @transform_1, window_bounds = array<i64: 192, 32>}, {pipeline_mode = #tpu.pipeline_mode<synchronous>, transform_indices = @transform_2, window_bounds = array<i64: 1, 32>}, {transform_indices = @transform_3, window_bounds = array<i64: 1, 1>}, {transform_indices = @transform_4, window_bounds = array<i64: 1, 8, 8, 32>}]} {
    %c0 = arith.constant 0 : index
    %c0_0 = arith.constant 0 : index
    %c0_1 = arith.constant 0 : index
    %0 = vector.load %arg1[%c0, %c0_0, %c0_1] : memref<1x64x192xbf16, #tpu.memory_space<vmem>>, vector<1x64x192xbf16>
    %1 = vector.shape_cast %0 : vector<1x64x192xbf16> to vector<64x192xbf16>
    %c0_2 = arith.constant 0 : index
    %c0_3 = arith.constant 0 : index
    %2 = vector.load %arg2[%c0_2, %c0_3] : memref<192x32xbf16, #tpu.memory_space<vmem>>, vector<192x32xbf16>
    %cst = arith.constant dense<0.000000e+00> : vector<64x32xf32>
    %3 = tpu.matmul %1, %2, %cst {dimension_numbers = #tpu.dot_dimension_numbers<[1], [0], [0], [1], [0, 0, 1, 1], [], []>} : vector<64x192xbf16>, vector<192x32xbf16>, vector<64x32xf32> -> vector<64x32xf32>
    %c0_4 = arith.constant 0 : index
    %c0_5 = arith.constant 0 : index
    %4 = vector.load %arg3[%c0_4, %c0_5] : memref<1x32xf32, #tpu.memory_space<vmem>>, vector<1x32xf32>
    %5 = vector.broadcast %4 : vector<1x32xf32> to vector<64x32xf32>
    %6 = arith.addf %3, %5 : vector<64x32xf32>
    %7 = vector.shape_cast %6 : vector<64x32xf32> to vector<8x8x32xf32>
    %8 = vector.extract_strided_slice %7 {offsets = [1, 0, 0], sizes = [7, 8, 32], strides = [1, 1, 1]} : vector<8x8x32xf32> to vector<7x8x32xf32>
    %9 = vector.extract_strided_slice %7 {offsets = [0, 0, 0], sizes = [7, 8, 32], strides = [1, 1, 1]} : vector<8x8x32xf32> to vector<7x8x32xf32>
    %10 = arith.subf %8, %9 : vector<7x8x32xf32>
    %11 = math.absf %10 : vector<7x8x32xf32>
    %12 = vector.extract_strided_slice %7 {offsets = [0, 1, 0], sizes = [8, 7, 32], strides = [1, 1, 1]} : vector<8x8x32xf32> to vector<8x7x32xf32>
    %13 = vector.extract_strided_slice %7 {offsets = [0, 0, 0], sizes = [8, 7, 32], strides = [1, 1, 1]} : vector<8x8x32xf32> to vector<8x7x32xf32>
    %14 = arith.subf %12, %13 : vector<8x7x32xf32>
    %15 = math.absf %14 : vector<8x7x32xf32>
    %16 = vector.shape_cast %11 : vector<7x8x32xf32> to vector<1x7x8x32xf32>
    %cst_6 = arith.constant dense<0.000000e+00> : vector<1xf32>
    %17 = vector.multi_reduction <add>, %16, %cst_6 [1, 2, 3] : vector<1x7x8x32xf32> to vector<1xf32>
    %18 = vector.shape_cast %17 : vector<1xf32> to vector<1x1x1x1xf32>
    %19 = vector.extract %18[0, 0, 0, 0] : f32 from vector<1x1x1x1xf32>
    %20 = vector.shape_cast %15 : vector<8x7x32xf32> to vector<1x8x7x32xf32>
    %cst_7 = arith.constant dense<0.000000e+00> : vector<1xf32>
    %21 = vector.multi_reduction <add>, %20, %cst_7 [1, 2, 3] : vector<1x8x7x32xf32> to vector<1xf32>
    %22 = vector.shape_cast %21 : vector<1xf32> to vector<1x1x1x1xf32>
    %23 = vector.extract %22[0, 0, 0, 0] : f32 from vector<1x1x1x1xf32>
    %24 = arith.addf %19, %23 : f32
    %cst_8 = arith.constant 2.4414062E-6 : f32
    %25 = arith.mulf %24, %cst_8 : f32
    %c0_i32 = arith.constant 0 : i32
    %26 = arith.cmpi eq, %arg0, %c0_i32 : i32
    %27 = arith.extui %26 : i1 to i32
    %c0_i32_9 = arith.constant 0 : i32
    %28 = arith.cmpi ne, %27, %c0_i32_9 : i32
    scf.if %28 {
      %cst_20 = arith.constant 0.000000e+00 : f32
      %c0_21 = arith.constant 0 : index
      %c0_22 = arith.constant 0 : index
      %43 = memref.load %arg4[%c0_21, %c0_22] : memref<1x1xf32, #tpu.memory_space<smem>>
      memref.store %cst_20, %arg4[%c0_21, %c0_22] : memref<1x1xf32, #tpu.memory_space<smem>>
    } else {
    }
    %c0_10 = arith.constant 0 : index
    %c0_11 = arith.constant 0 : index
    %29 = memref.load %arg4[%c0_10, %c0_11] : memref<1x1xf32, #tpu.memory_space<smem>>
    %30 = arith.addf %29, %25 : f32
    %c0_12 = arith.constant 0 : index
    %c0_13 = arith.constant 0 : index
    %31 = memref.load %arg4[%c0_12, %c0_13] : memref<1x1xf32, #tpu.memory_space<smem>>
    memref.store %30, %arg4[%c0_12, %c0_13] : memref<1x1xf32, #tpu.memory_space<smem>>
    %32 = arith.mulf %7, %7 : vector<8x8x32xf32>
    %cst_14 = arith.constant dense<0.000000e+00> : vector<8x8xf32>
    %33 = vector.multi_reduction <add>, %32, %cst_14 [2] : vector<8x8x32xf32> to vector<8x8xf32>
    %34 = vector.shape_cast %33 : vector<8x8xf32> to vector<8x8x1xf32>
    %35 = math.sqrt %34 : vector<8x8x1xf32>
    %cst_15 = arith.constant 9.99999996E-13 : f32
    %36 = vector.broadcast %cst_15 : f32 to vector<8x8x1xf32>
    %37 = arith.maximumf %35, %36 : vector<8x8x1xf32>
    %38 = vector.broadcast %37 : vector<8x8x1xf32> to vector<8x8x32xf32>
    %39 = arith.divf %7, %38 : vector<8x8x32xf32>
    %c0_16 = arith.constant 0 : index
    %c0_17 = arith.constant 0 : index
    %c0_18 = arith.constant 0 : index
    %c0_19 = arith.constant 0 : index
    %40 = vector.load %arg5[%c0_16, %c0_17, %c0_18, %c0_19] : memref<1x8x8x32xf32, #tpu.memory_space<vmem>>, vector<1x8x8x32xf32>
    %41 = vector.shape_cast %40 : vector<1x8x8x32xf32> to vector<8x8x32xf32>
    %42 = vector.shape_cast %39 : vector<8x8x32xf32> to vector<1x8x8x32xf32>
    tpu.vector_store %arg5[%c0_16, %c0_17, %c0_18, %c0_19], %42 {strides = array<i32>} : memref<1x8x8x32xf32, #tpu.memory_space<vmem>>, vector<1x8x8x32xf32>,
    return
  }
  func.func @transform_0(%arg0: i32) -> (i32, i32, i32) {
    %c0_i32 = arith.constant 0 : i32
    %c0_i32_0 = arith.constant 0 : i32
    %c0_i32_1 = arith.constant 0 : i32
    return %arg0, %c0_i32, %c0_i32_0 : i32, i32, i32
  }
  func.func @transform_1(%arg0: i32) -> (i32, i32) {
    %c0_i32 = arith.constant 0 : i32
    %c0_i32_0 = arith.constant 0 : i32
    %c0_i32_1 = arith.constant 0 : i32
    return %c0_i32, %c0_i32_0 : i32, i32
  }
  func.func @transform_2(%arg0: i32) -> (i32, i32) {
    %c0_i32 = arith.constant 0 : i32
    %c0_i32_0 = arith.constant 0 : i32
    %c0_i32_1 = arith.constant 0 : i32
    return %c0_i32, %c0_i32_0 : i32, i32
  }
  func.func @transform_3(%arg0: i32) -> (i32, i32) {
    %c0_i32 = arith.constant 0 : i32
    %c0_i32_0 = arith.constant 0 : i32
    %c0_i32_1 = arith.constant 0 : i32
    return %c0_i32, %c0_i32_0 : i32, i32
  }
  func.func @transform_4(%arg0: i32) -> (i32, i32, i32, i32) {
    %c0_i32 = arith.constant 0 : i32
    %c0_i32_0 = arith.constant 0 : i32
    %c0_i32_1 = arith.constant 0 : i32
    %c0_i32_2 = arith.constant 0 : i32
    return %arg0, %c0_i32, %c0_i32_0, %c0_i32_1 : i32, i32, i32, i32
  }
}

</mosaic_0001>

<llo_original>
// kernel: featnet2d_forward.6
$region0: #{featnet2d_forward.6}
  #allocation0 [shape = 'u32[]', space=smem, size = 0x4, offset = 0x4, fixed_abs, tag = 'smem constant byte address 0x4 - core index']
  #allocation1 [shape = 'u32[144,128]{1,0:T(1,128)}', space=vmem, size = 0x12000, scoped, tag = 'internal scratch']
  %s0 = inlined_call_operand.vmem [shape: bf16[1,128,48], index: 0, kind: input, shape index: {}]
  %s1 = inlined_call_operand.vmem [shape: bf16[1,48,64], index: 1, kind: input, shape index: {}]
  %s2 = inlined_call_operand.vmem [shape: f32[1,64], index: 2, kind: input, shape index: {}]
  %s3 = inlined_call_operand.vmem [shape: bf16[1,128,64], index: 3, kind: output, shape index: {0}]
  %s4 = inlined_call_operand.vmem [shape: f32[1,1,1,64], index: 4, kind: output, shape index: {1}]
  %s5 = inlined_call_operand.vmem [shape: f32[1,1,1,64], index: 5, kind: output, shape index: {2}]
  %6 = xla_tuple %s3, %s4, %s5
  %s7 = sld [smem:[#allocation0]]
  $region38: #{featnet2d_forward.6} parent=0
    _
  %s9 = ssub.s32 1, %s7
  %s10 = scalar_select 0, %s9, %s7
  // Predicated region
  $region2: #{featnet2d_forward.6} parent=0 // pred_check
    _
  $region3: #{featnet2d_forward.6} parent=0 // pred_check_branch
    %12 = sbr.rel (0) target = $region5
  $region4: #{featnet2d_forward.6} parent=0 // pred_region
    _
  $region5: #{featnet2d_forward.6} parent=0 // pred_fallthru
    _
  // Predicated region
  $region6: #{featnet2d_forward.6} parent=0 // pred_check
    _
  $region7: #{featnet2d_forward.6} parent=0 // pred_check_branch
    %14 = sbr.rel (0) target = $region9
  $region8: #{featnet2d_forward.6} parent=0 // pred_region
    _
  $region9: #{featnet2d_forward.6} parent=0 // pred_fallthru
    _
  // Predicated region
  $region10: #{featnet2d_forward.6} parent=0 // pred_check
    _
  $region11: #{featnet2d_forward.6} parent=0 // pred_check_branch
    %16 = sbr.rel (0) target = $region13
  $region12: #{featnet2d_forward.6} parent=0 // pred_region
    _
  $region13: #{featnet2d_forward.6} parent=0 // pred_fallthru
    _
  %v18 = vld [vmem:[%s0] sm:$0xf]
  %v19 = vld [vmem:[%s0 + $0x4] sm:$0xf]
  %v20 = vld [vmem:[%s0 + $0x8] sm:$0xf]
  %v21 = vld [vmem:[%s0 + $0xc] sm:$0xf]
  %v22 = vld [vmem:[%s0 + $0x10] sm:$0xf]
  %v23 = vld [vmem:[%s0 + $0x14] sm:$0xf]
  %v24 = vld [vmem:[%s0 + $0x18] sm:$0xf]
  %v25 = vld [vmem:[%s0 + $0x1c] sm:$0xf]
  %v26 = vld [vmem:[%s0 + $0x20] sm:$0xf]
  %v27 = vld [vmem:[%s0 + $0x24] sm:$0xf]
  %v28 = vld [vmem:[%s0 + $0x28] sm:$0xf]
  %v29 = vld [vmem:[%s0 + $0x2c] sm:$0xf]
  %v30 = vld [vmem:[%s0 + $0x30] sm:$0xf]
  %v31 = vld [vmem:[%s0 + $0x34] sm:$0xf]
  %v32 = vld [vmem:[%s0 + $0x38] sm:$0xf]
  %v33 = vld [vmem:[%s0 + $0x3c] sm:$0xf]
  %v34 = vld [vmem:[%s1] sm:$0xf]
  %v35 = vld [vmem:[%s1 + $0x4] sm:$0xf]
  %v36 = vld [vmem:[%s1 + $0x8] sm:$0xf]
  %v37 = vld [vmem:[%s1 + $0xc] sm:$0xf]
  %v38 = vld [vmem:[%s1 + $0x10] sm:$0xf]
  %v39 = vld [vmem:[%s1 + $0x14] sm:$0xf]
  %v40 = vld [vmem:[%s2] sm:$0x1]
  %v42 = vlaneseq
  %v43 = vshrl.u32 %v42, 7
  %v44 = vsub.s32 0, %v43
  %v45 = vrot.slane %v40, %v44
  %v63 = vunpack.c.l.b16 %v18
  %v64 = vunpack.c.l.b16 %v19
  %v65 = vunpack.c.l.b16 %v20
  %v66 = vunpack.c.l.b16 %v21
  %v67 = vunpack.c.l.b16 %v22
  %v68 = vunpack.c.l.b16 %v23
  %v69 = vunpack.c.l.b16 %v24
  %v70 = vunpack.c.l.b16 %v25
  %v71 = vunpack.c.l.b16 %v26
  %v72 = vunpack.c.l.b16 %v27
  %v73 = vunpack.c.l.b16 %v28
  %v74 = vunpack.c.l.b16 %v29
  %v75 = vunpack.c.l.b16 %v30
  %v76 = vunpack.c.l.b16 %v31
  %v77 = vunpack.c.l.b16 %v32
  %v78 = vunpack.c.l.b16 %v33
  %v79 = vpack.c.b16 %v64, %v63
  %v80 = vpack.c.b16 %v66, %v65
  %v81 = vpack.c.b16 %v68, %v67
  %v82 = vpack.c.b16 %v70, %v69
  %v83 = vpack.c.b16 %v72, %v71
  %v84 = vpack.c.b16 %v74, %v73
  %v85 = vpack.c.b16 %v76, %v75
  %v86 = vpack.c.b16 %v78, %v77
  %v93 = vunpack.c.l.b16 %v34
  %v94 = vunpack.c.l.b16 %v35
  %v95 = vunpack.c.l.b16 %v36
  %v96 = vunpack.c.l.b16 %v37
  %v97 = vunpack.c.l.b16 %v38
  %v98 = vunpack.c.l.b16 %v39
  %v99 = vpack.c.b16 %v94, %v93
  %v100 = vpack.c.b16 %v96, %v95
  %v101 = vpack.c.b16 %v98, %v97
  %vm105 = vcmask 392192
  %v107 = vsel %vm105, %v79, 0
  %v110 = vsel %vm105, %v80, 0
  %v113 = vsel %vm105, %v81, 0
  %v116 = vsel %vm105, %v82, 0
  %v119 = vsel %vm105, %v83, 0
  %v122 = vsel %vm105, %v84, 0
  %v125 = vsel %vm105, %v85, 0
  %v128 = vsel %vm105, %v86, 0
  %130 = vmatprep.subr.bf16.mxu0 0
  %131 = vmatpush1.bf16.msra.mxu0 0
  %132 = vmatprep.subr.bf16.mxu0 0
  %133 = vmatpush1.bf16.msra.mxu0 0
  %134 = vmatprep.subr.bf16.mxu0 0
  %135 = vmatpush1.bf16.msra.mxu0 0
  %136 = vmatprep.subr.bf16.mxu0 0
  %137 = vmatpush1.bf16.msra.mxu0 0
  %138 = vmatprep.subr.bf16.mxu0 0
  %139 = vmatpush1.bf16.msra.mxu0 0
  %140 = vmatprep.subr.bf16.mxu0 0
  %141 = vmatpush1.bf16.msra.mxu0 %v101
  %142 = vmatprep.subr.bf16.mxu0 0
  %143 = vmatpush1.bf16.msra.mxu0 %v100
  %144 = vmatprep.subr.bf16.mxu0 0
  %145 = vmatpush1.bf16.msra.mxu0 %v99
  %146 = vmatprep.subr.bf16.mxu0 0
  %147 = vmatpush2.bf16.msra.mxu0 0
  %148 = vmatprep.subr.bf16.mxu0 0
  %149 = vmatpush2.bf16.msra.mxu0 0
  %150 = vmatprep.subr.bf16.mxu0 0
  %151 = vmatpush2.bf16.msra.mxu0 0
  %152 = vmatprep.subr.bf16.mxu0 0
  %153 = vmatpush2.bf16.msra.mxu0 0
  %154 = vmatprep.subr.bf16.mxu0 0
  %155 = vmatpush2.bf16.msra.mxu0 0
  %156 = vmatprep.subr.bf16.mxu0 0
  %157 = vmatpush2.bf16.msra.mxu0 0
  %158 = vmatprep.subr.bf16.mxu0 0
  %159 = vmatpush2.bf16.msra.mxu0 0
  %160 = vmatprep.subr.bf16.mxu0 0
  %161 = vmatpush2.bf16.msra.mxu0 0
  %162 = vmatprep.mubr.bf16.mxu0 0
  %163 = vmatmul.mubr.bf16.gmra.mxu0 %v107
  %v164 = vpop.f32.mrf.mxu0
  %v165 = vadd.f32 %v45, %v164
  %v166 = vpop.f32.mrf.mxu0
  %v167 = vpop.f32.mrf.mxu0
  %v168 = vadd.f32 %v45, %v167
  %v169 = vpop.f32.mrf.mxu0
  %170 = vmatprep.mubr.bf16.mxu0 0
  %171 = vmatmul.mubr.bf16.gmra.mxu0 %v110
  %v172 = vpop.f32.mrf.mxu0
  %v173 = vadd.f32 %v45, %v172
  %v174 = vpop.f32.mrf.mxu0
  %v175 = vpop.f32.mrf.mxu0
  %v176 = vadd.f32 %v45, %v175
  %v177 = vpop.f32.mrf.mxu0
  %178 = vmatprep.mubr.bf16.mxu0 0
  %179 = vmatmul.mubr.bf16.gmra.mxu0 %v113
  %v180 = vpop.f32.mrf.mxu0
  %v181 = vadd.f32 %v45, %v180
  %v182 = vpop.f32.mrf.mxu0
  %v183 = vpop.f32.mrf.mxu0
  %v184 = vadd.f32 %v45, %v183
  %v185 = vpop.f32.mrf.mxu0
  %186 = vmatprep.mubr.bf16.mxu0 0
  %187 = vmatmul.mubr.bf16.gmra.mxu0 %v116
  %v188 = vpop.f32.mrf.mxu0
  %v189 = vadd.f32 %v45, %v188
  %v190 = vpop.f32.mrf.mxu0
  %v191 = vpop.f32.mrf.mxu0
  %v192 = vadd.f32 %v45, %v191
  %v193 = vpop.f32.mrf.mxu0
  %194 = vmatprep.mubr.bf16.mxu0 0
  %195 = vmatmul.mubr.bf16.gmra.mxu0 %v119
  %v196 = vpop.f32.mrf.mxu0
  %v197 = vadd.f32 %v45, %v196
  %v198 = vpop.f32.mrf.mxu0
  %v199 = vpop.f32.mrf.mxu0
  %v200 = vadd.f32 %v45, %v199
  %v201 = vpop.f32.mrf.mxu0
  %202 = vmatprep.mubr.bf16.mxu0 0
  %203 = vmatmul.mubr.bf16.gmra.mxu0 %v122
  %v204 = vpop.f32.mrf.mxu0
  %v205 = vadd.f32 %v45, %v204
  %v206 = vpop.f32.mrf.mxu0
  %v207 = vpop.f32.mrf.mxu0
  %v208 = vadd.f32 %v45, %v207
  %v209 = vpop.f32.mrf.mxu0
  %210 = vmatprep.mubr.bf16.mxu0 0
  %211 = vmatmul.mubr.bf16.gmra.mxu0 %v125
  %v212 = vpop.f32.mrf.mxu0
  %v213 = vadd.f32 %v45, %v212
  %v214 = vpop.f32.mrf.mxu0
  %v215 = vpop.f32.mrf.mxu0
  %v216 = vadd.f32 %v45, %v215
  %v217 = vpop.f32.mrf.mxu0
  %218 = vmatprep.mubr.bf16.mxu0 0
  %219 = vmatmul.mubr.bf16.gmra.mxu0 %v128
  %v220 = vpop.f32.mrf.mxu0
  %v221 = vadd.f32 %v45, %v220
  %v222 = vpop.f32.mrf.mxu0
  %v223 = vpop.f32.mrf.mxu0
  %v224 = vadd.f32 %v45, %v223
  %v225 = vpop.f32.mrf.mxu0
  %226 = vdwg.mxu0
  %v227 = vmul.f32 %v165, 0.01
  %v228 = vmul.f32 %v168, 0.01
  %v229 = vmul.f32 %v173, 0.01
  %v230 = vmul.f32 %v176, 0.01
  %v231 = vmul.f32 %v181, 0.01
  %v232 = vmul.f32 %v184, 0.01
  %v233 = vmul.f32 %v189, 0.01
  %v234 = vmul.f32 %v192, 0.01
  %v235 = vmul.f32 %v197, 0.01
  %v236 = vmul.f32 %v200, 0.01
  %v237 = vmul.f32 %v205, 0.01
  %v238 = vmul.f32 %v208, 0.01
  %v239 = vmul.f32 %v213, 0.01
  %v240 = vmul.f32 %v216, 0.01
  %v241 = vmul.f32 %v221, 0.01
  %v242 = vmul.f32 %v224, 0.01
  %v243 = vmax.f32 %v165, %v227
  %v244 = vmax.f32 %v168, %v228
  %v245 = vmax.f32 %v173, %v229
  %v246 = vmax.f32 %v176, %v230
  %v247 = vmax.f32 %v181, %v231
  %v248 = vmax.f32 %v184, %v232
  %v249 = vmax.f32 %v189, %v233
  %v250 = vmax.f32 %v192, %v234
  %v251 = vmax.f32 %v197, %v235
  %v252 = vmax.f32 %v200, %v236
  %v253 = vmax.f32 %v205, %v237
  %v254 = vmax.f32 %v208, %v238
  %v255 = vmax.f32 %v213, %v239
  %v256 = vmax.f32 %v216, %v240
  %v257 = vmax.f32 %v221, %v241
  %v258 = vmax.f32 %v224, %v242
  %v259 = vpack.c.bf16 %v244, %v243
  %v260 = vpack.c.bf16 %v246, %v245
  %v261 = vpack.c.bf16 %v248, %v247
  %v262 = vpack.c.bf16 %v250, %v249
  %v263 = vpack.c.bf16 %v252, %v251
  %v264 = vpack.c.bf16 %v254, %v253
  %v265 = vpack.c.bf16 %v256, %v255
  %v266 = vpack.c.bf16 %v258, %v257
  %v275 = vunpack.c.l.b16 %v259
  %v276 = vunpack.c.h.b16 %v259
  %v277 = vunpack.c.l.b16 %v260
  %v278 = vunpack.c.h.b16 %v260
  %v279 = vunpack.c.l.b16 %v261
  %v280 = vunpack.c.h.b16 %v261
  %v281 = vunpack.c.l.b16 %v262
  %v282 = vunpack.c.h.b16 %v262
  %v283 = vunpack.c.l.b16 %v263
  %v284 = vunpack.c.h.b16 %v263
  %v285 = vunpack.c.l.b16 %v264
  %v286 = vunpack.c.h.b16 %v264
  %v287 = vunpack.c.l.b16 %v265
  %v288 = vunpack.c.h.b16 %v265
  %v289 = vunpack.c.l.b16 %v266
  %v290 = vunpack.c.h.b16 %v266
  %v291 = vpack.c.b16 %v275, %v275
  %v292 = vpack.c.b16 %v276, %v276
  %v293 = vpack.c.b16 %v277, %v277
  %v294 = vpack.c.b16 %v278, %v278
  %v295 = vpack.c.b16 %v279, %v279
  %v296 = vpack.c.b16 %v280, %v280
  %v297 = vpack.c.b16 %v281, %v281
  %v298 = vpack.c.b16 %v282, %v282
  %v299 = vpack.c.b16 %v283, %v283
  %v300 = vpack.c.b16 %v284, %v284
  %v301 = vpack.c.b16 %v285, %v285
  %v302 = vpack.c.b16 %v286, %v286
  %v303 = vpack.c.b16 %v287, %v287
  %v304 = vpack.c.b16 %v288, %v288
  %v305 = vpack.c.b16 %v289, %v289
  %v306 = vpack.c.b16 %v290, %v290
  %vm323 = vcmask 519168
  %324 = vst.msk [vmem:[%s3] sm:$0xf] %vm323, %v291
  %325 = vst.msk [vmem:[%s3 + $0x4] sm:$0xf] %vm323, %v292
  %326 = vst.msk [vmem:[%s3 + $0x8] sm:$0xf] %vm323, %v293
  %327 = vst.msk [vmem:[%s3 + $0xc] sm:$0xf] %vm323, %v294
  %328 = vst.msk [vmem:[%s3 + $0x10] sm:$0xf] %vm323, %v295
  %329 = vst.msk [vmem:[%s3 + $0x14] sm:$0xf] %vm323, %v296
  %330 = vst.msk [vmem:[%s3 + $0x18] sm:$0xf] %vm323, %v297
  %331 = vst.msk [vmem:[%s3 + $0x1c] sm:$0xf] %vm323, %v298
  %332 = vst.msk [vmem:[%s3 + $0x20] sm:$0xf] %vm323, %v299
  %333 = vst.msk [vmem:[%s3 + $0x24] sm:$0xf] %vm323, %v300
  %334 = vst.msk [vmem:[%s3 + $0x28] sm:$0xf] %vm323, %v301
  %335 = vst.msk [vmem:[%s3 + $0x2c] sm:$0xf] %vm323, %v302
  %336 = vst.msk [vmem:[%s3 + $0x30] sm:$0xf] %vm323, %v303
  %337 = vst.msk [vmem:[%s3 + $0x34] sm:$0xf] %vm323, %v304
  %338 = vst.msk [vmem:[%s3 + $0x38] sm:$0xf] %vm323, %v305
  %339 = vst.msk [vmem:[%s3 + $0x3c] sm:$0xf] %vm323, %v306
  %vm340 = vcmask 523264
  %v341 = vsel %vm340, %v243, 0.0
  %v342 = vsel %vm340, %v244, 0.0
  %v343 = vadd.f32 %v341, %v342
  %v344 = vsel %vm340, %v245, 0.0
  %v345 = vadd.f32 %v343, %v344
  %v346 = vsel %vm340, %v246, 0.0
  %v347 = vadd.f32 %v345, %v346
  %v348 = vsel %vm340, %v247, 0.0
  %v349 = vadd.f32 %v347, %v348
  %v350 = vsel %vm340, %v248, 0.0
  %v351 = vadd.f32 %v349, %v350
  %v352 = vsel %vm340, %v249, 0.0
  %v353 = vadd.f32 %v351, %v352
  %v354 = vsel %vm340, %v250, 0.0
  %v355 = vadd.f32 %v353, %v354
  %v356 = vsel %vm340, %v251, 0.0
  %v357 = vadd.f32 %v355, %v356
  %v358 = vsel %vm340, %v252, 0.0
  %v359 = vadd.f32 %v357, %v358
  %v360 = vsel %vm340, %v253, 0.0
  %v361 = vadd.f32 %v359, %v360
  %v362 = vsel %vm340, %v254, 0.0
  %v363 = vadd.f32 %v361, %v362
  %v364 = vsel %vm340, %v255, 0.0
  %v365 = vadd.f32 %v363, %v364
  %v366 = vsel %vm340, %v256, 0.0
  %v367 = vadd.f32 %v365, %v366
  %v368 = vsel %vm340, %v257, 0.0
  %v369 = vadd.f32 %v367, %v368
  %v370 = vsel %vm340, %v258, 0.0
  %v371 = vadd.f32 %v369, %v370
  %v372 = vrot.slane %v371, 4
  %v373 = vadd.f32 %v371, %v372
  %v374 = vrot.slane %v373, 2
  %v375 = vadd.f32 %v373, %v374
  %v376 = vrot.slane %v375, 1
  %v377 = vadd.f32 %v375, %v376
  %vm378 = vcmask 516096
  %379 = vst.msk [vmem:[%s4] sm:$0x1] %vm378, %v377
  %v380 = vmul.f32 %v243, %v243
  %v381 = vmul.f32 %v244, %v244
  %v382 = vmul.f32 %v245, %v245
  %v383 = vmul.f32 %v246, %v246
  %v384 = vmul.f32 %v247, %v247
  %v385 = vmul.f32 %v248, %v248
  %v386 = vmul.f32 %v249, %v249
  %v387 = vmul.f32 %v250, %v250
  %v388 = vmul.f32 %v251, %v251
  %v389 = vmul.f32 %v252, %v252
  %v390 = vmul.f32 %v253, %v253
  %v391 = vmul.f32 %v254, %v254
  %v392 = vmul.f32 %v255, %v255
  %v393 = vmul.f32 %v256, %v256
  %v394 = vmul.f32 %v257, %v257
  %v395 = vmul.f32 %v258, %v258
  %v396 = vsel %vm340, %v380, 0.0
  %v397 = vsel %vm340, %v381, 0.0
  %v398 = vadd.f32 %v396, %v397
  %v399 = vsel %vm340, %v382, 0.0
  %v400 = vadd.f32 %v398, %v399
  %v401 = vsel %vm340, %v383, 0.0
  %v402 = vadd.f32 %v400, %v401
  %v403 = vsel %vm340, %v384, 0.0
  %v404 = vadd.f32 %v402, %v403
  %v405 = vsel %vm340, %v385, 0.0
  %v406 = vadd.f32 %v404, %v405
  %v407 = vsel %vm340, %v386, 0.0
  %v408 = vadd.f32 %v406, %v407
  %v409 = vsel %vm340, %v387, 0.0
  %v410 = vadd.f32 %v408, %v409
  %v411 = vsel %vm340, %v388, 0.0
  %v412 = vadd.f32 %v410, %v411
  %v413 = vsel %vm340, %v389, 0.0
  %v414 = vadd.f32 %v412, %v413
  %v415 = vsel %vm340, %v390, 0.0
  %v416 = vadd.f32 %v414, %v415
  %v417 = vsel %vm340, %v391, 0.0
  %v418 = vadd.f32 %v416, %v417
  %v419 = vsel %vm340, %v392, 0.0
  %v420 = vadd.f32 %v418, %v419
  %v421 = vsel %vm340, %v393, 0.0
  %v422 = vadd.f32 %v420, %v421
  %v423 = vsel %vm340, %v394, 0.0
  %v424 = vadd.f32 %v422, %v423
  %v425 = vsel %vm340, %v395, 0.0
  %v426 = vadd.f32 %v424, %v425
  %v427 = vrot.slane %v426, 4
  %v428 = vadd.f32 %v426, %v427
  %v429 = vrot.slane %v428, 2
  %v430 = vadd.f32 %v428, %v429
  %v431 = vrot.slane %v430, 1
  %v432 = vadd.f32 %v430, %v431
  %433 = vst.msk [vmem:[%s5] sm:$0x1] %vm378, %v432
  // Predicated region
  $region14: #{featnet2d_forward.6} parent=0 // pred_check
    _
  $region15: #{featnet2d_forward.6} parent=0 // pred_check_branch
    %435 = sbr.rel (0) target = $region17
  $region16: #{featnet2d_forward.6} parent=0 // pred_region
    _
  $region17: #{featnet2d_forward.6} parent=0 // pred_fallthru
    _
  // Predicated region
  $region18: #{featnet2d_forward.6} parent=0 // pred_check
    _
  $region19: #{featnet2d_forward.6} parent=0 // pred_check_branch
    %437 = sbr.rel (0) target = $region21
  $region20: #{featnet2d_forward.6} parent=0 // pred_region
    _
  $region21: #{featnet2d_forward.6} parent=0 // pred_fallthru
    _
  // Predicated region
  $region22: #{featnet2d_forward.6} parent=0 // pred_check
    _
  $region23: #{featnet2d_forward.6} parent=0 // pred_check_branch
    %439 = sbr.rel (0) target = $region25
  $region24: #{featnet2d_forward.6} parent=0 // pred_region
    _
  $region25: #{featnet2d_forward.6} parent=0 // pred_fallthru
    _
  // Predicated region
  $region26: #{featnet2d_forward.6} parent=0 // pred_check
    _
  $region27: #{featnet2d_forward.6} parent=0 // pred_check_branch
    %441 = sbr.rel (0) target = $region29
  $region28: #{featnet2d_forward.6} parent=0 // pred_region
    _
  $region29: #{featnet2d_forward.6} parent=0 // pred_fallthru
    _
  // Predicated region
  $region30: #{featnet2d_forward.6} parent=0 // pred_check
    _
  $region31: #{featnet2d_forward.6} parent=0 // pred_check_branch
    %443 = sbr.rel (0) target = $region33
  $region32: #{featnet2d_forward.6} parent=0 // pred_region
    _
  $region33: #{featnet2d_forward.6} parent=0 // pred_fallthru
    _
  // Predicated region
  $region34: #{featnet2d_forward.6} parent=0 // pred_check
    _
  $region35: #{featnet2d_forward.6} parent=0 // pred_check_branch
    %445 = sbr.rel (0) target = $region37
  $region36: #{featnet2d_forward.6} parent=0 // pred_region
    _
  $region37: #{featnet2d_forward.6} parent=0 // pred_fallthru
    _

// kernel: featnet2d_forward.7
$region0: #{featnet2d_forward.7}
  #allocation0 [shape = 'u32[]', space=smem, size = 0x4, offset = 0x4, fixed_abs, tag = 'smem constant byte address 0x4 - core index']
  #allocation1 [shape = 'u32[144,128]{1,0:T(1,128)}', space=vmem, size = 0x12000, scoped, tag = 'internal scratch']
  %s0 = inlined_call_operand.vmem [shape: bf16[1,32,1024], index: 0, kind: input, shape index: {}]
  %s1 = inlined_call_operand.vmem [shape: bf16[1,1024,128], index: 1, kind: input, shape index: {}]
  %s2 = inlined_call_operand.vmem [shape: f32[1,128], index: 2, kind: input, shape index: {}]
  %s3 = inlined_call_operand.vmem [shape: bf16[1,32,128], index: 3, kind: output, shape index: {0}]
  %s4 = inlined_call_operand.vmem [shape: f32[1,1,1,128], index: 4, kind: output, shape index: {1}]
  %s5 = inlined_call_operand.vmem [shape: f32[1,1,1,128], index: 5, kind: output, shape index: {2}]
  %6 = xla_tuple %s3, %s4, %s5
  %s7 = sld [smem:[#allocation0]]
  $region38: #{featnet2d_forward.7} parent=0
    _
  %s9 = ssub.s32 1, %s7
  %s10 = scalar_select 0, %s9, %s7
  // Predicated region
  $region2: #{featnet2d_forward.7} parent=0 // pred_check
    _
  $region3: #{featnet2d_forward.7} parent=0 // pred_check_branch
    %12 = sbr.rel (0) target = $region5
  $region4: #{featnet2d_forward.7} parent=0 // pred_region
    _
  $region5: #{featnet2d_forward.7} parent=0 // pred_fallthru
    _
  // Predicated region
  $region6: #{featnet2d_forward.7} parent=0 // pred_check
    _
  $region7: #{featnet2d_forward.7} parent=0 // pred_check_branch
    %14 = sbr.rel (0) target = $region9
  $region8: #{featnet2d_forward.7} parent=0 // pred_region
    _
  $region9: #{featnet2d_forward.7} parent=0 // pred_fallthru
    _
  // Predicated region
  $region10: #{featnet2d_forward.7} parent=0 // pred_check
    _
  $region11: #{featnet2d_forward.7} parent=0 // pred_check_branch
    %16 = sbr.rel (0) target = $region13
  $region12: #{featnet2d_forward.7} parent=0 // pred_region
    _
  $region13: #{featnet2d_forward.7} parent=0 // pred_fallthru
    _
  %v18 = vld [vmem:[%s0] sm:$0xff]
  %v19 = vld [vmem:[%s0 + $0x8] sm:$0xff]
  %v20 = vld [vmem:[%s0 + $0x10] sm:$0xff]
  %v21 = vld [vmem:[%s0 + $0x18] sm:$0xff]
  %v22 = vld [vmem:[%s0 + $0x20] sm:$0xff]
  %v23 = vld [vmem:[%s0 + $0x28] sm:$0xff]
  %v24 = vld [vmem:[%s0 + $0x30] sm:$0xff]
  %v25 = vld [vmem:[%s0 + $0x38] sm:$0xff]
  %v26 = vld [vmem:[%s0 + $0x40] sm:$0xff]
  %v27 = vld [vmem:[%s0 + $0x48] sm:$0xff]
  %v28 = vld [vmem:[%s0 + $0x50] sm:$0xff]
  %v29 = vld [vmem:[%s0 + $0x58] sm:$0xff]
  %v30 = vld [vmem:[%s0 + $0x60] sm:$0xff]
  %v31 = vld [vmem:[%s0 + $0x68] sm:$0xff]
  %v32 = vld [vmem:[%s0 + $0x70] sm:$0xff]
  %v33 = vld [vmem:[%s0 + $0x78] sm:$0xff]
  %v34 = vld [vmem:[%s1] sm:$0xf]
  %v35 = vld [vmem:[%s1 + $0x4] sm:$0xf]
  %v36 = vld [vmem:[%s1 + $0x8] sm:$0xf]
  %v37 = vld [vmem:[%s1 + $0xc] sm:$0xf]
  %v38 = vld [vmem:[%s1 + $0x10] sm:$0xf]
  %v39 = vld [vmem:[%s1 + $0x14] sm:$0xf]
  %v40 = vld [vmem:[%s1 + $0x18] sm:$0xf]
  %v41 = vld [vmem:[%s1 + $0x1c] sm:$0xf]
  %v42 = vld [vmem:[%s1 + $0x20] sm:$0xf]
  %v43 = vld [vmem:[%s1 + $0x24] sm:$0xf]
  %v44 = vld [vmem:[%s1 + $0x28] sm:$0xf]
  %v45 = vld [vmem:[%s1 + $0x2c] sm:$0xf]
  %v46 = vld [vmem:[%s1 + $0x30] sm:$0xf]
  %v47 = vld [vmem:[%s1 + $0x34] sm:$0xf]
  %v48 = vld [vmem:[%s1 + $0x38] sm:$0xf]
  %v49 = vld [vmem:[%s1 + $0x3c] sm:$0xf]
  %v50 = vld [vmem:[%s1 + $0x40] sm:$0xf]
  %v51 = vld [vmem:[%s1 + $0x44] sm:$0xf]
  %v52 = vld [vmem:[%s1 + $0x48] sm:$0xf]
  %v53 = vld [vmem:[%s1 + $0x4c] sm:$0xf]
  %v54 = vld [vmem:[%s1 + $0x50] sm:$0xf]
  %v55 = vld [vmem:[%s1 + $0x54] sm:$0xf]
  %v56 = vld [vmem:[%s1 + $0x58] sm:$0xf]
  %v57 = vld [vmem:[%s1 + $0x5c] sm:$0xf]
  %v58 = vld [vmem:[%s1 + $0x60] sm:$0xf]
  %v59 = vld [vmem:[%s1 + $0x64] sm:$0xf]
  %v60 = vld [vmem:[%s1 + $0x68] sm:$0xf]
  %v61 = vld [vmem:[%s1 + $0x6c] sm:$0xf]
  %v62 = vld [vmem:[%s1 + $0x70] sm:$0xf]
  %v63 = vld [vmem:[%s1 + $0x74] sm:$0xf]
  %v64 = vld [vmem:[%s1 + $0x78] sm:$0xf]
  %v65 = vld [vmem:[%s1 + $0x7c] sm:$0xf]
  %v66 = vld [vmem:[%s1 + $0x80] sm:$0xf]
  %v67 = vld [vmem:[%s1 + $0x84] sm:$0xf]
  %v68 = vld [vmem:[%s1 + $0x88] sm:$0xf]
  %v69 = vld [vmem:[%s1 + $0x8c] sm:$0xf]
  %v70 = vld [vmem:[%s1 + $0x90] sm:$0xf]
  %v71 = vld [vmem:[%s1 + $0x94] sm:$0xf]
  %v72 = vld [vmem:[%s1 + $0x98] sm:$0xf]
  %v73 = vld [vmem:[%s1 + $0x9c] sm:$0xf]
  %v74 = vld [vmem:[%s1 + $0xa0] sm:$0xf]
  %v75 = vld [vmem:[%s1 + $0xa4] sm:$0xf]
  %v76 = vld [vmem:[%s1 + $0xa8] sm:$0xf]
  %v77 = vld [vmem:[%s1 + $0xac] sm:$0xf]
  %v78 = vld [vmem:[%s1 + $0xb0] sm:$0xf]
  %v79 = vld [vmem:[%s1 + $0xb4] sm:$0xf]
  %v80 = vld [vmem:[%s1 + $0xb8] sm:$0xf]
  %v81 = vld [vmem:[%s1 + $0xbc] sm:$0xf]
  %v82 = vld [vmem:[%s1 + $0xc0] sm:$0xf]
  %v83 = vld [vmem:[%s1 + $0xc4] sm:$0xf]
  %v84 = vld [vmem:[%s1 + $0xc8] sm:$0xf]
  %v85 = vld [vmem:[%s1 + $0xcc] sm:$0xf]
  %v86 = vld [vmem:[%s1 + $0xd0] sm:$0xf]
  %v87 = vld [vmem:[%s1 + $0xd4] sm:$0xf]
  %v88 = vld [vmem:[%s1 + $0xd8] sm:$0xf]
  %v89 = vld [vmem:[%s1 + $0xdc] sm:$0xf]
  %v90 = vld [vmem:[%s1 + $0xe0] sm:$0xf]
  %v91 = vld [vmem:[%s1 + $0xe4] sm:$0xf]
  %v92 = vld [vmem:[%s1 + $0xe8] sm:$0xf]
  %v93 = vld [vmem:[%s1 + $0xec] sm:$0xf]
  %v94 = vld [vmem:[%s1 + $0xf0] sm:$0xf]
  %v95 = vld [vmem:[%s1 + $0xf4] sm:$0xf]
  %v96 = vld [vmem:[%s1 + $0xf8] sm:$0xf]
  %v97 = vld [vmem:[%s1 + $0xfc] sm:$0xf]
  %v98 = vld [vmem:[%s1 + $0x100] sm:$0xf]
  %v99 = vld [vmem:[%s1 + $0x104] sm:$0xf]
  %v100 = vld [vmem:[%s1 + $0x108] sm:$0xf]
  %v101 = vld [vmem:[%s1 + $0x10c] sm:$0xf]
  %v102 = vld [vmem:[%s1 + $0x110] sm:$0xf]
  %v103 = vld [vmem:[%s1 + $0x114] sm:$0xf]
  %v104 = vld [vmem:[%s1 + $0x118] sm:$0xf]
  %v105 = vld [vmem:[%s1 + $0x11c] sm:$0xf]
  %v106 = vld [vmem:[%s1 + $0x120] sm:$0xf]
  %v107 = vld [vmem:[%s1 + $0x124] sm:$0xf]
  %v108 = vld [vmem:[%s1 + $0x128] sm:$0xf]
  %v109 = vld [vmem:[%s1 + $0x12c] sm:$0xf]
  %v110 = vld [vmem:[%s1 + $0x130] sm:$0xf]
  %v111 = vld [vmem:[%s1 + $0x134] sm:$0xf]
  %v112 = vld [vmem:[%s1 + $0x138] sm:$0xf]
  %v113 = vld [vmem:[%s1 + $0x13c] sm:$0xf]
  %v114 = vld [vmem:[%s1 + $0x140] sm:$0xf]
  %v115 = vld [vmem:[%s1 + $0x144] sm:$0xf]
  %v116 = vld [vmem:[%s1 + $0x148] sm:$0xf]
  %v117 = vld [vmem:[%s1 + $0x14c] sm:$0xf]
  %v118 = vld [vmem:[%s1 + $0x150] sm:$0xf]
  %v119 = vld [vmem:[%s1 + $0x154] sm:$0xf]
  %v120 = vld [vmem:[%s1 + $0x158] sm:$0xf]
  %v121 = vld [vmem:[%s1 + $0x15c] sm:$0xf]
  %v122 = vld [vmem:[%s1 + $0x160] sm:$0xf]
  %v123 = vld [vmem:[%s1 + $0x164] sm:$0xf]
  %v124 = vld [vmem:[%s1 + $0x168] sm:$0xf]
  %v125 = vld [vmem:[%s1 + $0x16c] sm:$0xf]
  %v126 = vld [vmem:[%s1 + $0x170] sm:$0xf]
  %v127 = vld [vmem:[%s1 + $0x174] sm:$0xf]
  %v128 = vld [vmem:[%s1 + $0x178] sm:$0xf]
  %v129 = vld [vmem:[%s1 + $0x17c] sm:$0xf]
  %v130 = vld [vmem:[%s1 + $0x180] sm:$0xf]
  %v131 = vld [vmem:[%s1 + $0x184] sm:$0xf]
  %v132 = vld [vmem:[%s1 + $0x188] sm:$0xf]
  %v133 = vld [vmem:[%s1 + $0x18c] sm:$0xf]
  %v134 = vld [vmem:[%s1 + $0x190] sm:$0xf]
  %v135 = vld [vmem:[%s1 + $0x194] sm:$0xf]
  %v136 = vld [vmem:[%s1 + $0x198] sm:$0xf]
  %v137 = vld [vmem:[%s1 + $0x19c] sm:$0xf]
  %v138 = vld [vmem:[%s1 + $0x1a0] sm:$0xf]
  %v139 = vld [vmem:[%s1 + $0x1a4] sm:$0xf]
  %v140 = vld [vmem:[%s1 + $0x1a8] sm:$0xf]
  %v141 = vld [vmem:[%s1 + $0x1ac] sm:$0xf]
  %v142 = vld [vmem:[%s1 + $0x1b0] sm:$0xf]
  %v143 = vld [vmem:[%s1 + $0x1b4] sm:$0xf]
  %v144 = vld [vmem:[%s1 + $0x1b8] sm:$0xf]
  %v145 = vld [vmem:[%s1 + $0x1bc] sm:$0xf]
  %v146 = vld [vmem:[%s1 + $0x1c0] sm:$0xf]
  %v147 = vld [vmem:[%s1 + $0x1c4] sm:$0xf]
  %v148 = vld [vmem:[%s1 + $0x1c8] sm:$0xf]
  %v149 = vld [vmem:[%s1 + $0x1cc] sm:$0xf]
  %v150 = vld [vmem:[%s1 + $0x1d0] sm:$0xf]
  %v151 = vld [vmem:[%s1 + $0x1d4] sm:$0xf]
  %v152 = vld [vmem:[%s1 + $0x1d8] sm:$0xf]
  %v153 = vld [vmem:[%s1 + $0x1dc] sm:$0xf]
  %v154 = vld [vmem:[%s1 + $0x1e0] sm:$0xf]
  %v155 = vld [vmem:[%s1 + $0x1e4] sm:$0xf]
  %v156 = vld [vmem:[%s1 + $0x1e8] sm:$0xf]
  %v157 = vld [vmem:[%s1 + $0x1ec] sm:$0xf]
  %v158 = vld [vmem:[%s1 + $0x1f0] sm:$0xf]
  %v159 = vld [vmem:[%s1 + $0x1f4] sm:$0xf]
  %v160 = vld [vmem:[%s1 + $0x1f8] sm:$0xf]
  %v161 = vld [vmem:[%s1 + $0x1fc] sm:$0xf]
  %v162 = vld [vmem:[%s2] sm:$0x1]
  %v164 = vlaneseq
  %v165 = vshrl.u32 %v164, 7
  %v166 = vsub.s32 0, %v165
  %v167 = vrot.slane %v162, %v166
  %v185 = vunpack.c.l.b16 %v18
  %v186 = vunpack.c.h.b16 %v18
  %v187 = vunpack.c.l.b16 %v19
  %v188 = vunpack.c.h.b16 %v19
  %v189 = vunpack.c.l.b16 %v20
  %v190 = vunpack.c.h.b16 %v20
  %v191 = vunpack.c.l.b16 %v21
  %v192 = vunpack.c.h.b16 %v21
  %v193 = vunpack.c.l.b16 %v22
  %v194 = vunpack.c.h.b16 %v22
  %v195 = vunpack.c.l.b16 %v23
  %v196 = vunpack.c.h.b16 %v23
  %v197 = vunpack.c.l.b16 %v24
  %v198 = vunpack.c.h.b16 %v24
  %v199 = vunpack.c.l.b16 %v25
  %v200 = vunpack.c.h.b16 %v25
  %v201 = vunpack.c.l.b16 %v26
  %v202 = vunpack.c.h.b16 %v26
  %v203 = vunpack.c.l.b16 %v27
  %v204 = vunpack.c.h.b16 %v27
  %v205 = vunpack.c.l.b16 %v28
  %v206 = vunpack.c.h.b16 %v28
  %v207 = vunpack.c.l.b16 %v29
  %v208 = vunpack.c.h.b16 %v29
  %v209 = vunpack.c.l.b16 %v30
  %v210 = vunpack.c.h.b16 %v30
  %v211 = vunpack.c.l.b16 %v31
  %v212 = vunpack.c.h.b16 %v31
  %v213 = vunpack.c.l.b16 %v32
  %v214 = vunpack.c.h.b16 %v32
  %v215 = vunpack.c.l.b16 %v33
  %v216 = vunpack.c.h.b16 %v33
  %v217 = vpack.c.b16 %v193, %v185
  %v218 = vpack.c.b16 %v194, %v186
  %v219 = vpack.c.b16 %v195, %v187
  %v220 = vpack.c.b16 %v196, %v188
  %v221 = vpack.c.b16 %v197, %v189
  %v222 = vpack.c.b16 %v198, %v190
  %v223 = vpack.c.b16 %v199, %v191
  %v224 = vpack.c.b16 %v200, %v192
  %v225 = vpack.c.b16 %v209, %v201
  %v226 = vpack.c.b16 %v210, %v202
  %v227 = vpack.c.b16 %v211, %v203
  %v228 = vpack.c.b16 %v212, %v204
  %v229 = vpack.c.b16 %v213, %v205
  %v230 = vpack.c.b16 %v214, %v206
  %v231 = vpack.c.b16 %v215, %v207
  %v232 = vpack.c.b16 %v216, %v208
  %v377 = vunpack.c.l.b16 %v34
  %v378 = vunpack.c.l.b16 %v35
  %v379 = vunpack.c.l.b16 %v36
  %v380 = vunpack.c.l.b16 %v37
  %v381 = vunpack.c.l.b16 %v38
  %v382 = vunpack.c.l.b16 %v39
  %v383 = vunpack.c.l.b16 %v40
  %v384 = vunpack.c.l.b16 %v41
  %v385 = vunpack.c.l.b16 %v42
  %v386 = vunpack.c.l.b16 %v43
  %v387 = vunpack.c.l.b16 %v44
  %v388 = vunpack.c.l.b16 %v45
  %v389 = vunpack.c.l.b16 %v46
  %v390 = vunpack.c.l.b16 %v47
  %v391 = vunpack.c.l.b16 %v48
  %v392 = vunpack.c.l.b16 %v49
  %v393 = vunpack.c.l.b16 %v50
  %v394 = vunpack.c.l.b16 %v51
  %v395 = vunpack.c.l.b16 %v52
  %v396 = vunpack.c.l.b16 %v53
  %v397 = vunpack.c.l.b16 %v54
  %v398 = vunpack.c.l.b16 %v55
  %v399 = vunpack.c.l.b16 %v56
  %v400 = vunpack.c.l.b16 %v57
  %v401 = vunpack.c.l.b16 %v58
  %v402 = vunpack.c.l.b16 %v59
  %v403 = vunpack.c.l.b16 %v60
  %v404 = vunpack.c.l.b16 %v61
  %v405 = vunpack.c.l.b16 %v62
  %v406 = vunpack.c.l.b16 %v63
  %v407 = vunpack.c.l.b16 %v64
  %v408 = vunpack.c.l.b16 %v65
  %v409 = vunpack.c.l.b16 %v66
  %v410 = vunpack.c.l.b16 %v67
  %v411 = vunpack.c.l.b16 %v68
  %v412 = vunpack.c.l.b16 %v69
  %v413 = vunpack.c.l.b16 %v70
  %v414 = vunpack.c.l.b16 %v71
  %v415 = vunpack.c.l.b16 %v72
  %v416 = vunpack.c.l.b16 %v73
  %v417 = vunpack.c.l.b16 %v74
  %v418 = vunpack.c.l.b16 %v75
  %v419 = vunpack.c.l.b16 %v76
  %v420 = vunpack.c.l.b16 %v77
  %v421 = vunpack.c.l.b16 %v78
  %v422 = vunpack.c.l.b16 %v79
  %v423 = vunpack.c.l.b16 %v80
  %v424 = vunpack.c.l.b16 %v81
  %v425 = vunpack.c.l.b16 %v82
  %v426 = vunpack.c.l.b16 %v83
  %v427 = vunpack.c.l.b16 %v84
  %v428 = vunpack.c.l.b16 %v85
  %v429 = vunpack.c.l.b16 %v86
  %v430 = vunpack.c.l.b16 %v87
  %v431 = vunpack.c.l.b16 %v88
  %v432 = vunpack.c.l.b16 %v89
  %v433 = vunpack.c.l.b16 %v90
  %v434 = vunpack.c.l.b16 %v91
  %v435 = vunpack.c.l.b16 %v92
  %v436 = vunpack.c.l.b16 %v93
  %v437 = vunpack.c.l.b16 %v94
  %v438 = vunpack.c.l.b16 %v95
  %v439 = vunpack.c.l.b16 %v96
  %v440 = vunpack.c.l.b16 %v97
  %v441 = vunpack.c.l.b16 %v98
  %v442 = vunpack.c.l.b16 %v99
  %v443 = vunpack.c.l.b16 %v100
  %v444 = vunpack.c.l.b16 %v101
  %v445 = vunpack.c.l.b16 %v102
  %v446 = vunpack.c.l.b16 %v103
  %v447 = vunpack.c.l.b16 %v104
  %v448 = vunpack.c.l.b16 %v105
  %v449 = vunpack.c.l.b16 %v106
  %v450 = vunpack.c.l.b16 %v107
  %v451 = vunpack.c.l.b16 %v108
  %v452 = vunpack.c.l.b16 %v109
  %v453 = vunpack.c.l.b16 %v110
  %v454 = vunpack.c.l.b16 %v111
  %v455 = vunpack.c.l.b16 %v112
  %v456 = vunpack.c.l.b16 %v113
  %v457 = vunpack.c.l.b16 %v114
  %v458 = vunpack.c.l.b16 %v115
  %v459 = vunpack.c.l.b16 %v116
  %v460 = vunpack.c.l.b16 %v117
  %v461 = vunpack.c.l.b16 %v118
  %v462 = vunpack.c.l.b16 %v119
  %v463 = vunpack.c.l.b16 %v120
  %v464 = vunpack.c.l.b16 %v121
  %v465 = vunpack.c.l.b16 %v122
  %v466 = vunpack.c.l.b16 %v123
  %v467 = vunpack.c.l.b16 %v124
  %v468 = vunpack.c.l.b16 %v125
  %v469 = vunpack.c.l.b16 %v126
  %v470 = vunpack.c.l.b16 %v127
  %v471 = vunpack.c.l.b16 %v128
  %v472 = vunpack.c.l.b16 %v129
  %v473 = vunpack.c.l.b16 %v130
  %v474 = vunpack.c.l.b16 %v131
  %v475 = vunpack.c.l.b16 %v132
  %v476 = vunpack.c.l.b16 %v133
  %v477 = vunpack.c.l.b16 %v134
  %v478 = vunpack.c.l.b16 %v135
  %v479 = vunpack.c.l.b16 %v136
  %v480 = vunpack.c.l.b16 %v137
  %v481 = vunpack.c.l.b16 %v138
  %v482 = vunpack.c.l.b16 %v139
  %v483 = vunpack.c.l.b16 %v140
  %v484 = vunpack.c.l.b16 %v141
  %v485 = vunpack.c.l.b16 %v142
  %v486 = vunpack.c.l.b16 %v143
  %v487 = vunpack.c.l.b16 %v144
  %v488 = vunpack.c.l.b16 %v145
  %v489 = vunpack.c.l.b16 %v146
  %v490 = vunpack.c.l.b16 %v147
  %v491 = vunpack.c.l.b16 %v148
  %v492 = vunpack.c.l.b16 %v149
  %v493 = vunpack.c.l.b16 %v150
  %v494 = vunpack.c.l.b16 %v151
  %v495 = vunpack.c.l.b16 %v152
  %v496 = vunpack.c.l.b16 %v153
  %v497 = vunpack.c.l.b16 %v154
  %v498 = vunpack.c.l.b16 %v155
  %v499 = vunpack.c.l.b16 %v156
  %v500 = vunpack.c.l.b16 %v157
  %v501 = vunpack.c.l.b16 %v158
  %v502 = vunpack.c.l.b16 %v159
  %v503 = vunpack.c.l.b16 %v160
  %v504 = vunpack.c.l.b16 %v161
  %v505 = vpack.c.b16 %v378, %v377
  %v506 = vpack.c.b16 %v380, %v379
  %v507 = vpack.c.b16 %v382, %v381
  %v508 = vpack.c.b16 %v384, %v383
  %v509 = vpack.c.b16 %v386, %v385
  %v510 = vpack.c.b16 %v388, %v387
  %v511 = vpack.c.b16 %v390, %v389
  %v512 = vpack.c.b16 %v392, %v391
  %v513 = vpack.c.b16 %v394, %v393
  %v514 = vpack.c.b16 %v396, %v395
  %v515 = vpack.c.b16 %v398, %v397
  %v516 = vpack.c.b16 %v400, %v399
  %v517 = vpack.c.b16 %v402, %v401
  %v518 = vpack.c.b16 %v404, %v403
  %v519 = vpack.c.b16 %v406, %v405
  %v520 = vpack.c.b16 %v408, %v407
  %v521 = vpack.c.b16 %v410, %v409
  %v522 = vpack.c.b16 %v412, %v411
  %v523 = vpack.c.b16 %v414, %v413
  %v524 = vpack.c.b16 %v416, %v415
  %v525 = vpack.c.b16 %v418, %v417
  %v526 = vpack.c.b16 %v420, %v419
  %v527 = vpack.c.b16 %v422, %v421
  %v528 = vpack.c.b16 %v424, %v423
  %v529 = vpack.c.b16 %v426, %v425
  %v530 = vpack.c.b16 %v428, %v427
  %v531 = vpack.c.b16 %v430, %v429
  %v532 = vpack.c.b16 %v432, %v431
  %v533 = vpack.c.b16 %v434, %v433
  %v534 = vpack.c.b16 %v436, %v435
  %v535 = vpack.c.b16 %v438, %v437
  %v536 = vpack.c.b16 %v440, %v439
  %v537 = vpack.c.b16 %v442, %v441
  %v538 = vpack.c.b16 %v444, %v443
  %v539 = vpack.c.b16 %v446, %v445
  %v540 = vpack.c.b16 %v448, %v447
  %v541 = vpack.c.b16 %v450, %v449
  %v542 = vpack.c.b16 %v452, %v451
  %v543 = vpack.c.b16 %v454, %v453
  %v544 = vpack.c.b16 %v456, %v455
  %v545 = vpack.c.b16 %v458, %v457
  %v546 = vpack.c.b16 %v460, %v459
  %v547 = vpack.c.b16 %v462, %v461
  %v548 = vpack.c.b16 %v464, %v463
  %v549 = vpack.c.b16 %v466, %v465
  %v550 = vpack.c.b16 %v468, %v467
  %v551 = vpack.c.b16 %v470, %v469
  %v552 = vpack.c.b16 %v472, %v471
  %v553 = vpack.c.b16 %v474, %v473
  %v554 = vpack.c.b16 %v476, %v475
  %v555 = vpack.c.b16 %v478, %v477
  %v556 = vpack.c.b16 %v480, %v479
  %v557 = vpack.c.b16 %v482, %v481
  %v558 = vpack.c.b16 %v484, %v483
  %v559 = vpack.c.b16 %v486, %v485
  %v560 = vpack.c.b16 %v488, %v487
  %v561 = vpack.c.b16 %v490, %v489
  %v562 = vpack.c.b16 %v492, %v491
  %v563 = vpack.c.b16 %v494, %v493
  %v564 = vpack.c.b16 %v496, %v495
  %v565 = vpack.c.b16 %v498, %v497
  %v566 = vpack.c.b16 %v500, %v499
  %v567 = vpack.c.b16 %v502, %v501
  %v568 = vpack.c.b16 %v504, %v503
  %633 = vmatprep.subr.bf16.mxu0 0
  %634 = vmatpush1.bf16.msra.mxu0 %v512
  %635 = vmatprep.subr.bf16.mxu0 0
  %636 = vmatpush1.bf16.msra.mxu0 %v511
  %637 = vmatprep.subr.bf16.mxu0 0
  %638 = vmatpush1.bf16.msra.mxu0 %v510
  %639 = vmatprep.subr.bf16.mxu0 0
  %640 = vmatpush1.bf16.msra.mxu0 %v509
  %641 = vmatprep.subr.bf16.mxu0 0
  %642 = vmatpush1.bf16.msra.mxu0 %v508
  %643 = vmatprep.subr.bf16.mxu0 0
  %644 = vmatpush1.bf16.msra.mxu0 %v507
  %645 = vmatprep.subr.bf16.mxu0 0
  %646 = vmatpush1.bf16.msra.mxu0 %v506
  %647 = vmatprep.subr.bf16.mxu0 0
  %648 = vmatpush1.bf16.msra.mxu0 %v505
  %649 = vmatprep.subr.bf16.mxu0 0
  %650 = vmatpush2.bf16.msra.mxu0 %v520
  %651 = vmatprep.subr.bf16.mxu0 0
  %652 = vmatpush2.bf16.msra.mxu0 %v519
  %653 = vmatprep.subr.bf16.mxu0 0
  %654 = vmatpush2.bf16.msra.mxu0 %v518
  %655 = vmatprep.subr.bf16.mxu0 0
  %656 = vmatpush2.bf16.msra.mxu0 %v517
  %657 = vmatprep.subr.bf16.mxu0 0
  %658 = vmatpush2.bf16.msra.mxu0 %v516
  %659 = vmatprep.subr.bf16.mxu0 0
  %660 = vmatpush2.bf16.msra.mxu0 %v515
  %661 = vmatprep.subr.bf16.mxu0 0
  %662 = vmatpush2.bf16.msra.mxu0 %v514
  %663 = vmatprep.subr.bf16.mxu0 0
  %664 = vmatpush2.bf16.msra.mxu0 %v513
  %665 = vmatprep.mubr.bf16.mxu0 %v218
  %666 = vmatmul.mubr.bf16.gmra.mxu0 %v217
  %v667 = vpop.f32.mrf.mxu0
  %v668 = vadd.f32 %v167, %v667
  %v669 = vpop.f32.mrf.mxu0
  %v670 = vpop.f32.mrf.mxu0
  %v671 = vadd.f32 %v167, %v670
  %v672 = vpop.f32.mrf.mxu0
  %673 = vmatprep.mubr.bf16.mxu0 %v226
  %674 = vmatmul.mubr.bf16.gmra.mxu0 %v225
  %v675 = vpop.f32.mrf.mxu0
  %v676 = vadd.f32 %v167, %v675
  %v677 = vpop.f32.mrf.mxu0
  %v678 = vpop.f32.mrf.mxu0
  %v679 = vadd.f32 %v167, %v678
  %v680 = vpop.f32.mrf.mxu0
  %681 = vdwg.mxu0
  %682 = vmatprep.subr.bf16.mxu0 0
  %683 = vmatpush1.bf16.msra.mxu0 %v528
  %684 = vmatprep.subr.bf16.mxu0 0
  %685 = vmatpush1.bf16.msra.mxu0 %v527
  %686 = vmatprep.subr.bf16.mxu0 0
  %687 = vmatpush1.bf16.msra.mxu0 %v526
  %688 = vmatprep.subr.bf16.mxu0 0
  %689 = vmatpush1.bf16.msra.mxu0 %v525
  %690 = vmatprep.subr.bf16.mxu0 0
  %691 = vmatpush1.bf16.msra.mxu0 %v524
  %692 = vmatprep.subr.bf16.mxu0 0
  %693 = vmatpush1.bf16.msra.mxu0 %v523
  %694 = vmatprep.subr.bf16.mxu0 0
  %695 = vmatpush1.bf16.msra.mxu0 %v522
  %696 = vmatprep.subr.bf16.mxu0 0
  %697 = vmatpush1.bf16.msra.mxu0 %v521
  %698 = vmatprep.subr.bf16.mxu0 0
  %699 = vmatpush2.bf16.msra.mxu0 %v536
  %700 = vmatprep.subr.bf16.mxu0 0
  %701 = vmatpush2.bf16.msra.mxu0 %v535
  %702 = vmatprep.subr.bf16.mxu0 0
  %703 = vmatpush2.bf16.msra.mxu0 %v534
  %704 = vmatprep.subr.bf16.mxu0 0
  %705 = vmatpush2.bf16.msra.mxu0 %v533
  %706 = vmatprep.subr.bf16.mxu0 0
  %707 = vmatpush2.bf16.msra.mxu0 %v532
  %708 = vmatprep.subr.bf16.mxu0 0
  %709 = vmatpush2.bf16.msra.mxu0 %v531
  %710 = vmatprep.subr.bf16.mxu0 0
  %711 = vmatpush2.bf16.msra.mxu0 %v530
  %712 = vmatprep.subr.bf16.mxu0 0
  %713 = vmatpush2.bf16.msra.mxu0 %v529
  %714 = vmatprep.mubr.bf16.mxu0 %v220
  %715 = vmatmul.mubr.bf16.gmra.mxu0 %v219
  %v716 = vpop.f32.mrf.mxu0
  %v717 = vadd.f32 %v668, %v716
  %v718 = vpop.f32.mrf.mxu0
  %v719 = vpop.f32.mrf.mxu0
  %v720 = vadd.f32 %v671, %v719
  %v721 = vpop.f32.mrf.mxu0
  %722 = vmatprep.mubr.bf16.mxu0 %v228
  %723 = vmatmul.mubr.bf16.gmra.mxu0 %v227
  %v724 = vpop.f32.mrf.mxu0
  %v725 = vadd.f32 %v676, %v724
  %v726 = vpop.f32.mrf.mxu0
  %v727 = vpop.f32.mrf.mxu0
  %v728 = vadd.f32 %v679, %v727
  %v729 = vpop.f32.mrf.mxu0
  %730 = vdwg.mxu0
  %731 = vmatprep.subr.bf16.mxu0 0
  %732 = vmatpush1.bf16.msra.mxu0 %v544
  %733 = vmatprep.subr.bf16.mxu0 0
  %734 = vmatpush1.bf16.msra.mxu0 %v543
  %735 = vmatprep.subr.bf16.mxu0 0
  %736 = vmatpush1.bf16.msra.mxu0 %v542
  %737 = vmatprep.subr.bf16.mxu0 0
  %738 = vmatpush1.bf16.msra.mxu0 %v541
  %739 = vmatprep.subr.bf16.mxu0 0
  %740 = vmatpush1.bf16.msra.mxu0 %v540
  %741 = vmatprep.subr.bf16.mxu0 0
  %742 = vmatpush1.bf16.msra.mxu0 %v539
  %743 = vmatprep.subr.bf16.mxu0 0
  %744 = vmatpush1.bf16.msra.mxu0 %v538
  %745 = vmatprep.subr.bf16.mxu0 0
  %746 = vmatpush1.bf16.msra.mxu0 %v537
  %747 = vmatprep.subr.bf16.mxu0 0
  %748 = vmatpush2.bf16.msra.mxu0 %v552
  %749 = vmatprep.subr.bf16.mxu0 0
  %750 = vmatpush2.bf16.msra.mxu0 %v551
  %751 = vmatprep.subr.bf16.mxu0 0
  %752 = vmatpush2.bf16.msra.mxu0 %v550
  %753 = vmatprep.subr.bf16.mxu0 0
  %754 = vmatpush2.bf16.msra.mxu0 %v549
  %755 = vmatprep.subr.bf16.mxu0 0
  %756 = vmatpush2.bf16.msra.mxu0 %v548
  %757 = vmatprep.subr.bf16.mxu0 0
  %758 = vmatpush2.bf16.msra.mxu0 %v547
  %759 = vmatprep.subr.bf16.mxu0 0
  %760 = vmatpush2.bf16.msra.mxu0 %v546
  %761 = vmatprep.subr.bf16.mxu0 0
  %762 = vmatpush2.bf16.msra.mxu0 %v545
  %763 = vmatprep.mubr.bf16.mxu0 %v222
  %764 = vmatmul.mubr.bf16.gmra.mxu0 %v221
  %v765 = vpop.f32.mrf.mxu0
  %v766 = vadd.f32 %v717, %v765
  %v767 = vpop.f32.mrf.mxu0
  %v768 = vpop.f32.mrf.mxu0
  %v769 = vadd.f32 %v720, %v768
  %v770 = vpop.f32.mrf.mxu0
  %771 = vmatprep.mubr.bf16.mxu0 %v230
  %772 = vmatmul.mubr.bf16.gmra.mxu0 %v229
  %v773 = vpop.f32.mrf.mxu0
  %v774 = vadd.f32 %v725, %v773
  %v775 = vpop.f32.mrf.mxu0
  %v776 = vpop.f32.mrf.mxu0
  %v777 = vadd.f32 %v728, %v776
  %v778 = vpop.f32.mrf.mxu0
  %779 = vdwg.mxu0
  %780 = vmatprep.subr.bf16.mxu0 0
  %781 = vmatpush1.bf16.msra.mxu0 %v560
  %782 = vmatprep.subr.bf16.mxu0 0
  %783 = vmatpush1.bf16.msra.mxu0 %v559
  %784 = vmatprep.subr.bf16.mxu0 0
  %785 = vmatpush1.bf16.msra.mxu0 %v558
  %786 = vmatprep.subr.bf16.mxu0 0
  %787 = vmatpush1.bf16.msra.mxu0 %v557
  %788 = vmatprep.subr.bf16.mxu0 0
  %789 = vmatpush1.bf16.msra.mxu0 %v556
  %790 = vmatprep.subr.bf16.mxu0 0
  %791 = vmatpush1.bf16.msra.mxu0 %v555
  %792 = vmatprep.subr.bf16.mxu0 0
  %793 = vmatpush1.bf16.msra.mxu0 %v554
  %794 = vmatprep.subr.bf16.mxu0 0
  %795 = vmatpush1.bf16.msra.mxu0 %v553
  %796 = vmatprep.subr.bf16.mxu0 0
  %797 = vmatpush2.bf16.msra.mxu0 %v568
  %798 = vmatprep.subr.bf16.mxu0 0
  %799 = vmatpush2.bf16.msra.mxu0 %v567
  %800 = vmatprep.subr.bf16.mxu0 0
  %801 = vmatpush2.bf16.msra.mxu0 %v566
  %802 = vmatprep.subr.bf16.mxu0 0
  %803 = vmatpush2.bf16.msra.mxu0 %v565
  %804 = vmatprep.subr.bf16.mxu0 0
  %805 = vmatpush2.bf16.msra.mxu0 %v564
  %806 = vmatprep.subr.bf16.mxu0 0
  %807 = vmatpush2.bf16.msra.mxu0 %v563
  %808 = vmatprep.subr.bf16.mxu0 0
  %809 = vmatpush2.bf16.msra.mxu0 %v562
  %810 = vmatprep.subr.bf16.mxu0 0
  %811 = vmatpush2.bf16.msra.mxu0 %v561
  %812 = vmatprep.mubr.bf16.mxu0 %v224
  %813 = vmatmul.mubr.bf16.gmra.mxu0 %v223
  %v814 = vpop.f32.mrf.mxu0
  %v815 = vadd.f32 %v766, %v814
  %v816 = vpop.f32.mrf.mxu0
  %v817 = vpop.f32.mrf.mxu0
  %v818 = vadd.f32 %v769, %v817
  %v819 = vpop.f32.mrf.mxu0
  %820 = vmatprep.mubr.bf16.mxu0 %v232
  %821 = vmatmul.mubr.bf16.gmra.mxu0 %v231
  %v822 = vpop.f32.mrf.mxu0
  %v823 = vadd.f32 %v774, %v822
  %v824 = vpop.f32.mrf.mxu0
  %v825 = vpop.f32.mrf.mxu0
  %v826 = vadd.f32 %v777, %v825
  %v827 = vpop.f32.mrf.mxu0
  %828 = vdwg.mxu0
  %v829 = vmul.f32 %v815, 0.01
  %v830 = vmul.f32 %v818, 0.01
  %v831 = vmul.f32 %v823, 0.01
  %v832 = vmul.f32 %v826, 0.01
  %v833 = vmax.f32 %v815, %v829
  %v834 = vmax.f32 %v818, %v830
  %v835 = vmax.f32 %v823, %v831
  %v836 = vmax.f32 %v826, %v832
  %v837 = vpack.c.bf16 %v834, %v833
  %v838 = vpack.c.bf16 %v836, %v835
  %v841 = vunpack.c.l.b16 %v837
  %v842 = vunpack.c.h.b16 %v837
  %v843 = vunpack.c.l.b16 %v838
  %v844 = vunpack.c.h.b16 %v838
  %v845 = vpack.c.b16 %v841, %v841
  %v846 = vpack.c.b16 %v842, %v842
  %v847 = vpack.c.b16 %v843, %v843
  %v848 = vpack.c.b16 %v844, %v844
  %853 = vst [vmem:[%s3] sm:$0xf] %v845
  %854 = vst [vmem:[%s3 + $0x4] sm:$0xf] %v846
  %855 = vst [vmem:[%s3 + $0x8] sm:$0xf] %v847
  %856 = vst [vmem:[%s3 + $0xc] sm:$0xf] %v848
  %v857 = vadd.f32 %v833, %v834
  %v858 = vadd.f32 %v857, %v835
  %v859 = vadd.f32 %v858, %v836
  %v860 = vrot.slane %v859, 4
  %v861 = vadd.f32 %v859, %v860
  %v862 = vrot.slane %v861, 2
  %v863 = vadd.f32 %v861, %v862
  %v864 = vrot.slane %v863, 1
  %v865 = vadd.f32 %v863, %v864
  %866 = vst [vmem:[%s4] sm:$0x1] %v865
  %v867 = vmul.f32 %v833, %v833
  %v868 = vmul.f32 %v834, %v834
  %v869 = vmul.f32 %v835, %v835
  %v870 = vmul.f32 %v836, %v836
  %v871 = vadd.f32 %v867, %v868
  %v872 = vadd.f32 %v871, %v869
  %v873 = vadd.f32 %v872, %v870
  %v874 = vrot.slane %v873, 4
  %v875 = vadd.f32 %v873, %v874
  %v876 = vrot.slane %v875, 2
  %v877 = vadd.f32 %v875, %v876
  %v878 = vrot.slane %v877, 1
  %v879 = vadd.f32 %v877, %v878
  %880 = vst [vmem:[%s5] sm:$0x1] %v879
  // Predicated region
  $region14: #{featnet2d_forward.7} parent=0 // pred_check
    _
  $region15: #{featnet2d_forward.7} parent=0 // pred_check_branch
    %882 = sbr.rel (0) target = $region17
  $region16: #{featnet2d_forward.7} parent=0 // pred_region
    _
  $region17: #{featnet2d_forward.7} parent=0 // pred_fallthru
    _
  // Predicated region
  $region18: #{featnet2d_forward.7} parent=0 // pred_check
    _
  $region19: #{featnet2d_forward.7} parent=0 // pred_check_branch
    %884 = sbr.rel (0) target = $region21
  $region20: #{featnet2d_forward.7} parent=0 // pred_region
    _
  $region21: #{featnet2d_forward.7} parent=0 // pred_fallthru
    _
  // Predicated region
  $region22: #{featnet2d_forward.7} parent=0 // pred_check
    _
  $region23: #{featnet2d_forward.7} parent=0 // pred_check_branch
    %886 = sbr.rel (0) target = $region25
  $region24: #{featnet2d_forward.7} parent=0 // pred_region
    _
  $region25: #{featnet2d_forward.7} parent=0 // pred_fallthru
    _
  // Predicated region
  $region26: #{featnet2d_forward.7} parent=0 // pred_check
    _
  $region27: #{featnet2d_forward.7} parent=0 // pred_check_branch
    %888 = sbr.rel (0) target = $region29
  $region28: #{featnet2d_forward.7} parent=0 // pred_region
    _
  $region29: #{featnet2d_forward.7} parent=0 // pred_fallthru
    _
  // Predicated region
  $region30: #{featnet2d_forward.7} parent=0 // pred_check
    _
  $region31: #{featnet2d_forward.7} parent=0 // pred_check_branch
    %890 = sbr.rel (0) target = $region33
  $region32: #{featnet2d_forward.7} parent=0 // pred_region
    _
  $region33: #{featnet2d_forward.7} parent=0 // pred_fallthru
    _
  // Predicated region
  $region34: #{featnet2d_forward.7} parent=0 // pred_check
    _
  $region35: #{featnet2d_forward.7} parent=0 // pred_check_branch
    %892 = sbr.rel (0) target = $region37
  $region36: #{featnet2d_forward.7} parent=0 // pred_region
    _
  $region37: #{featnet2d_forward.7} parent=0 // pred_fallthru
    _

// kernel: featnet2d_forward.9
$region0: #{featnet2d_forward.9}
  #allocation0 [shape = 'u32[]', space=smem, size = 0x4, offset = 0x4, fixed_abs, tag = 'smem constant byte address 0x4 - core index']
  #allocation1 [shape = 'u32[144,128]{1,0:T(1,128)}', space=vmem, size = 0x12000, scoped, tag = 'internal scratch']
  %s0 = inlined_call_operand.vmem [shape: bf16[4,8,1024], index: 0, kind: input, shape index: {}]
  %s1 = inlined_call_operand.vmem [shape: bf16[4,1024,256], index: 1, kind: input, shape index: {}]
  %s2 = inlined_call_operand.vmem [shape: f32[1,256], index: 2, kind: input, shape index: {}]
  %s3 = inlined_call_operand.vmem [shape: bf16[4,8,256], index: 3, kind: output, shape index: {0}]
  %s4 = inlined_call_operand.vmem [shape: f32[4,1,1,256], index: 4, kind: output, shape index: {1}]
  %s5 = inlined_call_operand.vmem [shape: f32[4,1,1,256], index: 5, kind: output, shape index: {2}]
  %6 = xla_tuple %s3, %s4, %s5
  %s7 = sld [smem:[#allocation0]]
  $region61: #{featnet2d_forward.9} parent=0
    _
  %s9 = ssub.s32 1, %s7
  %s10 = scalar_select 0, %s9, %s7
  loop: start=0, step=1, limit=6
  $region2: #{featnet2d_forward.9} parent=0 // loop_pre_header
    _
  $region3: #{featnet2d_forward.9} parent=0 // loop_header
    %s12 = sphi 0, %s16
    %p13 = scmp.ge.s32.totalorder %s12, 6
    %s19 = sphi 0, %s31
    %s20 = sphi 0, %s27
    %s21 = sphi 0, %s19
    %s22 = sphi 0, %s20
    %s23 = sphi 0, %s21
    %s24 = sphi 0, %s22
    %s36 = sphi 0, %s38
    %s39 = sphi 0, %s36
    %s40 = sphi 0, %s39
    %s56 = sphi 0, %s40
    %s62 = sphi 0, %s64
    %s65 = sphi 0, %s62
    %s66 = sphi 0, %s65
    %s82 = sphi 0, %s66
    %s86 = sphi 0, %s86
    %s88 = sphi 0, %s86
    %s89 = sphi 0, %s88
    %s103 = sphi 0, %s89
    %s111 = sphi 0, %s113
    %s114 = sphi 0, %s111
    %s115 = sphi 0, %s114
    %s131 = sphi 0, %s115
    %s139 = sphi 0, %s141
    %s142 = sphi 0, %s139
    %s143 = sphi 0, %s142
    %s159 = sphi 0, %s143
    %s167 = sphi 0, %s169
    %s170 = sphi 0, %s167
    %s171 = sphi 0, %s170
    %s187 = sphi 0, %s171
  $region4: #{featnet2d_forward.9} parent=0 // loop_header_branch
    %15 = sbr.rel (%p13) target = $region8
  $region5: #{featnet2d_forward.9} parent=0 // loop_body
    %s17 = ssub.s32 %s12, 1
    %s18 = ssub.s32 %s12, 2
    %s25 = sadd.s32 1, %s20
    %p26 = scmp.ge.s32.totalorder %s25, 1
    %s27 = scalar_select %p26, 0, %s25
    %s28 = sadd.s32 1, %s19
    %s29 = scalar_select %p26, %s28, %s19
    %p30 = scmp.ge.s32.totalorder %s29, 4
    %s31 = scalar_select %p30, 0, %s29
    %s32 = ssub.s32 %s19, %s31
    %s33 = ssub.s32 %s20, %s27
    %s34 = sor.u32 %s32, %s33
    %p35 = scmp.eq.s32.totalorder %s34, 0
    %s37 = sadd.s32 %s36, 1
    %s38 = scalar_select %p35, %s36, %s37
    %p41 = pneg %p35
    %p42 = scmp.eq.s32.totalorder %s12, 3
    %p43 = por %p41, %p42
    %p44 = scmp.ne.s32.totalorder %s36, %s39
    %p45 = scmp.eq.s32.totalorder %s12, 0
    %p46 = por %p44, %p45
    %p47 = scmp.ne.s32.totalorder %s36, %s39
    %p48 = scmp.eq.s32.totalorder %s17, 3
    %p49 = por %p47, %p48
    %p50 = scmp.ne.s32.totalorder %s39, %s40
    %p51 = scmp.eq.s32.totalorder %s17, 0
    %p52 = por %p50, %p51
    %p53 = scmp.ne.s32.totalorder %s39, %s40
    %p54 = scmp.eq.s32.totalorder %s18, 3
    %p55 = por %p53, %p54
    %p57 = scmp.ne.s32.totalorder %s40, %s56
    %p58 = scmp.eq.s32.totalorder %s18, 0
    %p59 = por %p57, %p58
    %s60 = ssub.s32 %s19, %s31
    %p61 = scmp.eq.s32.totalorder %s60, 0
    %s63 = sadd.s32 %s62, 1
    %s64 = scalar_select %p61, %s62, %s63
    %p67 = pneg %p61
    %p68 = scmp.eq.s32.totalorder %s12, 3
    %p69 = por %p67, %p68
    %p70 = scmp.ne.s32.totalorder %s62, %s65
    %p71 = scmp.eq.s32.totalorder %s12, 0
    %p72 = por %p70, %p71
    %p73 = scmp.ne.s32.totalorder %s62, %s65
    %p74 = scmp.eq.s32.totalorder %s17, 3
    %p75 = por %p73, %p74
    %p76 = scmp.ne.s32.totalorder %s65, %s66
    %p77 = scmp.eq.s32.totalorder %s17, 0
    %p78 = por %p76, %p77
    %p79 = scmp.ne.s32.totalorder %s65, %s66
    %p80 = scmp.eq.s32.totalorder %s18, 3
    %p81 = por %p79, %p80
    %p83 = scmp.ne.s32.totalorder %s66, %s82
    %p84 = scmp.eq.s32.totalorder %s18, 0
    %p85 = por %p83, %p84
    %s87 = sadd.s32 %s86, 1
    %p90 = scmp.eq.s32.totalorder %s12, 3
    %p91 = scmp.ne.s32.totalorder %s86, %s88
    %p92 = scmp.eq.s32.totalorder %s12, 0
    %p93 = por %p91, %p92
    %p94 = scmp.ne.s32.totalorder %s86, %s88
    %p95 = scmp.eq.s32.totalorder %s17, 3
    %p96 = por %p94, %p95
    %p97 = scmp.ne.s32.totalorder %s88, %s89
    %p98 = scmp.eq.s32.totalorder %s17, 0
    %p99 = por %p97, %p98
    %p100 = scmp.ne.s32.totalorder %s88, %s89
    %p101 = scmp.eq.s32.totalorder %s18, 3
    %p102 = por %p100, %p101
    %p104 = scmp.ne.s32.totalorder %s89, %s103
    %p105 = scmp.eq.s32.totalorder %s18, 0
    %p106 = por %p104, %p105
    %s107 = ssub.s32 %s19, %s31
    %s108 = ssub.s32 %s20, %s27
    %s109 = sor.u32 %s107, %s108
    %p110 = scmp.eq.s32.totalorder %s109, 0
    %s112 = sadd.s32 %s111, 1
    %s113 = scalar_select %p110, %s111, %s112
    %p116 = pneg %p110
    %p117 = scmp.eq.s32.totalorder %s12, 3
    %p118 = por %p116, %p117
    %p119 = scmp.ne.s32.totalorder %s111, %s114
    %p120 = scmp.eq.s32.totalorder %s12, 0
    %p121 = por %p119, %p120
    %p122 = scmp.ne.s32.totalorder %s111, %s114
    %p123 = scmp.eq.s32.totalorder %s17, 3
    %p124 = por %p122, %p123
    %p125 = scmp.ne.s32.totalorder %s114, %s115
    %p126 = scmp.eq.s32.totalorder %s17, 0
    %p127 = por %p125, %p126
    %p128 = scmp.ne.s32.totalorder %s114, %s115
    %p129 = scmp.eq.s32.totalorder %s18, 3
    %p130 = por %p128, %p129
    %p132 = scmp.ne.s32.totalorder %s115, %s131
    %p133 = scmp.eq.s32.totalorder %s18, 0
    %p134 = por %p132, %p133
    %s135 = ssub.s32 %s19, %s31
    %s136 = ssub.s32 %s20, %s27
    %s137 = sor.u32 %s135, %s136
    %p138 = scmp.eq.s32.totalorder %s137, 0
    %s140 = sadd.s32 %s139, 1
    %s141 = scalar_select %p138, %s139, %s140
    %p144 = pneg %p138
    %p145 = scmp.eq.s32.totalorder %s12, 3
    %p146 = por %p144, %p145
    %p147 = scmp.ne.s32.totalorder %s139, %s142
    %p148 = scmp.eq.s32.totalorder %s12, 0
    %p149 = por %p147, %p148
    %p150 = scmp.ne.s32.totalorder %s139, %s142
    %p151 = scmp.eq.s32.totalorder %s17, 3
    %p152 = por %p150, %p151
    %p153 = scmp.ne.s32.totalorder %s142, %s143
    %p154 = scmp.eq.s32.totalorder %s17, 0
    %p155 = por %p153, %p154
    %p156 = scmp.ne.s32.totalorder %s142, %s143
    %p157 = scmp.eq.s32.totalorder %s18, 3
    %p158 = por %p156, %p157
    %p160 = scmp.ne.s32.totalorder %s143, %s159
    %p161 = scmp.eq.s32.totalorder %s18, 0
    %p162 = por %p160, %p161
    %s163 = ssub.s32 %s19, %s31
    %s164 = ssub.s32 %s20, %s27
    %s165 = sor.u32 %s163, %s164
    %p166 = scmp.eq.s32.totalorder %s165, 0
    %s168 = sadd.s32 %s167, 1
    %s169 = scalar_select %p166, %s167, %s168
    %p172 = pneg %p166
    %p173 = scmp.eq.s32.totalorder %s12, 3
    %p174 = por %p172, %p173
    %p175 = scmp.ne.s32.totalorder %s167, %s170
    %p176 = scmp.eq.s32.totalorder %s12, 0
    %p177 = por %p175, %p176
    %p178 = scmp.ne.s32.totalorder %s167, %s170
    %p179 = scmp.eq.s32.totalorder %s17, 3
    %p180 = por %p178, %p179
    %p181 = scmp.ne.s32.totalorder %s170, %s171
    %p182 = scmp.eq.s32.totalorder %s17, 0
    %p183 = por %p181, %p182
    %p184 = scmp.ne.s32.totalorder %s170, %s171
    %p185 = scmp.eq.s32.totalorder %s18, 3
    %p186 = por %p184, %p185
    %p188 = scmp.ne.s32.totalorder %s171, %s187
    %p189 = scmp.eq.s32.totalorder %s18, 0
    %p190 = por %p188, %p189
    %p191 = scmp.le.s32.totalorder 1, %s12
    %p192 = scmp.lt.s32.totalorder %s12, 5
    %p193 = pnand %p191, %p192
    %p194 = pneg %p193
    // Predicated region
    $region9: #{featnet2d_forward.9} parent=5 // pred_check
      _
    $region10: #{featnet2d_forward.9} parent=5 // pred_check_branch
      %196 = sbr.rel (%p193) target = $region12
    $region11: #{featnet2d_forward.9} parent=5 // pred_region
      %s197 = ssub.s32 %s12, 1
      // Predicated region
      $region13: #{featnet2d_forward.9} parent=11 // pred_check
        %p198 = pneg %p99
      $region14: #{featnet2d_forward.9} parent=11 // pred_check_branch
        %200 = sbr.rel (%p198) target = $region16
      $region15: #{featnet2d_forward.9} parent=11 // pred_region
        _
      $region16: #{featnet2d_forward.9} parent=11 // pred_fallthru
        _
    $region12: #{featnet2d_forward.9} parent=5 // pred_fallthru
      _
    %p201 = scmp.lt.s32.totalorder %s12, 4
    // Predicated region
    $region17: #{featnet2d_forward.9} parent=5 // pred_check
      %p202 = pneg %p201
    $region18: #{featnet2d_forward.9} parent=5 // pred_check_branch
      %204 = sbr.rel (%p202) target = $region20
    $region19: #{featnet2d_forward.9} parent=5 // pred_region
      // Predicated region
      $region21: #{featnet2d_forward.9} parent=19 // pred_check
        %p205 = pneg %p46
      $region22: #{featnet2d_forward.9} parent=19 // pred_check_branch
        %207 = sbr.rel (%p205) target = $region24
      $region23: #{featnet2d_forward.9} parent=19 // pred_region
        %p208 = scmp.lt.s32.totalorder %s19, 3
        %s209 = scalar_select %p208, %s19, 3
        %p210 = scmp.lt.s32.totalorder %s20, 0
        %s211 = scalar_select %p210, %s20, 0
        %s212 = smul.addr %s211, 8
        %s213 = smul.addr %s209, 8
        %s214 = sadd.s32 %s212, %s213
        %s215 = smul.addr %s214, 4
        %s216 = scalar_lea.vmem %s0, %s215
      $region24: #{featnet2d_forward.9} parent=19 // pred_fallthru
        _
      // Predicated region
      $region25: #{featnet2d_forward.9} parent=19 // pred_check
        %p217 = pneg %p72
      $region26: #{featnet2d_forward.9} parent=19 // pred_check_branch
        %219 = sbr.rel (%p217) target = $region28
      $region27: #{featnet2d_forward.9} parent=19 // pred_region
        %p220 = scmp.lt.s32.totalorder %s19, 3
        %s221 = scalar_select %p220, %s19, 3
        %s222 = smul.addr %s221, 256
        %s223 = smul.addr %s222, 4
        %s224 = scalar_lea.vmem %s1, %s223
      $region28: #{featnet2d_forward.9} parent=19 // pred_fallthru
        _
    $region20: #{featnet2d_forward.9} parent=5 // pred_fallthru
      _
    %p225 = scmp.le.s32.totalorder 1, %s12
    %p226 = scmp.lt.s32.totalorder %s12, 5
    %p227 = pnand %p225, %p226
    %p228 = pneg %p227
    // Predicated region
    $region29: #{featnet2d_forward.9} parent=5 // pred_check
      _
    $region30: #{featnet2d_forward.9} parent=5 // pred_check_branch
      %230 = sbr.rel (%p227) target = $region32
    $region31: #{featnet2d_forward.9} parent=5 // pred_region
      %s231 = ssub.s32 %s12, 1
      %p232 = scmp.lt.s32.totalorder %s21, 3
      %s233 = scalar_select %p232, %s21, 3
      %p234 = scmp.lt.s32.totalorder %s22, 0
      %s235 = scalar_select %p234, %s22, 0
      %s236 = smul.addr %s235, 8
      %s237 = smul.addr %s233, 8
      %s238 = sadd.s32 %s236, %s237
      %s239 = smul.addr %s238, 4
      %s240 = scalar_lea.vmem %s0, %s239
      %p241 = pneg %p52
      %p242 = pneg %p49
      %p243 = scmp.lt.s32.totalorder %s21, 3
      %s244 = scalar_select %p243, %s21, 3
      %s245 = smul.addr %s244, 256
      %s246 = smul.addr %s245, 4
      %s247 = scalar_lea.vmem %s1, %s246
      %p248 = pneg %p78
      %p249 = pneg %p75
      %p250 = pneg %p99
      %p251 = pneg %p96
      %p252 = pneg %p127
      %p253 = pneg %p124
      %p254 = scmp.lt.s32.totalorder %s21, 3
      %s255 = scalar_select %p254, %s21, 3
      %p256 = scmp.lt.s32.totalorder %s22, 0
      %s257 = scalar_select %p256, %s22, 0
      %s258 = smul.addr %s257, 2
      %s259 = smul.addr %s255, 2
      %s260 = sadd.s32 %s258, %s259
      %s261 = smul.addr %s260, 4
      %s262 = scalar_lea.vmem %s3, %s261
      %p263 = pneg %p155
      %p264 = pneg %p152
      %p265 = scmp.lt.s32.totalorder %s21, 3
      %s266 = scalar_select %p265, %s21, 3
      %p267 = scmp.lt.s32.totalorder %s22, 0
      %s268 = scalar_select %p267, %s22, 0
      %s269 = smul.addr %s268, 2
      %s270 = smul.addr %s266, 2
      %s271 = sadd.s32 %s269, %s270
      %s272 = scalar_lea.vmem %s4, %s271
      %p273 = pneg %p183
      %p274 = pneg %p180
      %p275 = scmp.lt.s32.totalorder %s21, 3
      %s276 = scalar_select %p275, %s21, 3
      %p277 = scmp.lt.s32.totalorder %s22, 0
      %s278 = scalar_select %p277, %s22, 0
      %s279 = smul.addr %s278, 2
      %s280 = smul.addr %s276, 2
      %s281 = sadd.s32 %s279, %s280
      %s282 = scalar_lea.vmem %s5, %s281
      %p283 = scmp.lt.s32.totalorder %s21, 3
      %s284 = scalar_select %p283, %s21, 3
      %p285 = scmp.lt.s32.totalorder %s22, 0
      %s286 = scalar_select %p285, %s22, 0
      %s287 = smul.addr %s286, 8
      %s288 = smul.addr %s284, 8
      %s289 = sadd.s32 %s287, %s288
      %s290 = smul.addr %s289, 4
      %s291 = scalar_lea.vmem %s0, %s290
      %p292 = scmp.lt.s32.totalorder %s21, 3
      %s293 = scalar_select %p292, %s21, 3
      %s294 = smul.addr %s293, 256
      %s295 = smul.addr %s294, 4
      %s296 = scalar_lea.vmem %s1, %s295
      %p297 = scmp.lt.s32.totalorder %s21, 3
      %s298 = scalar_select %p297, %s21, 3
      %p299 = scmp.lt.s32.totalorder %s22, 0
      %s300 = scalar_select %p299, %s22, 0
      %s301 = smul.addr %s300, 2
      %s302 = smul.addr %s298, 2
      %s303 = sadd.s32 %s301, %s302
      %s304 = smul.addr %s303, 4
      %s305 = scalar_lea.vmem %s3, %s304
      %p306 = scmp.lt.s32.totalorder %s21, 3
      %s307 = scalar_select %p306, %s21, 3
      %p308 = scmp.lt.s32.totalorder %s22, 0
      %s309 = scalar_select %p308, %s22, 0
      %s310 = smul.addr %s309, 2
      %s311 = smul.addr %s307, 2
      %s312 = sadd.s32 %s310, %s311
      %s313 = scalar_lea.vmem %s4, %s312
      %p314 = scmp.lt.s32.totalorder %s21, 3
      %s315 = scalar_select %p314, %s21, 3
      %p316 = scmp.lt.s32.totalorder %s22, 0
      %s317 = scalar_select %p316, %s22, 0
      %s318 = smul.addr %s317, 2
      %s319 = smul.addr %s315, 2
      %s320 = sadd.s32 %s318, %s319
      %s321 = scalar_lea.vmem %s5, %s320
      %v322 = vld [vmem:[%s291] sm:$0xff]
      %v323 = vld [vmem:[%s291 + $0x8] sm:$0xff]
      %v324 = vld [vmem:[%s291 + $0x10] sm:$0xff]
      %v325 = vld [vmem:[%s291 + $0x18] sm:$0xff]
      %v326 = vld [vmem:[%s296] sm:$0xff]
      %v327 = vld [vmem:[%s296 + $0x8] sm:$0xff]
      %v328 = vld [vmem:[%s296 + $0x10] sm:$0xff]
      %v329 = vld [vmem:[%s296 + $0x18] sm:$0xff]
      %v330 = vld [vmem:[%s296 + $0x20] sm:$0xff]
      %v331 = vld [vmem:[%s296 + $0x28] sm:$0xff]
      %v332 = vld [vmem:[%s296 + $0x30] sm:$0xff]
      %v333 = vld [vmem:[%s296 + $0x38] sm:$0xff]
      %v334 = vld [vmem:[%s296 + $0x40] sm:$0xff]
      %v335 = vld [vmem:[%s296 + $0x48] sm:$0xff]
      %v336 = vld [vmem:[%s296 + $0x50] sm:$0xff]
      %v337 = vld [vmem:[%s296 + $0x58] sm:$0xff]
      %v338 = vld [vmem:[%s296 + $0x60] sm:$0xff]
      %v339 = vld [vmem:[%s296 + $0x68] sm:$0xff]
      %v340 = vld [vmem:[%s296 + $0x70] sm:$0xff]
      %v341 = vld [vmem:[%s296 + $0x78] sm:$0xff]
      %v342 = vld [vmem:[%s296 + $0x80] sm:$0xff]
      %v343 = vld [vmem:[%s296 + $0x88] sm:$0xff]
      %v344 = vld [vmem:[%s296 + $0x90] sm:$0xff]
      %v345 = vld [vmem:[%s296 + $0x98] sm:$0xff]
      %v346 = vld [vmem:[%s296 + $0xa0] sm:$0xff]
      %v347 = vld [vmem:[%s296 + $0xa8] sm:$0xff]
      %v348 = vld [vmem:[%s296 + $0xb0] sm:$0xff]
      %v349 = vld [vmem:[%s296 + $0xb8] sm:$0xff]
      %v350 = vld [vmem:[%s296 + $0xc0] sm:$0xff]
      %v351 = vld [vmem:[%s296 + $0xc8] sm:$0xff]
      %v352 = vld [vmem:[%s296 + $0xd0] sm:$0xff]
      %v353 = vld [vmem:[%s296 + $0xd8] sm:$0xff]
      %v354 = vld [vmem:[%s296 + $0xe0] sm:$0xff]
      %v355 = vld [vmem:[%s296 + $0xe8] sm:$0xff]
      %v356 = vld [vmem:[%s296 + $0xf0] sm:$0xff]
      %v357 = vld [vmem:[%s296 + $0xf8] sm:$0xff]
      %v358 = vld [vmem:[%s296 + $0x100] sm:$0xff]
      %v359 = vld [vmem:[%s296 + $0x108] sm:$0xff]
      %v360 = vld [vmem:[%s296 + $0x110] sm:$0xff]
      %v361 = vld [vmem:[%s296 + $0x118] sm:$0xff]
      %v362 = vld [vmem:[%s296 + $0x120] sm:$0xff]
      %v363 = vld [vmem:[%s296 + $0x128] sm:$0xff]
      %v364 = vld [vmem:[%s296 + $0x130] sm:$0xff]
      %v365 = vld [vmem:[%s296 + $0x138] sm:$0xff]
      %v366 = vld [vmem:[%s296 + $0x140] sm:$0xff]
      %v367 = vld [vmem:[%s296 + $0x148] sm:$0xff]
      %v368 = vld [vmem:[%s296 + $0x150] sm:$0xff]
      %v369 = vld [vmem:[%s296 + $0x158] sm:$0xff]
      %v370 = vld [vmem:[%s296 + $0x160] sm:$0xff]
      %v371 = vld [vmem:[%s296 + $0x168] sm:$0xff]
      %v372 = vld [vmem:[%s296 + $0x170] sm:$0xff]
      %v373 = vld [vmem:[%s296 + $0x178] sm:$0xff]
      %v374 = vld [vmem:[%s296 + $0x180] sm:$0xff]
      %v375 = vld [vmem:[%s296 + $0x188] sm:$0xff]
      %v376 = vld [vmem:[%s296 + $0x190] sm:$0xff]
      %v377 = vld [vmem:[%s296 + $0x198] sm:$0xff]
      %v378 = vld [vmem:[%s296 + $0x1a0] sm:$0xff]
      %v379 = vld [vmem:[%s296 + $0x1a8] sm:$0xff]
      %v380 = vld [vmem:[%s296 + $0x1b0] sm:$0xff]
      %v381 = vld [vmem:[%s296 + $0x1b8] sm:$0xff]
      %v382 = vld [vmem:[%s296 + $0x1c0] sm:$0xff]
      %v383 = vld [vmem:[%s296 + $0x1c8] sm:$0xff]
      %v384 = vld [vmem:[%s296 + $0x1d0] sm:$0xff]
      %v385 = vld [vmem:[%s296 + $0x1d8] sm:$0xff]
      %v386 = vld [vmem:[%s296 + $0x1e0] sm:$0xff]
      %v387 = vld [vmem:[%s296 + $0x1e8] sm:$0xff]
      %v388 = vld [vmem:[%s296 + $0x1f0] sm:$0xff]
      %v389 = vld [vmem:[%s296 + $0x1f8] sm:$0xff]
      %v390 = vld [vmem:[%s296 + $0x200] sm:$0xff]
      %v391 = vld [vmem:[%s296 + $0x208] sm:$0xff]
      %v392 = vld [vmem:[%s296 + $0x210] sm:$0xff]
      %v393 = vld [vmem:[%s296 + $0x218] sm:$0xff]
      %v394 = vld [vmem:[%s296 + $0x220] sm:$0xff]
      %v395 = vld [vmem:[%s296 + $0x228] sm:$0xff]
      %v396 = vld [vmem:[%s296 + $0x230] sm:$0xff]
      %v397 = vld [vmem:[%s296 + $0x238] sm:$0xff]
      %v398 = vld [vmem:[%s296 + $0x240] sm:$0xff]
      %v399 = vld [vmem:[%s296 + $0x248] sm:$0xff]
      %v400 = vld [vmem:[%s296 + $0x250] sm:$0xff]
      %v401 = vld [vmem:[%s296 + $0x258] sm:$0xff]
      %v402 = vld [vmem:[%s296 + $0x260] sm:$0xff]
      %v403 = vld [vmem:[%s296 + $0x268] sm:$0xff]
      %v404 = vld [vmem:[%s296 + $0x270] sm:$0xff]
      %v405 = vld [vmem:[%s296 + $0x278] sm:$0xff]
      %v406 = vld [vmem:[%s296 + $0x280] sm:$0xff]
      %v407 = vld [vmem:[%s296 + $0x288] sm:$0xff]
      %v408 = vld [vmem:[%s296 + $0x290] sm:$0xff]
      %v409 = vld [vmem:[%s296 + $0x298] sm:$0xff]
      %v410 = vld [vmem:[%s296 + $0x2a0] sm:$0xff]
      %v411 = vld [vmem:[%s296 + $0x2a8] sm:$0xff]
      %v412 = vld [vmem:[%s296 + $0x2b0] sm:$0xff]
      %v413 = vld [vmem:[%s296 + $0x2b8] sm:$0xff]
      %v414 = vld [vmem:[%s296 + $0x2c0] sm:$0xff]
      %v415 = vld [vmem:[%s296 + $0x2c8] sm:$0xff]
      %v416 = vld [vmem:[%s296 + $0x2d0] sm:$0xff]
      %v417 = vld [vmem:[%s296 + $0x2d8] sm:$0xff]
      %v418 = vld [vmem:[%s296 + $0x2e0] sm:$0xff]
      %v419 = vld [vmem:[%s296 + $0x2e8] sm:$0xff]
      %v420 = vld [vmem:[%s296 + $0x2f0] sm:$0xff]
      %v421 = vld [vmem:[%s296 + $0x2f8] sm:$0xff]
      %v422 = vld [vmem:[%s296 + $0x300] sm:$0xff]
      %v423 = vld [vmem:[%s296 + $0x308] sm:$0xff]
      %v424 = vld [vmem:[%s296 + $0x310] sm:$0xff]
      %v425 = vld [vmem:[%s296 + $0x318] sm:$0xff]
      %v426 = vld [vmem:[%s296 + $0x320] sm:$0xff]
      %v427 = vld [vmem:[%s296 + $0x328] sm:$0xff]
      %v428 = vld [vmem:[%s296 + $0x330] sm:$0xff]
      %v429 = vld [vmem:[%s296 + $0x338] sm:$0xff]
      %v430 = vld [vmem:[%s296 + $0x340] sm:$0xff]
      %v431 = vld [vmem:[%s296 + $0x348] sm:$0xff]
      %v432 = vld [vmem:[%s296 + $0x350] sm:$0xff]
      %v433 = vld [vmem:[%s296 + $0x358] sm:$0xff]
      %v434 = vld [vmem:[%s296 + $0x360] sm:$0xff]
      %v435 = vld [vmem:[%s296 + $0x368] sm:$0xff]
      %v436 = vld [vmem:[%s296 + $0x370] sm:$0xff]
      %v437 = vld [vmem:[%s296 + $0x378] sm:$0xff]
      %v438 = vld [vmem:[%s296 + $0x380] sm:$0xff]
      %v439 = vld [vmem:[%s296 + $0x388] sm:$0xff]
      %v440 = vld [vmem:[%s296 + $0x390] sm:$0xff]
      %v441 = vld [vmem:[%s296 + $0x398] sm:$0xff]
      %v442 = vld [vmem:[%s296 + $0x3a0] sm:$0xff]
      %v443 = vld [vmem:[%s296 + $0x3a8] sm:$0xff]
      %v444 = vld [vmem:[%s296 + $0x3b0] sm:$0xff]
      %v445 = vld [vmem:[%s296 + $0x3b8] sm:$0xff]
      %v446 = vld [vmem:[%s296 + $0x3c0] sm:$0xff]
      %v447 = vld [vmem:[%s296 + $0x3c8] sm:$0xff]
      %v448 = vld [vmem:[%s296 + $0x3d0] sm:$0xff]
      %v449 = vld [vmem:[%s296 + $0x3d8] sm:$0xff]
      %v450 = vld [vmem:[%s296 + $0x3e0] sm:$0xff]
      %v451 = vld [vmem:[%s296 + $0x3e8] sm:$0xff]
      %v452 = vld [vmem:[%s296 + $0x3f0] sm:$0xff]
      %v453 = vld [vmem:[%s296 + $0x3f8] sm:$0xff]
      %v454 = vld [vmem:[%s2] sm:$0x3]
      %v456 = vlaneseq
      %v457 = vshrl.u32 %v456, 7
      %v458 = vsub.s32 0, %v457
      %v459 = vrot.slane %v454, %v458
      %v460 = vlaneseq
      %v461 = vshrl.u32 %v460, 7
      %v462 = vsub.s32 1, %v461
      %v463 = vrot.slane %v454, %v462
      %v470 = vunpack.c.l.b16 %v322
      %v471 = vunpack.c.h.b16 %v322
      %v472 = vunpack.c.l.b16 %v323
      %v473 = vunpack.c.h.b16 %v323
      %v474 = vunpack.c.l.b16 %v324
      %v475 = vunpack.c.h.b16 %v324
      %v476 = vunpack.c.l.b16 %v325
      %v477 = vunpack.c.h.b16 %v325
      %v478 = vpack.c.b16 %v470, %v470
      %v479 = vpack.c.b16 %v471, %v471
      %v480 = vpack.c.b16 %v472, %v472
      %v481 = vpack.c.b16 %v473, %v473
      %v482 = vpack.c.b16 %v474, %v474
      %v483 = vpack.c.b16 %v475, %v475
      %v484 = vpack.c.b16 %v476, %v476
      %v485 = vpack.c.b16 %v477, %v477
      %v622 = vunpack.c.l.b16 %v326
      %v623 = vunpack.c.h.b16 %v326
      %v624 = vunpack.c.l.b16 %v327
      %v625 = vunpack.c.h.b16 %v327
      %v626 = vunpack.c.l.b16 %v328
      %v627 = vunpack.c.h.b16 %v328
      %v628 = vunpack.c.l.b16 %v329
      %v629 = vunpack.c.h.b16 %v329
      %v630 = vunpack.c.l.b16 %v330
      %v631 = vunpack.c.h.b16 %v330
      %v632 = vunpack.c.l.b16 %v331
      %v633 = vunpack.c.h.b16 %v331
      %v634 = vunpack.c.l.b16 %v332
      %v635 = vunpack.c.h.b16 %v332
      %v636 = vunpack.c.l.b16 %v333
      %v637 = vunpack.c.h.b16 %v333
      %v638 = vunpack.c.l.b16 %v334
      %v639 = vunpack.c.h.b16 %v334
      %v640 = vunpack.c.l.b16 %v335
      %v641 = vunpack.c.h.b16 %v335
      %v642 = vunpack.c.l.b16 %v336
      %v643 = vunpack.c.h.b16 %v336
      %v644 = vunpack.c.l.b16 %v337
      %v645 = vunpack.c.h.b16 %v337
      %v646 = vunpack.c.l.b16 %v338
      %v647 = vunpack.c.h.b16 %v338
      %v648 = vunpack.c.l.b16 %v339
      %v649 = vunpack.c.h.b16 %v339
      %v650 = vunpack.c.l.b16 %v340
      %v651 = vunpack.c.h.b16 %v340
      %v652 = vunpack.c.l.b16 %v341
      %v653 = vunpack.c.h.b16 %v341
      %v654 = vunpack.c.l.b16 %v342
      %v655 = vunpack.c.h.b16 %v342
      %v656 = vunpack.c.l.b16 %v343
      %v657 = vunpack.c.h.b16 %v343
      %v658 = vunpack.c.l.b16 %v344
      %v659 = vunpack.c.h.b16 %v344
      %v660 = vunpack.c.l.b16 %v345
      %v661 = vunpack.c.h.b16 %v345
      %v662 = vunpack.c.l.b16 %v346
      %v663 = vunpack.c.h.b16 %v346
      %v664 = vunpack.c.l.b16 %v347
      %v665 = vunpack.c.h.b16 %v347
      %v666 = vunpack.c.l.b16 %v348
      %v667 = vunpack.c.h.b16 %v348
      %v668 = vunpack.c.l.b16 %v349
      %v669 = vunpack.c.h.b16 %v349
      %v670 = vunpack.c.l.b16 %v350
      %v671 = vunpack.c.h.b16 %v350
      %v672 = vunpack.c.l.b16 %v351
      %v673 = vunpack.c.h.b16 %v351
      %v674 = vunpack.c.l.b16 %v352
      %v675 = vunpack.c.h.b16 %v352
      %v676 = vunpack.c.l.b16 %v353
      %v677 = vunpack.c.h.b16 %v353
      %v678 = vunpack.c.l.b16 %v354
      %v679 = vunpack.c.h.b16 %v354
      %v680 = vunpack.c.l.b16 %v355
      %v681 = vunpack.c.h.b16 %v355
      %v682 = vunpack.c.l.b16 %v356
      %v683 = vunpack.c.h.b16 %v356
      %v684 = vunpack.c.l.b16 %v357
      %v685 = vunpack.c.h.b16 %v357
      %v686 = vunpack.c.l.b16 %v358
      %v687 = vunpack.c.h.b16 %v358
      %v688 = vunpack.c.l.b16 %v359
      %v689 = vunpack.c.h.b16 %v359
      %v690 = vunpack.c.l.b16 %v360
      %v691 = vunpack.c.h.b16 %v360
      %v692 = vunpack.c.l.b16 %v361
      %v693 = vunpack.c.h.b16 %v361
      %v694 = vunpack.c.l.b16 %v362
      %v695 = vunpack.c.h.b16 %v362
      %v696 = vunpack.c.l.b16 %v363
      %v697 = vunpack.c.h.b16 %v363
      %v698 = vunpack.c.l.b16 %v364
      %v699 = vunpack.c.h.b16 %v364
      %v700 = vunpack.c.l.b16 %v365
      %v701 = vunpack.c.h.b16 %v365
      %v702 = vunpack.c.l.b16 %v366
      %v703 = vunpack.c.h.b16 %v366
      %v704 = vunpack.c.l.b16 %v367
      %v705 = vunpack.c.h.b16 %v367
      %v706 = vunpack.c.l.b16 %v368
      %v707 = vunpack.c.h.b16 %v368
      %v708 = vunpack.c.l.b16 %v369
      %v709 = vunpack.c.h.b16 %v369
      %v710 = vunpack.c.l.b16 %v370
      %v711 = vunpack.c.h.b16 %v370
      %v712 = vunpack.c.l.b16 %v371
      %v713 = vunpack.c.h.b16 %v371
      %v714 = vunpack.c.l.b16 %v372
      %v715 = vunpack.c.h.b16 %v372
      %v716 = vunpack.c.l.b16 %v373
      %v717 = vunpack.c.h.b16 %v373
      %v718 = vunpack.c.l.b16 %v374
      %v719 = vunpack.c.h.b16 %v374
      %v720 = vunpack.c.l.b16 %v375
      %v721 = vunpack.c.h.b16 %v375
      %v722 = vunpack.c.l.b16 %v376
      %v723 = vunpack.c.h.b16 %v376
      %v724 = vunpack.c.l.b16 %v377
      %v725 = vunpack.c.h.b16 %v377
      %v726 = vunpack.c.l.b16 %v378
      %v727 = vunpack.c.h.b16 %v378
      %v728 = vunpack.c.l.b16 %v379
      %v729 = vunpack.c.h.b16 %v379
      %v730 = vunpack.c.l.b16 %v380
      %v731 = vunpack.c.h.b16 %v380
      %v732 = vunpack.c.l.b16 %v381
      %v733 = vunpack.c.h.b16 %v381
      %v734 = vunpack.c.l.b16 %v382
      %v735 = vunpack.c.h.b16 %v382
      %v736 = vunpack.c.l.b16 %v383
      %v737 = vunpack.c.h.b16 %v383
      %v738 = vunpack.c.l.b16 %v384
      %v739 = vunpack.c.h.b16 %v384
      %v740 = vunpack.c.l.b16 %v385
      %v741 = vunpack.c.h.b16 %v385
      %v742 = vunpack.c.l.b16 %v386
      %v743 = vunpack.c.h.b16 %v386
      %v744 = vunpack.c.l.b16 %v387
      %v745 = vunpack.c.h.b16 %v387
      %v746 = vunpack.c.l.b16 %v388
      %v747 = vunpack.c.h.b16 %v388
      %v748 = vunpack.c.l.b16 %v389
      %v749 = vunpack.c.h.b16 %v389
      %v750 = vunpack.c.l.b16 %v390
      %v751 = vunpack.c.h.b16 %v390
      %v752 = vunpack.c.l.b16 %v391
      %v753 = vunpack.c.h.b16 %v391
      %v754 = vunpack.c.l.b16 %v392
      %v755 = vunpack.c.h.b16 %v392
      %v756 = vunpack.c.l.b16 %v393
      %v757 = vunpack.c.h.b16 %v393
      %v758 = vunpack.c.l.b16 %v394
      %v759 = vunpack.c.h.b16 %v394
      %v760 = vunpack.c.l.b16 %v395
      %v761 = vunpack.c.h.b16 %v395
      %v762 = vunpack.c.l.b16 %v396
      %v763 = vunpack.c.h.b16 %v396
      %v764 = vunpack.c.l.b16 %v397
      %v765 = vunpack.c.h.b16 %v397
      %v766 = vunpack.c.l.b16 %v398
      %v767 = vunpack.c.h.b16 %v398
      %v768 = vunpack.c.l.b16 %v399
      %v769 = vunpack.c.h.b16 %v399
      %v770 = vunpack.c.l.b16 %v400
      %v771 = vunpack.c.h.b16 %v400
      %v772 = vunpack.c.l.b16 %v401
      %v773 = vunpack.c.h.b16 %v401
      %v774 = vunpack.c.l.b16 %v402
      %v775 = vunpack.c.h.b16 %v402
      %v776 = vunpack.c.l.b16 %v403
      %v777 = vunpack.c.h.b16 %v403
      %v778 = vunpack.c.l.b16 %v404
      %v779 = vunpack.c.h.b16 %v404
      %v780 = vunpack.c.l.b16 %v405
      %v781 = vunpack.c.h.b16 %v405
      %v782 = vunpack.c.l.b16 %v406
      %v783 = vunpack.c.h.b16 %v406
      %v784 = vunpack.c.l.b16 %v407
      %v785 = vunpack.c.h.b16 %v407
      %v786 = vunpack.c.l.b16 %v408
      %v787 = vunpack.c.h.b16 %v408
      %v788 = vunpack.c.l.b16 %v409
      %v789 = vunpack.c.h.b16 %v409
      %v790 = vunpack.c.l.b16 %v410
      %v791 = vunpack.c.h.b16 %v410
      %v792 = vunpack.c.l.b16 %v411
      %v793 = vunpack.c.h.b16 %v411
      %v794 = vunpack.c.l.b16 %v412
      %v795 = vunpack.c.h.b16 %v412
      %v796 = vunpack.c.l.b16 %v413
      %v797 = vunpack.c.h.b16 %v413
      %v798 = vunpack.c.l.b16 %v414
      %v799 = vunpack.c.h.b16 %v414
      %v800 = vunpack.c.l.b16 %v415
      %v801 = vunpack.c.h.b16 %v415
      %v802 = vunpack.c.l.b16 %v416
      %v803 = vunpack.c.h.b16 %v416
      %v804 = vunpack.c.l.b16 %v417
      %v805 = vunpack.c.h.b16 %v417
      %v806 = vunpack.c.l.b16 %v418
      %v807 = vunpack.c.h.b16 %v418
      %v808 = vunpack.c.l.b16 %v419
      %v809 = vunpack.c.h.b16 %v419
      %v810 = vunpack.c.l.b16 %v420
      %v811 = vunpack.c.h.b16 %v420
      %v812 = vunpack.c.l.b16 %v421
      %v813 = vunpack.c.h.b16 %v421
      %v814 = vunpack.c.l.b16 %v422
      %v815 = vunpack.c.h.b16 %v422
      %v816 = vunpack.c.l.b16 %v423
      %v817 = vunpack.c.h.b16 %v423
      %v818 = vunpack.c.l.b16 %v424
      %v819 = vunpack.c.h.b16 %v424
      %v820 = vunpack.c.l.b16 %v425
      %v821 = vunpack.c.h.b16 %v425
      %v822 = vunpack.c.l.b16 %v426
      %v823 = vunpack.c.h.b16 %v426
      %v824 = vunpack.c.l.b16 %v427
      %v825 = vunpack.c.h.b16 %v427
      %v826 = vunpack.c.l.b16 %v428
      %v827 = vunpack.c.h.b16 %v428
      %v828 = vunpack.c.l.b16 %v429
      %v829 = vunpack.c.h.b16 %v429
      %v830 = vunpack.c.l.b16 %v430
      %v831 = vunpack.c.h.b16 %v430
      %v832 = vunpack.c.l.b16 %v431
      %v833 = vunpack.c.h.b16 %v431
      %v834 = vunpack.c.l.b16 %v432
      %v835 = vunpack.c.h.b16 %v432
      %v836 = vunpack.c.l.b16 %v433
      %v837 = vunpack.c.h.b16 %v433
      %v838 = vunpack.c.l.b16 %v434
      %v839 = vunpack.c.h.b16 %v434
      %v840 = vunpack.c.l.b16 %v435
      %v841 = vunpack.c.h.b16 %v435
      %v842 = vunpack.c.l.b16 %v436
      %v843 = vunpack.c.h.b16 %v436
      %v844 = vunpack.c.l.b16 %v437
      %v845 = vunpack.c.h.b16 %v437
      %v846 = vunpack.c.l.b16 %v438
      %v847 = vunpack.c.h.b16 %v438
      %v848 = vunpack.c.l.b16 %v439
      %v849 = vunpack.c.h.b16 %v439
      %v850 = vunpack.c.l.b16 %v440
      %v851 = vunpack.c.h.b16 %v440
      %v852 = vunpack.c.l.b16 %v441
      %v853 = vunpack.c.h.b16 %v441
      %v854 = vunpack.c.l.b16 %v442
      %v855 = vunpack.c.h.b16 %v442
      %v856 = vunpack.c.l.b16 %v443
      %v857 = vunpack.c.h.b16 %v443
      %v858 = vunpack.c.l.b16 %v444
      %v859 = vunpack.c.h.b16 %v444
      %v860 = vunpack.c.l.b16 %v445
      %v861 = vunpack.c.h.b16 %v445
      %v862 = vunpack.c.l.b16 %v446
      %v863 = vunpack.c.h.b16 %v446
      %v864 = vunpack.c.l.b16 %v447
      %v865 = vunpack.c.h.b16 %v447
      %v866 = vunpack.c.l.b16 %v448
      %v867 = vunpack.c.h.b16 %v448
      %v868 = vunpack.c.l.b16 %v449
      %v869 = vunpack.c.h.b16 %v449
      %v870 = vunpack.c.l.b16 %v450
      %v871 = vunpack.c.h.b16 %v450
      %v872 = vunpack.c.l.b16 %v451
      %v873 = vunpack.c.h.b16 %v451
      %v874 = vunpack.c.l.b16 %v452
      %v875 = vunpack.c.h.b16 %v452
      %v876 = vunpack.c.l.b16 %v453
      %v877 = vunpack.c.h.b16 %v453
      %v878 = vpack.c.b16 %v624, %v622
      %v879 = vpack.c.b16 %v625, %v623
      %v880 = vpack.c.b16 %v628, %v626
      %v881 = vpack.c.b16 %v629, %v627
      %v882 = vpack.c.b16 %v632, %v630
      %v883 = vpack.c.b16 %v633, %v631
      %v884 = vpack.c.b16 %v636, %v634
      %v885 = vpack.c.b16 %v637, %v635
      %v886 = vpack.c.b16 %v640, %v638
      %v887 = vpack.c.b16 %v641, %v639
      %v888 = vpack.c.b16 %v644, %v642
      %v889 = vpack.c.b16 %v645, %v643
      %v890 = vpack.c.b16 %v648, %v646
      %v891 = vpack.c.b16 %v649, %v647
      %v892 = vpack.c.b16 %v652, %v650
      %v893 = vpack.c.b16 %v653, %v651
      %v894 = vpack.c.b16 %v656, %v654
      %v895 = vpack.c.b16 %v657, %v655
      %v896 = vpack.c.b16 %v660, %v658
      %v897 = vpack.c.b16 %v661, %v659
      %v898 = vpack.c.b16 %v664, %v662
      %v899 = vpack.c.b16 %v665, %v663
      %v900 = vpack.c.b16 %v668, %v666
      %v901 = vpack.c.b16 %v669, %v667
      %v902 = vpack.c.b16 %v672, %v670
      %v903 = vpack.c.b16 %v673, %v671
      %v904 = vpack.c.b16 %v676, %v674
      %v905 = vpack.c.b16 %v677, %v675
      %v906 = vpack.c.b16 %v680, %v678
      %v907 = vpack.c.b16 %v681, %v679
      %v908 = vpack.c.b16 %v684, %v682
      %v909 = vpack.c.b16 %v685, %v683
      %v910 = vpack.c.b16 %v688, %v686
      %v911 = vpack.c.b16 %v689, %v687
      %v912 = vpack.c.b16 %v692, %v690
      %v913 = vpack.c.b16 %v693, %v691
      %v914 = vpack.c.b16 %v696, %v694
      %v915 = vpack.c.b16 %v697, %v695
      %v916 = vpack.c.b16 %v700, %v698
      %v917 = vpack.c.b16 %v701, %v699
      %v918 = vpack.c.b16 %v704, %v702
      %v919 = vpack.c.b16 %v705, %v703
      %v920 = vpack.c.b16 %v708, %v706
      %v921 = vpack.c.b16 %v709, %v707
      %v922 = vpack.c.b16 %v712, %v710
      %v923 = vpack.c.b16 %v713, %v711
      %v924 = vpack.c.b16 %v716, %v714
      %v925 = vpack.c.b16 %v717, %v715
      %v926 = vpack.c.b16 %v720, %v718
      %v927 = vpack.c.b16 %v721, %v719
      %v928 = vpack.c.b16 %v724, %v722
      %v929 = vpack.c.b16 %v725, %v723
      %v930 = vpack.c.b16 %v728, %v726
      %v931 = vpack.c.b16 %v729, %v727
      %v932 = vpack.c.b16 %v732, %v730
      %v933 = vpack.c.b16 %v733, %v731
      %v934 = vpack.c.b16 %v736, %v734
      %v935 = vpack.c.b16 %v737, %v735
      %v936 = vpack.c.b16 %v740, %v738
      %v937 = vpack.c.b16 %v741, %v739
      %v938 = vpack.c.b16 %v744, %v742
      %v939 = vpack.c.b16 %v745, %v743
      %v940 = vpack.c.b16 %v748, %v746
      %v941 = vpack.c.b16 %v749, %v747
      %v942 = vpack.c.b16 %v752, %v750
      %v943 = vpack.c.b16 %v753, %v751
      %v944 = vpack.c.b16 %v756, %v754
      %v945 = vpack.c.b16 %v757, %v755
      %v946 = vpack.c.b16 %v760, %v758
      %v947 = vpack.c.b16 %v761, %v759
      %v948 = vpack.c.b16 %v764, %v762
      %v949 = vpack.c.b16 %v765, %v763
      %v950 = vpack.c.b16 %v768, %v766
      %v951 = vpack.c.b16 %v769, %v767
      %v952 = vpack.c.b16 %v772, %v770
      %v953 = vpack.c.b16 %v773, %v771
      %v954 = vpack.c.b16 %v776, %v774
      %v955 = vpack.c.b16 %v777, %v775
      %v956 = vpack.c.b16 %v780, %v778
      %v957 = vpack.c.b16 %v781, %v779
      %v958 = vpack.c.b16 %v784, %v782
      %v959 = vpack.c.b16 %v785, %v783
      %v960 = vpack.c.b16 %v788, %v786
      %v961 = vpack.c.b16 %v789, %v787
      %v962 = vpack.c.b16 %v792, %v790
      %v963 = vpack.c.b16 %v793, %v791
      %v964 = vpack.c.b16 %v796, %v794
      %v965 = vpack.c.b16 %v797, %v795
      %v966 = vpack.c.b16 %v800, %v798
      %v967 = vpack.c.b16 %v801, %v799
      %v968 = vpack.c.b16 %v804, %v802
      %v969 = vpack.c.b16 %v805, %v803
      %v970 = vpack.c.b16 %v808, %v806
      %v971 = vpack.c.b16 %v809, %v807
      %v972 = vpack.c.b16 %v812, %v810
      %v973 = vpack.c.b16 %v813, %v811
      %v974 = vpack.c.b16 %v816, %v814
      %v975 = vpack.c.b16 %v817, %v815
      %v976 = vpack.c.b16 %v820, %v818
      %v977 = vpack.c.b16 %v821, %v819
      %v978 = vpack.c.b16 %v824, %v822
      %v979 = vpack.c.b16 %v825, %v823
      %v980 = vpack.c.b16 %v828, %v826
      %v981 = vpack.c.b16 %v829, %v827
      %v982 = vpack.c.b16 %v832, %v830
      %v983 = vpack.c.b16 %v833, %v831
      %v984 = vpack.c.b16 %v836, %v834
      %v985 = vpack.c.b16 %v837, %v835
      %v986 = vpack.c.b16 %v840, %v838
      %v987 = vpack.c.b16 %v841, %v839
      %v988 = vpack.c.b16 %v844, %v842
      %v989 = vpack.c.b16 %v845, %v843
      %v990 = vpack.c.b16 %v848, %v846
      %v991 = vpack.c.b16 %v849, %v847
      %v992 = vpack.c.b16 %v852, %v850
      %v993 = vpack.c.b16 %v853, %v851
      %v994 = vpack.c.b16 %v856, %v854
      %v995 = vpack.c.b16 %v857, %v855
      %v996 = vpack.c.b16 %v860, %v858
      %v997 = vpack.c.b16 %v861, %v859
      %v998 = vpack.c.b16 %v864, %v862
      %v999 = vpack.c.b16 %v865, %v863
      %v1000 = vpack.c.b16 %v868, %v866
      %v1001 = vpack.c.b16 %v869, %v867
      %v1002 = vpack.c.b16 %v872, %v870
      %v1003 = vpack.c.b16 %v873, %v871
      %v1004 = vpack.c.b16 %v876, %v874
      %v1005 = vpack.c.b16 %v877, %v875
      %1134 = vmatprep.subr.bf16.mxu0 %v893
      %1135 = vmatpush1.bf16.msra.mxu0 %v892
      %1136 = vmatprep.subr.bf16.mxu0 %v891
      %1137 = vmatpush1.bf16.msra.mxu0 %v890
      %1138 = vmatprep.subr.bf16.mxu0 %v889
      %1139 = vmatpush1.bf16.msra.mxu0 %v888
      %1140 = vmatprep.subr.bf16.mxu0 %v887
      %1141 = vmatpush1.bf16.msra.mxu0 %v886
      %1142 = vmatprep.subr.bf16.mxu0 %v885
      %1143 = vmatpush1.bf16.msra.mxu0 %v884
      %1144 = vmatprep.subr.bf16.mxu0 %v883
      %1145 = vmatpush1.bf16.msra.mxu0 %v882
      %1146 = vmatprep.subr.bf16.mxu0 %v881
      %1147 = vmatpush1.bf16.msra.mxu0 %v880
      %1148 = vmatprep.subr.bf16.mxu0 %v879
      %1149 = vmatpush1.bf16.msra.mxu0 %v878
      %1150 = vmatprep.subr.bf16.mxu0 %v909
      %1151 = vmatpush2.bf16.msra.mxu0 %v908
      %1152 = vmatprep.subr.bf16.mxu0 %v907
      %1153 = vmatpush2.bf16.msra.mxu0 %v906
      %1154 = vmatprep.subr.bf16.mxu0 %v905
      %1155 = vmatpush2.bf16.msra.mxu0 %v904
      %1156 = vmatprep.subr.bf16.mxu0 %v903
      %1157 = vmatpush2.bf16.msra.mxu0 %v902
      %1158 = vmatprep.subr.bf16.mxu0 %v901
      %1159 = vmatpush2.bf16.msra.mxu0 %v900
      %1160 = vmatprep.subr.bf16.mxu0 %v899
      %1161 = vmatpush2.bf16.msra.mxu0 %v898
      %1162 = vmatprep.subr.bf16.mxu0 %v897
      %1163 = vmatpush2.bf16.msra.mxu0 %v896
      %1164 = vmatprep.subr.bf16.mxu0 %v895
      %1165 = vmatpush2.bf16.msra.mxu0 %v894
      %1166 = vmatprep.mubr.bf16.mxu0 %v479
      %1167 = vmatmul.mubr.bf16.gmra.mxu0 %v478
      %v1168 = vpop.f32.mrf.mxu0
      %v1169 = vadd.f32 %v459, %v1168
      %v1170 = vpop.f32.mrf.mxu0
      %v1171 = vadd.f32 %v463, %v1170
      %v1172 = vpop.f32.mrf.mxu0
      %v1173 = vpop.f32.mrf.mxu0
      %1174 = vdwg.mxu0
      %1175 = vmatprep.subr.bf16.mxu0 %v925
      %1176 = vmatpush1.bf16.msra.mxu0 %v924
      %1177 = vmatprep.subr.bf16.mxu0 %v923
      %1178 = vmatpush1.bf16.msra.mxu0 %v922
      %1179 = vmatprep.subr.bf16.mxu0 %v921
      %1180 = vmatpush1.bf16.msra.mxu0 %v920
      %1181 = vmatprep.subr.bf16.mxu0 %v919
      %1182 = vmatpush1.bf16.msra.mxu0 %v918
      %1183 = vmatprep.subr.bf16.mxu0 %v917
      %1184 = vmatpush1.bf16.msra.mxu0 %v916
      %1185 = vmatprep.subr.bf16.mxu0 %v915
      %1186 = vmatpush1.bf16.msra.mxu0 %v914
      %1187 = vmatprep.subr.bf16.mxu0 %v913
      %1188 = vmatpush1.bf16.msra.mxu0 %v912
      %1189 = vmatprep.subr.bf16.mxu0 %v911
      %1190 = vmatpush1.bf16.msra.mxu0 %v910
      %1191 = vmatprep.subr.bf16.mxu0 %v941
      %1192 = vmatpush2.bf16.msra.mxu0 %v940
      %1193 = vmatprep.subr.bf16.mxu0 %v939
      %1194 = vmatpush2.bf16.msra.mxu0 %v938
      %1195 = vmatprep.subr.bf16.mxu0 %v937
      %1196 = vmatpush2.bf16.msra.mxu0 %v936
      %1197 = vmatprep.subr.bf16.mxu0 %v935
      %1198 = vmatpush2.bf16.msra.mxu0 %v934
      %1199 = vmatprep.subr.bf16.mxu0 %v933
      %1200 = vmatpush2.bf16.msra.mxu0 %v932
      %1201 = vmatprep.subr.bf16.mxu0 %v931
      %1202 = vmatpush2.bf16.msra.mxu0 %v930
      %1203 = vmatprep.subr.bf16.mxu0 %v929
      %1204 = vmatpush2.bf16.msra.mxu0 %v928
      %1205 = vmatprep.subr.bf16.mxu0 %v927
      %1206 = vmatpush2.bf16.msra.mxu0 %v926
      %1207 = vmatprep.mubr.bf16.mxu0 %v481
      %1208 = vmatmul.mubr.bf16.gmra.mxu0 %v480
      %v1209 = vpop.f32.mrf.mxu0
      %v1210 = vadd.f32 %v1169, %v1209
      %v1211 = vpop.f32.mrf.mxu0
      %v1212 = vadd.f32 %v1171, %v1211
      %v1213 = vpop.f32.mrf.mxu0
      %v1214 = vpop.f32.mrf.mxu0
      %1215 = vdwg.mxu0
      %1216 = vmatprep.subr.bf16.mxu0 %v957
      %1217 = vmatpush1.bf16.msra.mxu0 %v956
      %1218 = vmatprep.subr.bf16.mxu0 %v955
      %1219 = vmatpush1.bf16.msra.mxu0 %v954
      %1220 = vmatprep.subr.bf16.mxu0 %v953
      %1221 = vmatpush1.bf16.msra.mxu0 %v952
      %1222 = vmatprep.subr.bf16.mxu0 %v951
      %1223 = vmatpush1.bf16.msra.mxu0 %v950
      %1224 = vmatprep.subr.bf16.mxu0 %v949
      %1225 = vmatpush1.bf16.msra.mxu0 %v948
      %1226 = vmatprep.subr.bf16.mxu0 %v947
      %1227 = vmatpush1.bf16.msra.mxu0 %v946
      %1228 = vmatprep.subr.bf16.mxu0 %v945
      %1229 = vmatpush1.bf16.msra.mxu0 %v944
      %1230 = vmatprep.subr.bf16.mxu0 %v943
      %1231 = vmatpush1.bf16.msra.mxu0 %v942
      %1232 = vmatprep.subr.bf16.mxu0 %v973
      %1233 = vmatpush2.bf16.msra.mxu0 %v972
      %1234 = vmatprep.subr.bf16.mxu0 %v971
      %1235 = vmatpush2.bf16.msra.mxu0 %v970
      %1236 = vmatprep.subr.bf16.mxu0 %v969
      %1237 = vmatpush2.bf16.msra.mxu0 %v968
      %1238 = vmatprep.subr.bf16.mxu0 %v967
      %1239 = vmatpush2.bf16.msra.mxu0 %v966
      %1240 = vmatprep.subr.bf16.mxu0 %v965
      %1241 = vmatpush2.bf16.msra.mxu0 %v964
      %1242 = vmatprep.subr.bf16.mxu0 %v963
      %1243 = vmatpush2.bf16.msra.mxu0 %v962
      %1244 = vmatprep.subr.bf16.mxu0 %v961
      %1245 = vmatpush2.bf16.msra.mxu0 %v960
      %1246 = vmatprep.subr.bf16.mxu0 %v959
      %1247 = vmatpush2.bf16.msra.mxu0 %v958
      %1248 = vmatprep.mubr.bf16.mxu0 %v483
      %1249 = vmatmul.mubr.bf16.gmra.mxu0 %v482
      %v1250 = vpop.f32.mrf.mxu0
      %v1251 = vadd.f32 %v1210, %v1250
      %v1252 = vpop.f32.mrf.mxu0
      %v1253 = vadd.f32 %v1212, %v1252
      %v1254 = vpop.f32.mrf.mxu0
      %v1255 = vpop.f32.mrf.mxu0
      %1256 = vdwg.mxu0
      %1257 = vmatprep.subr.bf16.mxu0 %v989
      %1258 = vmatpush1.bf16.msra.mxu0 %v988
      %1259 = vmatprep.subr.bf16.mxu0 %v987
      %1260 = vmatpush1.bf16.msra.mxu0 %v986
      %1261 = vmatprep.subr.bf16.mxu0 %v985
      %1262 = vmatpush1.bf16.msra.mxu0 %v984
      %1263 = vmatprep.subr.bf16.mxu0 %v983
      %1264 = vmatpush1.bf16.msra.mxu0 %v982
      %1265 = vmatprep.subr.bf16.mxu0 %v981
      %1266 = vmatpush1.bf16.msra.mxu0 %v980
      %1267 = vmatprep.subr.bf16.mxu0 %v979
      %1268 = vmatpush1.bf16.msra.mxu0 %v978
      %1269 = vmatprep.subr.bf16.mxu0 %v977
      %1270 = vmatpush1.bf16.msra.mxu0 %v976
      %1271 = vmatprep.subr.bf16.mxu0 %v975
      %1272 = vmatpush1.bf16.msra.mxu0 %v974
      %1273 = vmatprep.subr.bf16.mxu0 %v1005
      %1274 = vmatpush2.bf16.msra.mxu0 %v1004
      %1275 = vmatprep.subr.bf16.mxu0 %v1003
      %1276 = vmatpush2.bf16.msra.mxu0 %v1002
      %1277 = vmatprep.subr.bf16.mxu0 %v1001
      %1278 = vmatpush2.bf16.msra.mxu0 %v1000
      %1279 = vmatprep.subr.bf16.mxu0 %v999
      %1280 = vmatpush2.bf16.msra.mxu0 %v998
      %1281 = vmatprep.subr.bf16.mxu0 %v997
      %1282 = vmatpush2.bf16.msra.mxu0 %v996
      %1283 = vmatprep.subr.bf16.mxu0 %v995
      %1284 = vmatpush2.bf16.msra.mxu0 %v994
      %1285 = vmatprep.subr.bf16.mxu0 %v993
      %1286 = vmatpush2.bf16.msra.mxu0 %v992
      %1287 = vmatprep.subr.bf16.mxu0 %v991
      %1288 = vmatpush2.bf16.msra.mxu0 %v990
      %1289 = vmatprep.mubr.bf16.mxu0 %v485
      %1290 = vmatmul.mubr.bf16.gmra.mxu0 %v484
      %v1291 = vpop.f32.mrf.mxu0
      %v1292 = vadd.f32 %v1251, %v1291
      %v1293 = vpop.f32.mrf.mxu0
      %v1294 = vadd.f32 %v1253, %v1293
      %v1295 = vpop.f32.mrf.mxu0
      %v1296 = vpop.f32.mrf.mxu0
      %1297 = vdwg.mxu0
      %v1298 = vmul.f32 %v1292, 0.01
      %v1299 = vmul.f32 %v1294, 0.01
      %v1300 = vmax.f32 %v1292, %v1298
      %v1301 = vmax.f32 %v1294, %v1299
      %v1302 = vpack.c.bf16 %v1300, %v1300
      %v1303 = vpack.c.bf16 %v1301, %v1301
      %v1306 = vunpack.c.l.b16 %v1302
      %v1307 = vunpack.c.l.b16 %v1303
      %v1308 = vpack.c.b16 %v1307, %v1306
      %1310 = vst [vmem:[%s305] sm:$0xff] %v1308
      %v1311 = vrot.slane %v1300, 4
      %v1312 = vadd.f32 %v1300, %v1311
      %v1313 = vrot.slane %v1312, 2
      %v1314 = vadd.f32 %v1312, %v1313
      %v1315 = vrot.slane %v1314, 1
      %v1316 = vadd.f32 %v1314, %v1315
      %v1317 = vrot.slane %v1301, 4
      %v1318 = vadd.f32 %v1301, %v1317
      %v1319 = vrot.slane %v1318, 2
      %v1320 = vadd.f32 %v1318, %v1319
      %v1321 = vrot.slane %v1320, 1
      %v1322 = vadd.f32 %v1320, %v1321
      %v1325 = vcombine.low %v1316, %v1322
      %v1327 = vunpack.c.l.s4 1966171168
      %v1328 = vunpack.c.0.s8 %v1327
      %v1329 = vlaneseq
      %v1330 = vshrl.u32 %v1329, 7
      %v1331 = vsub.s32 %v1328, %v1330
      %v1332 = vrot.slane %v1325, %v1331
      %v1334 = vunpack.c.l.s4 1966171168
      %v1335 = vunpack.c.0.s8 %v1334
      %v1336 = vlaneseq
      %v1337 = vshrl.u32 %v1336, 7
      %v1338 = vsub.s32 %v1335, %v1337
      %v1339 = vrot.slane %v1332, %v1338
      %v1341 = vlaneseq
      %vm1342 = vcmp.ge.s32.totalorder %v1341, 0
      %vm1343 = vcmp.lt.s32.totalorder %v1341, 256
      %vm1344 = vmand %vm1342, %vm1343
      %1345 = vst.msk [vmem:[%s313] sm:$0x3] %vm1344, %v1339
      %v1346 = vmul.f32 %v1300, %v1300
      %v1347 = vmul.f32 %v1301, %v1301
      %v1348 = vrot.slane %v1346, 4
      %v1349 = vadd.f32 %v1346, %v1348
      %v1350 = vrot.slane %v1349, 2
      %v1351 = vadd.f32 %v1349, %v1350
      %v1352 = vrot.slane %v1351, 1
      %v1353 = vadd.f32 %v1351, %v1352
      %v1354 = vrot.slane %v1347, 4
      %v1355 = vadd.f32 %v1347, %v1354
      %v1356 = vrot.slane %v1355, 2
      %v1357 = vadd.f32 %v1355, %v1356
      %v1358 = vrot.slane %v1357, 1
      %v1359 = vadd.f32 %v1357, %v1358
      %v1362 = vcombine.low %v1353, %v1359
      %v1364 = vunpack.c.l.s4 1966171168
      %v1365 = vunpack.c.0.s8 %v1364
      %v1366 = vlaneseq
      %v1367 = vshrl.u32 %v1366, 7
      %v1368 = vsub.s32 %v1365, %v1367
      %v1369 = vrot.slane %v1362, %v1368
      %v1371 = vunpack.c.l.s4 1966171168
      %v1372 = vunpack.c.0.s8 %v1371
      %v1373 = vlaneseq
      %v1374 = vshrl.u32 %v1373, 7
      %v1375 = vsub.s32 %v1372, %v1374
      %v1376 = vrot.slane %v1369, %v1375
      %1378 = vst.msk [vmem:[%s321] sm:$0x3] %vm1344, %v1376
      %p1379 = scmp.lt.s32.totalorder %s21, 3
      %s1380 = scalar_select %p1379, %s21, 3
      %p1381 = scmp.lt.s32.totalorder %s22, 0
      %s1382 = scalar_select %p1381, %s22, 0
      %s1383 = smul.addr %s1382, 2
      %s1384 = smul.addr %s1380, 2
      %s1385 = sadd.s32 %s1383, %s1384
      %s1386 = smul.addr %s1385, 4
      %s1387 = scalar_lea.vmem %s3, %s1386
      %p1388 = scmp.lt.s32.totalorder %s21, 3
      %s1389 = scalar_select %p1388, %s21, 3
      %p1390 = scmp.lt.s32.totalorder %s22, 0
      %s1391 = scalar_select %p1390, %s22, 0
      %s1392 = smul.addr %s1391, 2
      %s1393 = smul.addr %s1389, 2
      %s1394 = sadd.s32 %s1392, %s1393
      %s1395 = scalar_lea.vmem %s4, %s1394
      %p1396 = scmp.lt.s32.totalorder %s21, 3
      %s1397 = scalar_select %p1396, %s21, 3
      %p1398 = scmp.lt.s32.totalorder %s22, 0
      %s1399 = scalar_select %p1398, %s22, 0
      %s1400 = smul.addr %s1399, 2
      %s1401 = smul.addr %s1397, 2
      %s1402 = sadd.s32 %s1400, %s1401
      %s1403 = scalar_lea.vmem %s5, %s1402
      // Predicated region
      $region33: #{featnet2d_forward.9} parent=31 // pred_check
        %p1404 = pneg %p124
      $region34: #{featnet2d_forward.9} parent=31 // pred_check_branch
        %1406 = sbr.rel (%p1404) target = $region36
      $region35: #{featnet2d_forward.9} parent=31 // pred_region
        _
      $region36: #{featnet2d_forward.9} parent=31 // pred_fallthru
        _
      // Predicated region
      $region37: #{featnet2d_forward.9} parent=31 // pred_check
        %p1407 = pneg %p152
      $region38: #{featnet2d_forward.9} parent=31 // pred_check_branch
        %1409 = sbr.rel (%p1407) target = $region40
      $region39: #{featnet2d_forward.9} parent=31 // pred_region
        _
      $region40: #{featnet2d_forward.9} parent=31 // pred_fallthru
        _
      // Predicated region
      $region41: #{featnet2d_forward.9} parent=31 // pred_check
        %p1410 = pneg %p180
      $region42: #{featnet2d_forward.9} parent=31 // pred_check_branch
        %1412 = sbr.rel (%p1410) target = $region44
      $region43: #{featnet2d_forward.9} parent=31 // pred_region
        _
      $region44: #{featnet2d_forward.9} parent=31 // pred_fallthru
        _
    $region32: #{featnet2d_forward.9} parent=5 // pred_fallthru
      _
    %p1413 = scmp.le.s32.totalorder 2, %s12
    // Predicated region
    $region45: #{featnet2d_forward.9} parent=5 // pred_check
      %p1414 = pneg %p1413
    $region46: #{featnet2d_forward.9} parent=5 // pred_check_branch
      %1416 = sbr.rel (%p1414) target = $region48
    $region47: #{featnet2d_forward.9} parent=5 // pred_region
      %s1417 = ssub.s32 %s12, 2
      // Predicated region
      $region49: #{featnet2d_forward.9} parent=47 // pred_check
        %p1418 = pneg %p130
      $region50: #{featnet2d_forward.9} parent=47 // pred_check_branch
        %1420 = sbr.rel (%p1418) target = $region52
      $region51: #{featnet2d_forward.9} parent=47 // pred_region
        %p1421 = scmp.lt.s32.totalorder %s23, 3
        %s1422 = scalar_select %p1421, %s23, 3
        %p1423 = scmp.lt.s32.totalorder %s24, 0
        %s1424 = scalar_select %p1423, %s24, 0
        %s1425 = smul.addr %s1424, 2
        %s1426 = smul.addr %s1422, 2
        %s1427 = sadd.s32 %s1425, %s1426
        %s1428 = smul.addr %s1427, 4
        %s1429 = scalar_lea.vmem %s3, %s1428
      $region52: #{featnet2d_forward.9} parent=47 // pred_fallthru
        _
      // Predicated region
      $region53: #{featnet2d_forward.9} parent=47 // pred_check
        %p1430 = pneg %p158
      $region54: #{featnet2d_forward.9} parent=47 // pred_check_branch
        %1432 = sbr.rel (%p1430) target = $region56
      $region55: #{featnet2d_forward.9} parent=47 // pred_region
        %p1433 = scmp.lt.s32.totalorder %s23, 3
        %s1434 = scalar_select %p1433, %s23, 3
        %p1435 = scmp.lt.s32.totalorder %s24, 0
        %s1436 = scalar_select %p1435, %s24, 0
        %s1437 = smul.addr %s1436, 2
        %s1438 = smul.addr %s1434, 2
        %s1439 = sadd.s32 %s1437, %s1438
        %s1440 = scalar_lea.vmem %s4, %s1439
      $region56: #{featnet2d_forward.9} parent=47 // pred_fallthru
        _
      // Predicated region
      $region57: #{featnet2d_forward.9} parent=47 // pred_check
        %p1441 = pneg %p186
      $region58: #{featnet2d_forward.9} parent=47 // pred_check_branch
        %1443 = sbr.rel (%p1441) target = $region60
      $region59: #{featnet2d_forward.9} parent=47 // pred_region
        %p1444 = scmp.lt.s32.totalorder %s23, 3
        %s1445 = scalar_select %p1444, %s23, 3
        %p1446 = scmp.lt.s32.totalorder %s24, 0
        %s1447 = scalar_select %p1446, %s24, 0
        %s1448 = smul.addr %s1447, 2
        %s1449 = smul.addr %s1445, 2
        %s1450 = sadd.s32 %s1448, %s1449
        %s1451 = scalar_lea.vmem %s5, %s1450
      $region60: #{featnet2d_forward.9} parent=47 // pred_fallthru
        _
    $region48: #{featnet2d_forward.9} parent=5 // pred_fallthru
      _
  $region6: #{featnet2d_forward.9} parent=0 // loop_footer
    %s16 = sadd.s32 1, %s12
  $region7: #{featnet2d_forward.9} parent=0 // loop_footer_branch
    %11 = sbr.rel target = $region3
  $region8: #{featnet2d_forward.9} parent=0 // loop_exit
    _

// kernel: featnet2d_forward.8
$region0: #{featnet2d_forward.8}
  #allocation0 [shape = 'u32[]', space=smem, size = 0x4, offset = 0x4, fixed_abs, tag = 'smem constant byte address 0x4 - core index']
  #allocation1 [shape = 'u32[144,128]{1,0:T(1,128)}', space=vmem, size = 0x12000, scoped, tag = 'internal scratch']
  %s0 = inlined_call_operand.vmem [shape: bf16[1,8,2048], index: 0, kind: input, shape index: {}]
  %s1 = inlined_call_operand.vmem [shape: bf16[1,2048,256], index: 1, kind: input, shape index: {}]
  %s2 = inlined_call_operand.vmem [shape: f32[1,256], index: 2, kind: input, shape index: {}]
  %s3 = inlined_call_operand.vmem [shape: bf16[1,8,256], index: 3, kind: output, shape index: {0}]
  %s4 = inlined_call_operand.vmem [shape: f32[1,1,1,256], index: 4, kind: output, shape index: {1}]
  %s5 = inlined_call_operand.vmem [shape: f32[1,1,1,256], index: 5, kind: output, shape index: {2}]
  %6 = xla_tuple %s3, %s4, %s5
  %s7 = sld [smem:[#allocation0]]
  $region38: #{featnet2d_forward.8} parent=0
    _
  %s9 = ssub.s32 1, %s7
  %s10 = scalar_select 0, %s9, %s7
  // Predicated region
  $region2: #{featnet2d_forward.8} parent=0 // pred_check
    _
  $region3: #{featnet2d_forward.8} parent=0 // pred_check_branch
    %12 = sbr.rel (0) target = $region5
  $region4: #{featnet2d_forward.8} parent=0 // pred_region
    _
  $region5: #{featnet2d_forward.8} parent=0 // pred_fallthru
    _
  // Predicated region
  $region6: #{featnet2d_forward.8} parent=0 // pred_check
    _
  $region7: #{featnet2d_forward.8} parent=0 // pred_check_branch
    %14 = sbr.rel (0) target = $region9
  $region8: #{featnet2d_forward.8} parent=0 // pred_region
    _
  $region9: #{featnet2d_forward.8} parent=0 // pred_fallthru
    _
  // Predicated region
  $region10: #{featnet2d_forward.8} parent=0 // pred_check
    _
  $region11: #{featnet2d_forward.8} parent=0 // pred_check_branch
    %16 = sbr.rel (0) target = $region13
  $region12: #{featnet2d_forward.8} parent=0 // pred_region
    _
  $region13: #{featnet2d_forward.8} parent=0 // pred_fallthru
    _
  %v17 = vld [vmem:[%s0] sm:$0xff]
  %v18 = vld [vmem:[%s0 + $0x8] sm:$0xff]
  %v19 = vld [vmem:[%s0 + $0x10] sm:$0xff]
  %v20 = vld [vmem:[%s0 + $0x18] sm:$0xff]
  %v21 = vld [vmem:[%s0 + $0x20] sm:$0xff]
  %v22 = vld [vmem:[%s0 + $0x28] sm:$0xff]
  %v23 = vld [vmem:[%s0 + $0x30] sm:$0xff]
  %v24 = vld [vmem:[%s0 + $0x38] sm:$0xff]
  %v25 = vld [vmem:[%s1] sm:$0xff]
  %v26 = vld [vmem:[%s1 + $0x8] sm:$0xff]
  %v27 = vld [vmem:[%s1 + $0x10] sm:$0xff]
  %v28 = vld [vmem:[%s1 + $0x18] sm:$0xff]
  %v29 = vld [vmem:[%s1 + $0x20] sm:$0xff]
  %v30 = vld [vmem:[%s1 + $0x28] sm:$0xff]
  %v31 = vld [vmem:[%s1 + $0x30] sm:$0xff]
  %v32 = vld [vmem:[%s1 + $0x38] sm:$0xff]
  %v33 = vld [vmem:[%s1 + $0x40] sm:$0xff]
  %v34 = vld [vmem:[%s1 + $0x48] sm:$0xff]
  %v35 = vld [vmem:[%s1 + $0x50] sm:$0xff]
  %v36 = vld [vmem:[%s1 + $0x58] sm:$0xff]
  %v37 = vld [vmem:[%s1 + $0x60] sm:$0xff]
  %v38 = vld [vmem:[%s1 + $0x68] sm:$0xff]
  %v39 = vld [vmem:[%s1 + $0x70] sm:$0xff]
  %v40 = vld [vmem:[%s1 + $0x78] sm:$0xff]
  %v41 = vld [vmem:[%s1 + $0x80] sm:$0xff]
  %v42 = vld [vmem:[%s1 + $0x88] sm:$0xff]
  %v43 = vld [vmem:[%s1 + $0x90] sm:$0xff]
  %v44 = vld [vmem:[%s1 + $0x98] sm:$0xff]
  %v45 = vld [vmem:[%s1 + $0xa0] sm:$0xff]
  %v46 = vld [vmem:[%s1 + $0xa8] sm:$0xff]
  %v47 = vld [vmem:[%s1 + $0xb0] sm:$0xff]
  %v48 = vld [vmem:[%s1 + $0xb8] sm:$0xff]
  %v49 = vld [vmem:[%s1 + $0xc0] sm:$0xff]
  %v50 = vld [vmem:[%s1 + $0xc8] sm:$0xff]
  %v51 = vld [vmem:[%s1 + $0xd0] sm:$0xff]
  %v52 = vld [vmem:[%s1 + $0xd8] sm:$0xff]
  %v53 = vld [vmem:[%s1 + $0xe0] sm:$0xff]
  %v54 = vld [vmem:[%s1 + $0xe8] sm:$0xff]
  %v55 = vld [vmem:[%s1 + $0xf0] sm:$0xff]
  %v56 = vld [vmem:[%s1 + $0xf8] sm:$0xff]
  %v57 = vld [vmem:[%s1 + $0x100] sm:$0xff]
  %v58 = vld [vmem:[%s1 + $0x108] sm:$0xff]
  %v59 = vld [vmem:[%s1 + $0x110] sm:$0xff]
  %v60 = vld [vmem:[%s1 + $0x118] sm:$0xff]
  %v61 = vld [vmem:[%s1 + $0x120] sm:$0xff]
  %v62 = vld [vmem:[%s1 + $0x128] sm:$0xff]
  %v63 = vld [vmem:[%s1 + $0x130] sm:$0xff]
  %v64 = vld [vmem:[%s1 + $0x138] sm:$0xff]
  %v65 = vld [vmem:[%s1 + $0x140] sm:$0xff]
  %v66 = vld [vmem:[%s1 + $0x148] sm:$0xff]
  %v67 = vld [vmem:[%s1 + $0x150] sm:$0xff]
  %v68 = vld [vmem:[%s1 + $0x158] sm:$0xff]
  %v69 = vld [vmem:[%s1 + $0x160] sm:$0xff]
  %v70 = vld [vmem:[%s1 + $0x168] sm:$0xff]
  %v71 = vld [vmem:[%s1 + $0x170] sm:$0xff]
  %v72 = vld [vmem:[%s1 + $0x178] sm:$0xff]
  %v73 = vld [vmem:[%s1 + $0x180] sm:$0xff]
  %v74 = vld [vmem:[%s1 + $0x188] sm:$0xff]
  %v75 = vld [vmem:[%s1 + $0x190] sm:$0xff]
  %v76 = vld [vmem:[%s1 + $0x198] sm:$0xff]
  %v77 = vld [vmem:[%s1 + $0x1a0] sm:$0xff]
  %v78 = vld [vmem:[%s1 + $0x1a8] sm:$0xff]
  %v79 = vld [vmem:[%s1 + $0x1b0] sm:$0xff]
  %v80 = vld [vmem:[%s1 + $0x1b8] sm:$0xff]
  %v81 = vld [vmem:[%s1 + $0x1c0] sm:$0xff]
  %v82 = vld [vmem:[%s1 + $0x1c8] sm:$0xff]
  %v83 = vld [vmem:[%s1 + $0x1d0] sm:$0xff]
  %v84 = vld [vmem:[%s1 + $0x1d8] sm:$0xff]
  %v85 = vld [vmem:[%s1 + $0x1e0] sm:$0xff]
  %v86 = vld [vmem:[%s1 + $0x1e8] sm:$0xff]
  %v87 = vld [vmem:[%s1 + $0x1f0] sm:$0xff]
  %v88 = vld [vmem:[%s1 + $0x1f8] sm:$0xff]
  %v89 = vld [vmem:[%s1 + $0x200] sm:$0xff]
  %v90 = vld [vmem:[%s1 + $0x208] sm:$0xff]
  %v91 = vld [vmem:[%s1 + $0x210] sm:$0xff]
  %v92 = vld [vmem:[%s1 + $0x218] sm:$0xff]
  %v93 = vld [vmem:[%s1 + $0x220] sm:$0xff]
  %v94 = vld [vmem:[%s1 + $0x228] sm:$0xff]
  %v95 = vld [vmem:[%s1 + $0x230] sm:$0xff]
  %v96 = vld [vmem:[%s1 + $0x238] sm:$0xff]
  %v97 = vld [vmem:[%s1 + $0x240] sm:$0xff]
  %v98 = vld [vmem:[%s1 + $0x248] sm:$0xff]
  %v99 = vld [vmem:[%s1 + $0x250] sm:$0xff]
  %v100 = vld [vmem:[%s1 + $0x258] sm:$0xff]
  %v101 = vld [vmem:[%s1 + $0x260] sm:$0xff]
  %v102 = vld [vmem:[%s1 + $0x268] sm:$0xff]
  %v103 = vld [vmem:[%s1 + $0x270] sm:$0xff]
  %v104 = vld [vmem:[%s1 + $0x278] sm:$0xff]
  %v105 = vld [vmem:[%s1 + $0x280] sm:$0xff]
  %v106 = vld [vmem:[%s1 + $0x288] sm:$0xff]
  %v107 = vld [vmem:[%s1 + $0x290] sm:$0xff]
  %v108 = vld [vmem:[%s1 + $0x298] sm:$0xff]
  %v109 = vld [vmem:[%s1 + $0x2a0] sm:$0xff]
  %v110 = vld [vmem:[%s1 + $0x2a8] sm:$0xff]
  %v111 = vld [vmem:[%s1 + $0x2b0] sm:$0xff]
  %v112 = vld [vmem:[%s1 + $0x2b8] sm:$0xff]
  %v113 = vld [vmem:[%s1 + $0x2c0] sm:$0xff]
  %v114 = vld [vmem:[%s1 + $0x2c8] sm:$0xff]
  %v115 = vld [vmem:[%s1 + $0x2d0] sm:$0xff]
  %v116 = vld [vmem:[%s1 + $0x2d8] sm:$0xff]
  %v117 = vld [vmem:[%s1 + $0x2e0] sm:$0xff]
  %v118 = vld [vmem:[%s1 + $0x2e8] sm:$0xff]
  %v119 = vld [vmem:[%s1 + $0x2f0] sm:$0xff]
  %v120 = vld [vmem:[%s1 + $0x2f8] sm:$0xff]
  %v121 = vld [vmem:[%s1 + $0x300] sm:$0xff]
  %v122 = vld [vmem:[%s1 + $0x308] sm:$0xff]
  %v123 = vld [vmem:[%s1 + $0x310] sm:$0xff]
  %v124 = vld [vmem:[%s1 + $0x318] sm:$0xff]
  %v125 = vld [vmem:[%s1 + $0x320] sm:$0xff]
  %v126 = vld [vmem:[%s1 + $0x328] sm:$0xff]
  %v127 = vld [vmem:[%s1 + $0x330] sm:$0xff]
  %v128 = vld [vmem:[%s1 + $0x338] sm:$0xff]
  %v129 = vld [vmem:[%s1 + $0x340] sm:$0xff]
  %v130 = vld [vmem:[%s1 + $0x348] sm:$0xff]
  %v131 = vld [vmem:[%s1 + $0x350] sm:$0xff]
  %v132 = vld [vmem:[%s1 + $0x358] sm:$0xff]
  %v133 = vld [vmem:[%s1 + $0x360] sm:$0xff]
  %v134 = vld [vmem:[%s1 + $0x368] sm:$0xff]
  %v135 = vld [vmem:[%s1 + $0x370] sm:$0xff]
  %v136 = vld [vmem:[%s1 + $0x378] sm:$0xff]
  %v137 = vld [vmem:[%s1 + $0x380] sm:$0xff]
  %v138 = vld [vmem:[%s1 + $0x388] sm:$0xff]
  %v139 = vld [vmem:[%s1 + $0x390] sm:$0xff]
  %v140 = vld [vmem:[%s1 + $0x398] sm:$0xff]
  %v141 = vld [vmem:[%s1 + $0x3a0] sm:$0xff]
  %v142 = vld [vmem:[%s1 + $0x3a8] sm:$0xff]
  %v143 = vld [vmem:[%s1 + $0x3b0] sm:$0xff]
  %v144 = vld [vmem:[%s1 + $0x3b8] sm:$0xff]
  %v145 = vld [vmem:[%s1 + $0x3c0] sm:$0xff]
  %v146 = vld [vmem:[%s1 + $0x3c8] sm:$0xff]
  %v147 = vld [vmem:[%s1 + $0x3d0] sm:$0xff]
  %v148 = vld [vmem:[%s1 + $0x3d8] sm:$0xff]
  %v149 = vld [vmem:[%s1 + $0x3e0] sm:$0xff]
  %v150 = vld [vmem:[%s1 + $0x3e8] sm:$0xff]
  %v151 = vld [vmem:[%s1 + $0x3f0] sm:$0xff]
  %v152 = vld [vmem:[%s1 + $0x3f8] sm:$0xff]
  %v153 = vld [vmem:[%s1 + $0x400] sm:$0xff]
  %v154 = vld [vmem:[%s1 + $0x408] sm:$0xff]
  %v155 = vld [vmem:[%s1 + $0x410] sm:$0xff]
  %v156 = vld [vmem:[%s1 + $0x418] sm:$0xff]
  %v157 = vld [vmem:[%s1 + $0x420] sm:$0xff]
  %v158 = vld [vmem:[%s1 + $0x428] sm:$0xff]
  %v159 = vld [vmem:[%s1 + $0x430] sm:$0xff]
  %v160 = vld [vmem:[%s1 + $0x438] sm:$0xff]
  %v161 = vld [vmem:[%s1 + $0x440] sm:$0xff]
  %v162 = vld [vmem:[%s1 + $0x448] sm:$0xff]
  %v163 = vld [vmem:[%s1 + $0x450] sm:$0xff]
  %v164 = vld [vmem:[%s1 + $0x458] sm:$0xff]
  %v165 = vld [vmem:[%s1 + $0x460] sm:$0xff]
  %v166 = vld [vmem:[%s1 + $0x468] sm:$0xff]
  %v167 = vld [vmem:[%s1 + $0x470] sm:$0xff]
  %v168 = vld [vmem:[%s1 + $0x478] sm:$0xff]
  %v169 = vld [vmem:[%s1 + $0x480] sm:$0xff]
  %v170 = vld [vmem:[%s1 + $0x488] sm:$0xff]
  %v171 = vld [vmem:[%s1 + $0x490] sm:$0xff]
  %v172 = vld [vmem:[%s1 + $0x498] sm:$0xff]
  %v173 = vld [vmem:[%s1 + $0x4a0] sm:$0xff]
  %v174 = vld [vmem:[%s1 + $0x4a8] sm:$0xff]
  %v175 = vld [vmem:[%s1 + $0x4b0] sm:$0xff]
  %v176 = vld [vmem:[%s1 + $0x4b8] sm:$0xff]
  %v177 = vld [vmem:[%s1 + $0x4c0] sm:$0xff]
  %v178 = vld [vmem:[%s1 + $0x4c8] sm:$0xff]
  %v179 = vld [vmem:[%s1 + $0x4d0] sm:$0xff]
  %v180 = vld [vmem:[%s1 + $0x4d8] sm:$0xff]
  %v181 = vld [vmem:[%s1 + $0x4e0] sm:$0xff]
  %v182 = vld [vmem:[%s1 + $0x4e8] sm:$0xff]
  %v183 = vld [vmem:[%s1 + $0x4f0] sm:$0xff]
  %v184 = vld [vmem:[%s1 + $0x4f8] sm:$0xff]
  %v185 = vld [vmem:[%s1 + $0x500] sm:$0xff]
  %v186 = vld [vmem:[%s1 + $0x508] sm:$0xff]
  %v187 = vld [vmem:[%s1 + $0x510] sm:$0xff]
  %v188 = vld [vmem:[%s1 + $0x518] sm:$0xff]
  %v189 = vld [vmem:[%s1 + $0x520] sm:$0xff]
  %v190 = vld [vmem:[%s1 + $0x528] sm:$0xff]
  %v191 = vld [vmem:[%s1 + $0x530] sm:$0xff]
  %v192 = vld [vmem:[%s1 + $0x538] sm:$0xff]
  %v193 = vld [vmem:[%s1 + $0x540] sm:$0xff]
  %v194 = vld [vmem:[%s1 + $0x548] sm:$0xff]
  %v195 = vld [vmem:[%s1 + $0x550] sm:$0xff]
  %v196 = vld [vmem:[%s1 + $0x558] sm:$0xff]
  %v197 = vld [vmem:[%s1 + $0x560] sm:$0xff]
  %v198 = vld [vmem:[%s1 + $0x568] sm:$0xff]
  %v199 = vld [vmem:[%s1 + $0x570] sm:$0xff]
  %v200 = vld [vmem:[%s1 + $0x578] sm:$0xff]
  %v201 = vld [vmem:[%s1 + $0x580] sm:$0xff]
  %v202 = vld [vmem:[%s1 + $0x588] sm:$0xff]
  %v203 = vld [vmem:[%s1 + $0x590] sm:$0xff]
  %v204 = vld [vmem:[%s1 + $0x598] sm:$0xff]
  %v205 = vld [vmem:[%s1 + $0x5a0] sm:$0xff]
  %v206 = vld [vmem:[%s1 + $0x5a8] sm:$0xff]
  %v207 = vld [vmem:[%s1 + $0x5b0] sm:$0xff]
  %v208 = vld [vmem:[%s1 + $0x5b8] sm:$0xff]
  %v209 = vld [vmem:[%s1 + $0x5c0] sm:$0xff]
  %v210 = vld [vmem:[%s1 + $0x5c8] sm:$0xff]
  %v211 = vld [vmem:[%s1 + $0x5d0] sm:$0xff]
  %v212 = vld [vmem:[%s1 + $0x5d8] sm:$0xff]
  %v213 = vld [vmem:[%s1 + $0x5e0] sm:$0xff]
  %v214 = vld [vmem:[%s1 + $0x5e8] sm:$0xff]
  %v215 = vld [vmem:[%s1 + $0x5f0] sm:$0xff]
  %v216 = vld [vmem:[%s1 + $0x5f8] sm:$0xff]
  %v217 = vld [vmem:[%s1 + $0x600] sm:$0xff]
  %v218 = vld [vmem:[%s1 + $0x608] sm:$0xff]
  %v219 = vld [vmem:[%s1 + $0x610] sm:$0xff]
  %v220 = vld [vmem:[%s1 + $0x618] sm:$0xff]
  %v221 = vld [vmem:[%s1 + $0x620] sm:$0xff]
  %v222 = vld [vmem:[%s1 + $0x628] sm:$0xff]
  %v223 = vld [vmem:[%s1 + $0x630] sm:$0xff]
  %v224 = vld [vmem:[%s1 + $0x638] sm:$0xff]
  %v225 = vld [vmem:[%s1 + $0x640] sm:$0xff]
  %v226 = vld [vmem:[%s1 + $0x648] sm:$0xff]
  %v227 = vld [vmem:[%s1 + $0x650] sm:$0xff]
  %v228 = vld [vmem:[%s1 + $0x658] sm:$0xff]
  %v229 = vld [vmem:[%s1 + $0x660] sm:$0xff]
  %v230 = vld [vmem:[%s1 + $0x668] sm:$0xff]
  %v231 = vld [vmem:[%s1 + $0x670] sm:$0xff]
  %v232 = vld [vmem:[%s1 + $0x678] sm:$0xff]
  %v233 = vld [vmem:[%s1 + $0x680] sm:$0xff]
  %v234 = vld [vmem:[%s1 + $0x688] sm:$0xff]
  %v235 = vld [vmem:[%s1 + $0x690] sm:$0xff]
  %v236 = vld [vmem:[%s1 + $0x698] sm:$0xff]
  %v237 = vld [vmem:[%s1 + $0x6a0] sm:$0xff]
  %v238 = vld [vmem:[%s1 + $0x6a8] sm:$0xff]
  %v239 = vld [vmem:[%s1 + $0x6b0] sm:$0xff]
  %v240 = vld [vmem:[%s1 + $0x6b8] sm:$0xff]
  %v241 = vld [vmem:[%s1 + $0x6c0] sm:$0xff]
  %v242 = vld [vmem:[%s1 + $0x6c8] sm:$0xff]
  %v243 = vld [vmem:[%s1 + $0x6d0] sm:$0xff]
  %v244 = vld [vmem:[%s1 + $0x6d8] sm:$0xff]
  %v245 = vld [vmem:[%s1 + $0x6e0] sm:$0xff]
  %v246 = vld [vmem:[%s1 + $0x6e8] sm:$0xff]
  %v247 = vld [vmem:[%s1 + $0x6f0] sm:$0xff]
  %v248 = vld [vmem:[%s1 + $0x6f8] sm:$0xff]
  %v249 = vld [vmem:[%s1 + $0x700] sm:$0xff]
  %v250 = vld [vmem:[%s1 + $0x708] sm:$0xff]
  %v251 = vld [vmem:[%s1 + $0x710] sm:$0xff]
  %v252 = vld [vmem:[%s1 + $0x718] sm:$0xff]
  %v253 = vld [vmem:[%s1 + $0x720] sm:$0xff]
  %v254 = vld [vmem:[%s1 + $0x728] sm:$0xff]
  %v255 = vld [vmem:[%s1 + $0x730] sm:$0xff]
  %v256 = vld [vmem:[%s1 + $0x738] sm:$0xff]
  %v257 = vld [vmem:[%s1 + $0x740] sm:$0xff]
  %v258 = vld [vmem:[%s1 + $0x748] sm:$0xff]
  %v259 = vld [vmem:[%s1 + $0x750] sm:$0xff]
  %v260 = vld [vmem:[%s1 + $0x758] sm:$0xff]
  %v261 = vld [vmem:[%s1 + $0x760] sm:$0xff]
  %v262 = vld [vmem:[%s1 + $0x768] sm:$0xff]
  %v263 = vld [vmem:[%s1 + $0x770] sm:$0xff]
  %v264 = vld [vmem:[%s1 + $0x778] sm:$0xff]
  %v265 = vld [vmem:[%s1 + $0x780] sm:$0xff]
  %v266 = vld [vmem:[%s1 + $0x788] sm:$0xff]
  %v267 = vld [vmem:[%s1 + $0x790] sm:$0xff]
  %v268 = vld [vmem:[%s1 + $0x798] sm:$0xff]
  %v269 = vld [vmem:[%s1 + $0x7a0] sm:$0xff]
  %v270 = vld [vmem:[%s1 + $0x7a8] sm:$0xff]
  %v271 = vld [vmem:[%s1 + $0x7b0] sm:$0xff]
  %v272 = vld [vmem:[%s1 + $0x7b8] sm:$0xff]
  %v273 = vld [vmem:[%s1 + $0x7c0] sm:$0xff]
  %v274 = vld [vmem:[%s1 + $0x7c8] sm:$0xff]
  %v275 = vld [vmem:[%s1 + $0x7d0] sm:$0xff]
  %v276 = vld [vmem:[%s1 + $0x7d8] sm:$0xff]
  %v277 = vld [vmem:[%s1 + $0x7e0] sm:$0xff]
  %v278 = vld [vmem:[%s1 + $0x7e8] sm:$0xff]
  %v279 = vld [vmem:[%s1 + $0x7f0] sm:$0xff]
  %v280 = vld [vmem:[%s1 + $0x7f8] sm:$0xff]
  %v281 = vld [vmem:[%s2] sm:$0x3]
  %v283 = vlaneseq
  %v284 = vshrl.u32 %v283, 7
  %v285 = vsub.s32 0, %v284
  %v286 = vrot.slane %v281, %v285
  %v287 = vlaneseq
  %v288 = vshrl.u32 %v287, 7
  %v289 = vsub.s32 1, %v288
  %v290 = vrot.slane %v281, %v289
  %v301 = vunpack.c.l.b16 %v17
  %v302 = vunpack.c.h.b16 %v17
  %v303 = vunpack.c.l.b16 %v18
  %v304 = vunpack.c.h.b16 %v18
  %v305 = vunpack.c.l.b16 %v19
  %v306 = vunpack.c.h.b16 %v19
  %v307 = vunpack.c.l.b16 %v20
  %v308 = vunpack.c.h.b16 %v20
  %v309 = vunpack.c.l.b16 %v21
  %v310 = vunpack.c.h.b16 %v21
  %v311 = vunpack.c.l.b16 %v22
  %v312 = vunpack.c.h.b16 %v22
  %v313 = vunpack.c.l.b16 %v23
  %v314 = vunpack.c.h.b16 %v23
  %v315 = vunpack.c.l.b16 %v24
  %v316 = vunpack.c.h.b16 %v24
  %v317 = vpack.c.b16 %v301, %v301
  %v318 = vpack.c.b16 %v302, %v302
  %v319 = vpack.c.b16 %v303, %v303
  %v320 = vpack.c.b16 %v304, %v304
  %v321 = vpack.c.b16 %v305, %v305
  %v322 = vpack.c.b16 %v306, %v306
  %v323 = vpack.c.b16 %v307, %v307
  %v324 = vpack.c.b16 %v308, %v308
  %v325 = vpack.c.b16 %v309, %v309
  %v326 = vpack.c.b16 %v310, %v310
  %v327 = vpack.c.b16 %v311, %v311
  %v328 = vpack.c.b16 %v312, %v312
  %v329 = vpack.c.b16 %v313, %v313
  %v330 = vpack.c.b16 %v314, %v314
  %v331 = vpack.c.b16 %v315, %v315
  %v332 = vpack.c.b16 %v316, %v316
  %v605 = vunpack.c.l.b16 %v25
  %v606 = vunpack.c.h.b16 %v25
  %v607 = vunpack.c.l.b16 %v26
  %v608 = vunpack.c.h.b16 %v26
  %v609 = vunpack.c.l.b16 %v27
  %v610 = vunpack.c.h.b16 %v27
  %v611 = vunpack.c.l.b16 %v28
  %v612 = vunpack.c.h.b16 %v28
  %v613 = vunpack.c.l.b16 %v29
  %v614 = vunpack.c.h.b16 %v29
  %v615 = vunpack.c.l.b16 %v30
  %v616 = vunpack.c.h.b16 %v30
  %v617 = vunpack.c.l.b16 %v31
  %v618 = vunpack.c.h.b16 %v31
  %v619 = vunpack.c.l.b16 %v32
  %v620 = vunpack.c.h.b16 %v32
  %v621 = vunpack.c.l.b16 %v33
  %v622 = vunpack.c.h.b16 %v33
  %v623 = vunpack.c.l.b16 %v34
  %v624 = vunpack.c.h.b16 %v34
  %v625 = vunpack.c.l.b16 %v35
  %v626 = vunpack.c.h.b16 %v35
  %v627 = vunpack.c.l.b16 %v36
  %v628 = vunpack.c.h.b16 %v36
  %v629 = vunpack.c.l.b16 %v37
  %v630 = vunpack.c.h.b16 %v37
  %v631 = vunpack.c.l.b16 %v38
  %v632 = vunpack.c.h.b16 %v38
  %v633 = vunpack.c.l.b16 %v39
  %v634 = vunpack.c.h.b16 %v39
  %v635 = vunpack.c.l.b16 %v40
  %v636 = vunpack.c.h.b16 %v40
  %v637 = vunpack.c.l.b16 %v41
  %v638 = vunpack.c.h.b16 %v41
  %v639 = vunpack.c.l.b16 %v42
  %v640 = vunpack.c.h.b16 %v42
  %v641 = vunpack.c.l.b16 %v43
  %v642 = vunpack.c.h.b16 %v43
  %v643 = vunpack.c.l.b16 %v44
  %v644 = vunpack.c.h.b16 %v44
  %v645 = vunpack.c.l.b16 %v45
  %v646 = vunpack.c.h.b16 %v45
  %v647 = vunpack.c.l.b16 %v46
  %v648 = vunpack.c.h.b16 %v46
  %v649 = vunpack.c.l.b16 %v47
  %v650 = vunpack.c.h.b16 %v47
  %v651 = vunpack.c.l.b16 %v48
  %v652 = vunpack.c.h.b16 %v48
  %v653 = vunpack.c.l.b16 %v49
  %v654 = vunpack.c.h.b16 %v49
  %v655 = vunpack.c.l.b16 %v50
  %v656 = vunpack.c.h.b16 %v50
  %v657 = vunpack.c.l.b16 %v51
  %v658 = vunpack.c.h.b16 %v51
  %v659 = vunpack.c.l.b16 %v52
  %v660 = vunpack.c.h.b16 %v52
  %v661 = vunpack.c.l.b16 %v53
  %v662 = vunpack.c.h.b16 %v53
  %v663 = vunpack.c.l.b16 %v54
  %v664 = vunpack.c.h.b16 %v54
  %v665 = vunpack.c.l.b16 %v55
  %v666 = vunpack.c.h.b16 %v55
  %v667 = vunpack.c.l.b16 %v56
  %v668 = vunpack.c.h.b16 %v56
  %v669 = vunpack.c.l.b16 %v57
  %v670 = vunpack.c.h.b16 %v57
  %v671 = vunpack.c.l.b16 %v58
  %v672 = vunpack.c.h.b16 %v58
  %v673 = vunpack.c.l.b16 %v59
  %v674 = vunpack.c.h.b16 %v59
  %v675 = vunpack.c.l.b16 %v60
  %v676 = vunpack.c.h.b16 %v60
  %v677 = vunpack.c.l.b16 %v61
  %v678 = vunpack.c.h.b16 %v61
  %v679 = vunpack.c.l.b16 %v62
  %v680 = vunpack.c.h.b16 %v62
  %v681 = vunpack.c.l.b16 %v63
  %v682 = vunpack.c.h.b16 %v63
  %v683 = vunpack.c.l.b16 %v64
  %v684 = vunpack.c.h.b16 %v64
  %v685 = vunpack.c.l.b16 %v65
  %v686 = vunpack.c.h.b16 %v65
  %v687 = vunpack.c.l.b16 %v66
  %v688 = vunpack.c.h.b16 %v66
  %v689 = vunpack.c.l.b16 %v67
  %v690 = vunpack.c.h.b16 %v67
  %v691 = vunpack.c.l.b16 %v68
  %v692 = vunpack.c.h.b16 %v68
  %v693 = vunpack.c.l.b16 %v69
  %v694 = vunpack.c.h.b16 %v69
  %v695 = vunpack.c.l.b16 %v70
  %v696 = vunpack.c.h.b16 %v70
  %v697 = vunpack.c.l.b16 %v71
  %v698 = vunpack.c.h.b16 %v71
  %v699 = vunpack.c.l.b16 %v72
  %v700 = vunpack.c.h.b16 %v72
  %v701 = vunpack.c.l.b16 %v73
  %v702 = vunpack.c.h.b16 %v73
  %v703 = vunpack.c.l.b16 %v74
  %v704 = vunpack.c.h.b16 %v74
  %v705 = vunpack.c.l.b16 %v75
  %v706 = vunpack.c.h.b16 %v75
  %v707 = vunpack.c.l.b16 %v76
  %v708 = vunpack.c.h.b16 %v76
  %v709 = vunpack.c.l.b16 %v77
  %v710 = vunpack.c.h.b16 %v77
  %v711 = vunpack.c.l.b16 %v78
  %v712 = vunpack.c.h.b16 %v78
  %v713 = vunpack.c.l.b16 %v79
  %v714 = vunpack.c.h.b16 %v79
  %v715 = vunpack.c.l.b16 %v80
  %v716 = vunpack.c.h.b16 %v80
  %v717 = vunpack.c.l.b16 %v81
  %v718 = vunpack.c.h.b16 %v81
  %v719 = vunpack.c.l.b16 %v82
  %v720 = vunpack.c.h.b16 %v82
  %v721 = vunpack.c.l.b16 %v83
  %v722 = vunpack.c.h.b16 %v83
  %v723 = vunpack.c.l.b16 %v84
  %v724 = vunpack.c.h.b16 %v84
  %v725 = vunpack.c.l.b16 %v85
  %v726 = vunpack.c.h.b16 %v85
  %v727 = vunpack.c.l.b16 %v86
  %v728 = vunpack.c.h.b16 %v86
  %v729 = vunpack.c.l.b16 %v87
  %v730 = vunpack.c.h.b16 %v87
  %v731 = vunpack.c.l.b16 %v88
  %v732 = vunpack.c.h.b16 %v88
  %v733 = vunpack.c.l.b16 %v89
  %v734 = vunpack.c.h.b16 %v89
  %v735 = vunpack.c.l.b16 %v90
  %v736 = vunpack.c.h.b16 %v90
  %v737 = vunpack.c.l.b16 %v91
  %v738 = vunpack.c.h.b16 %v91
  %v739 = vunpack.c.l.b16 %v92
  %v740 = vunpack.c.h.b16 %v92
  %v741 = vunpack.c.l.b16 %v93
  %v742 = vunpack.c.h.b16 %v93
  %v743 = vunpack.c.l.b16 %v94
  %v744 = vunpack.c.h.b16 %v94
  %v745 = vunpack.c.l.b16 %v95
  %v746 = vunpack.c.h.b16 %v95
  %v747 = vunpack.c.l.b16 %v96
  %v748 = vunpack.c.h.b16 %v96
  %v749 = vunpack.c.l.b16 %v97
  %v750 = vunpack.c.h.b16 %v97
  %v751 = vunpack.c.l.b16 %v98
  %v752 = vunpack.c.h.b16 %v98
  %v753 = vunpack.c.l.b16 %v99
  %v754 = vunpack.c.h.b16 %v99
  %v755 = vunpack.c.l.b16 %v100
  %v756 = vunpack.c.h.b16 %v100
  %v757 = vunpack.c.l.b16 %v101
  %v758 = vunpack.c.h.b16 %v101
  %v759 = vunpack.c.l.b16 %v102
  %v760 = vunpack.c.h.b16 %v102
  %v761 = vunpack.c.l.b16 %v103
  %v762 = vunpack.c.h.b16 %v103
  %v763 = vunpack.c.l.b16 %v104
  %v764 = vunpack.c.h.b16 %v104
  %v765 = vunpack.c.l.b16 %v105
  %v766 = vunpack.c.h.b16 %v105
  %v767 = vunpack.c.l.b16 %v106
  %v768 = vunpack.c.h.b16 %v106
  %v769 = vunpack.c.l.b16 %v107
  %v770 = vunpack.c.h.b16 %v107
  %v771 = vunpack.c.l.b16 %v108
  %v772 = vunpack.c.h.b16 %v108
  %v773 = vunpack.c.l.b16 %v109
  %v774 = vunpack.c.h.b16 %v109
  %v775 = vunpack.c.l.b16 %v110
  %v776 = vunpack.c.h.b16 %v110
  %v777 = vunpack.c.l.b16 %v111
  %v778 = vunpack.c.h.b16 %v111
  %v779 = vunpack.c.l.b16 %v112
  %v780 = vunpack.c.h.b16 %v112
  %v781 = vunpack.c.l.b16 %v113
  %v782 = vunpack.c.h.b16 %v113
  %v783 = vunpack.c.l.b16 %v114
  %v784 = vunpack.c.h.b16 %v114
  %v785 = vunpack.c.l.b16 %v115
  %v786 = vunpack.c.h.b16 %v115
  %v787 = vunpack.c.l.b16 %v116
  %v788 = vunpack.c.h.b16 %v116
  %v789 = vunpack.c.l.b16 %v117
  %v790 = vunpack.c.h.b16 %v117
  %v791 = vunpack.c.l.b16 %v118
  %v792 = vunpack.c.h.b16 %v118
  %v793 = vunpack.c.l.b16 %v119
  %v794 = vunpack.c.h.b16 %v119
  %v795 = vunpack.c.l.b16 %v120
  %v796 = vunpack.c.h.b16 %v120
  %v797 = vunpack.c.l.b16 %v121
  %v798 = vunpack.c.h.b16 %v121
  %v799 = vunpack.c.l.b16 %v122
  %v800 = vunpack.c.h.b16 %v122
  %v801 = vunpack.c.l.b16 %v123
  %v802 = vunpack.c.h.b16 %v123
  %v803 = vunpack.c.l.b16 %v124
  %v804 = vunpack.c.h.b16 %v124
  %v805 = vunpack.c.l.b16 %v125
  %v806 = vunpack.c.h.b16 %v125
  %v807 = vunpack.c.l.b16 %v126
  %v808 = vunpack.c.h.b16 %v126
  %v809 = vunpack.c.l.b16 %v127
  %v810 = vunpack.c.h.b16 %v127
  %v811 = vunpack.c.l.b16 %v128
  %v812 = vunpack.c.h.b16 %v128
  %v813 = vunpack.c.l.b16 %v129
  %v814 = vunpack.c.h.b16 %v129
  %v815 = vunpack.c.l.b16 %v130
  %v816 = vunpack.c.h.b16 %v130
  %v817 = vunpack.c.l.b16 %v131
  %v818 = vunpack.c.h.b16 %v131
  %v819 = vunpack.c.l.b16 %v132
  %v820 = vunpack.c.h.b16 %v132
  %v821 = vunpack.c.l.b16 %v133
  %v822 = vunpack.c.h.b16 %v133
  %v823 = vunpack.c.l.b16 %v134
  %v824 = vunpack.c.h.b16 %v134
  %v825 = vunpack.c.l.b16 %v135
  %v826 = vunpack.c.h.b16 %v135
  %v827 = vunpack.c.l.b16 %v136
  %v828 = vunpack.c.h.b16 %v136
  %v829 = vunpack.c.l.b16 %v137
  %v830 = vunpack.c.h.b16 %v137
  %v831 = vunpack.c.l.b16 %v138
  %v832 = vunpack.c.h.b16 %v138
  %v833 = vunpack.c.l.b16 %v139
  %v834 = vunpack.c.h.b16 %v139
  %v835 = vunpack.c.l.b16 %v140
  %v836 = vunpack.c.h.b16 %v140
  %v837 = vunpack.c.l.b16 %v141
  %v838 = vunpack.c.h.b16 %v141
  %v839 = vunpack.c.l.b16 %v142
  %v840 = vunpack.c.h.b16 %v142
  %v841 = vunpack.c.l.b16 %v143
  %v842 = vunpack.c.h.b16 %v143
  %v843 = vunpack.c.l.b16 %v144
  %v844 = vunpack.c.h.b16 %v144
  %v845 = vunpack.c.l.b16 %v145
  %v846 = vunpack.c.h.b16 %v145
  %v847 = vunpack.c.l.b16 %v146
  %v848 = vunpack.c.h.b16 %v146
  %v849 = vunpack.c.l.b16 %v147
  %v850 = vunpack.c.h.b16 %v147
  %v851 = vunpack.c.l.b16 %v148
  %v852 = vunpack.c.h.b16 %v148
  %v853 = vunpack.c.l.b16 %v149
  %v854 = vunpack.c.h.b16 %v149
  %v855 = vunpack.c.l.b16 %v150
  %v856 = vunpack.c.h.b16 %v150
  %v857 = vunpack.c.l.b16 %v151
  %v858 = vunpack.c.h.b16 %v151
  %v859 = vunpack.c.l.b16 %v152
  %v860 = vunpack.c.h.b16 %v152
  %v861 = vunpack.c.l.b16 %v153
  %v862 = vunpack.c.h.b16 %v153
  %v863 = vunpack.c.l.b16 %v154
  %v864 = vunpack.c.h.b16 %v154
  %v865 = vunpack.c.l.b16 %v155
  %v866 = vunpack.c.h.b16 %v155
  %v867 = vunpack.c.l.b16 %v156
  %v868 = vunpack.c.h.b16 %v156
  %v869 = vunpack.c.l.b16 %v157
  %v870 = vunpack.c.h.b16 %v157
  %v871 = vunpack.c.l.b16 %v158
  %v872 = vunpack.c.h.b16 %v158
  %v873 = vunpack.c.l.b16 %v159
  %v874 = vunpack.c.h.b16 %v159
  %v875 = vunpack.c.l.b16 %v160
  %v876 = vunpack.c.h.b16 %v160
  %v877 = vunpack.c.l.b16 %v161
  %v878 = vunpack.c.h.b16 %v161
  %v879 = vunpack.c.l.b16 %v162
  %v880 = vunpack.c.h.b16 %v162
  %v881 = vunpack.c.l.b16 %v163
  %v882 = vunpack.c.h.b16 %v163
  %v883 = vunpack.c.l.b16 %v164
  %v884 = vunpack.c.h.b16 %v164
  %v885 = vunpack.c.l.b16 %v165
  %v886 = vunpack.c.h.b16 %v165
  %v887 = vunpack.c.l.b16 %v166
  %v888 = vunpack.c.h.b16 %v166
  %v889 = vunpack.c.l.b16 %v167
  %v890 = vunpack.c.h.b16 %v167
  %v891 = vunpack.c.l.b16 %v168
  %v892 = vunpack.c.h.b16 %v168
  %v893 = vunpack.c.l.b16 %v169
  %v894 = vunpack.c.h.b16 %v169
  %v895 = vunpack.c.l.b16 %v170
  %v896 = vunpack.c.h.b16 %v170
  %v897 = vunpack.c.l.b16 %v171
  %v898 = vunpack.c.h.b16 %v171
  %v899 = vunpack.c.l.b16 %v172
  %v900 = vunpack.c.h.b16 %v172
  %v901 = vunpack.c.l.b16 %v173
  %v902 = vunpack.c.h.b16 %v173
  %v903 = vunpack.c.l.b16 %v174
  %v904 = vunpack.c.h.b16 %v174
  %v905 = vunpack.c.l.b16 %v175
  %v906 = vunpack.c.h.b16 %v175
  %v907 = vunpack.c.l.b16 %v176
  %v908 = vunpack.c.h.b16 %v176
  %v909 = vunpack.c.l.b16 %v177
  %v910 = vunpack.c.h.b16 %v177
  %v911 = vunpack.c.l.b16 %v178
  %v912 = vunpack.c.h.b16 %v178
  %v913 = vunpack.c.l.b16 %v179
  %v914 = vunpack.c.h.b16 %v179
  %v915 = vunpack.c.l.b16 %v180
  %v916 = vunpack.c.h.b16 %v180
  %v917 = vunpack.c.l.b16 %v181
  %v918 = vunpack.c.h.b16 %v181
  %v919 = vunpack.c.l.b16 %v182
  %v920 = vunpack.c.h.b16 %v182
  %v921 = vunpack.c.l.b16 %v183
  %v922 = vunpack.c.h.b16 %v183
  %v923 = vunpack.c.l.b16 %v184
  %v924 = vunpack.c.h.b16 %v184
  %v925 = vunpack.c.l.b16 %v185
  %v926 = vunpack.c.h.b16 %v185
  %v927 = vunpack.c.l.b16 %v186
  %v928 = vunpack.c.h.b16 %v186
  %v929 = vunpack.c.l.b16 %v187
  %v930 = vunpack.c.h.b16 %v187
  %v931 = vunpack.c.l.b16 %v188
  %v932 = vunpack.c.h.b16 %v188
  %v933 = vunpack.c.l.b16 %v189
  %v934 = vunpack.c.h.b16 %v189
  %v935 = vunpack.c.l.b16 %v190
  %v936 = vunpack.c.h.b16 %v190
  %v937 = vunpack.c.l.b16 %v191
  %v938 = vunpack.c.h.b16 %v191
  %v939 = vunpack.c.l.b16 %v192
  %v940 = vunpack.c.h.b16 %v192
  %v941 = vunpack.c.l.b16 %v193
  %v942 = vunpack.c.h.b16 %v193
  %v943 = vunpack.c.l.b16 %v194
  %v944 = vunpack.c.h.b16 %v194
  %v945 = vunpack.c.l.b16 %v195
  %v946 = vunpack.c.h.b16 %v195
  %v947 = vunpack.c.l.b16 %v196
  %v948 = vunpack.c.h.b16 %v196
  %v949 = vunpack.c.l.b16 %v197
  %v950 = vunpack.c.h.b16 %v197
  %v951 = vunpack.c.l.b16 %v198
  %v952 = vunpack.c.h.b16 %v198
  %v953 = vunpack.c.l.b16 %v199
  %v954 = vunpack.c.h.b16 %v199
  %v955 = vunpack.c.l.b16 %v200
  %v956 = vunpack.c.h.b16 %v200
  %v957 = vunpack.c.l.b16 %v201
  %v958 = vunpack.c.h.b16 %v201
  %v959 = vunpack.c.l.b16 %v202
  %v960 = vunpack.c.h.b16 %v202
  %v961 = vunpack.c.l.b16 %v203
  %v962 = vunpack.c.h.b16 %v203
  %v963 = vunpack.c.l.b16 %v204
  %v964 = vunpack.c.h.b16 %v204
  %v965 = vunpack.c.l.b16 %v205
  %v966 = vunpack.c.h.b16 %v205
  %v967 = vunpack.c.l.b16 %v206
  %v968 = vunpack.c.h.b16 %v206
  %v969 = vunpack.c.l.b16 %v207
  %v970 = vunpack.c.h.b16 %v207
  %v971 = vunpack.c.l.b16 %v208
  %v972 = vunpack.c.h.b16 %v208
  %v973 = vunpack.c.l.b16 %v209
  %v974 = vunpack.c.h.b16 %v209
  %v975 = vunpack.c.l.b16 %v210
  %v976 = vunpack.c.h.b16 %v210
  %v977 = vunpack.c.l.b16 %v211
  %v978 = vunpack.c.h.b16 %v211
  %v979 = vunpack.c.l.b16 %v212
  %v980 = vunpack.c.h.b16 %v212
  %v981 = vunpack.c.l.b16 %v213
  %v982 = vunpack.c.h.b16 %v213
  %v983 = vunpack.c.l.b16 %v214
  %v984 = vunpack.c.h.b16 %v214
  %v985 = vunpack.c.l.b16 %v215
  %v986 = vunpack.c.h.b16 %v215
  %v987 = vunpack.c.l.b16 %v216
  %v988 = vunpack.c.h.b16 %v216
  %v989 = vunpack.c.l.b16 %v217
  %v990 = vunpack.c.h.b16 %v217
  %v991 = vunpack.c.l.b16 %v218
  %v992 = vunpack.c.h.b16 %v218
  %v993 = vunpack.c.l.b16 %v219
  %v994 = vunpack.c.h.b16 %v219
  %v995 = vunpack.c.l.b16 %v220
  %v996 = vunpack.c.h.b16 %v220
  %v997 = vunpack.c.l.b16 %v221
  %v998 = vunpack.c.h.b16 %v221
  %v999 = vunpack.c.l.b16 %v222
  %v1000 = vunpack.c.h.b16 %v222
  %v1001 = vunpack.c.l.b16 %v223
  %v1002 = vunpack.c.h.b16 %v223
  %v1003 = vunpack.c.l.b16 %v224
  %v1004 = vunpack.c.h.b16 %v224
  %v1005 = vunpack.c.l.b16 %v225
  %v1006 = vunpack.c.h.b16 %v225
  %v1007 = vunpack.c.l.b16 %v226
  %v1008 = vunpack.c.h.b16 %v226
  %v1009 = vunpack.c.l.b16 %v227
  %v1010 = vunpack.c.h.b16 %v227
  %v1011 = vunpack.c.l.b16 %v228
  %v1012 = vunpack.c.h.b16 %v228
  %v1013 = vunpack.c.l.b16 %v229
  %v1014 = vunpack.c.h.b16 %v229
  %v1015 = vunpack.c.l.b16 %v230
  %v1016 = vunpack.c.h.b16 %v230
  %v1017 = vunpack.c.l.b16 %v231
  %v1018 = vunpack.c.h.b16 %v231
  %v1019 = vunpack.c.l.b16 %v232
  %v1020 = vunpack.c.h.b16 %v232
  %v1021 = vunpack.c.l.b16 %v233
  %v1022 = vunpack.c.h.b16 %v233
  %v1023 = vunpack.c.l.b16 %v234
  %v1024 = vunpack.c.h.b16 %v234
  %v1025 = vunpack.c.l.b16 %v235
  %v1026 = vunpack.c.h.b16 %v235
  %v1027 = vunpack.c.l.b16 %v236
  %v1028 = vunpack.c.h.b16 %v236
  %v1029 = vunpack.c.l.b16 %v237
  %v1030 = vunpack.c.h.b16 %v237
  %v1031 = vunpack.c.l.b16 %v238
  %v1032 = vunpack.c.h.b16 %v238
  %v1033 = vunpack.c.l.b16 %v239
  %v1034 = vunpack.c.h.b16 %v239
  %v1035 = vunpack.c.l.b16 %v240
  %v1036 = vunpack.c.h.b16 %v240
  %v1037 = vunpack.c.l.b16 %v241
  %v1038 = vunpack.c.h.b16 %v241
  %v1039 = vunpack.c.l.b16 %v242
  %v1040 = vunpack.c.h.b16 %v242
  %v1041 = vunpack.c.l.b16 %v243
  %v1042 = vunpack.c.h.b16 %v243
  %v1043 = vunpack.c.l.b16 %v244
  %v1044 = vunpack.c.h.b16 %v244
  %v1045 = vunpack.c.l.b16 %v245
  %v1046 = vunpack.c.h.b16 %v245
  %v1047 = vunpack.c.l.b16 %v246
  %v1048 = vunpack.c.h.b16 %v246
  %v1049 = vunpack.c.l.b16 %v247
  %v1050 = vunpack.c.h.b16 %v247
  %v1051 = vunpack.c.l.b16 %v248
  %v1052 = vunpack.c.h.b16 %v248
  %v1053 = vunpack.c.l.b16 %v249
  %v1054 = vunpack.c.h.b16 %v249
  %v1055 = vunpack.c.l.b16 %v250
  %v1056 = vunpack.c.h.b16 %v250
  %v1057 = vunpack.c.l.b16 %v251
  %v1058 = vunpack.c.h.b16 %v251
  %v1059 = vunpack.c.l.b16 %v252
  %v1060 = vunpack.c.h.b16 %v252
  %v1061 = vunpack.c.l.b16 %v253
  %v1062 = vunpack.c.h.b16 %v253
  %v1063 = vunpack.c.l.b16 %v254
  %v1064 = vunpack.c.h.b16 %v254
  %v1065 = vunpack.c.l.b16 %v255
  %v1066 = vunpack.c.h.b16 %v255
  %v1067 = vunpack.c.l.b16 %v256
  %v1068 = vunpack.c.h.b16 %v256
  %v1069 = vunpack.c.l.b16 %v257
  %v1070 = vunpack.c.h.b16 %v257
  %v1071 = vunpack.c.l.b16 %v258
  %v1072 = vunpack.c.h.b16 %v258
  %v1073 = vunpack.c.l.b16 %v259
  %v1074 = vunpack.c.h.b16 %v259
  %v1075 = vunpack.c.l.b16 %v260
  %v1076 = vunpack.c.h.b16 %v260
  %v1077 = vunpack.c.l.b16 %v261
  %v1078 = vunpack.c.h.b16 %v261
  %v1079 = vunpack.c.l.b16 %v262
  %v1080 = vunpack.c.h.b16 %v262
  %v1081 = vunpack.c.l.b16 %v263
  %v1082 = vunpack.c.h.b16 %v263
  %v1083 = vunpack.c.l.b16 %v264
  %v1084 = vunpack.c.h.b16 %v264
  %v1085 = vunpack.c.l.b16 %v265
  %v1086 = vunpack.c.h.b16 %v265
  %v1087 = vunpack.c.l.b16 %v266
  %v1088 = vunpack.c.h.b16 %v266
  %v1089 = vunpack.c.l.b16 %v267
  %v1090 = vunpack.c.h.b16 %v267
  %v1091 = vunpack.c.l.b16 %v268
  %v1092 = vunpack.c.h.b16 %v268
  %v1093 = vunpack.c.l.b16 %v269
  %v1094 = vunpack.c.h.b16 %v269
  %v1095 = vunpack.c.l.b16 %v270
  %v1096 = vunpack.c.h.b16 %v270
  %v1097 = vunpack.c.l.b16 %v271
  %v1098 = vunpack.c.h.b16 %v271
  %v1099 = vunpack.c.l.b16 %v272
  %v1100 = vunpack.c.h.b16 %v272
  %v1101 = vunpack.c.l.b16 %v273
  %v1102 = vunpack.c.h.b16 %v273
  %v1103 = vunpack.c.l.b16 %v274
  %v1104 = vunpack.c.h.b16 %v274
  %v1105 = vunpack.c.l.b16 %v275
  %v1106 = vunpack.c.h.b16 %v275
  %v1107 = vunpack.c.l.b16 %v276
  %v1108 = vunpack.c.h.b16 %v276
  %v1109 = vunpack.c.l.b16 %v277
  %v1110 = vunpack.c.h.b16 %v277
  %v1111 = vunpack.c.l.b16 %v278
  %v1112 = vunpack.c.h.b16 %v278
  %v1113 = vunpack.c.l.b16 %v279
  %v1114 = vunpack.c.h.b16 %v279
  %v1115 = vunpack.c.l.b16 %v280
  %v1116 = vunpack.c.h.b16 %v280
  %v1117 = vpack.c.b16 %v607, %v605
  %v1118 = vpack.c.b16 %v608, %v606
  %v1119 = vpack.c.b16 %v611, %v609
  %v1120 = vpack.c.b16 %v612, %v610
  %v1121 = vpack.c.b16 %v615, %v613
  %v1122 = vpack.c.b16 %v616, %v614
  %v1123 = vpack.c.b16 %v619, %v617
  %v1124 = vpack.c.b16 %v620, %v618
  %v1125 = vpack.c.b16 %v623, %v621
  %v1126 = vpack.c.b16 %v624, %v622
  %v1127 = vpack.c.b16 %v627, %v625
  %v1128 = vpack.c.b16 %v628, %v626
  %v1129 = vpack.c.b16 %v631, %v629
  %v1130 = vpack.c.b16 %v632, %v630
  %v1131 = vpack.c.b16 %v635, %v633
  %v1132 = vpack.c.b16 %v636, %v634
  %v1133 = vpack.c.b16 %v639, %v637
  %v1134 = vpack.c.b16 %v640, %v638
  %v1135 = vpack.c.b16 %v643, %v641
  %v1136 = vpack.c.b16 %v644, %v642
  %v1137 = vpack.c.b16 %v647, %v645
  %v1138 = vpack.c.b16 %v648, %v646
  %v1139 = vpack.c.b16 %v651, %v649
  %v1140 = vpack.c.b16 %v652, %v650
  %v1141 = vpack.c.b16 %v655, %v653
  %v1142 = vpack.c.b16 %v656, %v654
  %v1143 = vpack.c.b16 %v659, %v657
  %v1144 = vpack.c.b16 %v660, %v658
  %v1145 = vpack.c.b16 %v663, %v661
  %v1146 = vpack.c.b16 %v664, %v662
  %v1147 = vpack.c.b16 %v667, %v665
  %v1148 = vpack.c.b16 %v668, %v666
  %v1149 = vpack.c.b16 %v671, %v669
  %v1150 = vpack.c.b16 %v672, %v670
  %v1151 = vpack.c.b16 %v675, %v673
  %v1152 = vpack.c.b16 %v676, %v674
  %v1153 = vpack.c.b16 %v679, %v677
  %v1154 = vpack.c.b16 %v680, %v678
  %v1155 = vpack.c.b16 %v683, %v681
  %v1156 = vpack.c.b16 %v684, %v682
  %v1157 = vpack.c.b16 %v687, %v685
  %v1158 = vpack.c.b16 %v688, %v686
  %v1159 = vpack.c.b16 %v691, %v689
  %v1160 = vpack.c.b16 %v692, %v690
  %v1161 = vpack.c.b16 %v695, %v693
  %v1162 = vpack.c.b16 %v696, %v694
  %v1163 = vpack.c.b16 %v699, %v697
  %v1164 = vpack.c.b16 %v700, %v698
  %v1165 = vpack.c.b16 %v703, %v701
  %v1166 = vpack.c.b16 %v704, %v702
  %v1167 = vpack.c.b16 %v707, %v705
  %v1168 = vpack.c.b16 %v708, %v706
  %v1169 = vpack.c.b16 %v711, %v709
  %v1170 = vpack.c.b16 %v712, %v710
  %v1171 = vpack.c.b16 %v715, %v713
  %v1172 = vpack.c.b16 %v716, %v714
  %v1173 = vpack.c.b16 %v719, %v717
  %v1174 = vpack.c.b16 %v720, %v718
  %v1175 = vpack.c.b16 %v723, %v721
  %v1176 = vpack.c.b16 %v724, %v722
  %v1177 = vpack.c.b16 %v727, %v725
  %v1178 = vpack.c.b16 %v728, %v726
  %v1179 = vpack.c.b16 %v731, %v729
  %v1180 = vpack.c.b16 %v732, %v730
  %v1181 = vpack.c.b16 %v735, %v733
  %v1182 = vpack.c.b16 %v736, %v734
  %v1183 = vpack.c.b16 %v739, %v737
  %v1184 = vpack.c.b16 %v740, %v738
  %v1185 = vpack.c.b16 %v743, %v741
  %v1186 = vpack.c.b16 %v744, %v742
  %v1187 = vpack.c.b16 %v747, %v745
  %v1188 = vpack.c.b16 %v748, %v746
  %v1189 = vpack.c.b16 %v751, %v749
  %v1190 = vpack.c.b16 %v752, %v750
  %v1191 = vpack.c.b16 %v755, %v753
  %v1192 = vpack.c.b16 %v756, %v754
  %v1193 = vpack.c.b16 %v759, %v757
  %v1194 = vpack.c.b16 %v760, %v758
  %v1195 = vpack.c.b16 %v763, %v761
  %v1196 = vpack.c.b16 %v764, %v762
  %v1197 = vpack.c.b16 %v767, %v765
  %v1198 = vpack.c.b16 %v768, %v766
  %v1199 = vpack.c.b16 %v771, %v769
  %v1200 = vpack.c.b16 %v772, %v770
  %v1201 = vpack.c.b16 %v775, %v773
  %v1202 = vpack.c.b16 %v776, %v774
  %v1203 = vpack.c.b16 %v779, %v777
  %v1204 = vpack.c.b16 %v780, %v778
  %v1205 = vpack.c.b16 %v783, %v781
  %v1206 = vpack.c.b16 %v784, %v782
  %v1207 = vpack.c.b16 %v787, %v785
  %v1208 = vpack.c.b16 %v788, %v786
  %v1209 = vpack.c.b16 %v791, %v789
  %v1210 = vpack.c.b16 %v792, %v790
  %v1211 = vpack.c.b16 %v795, %v793
  %v1212 = vpack.c.b16 %v796, %v794
  %v1213 = vpack.c.b16 %v799, %v797
  %v1214 = vpack.c.b16 %v800, %v798
  %v1215 = vpack.c.b16 %v803, %v801
  %v1216 = vpack.c.b16 %v804, %v802
  %v1217 = vpack.c.b16 %v807, %v805
  %v1218 = vpack.c.b16 %v808, %v806
  %v1219 = vpack.c.b16 %v811, %v809
  %v1220 = vpack.c.b16 %v812, %v810
  %v1221 = vpack.c.b16 %v815, %v813
  %v1222 = vpack.c.b16 %v816, %v814
  %v1223 = vpack.c.b16 %v819, %v817
  %v1224 = vpack.c.b16 %v820, %v818
  %v1225 = vpack.c.b16 %v823, %v821
  %v1226 = vpack.c.b16 %v824, %v822
  %v1227 = vpack.c.b16 %v827, %v825
  %v1228 = vpack.c.b16 %v828, %v826
  %v1229 = vpack.c.b16 %v831, %v829
  %v1230 = vpack.c.b16 %v832, %v830
  %v1231 = vpack.c.b16 %v835, %v833
  %v1232 = vpack.c.b16 %v836, %v834
  %v1233 = vpack.c.b16 %v839, %v837
  %v1234 = vpack.c.b16 %v840, %v838
  %v1235 = vpack.c.b16 %v843, %v841
  %v1236 = vpack.c.b16 %v844, %v842
  %v1237 = vpack.c.b16 %v847, %v845
  %v1238 = vpack.c.b16 %v848, %v846
  %v1239 = vpack.c.b16 %v851, %v849
  %v1240 = vpack.c.b16 %v852, %v850
  %v1241 = vpack.c.b16 %v855, %v853
  %v1242 = vpack.c.b16 %v856, %v854
  %v1243 = vpack.c.b16 %v859, %v857
  %v1244 = vpack.c.b16 %v860, %v858
  %v1245 = vpack.c.b16 %v863, %v861
  %v1246 = vpack.c.b16 %v864, %v862
  %v1247 = vpack.c.b16 %v867, %v865
  %v1248 = vpack.c.b16 %v868, %v866
  %v1249 = vpack.c.b16 %v871, %v869
  %v1250 = vpack.c.b16 %v872, %v870
  %v1251 = vpack.c.b16 %v875, %v873
  %v1252 = vpack.c.b16 %v876, %v874
  %v1253 = vpack.c.b16 %v879, %v877
  %v1254 = vpack.c.b16 %v880, %v878
  %v1255 = vpack.c.b16 %v883, %v881
  %v1256 = vpack.c.b16 %v884, %v882
  %v1257 = vpack.c.b16 %v887, %v885
  %v1258 = vpack.c.b16 %v888, %v886
  %v1259 = vpack.c.b16 %v891, %v889
  %v1260 = vpack.c.b16 %v892, %v890
  %v1261 = vpack.c.b16 %v895, %v893
  %v1262 = vpack.c.b16 %v896, %v894
  %v1263 = vpack.c.b16 %v899, %v897
  %v1264 = vpack.c.b16 %v900, %v898
  %v1265 = vpack.c.b16 %v903, %v901
  %v1266 = vpack.c.b16 %v904, %v902
  %v1267 = vpack.c.b16 %v907, %v905
  %v1268 = vpack.c.b16 %v908, %v906
  %v1269 = vpack.c.b16 %v911, %v909
  %v1270 = vpack.c.b16 %v912, %v910
  %v1271 = vpack.c.b16 %v915, %v913
  %v1272 = vpack.c.b16 %v916, %v914
  %v1273 = vpack.c.b16 %v919, %v917
  %v1274 = vpack.c.b16 %v920, %v918
  %v1275 = vpack.c.b16 %v923, %v921
  %v1276 = vpack.c.b16 %v924, %v922
  %v1277 = vpack.c.b16 %v927, %v925
  %v1278 = vpack.c.b16 %v928, %v926
  %v1279 = vpack.c.b16 %v931, %v929
  %v1280 = vpack.c.b16 %v932, %v930
  %v1281 = vpack.c.b16 %v935, %v933
  %v1282 = vpack.c.b16 %v936, %v934
  %v1283 = vpack.c.b16 %v939, %v937
  %v1284 = vpack.c.b16 %v940, %v938
  %v1285 = vpack.c.b16 %v943, %v941
  %v1286 = vpack.c.b16 %v944, %v942
  %v1287 = vpack.c.b16 %v947, %v945
  %v1288 = vpack.c.b16 %v948, %v946
  %v1289 = vpack.c.b16 %v951, %v949
  %v1290 = vpack.c.b16 %v952, %v950
  %v1291 = vpack.c.b16 %v955, %v953
  %v1292 = vpack.c.b16 %v956, %v954
  %v1293 = vpack.c.b16 %v959, %v957
  %v1294 = vpack.c.b16 %v960, %v958
  %v1295 = vpack.c.b16 %v963, %v961
  %v1296 = vpack.c.b16 %v964, %v962
  %v1297 = vpack.c.b16 %v967, %v965
  %v1298 = vpack.c.b16 %v968, %v966
  %v1299 = vpack.c.b16 %v971, %v969
  %v1300 = vpack.c.b16 %v972, %v970
  %v1301 = vpack.c.b16 %v975, %v973
  %v1302 = vpack.c.b16 %v976, %v974
  %v1303 = vpack.c.b16 %v979, %v977
  %v1304 = vpack.c.b16 %v980, %v978
  %v1305 = vpack.c.b16 %v983, %v981
  %v1306 = vpack.c.b16 %v984, %v982
  %v1307 = vpack.c.b16 %v987, %v985
  %v1308 = vpack.c.b16 %v988, %v986
  %v1309 = vpack.c.b16 %v991, %v989
  %v1310 = vpack.c.b16 %v992, %v990
  %v1311 = vpack.c.b16 %v995, %v993
  %v1312 = vpack.c.b16 %v996, %v994
  %v1313 = vpack.c.b16 %v999, %v997
  %v1314 = vpack.c.b16 %v1000, %v998
  %v1315 = vpack.c.b16 %v1003, %v1001
  %v1316 = vpack.c.b16 %v1004, %v1002
  %v1317 = vpack.c.b16 %v1007, %v1005
  %v1318 = vpack.c.b16 %v1008, %v1006
  %v1319 = vpack.c.b16 %v1011, %v1009
  %v1320 = vpack.c.b16 %v1012, %v1010
  %v1321 = vpack.c.b16 %v1015, %v1013
  %v1322 = vpack.c.b16 %v1016, %v1014
  %v1323 = vpack.c.b16 %v1019, %v1017
  %v1324 = vpack.c.b16 %v1020, %v1018
  %v1325 = vpack.c.b16 %v1023, %v1021
  %v1326 = vpack.c.b16 %v1024, %v1022
  %v1327 = vpack.c.b16 %v1027, %v1025
  %v1328 = vpack.c.b16 %v1028, %v1026
  %v1329 = vpack.c.b16 %v1031, %v1029
  %v1330 = vpack.c.b16 %v1032, %v1030
  %v1331 = vpack.c.b16 %v1035, %v1033
  %v1332 = vpack.c.b16 %v1036, %v1034
  %v1333 = vpack.c.b16 %v1039, %v1037
  %v1334 = vpack.c.b16 %v1040, %v1038
  %v1335 = vpack.c.b16 %v1043, %v1041
  %v1336 = vpack.c.b16 %v1044, %v1042
  %v1337 = vpack.c.b16 %v1047, %v1045
  %v1338 = vpack.c.b16 %v1048, %v1046
  %v1339 = vpack.c.b16 %v1051, %v1049
  %v1340 = vpack.c.b16 %v1052, %v1050
  %v1341 = vpack.c.b16 %v1055, %v1053
  %v1342 = vpack.c.b16 %v1056, %v1054
  %v1343 = vpack.c.b16 %v1059, %v1057
  %v1344 = vpack.c.b16 %v1060, %v1058
  %v1345 = vpack.c.b16 %v1063, %v1061
  %v1346 = vpack.c.b16 %v1064, %v1062
  %v1347 = vpack.c.b16 %v1067, %v1065
  %v1348 = vpack.c.b16 %v1068, %v1066
  %v1349 = vpack.c.b16 %v1071, %v1069
  %v1350 = vpack.c.b16 %v1072, %v1070
  %v1351 = vpack.c.b16 %v1075, %v1073
  %v1352 = vpack.c.b16 %v1076, %v1074
  %v1353 = vpack.c.b16 %v1079, %v1077
  %v1354 = vpack.c.b16 %v1080, %v1078
  %v1355 = vpack.c.b16 %v1083, %v1081
  %v1356 = vpack.c.b16 %v1084, %v1082
  %v1357 = vpack.c.b16 %v1087, %v1085
  %v1358 = vpack.c.b16 %v1088, %v1086
  %v1359 = vpack.c.b16 %v1091, %v1089
  %v1360 = vpack.c.b16 %v1092, %v1090
  %v1361 = vpack.c.b16 %v1095, %v1093
  %v1362 = vpack.c.b16 %v1096, %v1094
  %v1363 = vpack.c.b16 %v1099, %v1097
  %v1364 = vpack.c.b16 %v1100, %v1098
  %v1365 = vpack.c.b16 %v1103, %v1101
  %v1366 = vpack.c.b16 %v1104, %v1102
  %v1367 = vpack.c.b16 %v1107, %v1105
  %v1368 = vpack.c.b16 %v1108, %v1106
  %v1369 = vpack.c.b16 %v1111, %v1109
  %v1370 = vpack.c.b16 %v1112, %v1110
  %v1371 = vpack.c.b16 %v1115, %v1113
  %v1372 = vpack.c.b16 %v1116, %v1114
  %1629 = vmatprep.subr.bf16.mxu0 %v1132
  %1630 = vmatpush1.bf16.msra.mxu0 %v1131
  %1631 = vmatprep.subr.bf16.mxu0 %v1130
  %1632 = vmatpush1.bf16.msra.mxu0 %v1129
  %1633 = vmatprep.subr.bf16.mxu0 %v1128
  %1634 = vmatpush1.bf16.msra.mxu0 %v1127
  %1635 = vmatprep.subr.bf16.mxu0 %v1126
  %1636 = vmatpush1.bf16.msra.mxu0 %v1125
  %1637 = vmatprep.subr.bf16.mxu0 %v1124
  %1638 = vmatpush1.bf16.msra.mxu0 %v1123
  %1639 = vmatprep.subr.bf16.mxu0 %v1122
  %1640 = vmatpush1.bf16.msra.mxu0 %v1121
  %1641 = vmatprep.subr.bf16.mxu0 %v1120
  %1642 = vmatpush1.bf16.msra.mxu0 %v1119
  %1643 = vmatprep.subr.bf16.mxu0 %v1118
  %1644 = vmatpush1.bf16.msra.mxu0 %v1117
  %1645 = vmatprep.subr.bf16.mxu0 %v1148
  %1646 = vmatpush2.bf16.msra.mxu0 %v1147
  %1647 = vmatprep.subr.bf16.mxu0 %v1146
  %1648 = vmatpush2.bf16.msra.mxu0 %v1145
  %1649 = vmatprep.subr.bf16.mxu0 %v1144
  %1650 = vmatpush2.bf16.msra.mxu0 %v1143
  %1651 = vmatprep.subr.bf16.mxu0 %v1142
  %1652 = vmatpush2.bf16.msra.mxu0 %v1141
  %1653 = vmatprep.subr.bf16.mxu0 %v1140
  %1654 = vmatpush2.bf16.msra.mxu0 %v1139
  %1655 = vmatprep.subr.bf16.mxu0 %v1138
  %1656 = vmatpush2.bf16.msra.mxu0 %v1137
  %1657 = vmatprep.subr.bf16.mxu0 %v1136
  %1658 = vmatpush2.bf16.msra.mxu0 %v1135
  %1659 = vmatprep.subr.bf16.mxu0 %v1134
  %1660 = vmatpush2.bf16.msra.mxu0 %v1133
  %1661 = vmatprep.mubr.bf16.mxu0 %v318
  %1662 = vmatmul.mubr.bf16.gmra.mxu0 %v317
  %v1663 = vpop.f32.mrf.mxu0
  %v1664 = vadd.f32 %v286, %v1663
  %v1665 = vpop.f32.mrf.mxu0
  %v1666 = vadd.f32 %v290, %v1665
  %v1667 = vpop.f32.mrf.mxu0
  %v1668 = vpop.f32.mrf.mxu0
  %1669 = vdwg.mxu0
  %1670 = vmatprep.subr.bf16.mxu0 %v1164
  %1671 = vmatpush1.bf16.msra.mxu0 %v1163
  %1672 = vmatprep.subr.bf16.mxu0 %v1162
  %1673 = vmatpush1.bf16.msra.mxu0 %v1161
  %1674 = vmatprep.subr.bf16.mxu0 %v1160
  %1675 = vmatpush1.bf16.msra.mxu0 %v1159
  %1676 = vmatprep.subr.bf16.mxu0 %v1158
  %1677 = vmatpush1.bf16.msra.mxu0 %v1157
  %1678 = vmatprep.subr.bf16.mxu0 %v1156
  %1679 = vmatpush1.bf16.msra.mxu0 %v1155
  %1680 = vmatprep.subr.bf16.mxu0 %v1154
  %1681 = vmatpush1.bf16.msra.mxu0 %v1153
  %1682 = vmatprep.subr.bf16.mxu0 %v1152
  %1683 = vmatpush1.bf16.msra.mxu0 %v1151
  %1684 = vmatprep.subr.bf16.mxu0 %v1150
  %1685 = vmatpush1.bf16.msra.mxu0 %v1149
  %1686 = vmatprep.subr.bf16.mxu0 %v1180
  %1687 = vmatpush2.bf16.msra.mxu0 %v1179
  %1688 = vmatprep.subr.bf16.mxu0 %v1178
  %1689 = vmatpush2.bf16.msra.mxu0 %v1177
  %1690 = vmatprep.subr.bf16.mxu0 %v1176
  %1691 = vmatpush2.bf16.msra.mxu0 %v1175
  %1692 = vmatprep.subr.bf16.mxu0 %v1174
  %1693 = vmatpush2.bf16.msra.mxu0 %v1173
  %1694 = vmatprep.subr.bf16.mxu0 %v1172
  %1695 = vmatpush2.bf16.msra.mxu0 %v1171
  %1696 = vmatprep.subr.bf16.mxu0 %v1170
  %1697 = vmatpush2.bf16.msra.mxu0 %v1169
  %1698 = vmatprep.subr.bf16.mxu0 %v1168
  %1699 = vmatpush2.bf16.msra.mxu0 %v1167
  %1700 = vmatprep.subr.bf16.mxu0 %v1166
  %1701 = vmatpush2.bf16.msra.mxu0 %v1165
  %1702 = vmatprep.mubr.bf16.mxu0 %v320
  %1703 = vmatmul.mubr.bf16.gmra.mxu0 %v319
  %v1704 = vpop.f32.mrf.mxu0
  %v1705 = vadd.f32 %v1664, %v1704
  %v1706 = vpop.f32.mrf.mxu0
  %v1707 = vadd.f32 %v1666, %v1706
  %v1708 = vpop.f32.mrf.mxu0
  %v1709 = vpop.f32.mrf.mxu0
  %1710 = vdwg.mxu0
  %1711 = vmatprep.subr.bf16.mxu0 %v1196
  %1712 = vmatpush1.bf16.msra.mxu0 %v1195
  %1713 = vmatprep.subr.bf16.mxu0 %v1194
  %1714 = vmatpush1.bf16.msra.mxu0 %v1193
  %1715 = vmatprep.subr.bf16.mxu0 %v1192
  %1716 = vmatpush1.bf16.msra.mxu0 %v1191
  %1717 = vmatprep.subr.bf16.mxu0 %v1190
  %1718 = vmatpush1.bf16.msra.mxu0 %v1189
  %1719 = vmatprep.subr.bf16.mxu0 %v1188
  %1720 = vmatpush1.bf16.msra.mxu0 %v1187
  %1721 = vmatprep.subr.bf16.mxu0 %v1186
  %1722 = vmatpush1.bf16.msra.mxu0 %v1185
  %1723 = vmatprep.subr.bf16.mxu0 %v1184
  %1724 = vmatpush1.bf16.msra.mxu0 %v1183
  %1725 = vmatprep.subr.bf16.mxu0 %v1182
  %1726 = vmatpush1.bf16.msra.mxu0 %v1181
  %1727 = vmatprep.subr.bf16.mxu0 %v1212
  %1728 = vmatpush2.bf16.msra.mxu0 %v1211
  %1729 = vmatprep.subr.bf16.mxu0 %v1210
  %1730 = vmatpush2.bf16.msra.mxu0 %v1209
  %1731 = vmatprep.subr.bf16.mxu0 %v1208
  %1732 = vmatpush2.bf16.msra.mxu0 %v1207
  %1733 = vmatprep.subr.bf16.mxu0 %v1206
  %1734 = vmatpush2.bf16.msra.mxu0 %v1205
  %1735 = vmatprep.subr.bf16.mxu0 %v1204
  %1736 = vmatpush2.bf16.msra.mxu0 %v1203
  %1737 = vmatprep.subr.bf16.mxu0 %v1202
  %1738 = vmatpush2.bf16.msra.mxu0 %v1201
  %1739 = vmatprep.subr.bf16.mxu0 %v1200
  %1740 = vmatpush2.bf16.msra.mxu0 %v1199
  %1741 = vmatprep.subr.bf16.mxu0 %v1198
  %1742 = vmatpush2.bf16.msra.mxu0 %v1197
  %1743 = vmatprep.mubr.bf16.mxu0 %v322
  %1744 = vmatmul.mubr.bf16.gmra.mxu0 %v321
  %v1745 = vpop.f32.mrf.mxu0
  %v1746 = vadd.f32 %v1705, %v1745
  %v1747 = vpop.f32.mrf.mxu0
  %v1748 = vadd.f32 %v1707, %v1747
  %v1749 = vpop.f32.mrf.mxu0
  %v1750 = vpop.f32.mrf.mxu0
  %1751 = vdwg.mxu0
  %1752 = vmatprep.subr.bf16.mxu0 %v1228
  %1753 = vmatpush1.bf16.msra.mxu0 %v1227
  %1754 = vmatprep.subr.bf16.mxu0 %v1226
  %1755 = vmatpush1.bf16.msra.mxu0 %v1225
  %1756 = vmatprep.subr.bf16.mxu0 %v1224
  %1757 = vmatpush1.bf16.msra.mxu0 %v1223
  %1758 = vmatprep.subr.bf16.mxu0 %v1222
  %1759 = vmatpush1.bf16.msra.mxu0 %v1221
  %1760 = vmatprep.subr.bf16.mxu0 %v1220
  %1761 = vmatpush1.bf16.msra.mxu0 %v1219
  %1762 = vmatprep.subr.bf16.mxu0 %v1218
  %1763 = vmatpush1.bf16.msra.mxu0 %v1217
  %1764 = vmatprep.subr.bf16.mxu0 %v1216
  %1765 = vmatpush1.bf16.msra.mxu0 %v1215
  %1766 = vmatprep.subr.bf16.mxu0 %v1214
  %1767 = vmatpush1.bf16.msra.mxu0 %v1213
  %1768 = vmatprep.subr.bf16.mxu0 %v1244
  %1769 = vmatpush2.bf16.msra.mxu0 %v1243
  %1770 = vmatprep.subr.bf16.mxu0 %v1242
  %1771 = vmatpush2.bf16.msra.mxu0 %v1241
  %1772 = vmatprep.subr.bf16.mxu0 %v1240
  %1773 = vmatpush2.bf16.msra.mxu0 %v1239
  %1774 = vmatprep.subr.bf16.mxu0 %v1238
  %1775 = vmatpush2.bf16.msra.mxu0 %v1237
  %1776 = vmatprep.subr.bf16.mxu0 %v1236
  %1777 = vmatpush2.bf16.msra.mxu0 %v1235
  %1778 = vmatprep.subr.bf16.mxu0 %v1234
  %1779 = vmatpush2.bf16.msra.mxu0 %v1233
  %1780 = vmatprep.subr.bf16.mxu0 %v1232
  %1781 = vmatpush2.bf16.msra.mxu0 %v1231
  %1782 = vmatprep.subr.bf16.mxu0 %v1230
  %1783 = vmatpush2.bf16.msra.mxu0 %v1229
  %1784 = vmatprep.mubr.bf16.mxu0 %v324
  %1785 = vmatmul.mubr.bf16.gmra.mxu0 %v323
  %v1786 = vpop.f32.mrf.mxu0
  %v1787 = vadd.f32 %v1746, %v1786
  %v1788 = vpop.f32.mrf.mxu0
  %v1789 = vadd.f32 %v1748, %v1788
  %v1790 = vpop.f32.mrf.mxu0
  %v1791 = vpop.f32.mrf.mxu0
  %1792 = vdwg.mxu0
  %1793 = vmatprep.subr.bf16.mxu0 %v1260
  %1794 = vmatpush1.bf16.msra.mxu0 %v1259
  %1795 = vmatprep.subr.bf16.mxu0 %v1258
  %1796 = vmatpush1.bf16.msra.mxu0 %v1257
  %1797 = vmatprep.subr.bf16.mxu0 %v1256
  %1798 = vmatpush1.bf16.msra.mxu0 %v1255
  %1799 = vmatprep.subr.bf16.mxu0 %v1254
  %1800 = vmatpush1.bf16.msra.mxu0 %v1253
  %1801 = vmatprep.subr.bf16.mxu0 %v1252
  %1802 = vmatpush1.bf16.msra.mxu0 %v1251
  %1803 = vmatprep.subr.bf16.mxu0 %v1250
  %1804 = vmatpush1.bf16.msra.mxu0 %v1249
  %1805 = vmatprep.subr.bf16.mxu0 %v1248
  %1806 = vmatpush1.bf16.msra.mxu0 %v1247
  %1807 = vmatprep.subr.bf16.mxu0 %v1246
  %1808 = vmatpush1.bf16.msra.mxu0 %v1245
  %1809 = vmatprep.subr.bf16.mxu0 %v1276
  %1810 = vmatpush2.bf16.msra.mxu0 %v1275
  %1811 = vmatprep.subr.bf16.mxu0 %v1274
  %1812 = vmatpush2.bf16.msra.mxu0 %v1273
  %1813 = vmatprep.subr.bf16.mxu0 %v1272
  %1814 = vmatpush2.bf16.msra.mxu0 %v1271
  %1815 = vmatprep.subr.bf16.mxu0 %v1270
  %1816 = vmatpush2.bf16.msra.mxu0 %v1269
  %1817 = vmatprep.subr.bf16.mxu0 %v1268
  %1818 = vmatpush2.bf16.msra.mxu0 %v1267
  %1819 = vmatprep.subr.bf16.mxu0 %v1266
  %1820 = vmatpush2.bf16.msra.mxu0 %v1265
  %1821 = vmatprep.subr.bf16.mxu0 %v1264
  %1822 = vmatpush2.bf16.msra.mxu0 %v1263
  %1823 = vmatprep.subr.bf16.mxu0 %v1262
  %1824 = vmatpush2.bf16.msra.mxu0 %v1261
  %1825 = vmatprep.mubr.bf16.mxu0 %v326
  %1826 = vmatmul.mubr.bf16.gmra.mxu0 %v325
  %v1827 = vpop.f32.mrf.mxu0
  %v1828 = vadd.f32 %v1787, %v1827
  %v1829 = vpop.f32.mrf.mxu0
  %v1830 = vadd.f32 %v1789, %v1829
  %v1831 = vpop.f32.mrf.mxu0
  %v1832 = vpop.f32.mrf.mxu0
  %1833 = vdwg.mxu0
  %1834 = vmatprep.subr.bf16.mxu0 %v1292
  %1835 = vmatpush1.bf16.msra.mxu0 %v1291
  %1836 = vmatprep.subr.bf16.mxu0 %v1290
  %1837 = vmatpush1.bf16.msra.mxu0 %v1289
  %1838 = vmatprep.subr.bf16.mxu0 %v1288
  %1839 = vmatpush1.bf16.msra.mxu0 %v1287
  %1840 = vmatprep.subr.bf16.mxu0 %v1286
  %1841 = vmatpush1.bf16.msra.mxu0 %v1285
  %1842 = vmatprep.subr.bf16.mxu0 %v1284
  %1843 = vmatpush1.bf16.msra.mxu0 %v1283
  %1844 = vmatprep.subr.bf16.mxu0 %v1282
  %1845 = vmatpush1.bf16.msra.mxu0 %v1281
  %1846 = vmatprep.subr.bf16.mxu0 %v1280
  %1847 = vmatpush1.bf16.msra.mxu0 %v1279
  %1848 = vmatprep.subr.bf16.mxu0 %v1278
  %1849 = vmatpush1.bf16.msra.mxu0 %v1277
  %1850 = vmatprep.subr.bf16.mxu0 %v1308
  %1851 = vmatpush2.bf16.msra.mxu0 %v1307
  %1852 = vmatprep.subr.bf16.mxu0 %v1306
  %1853 = vmatpush2.bf16.msra.mxu0 %v1305
  %1854 = vmatprep.subr.bf16.mxu0 %v1304
  %1855 = vmatpush2.bf16.msra.mxu0 %v1303
  %1856 = vmatprep.subr.bf16.mxu0 %v1302
  %1857 = vmatpush2.bf16.msra.mxu0 %v1301
  %1858 = vmatprep.subr.bf16.mxu0 %v1300
  %1859 = vmatpush2.bf16.msra.mxu0 %v1299
  %1860 = vmatprep.subr.bf16.mxu0 %v1298
  %1861 = vmatpush2.bf16.msra.mxu0 %v1297
  %1862 = vmatprep.subr.bf16.mxu0 %v1296
  %1863 = vmatpush2.bf16.msra.mxu0 %v1295
  %1864 = vmatprep.subr.bf16.mxu0 %v1294
  %1865 = vmatpush2.bf16.msra.mxu0 %v1293
  %1866 = vmatprep.mubr.bf16.mxu0 %v328
  %1867 = vmatmul.mubr.bf16.gmra.mxu0 %v327
  %v1868 = vpop.f32.mrf.mxu0
  %v1869 = vadd.f32 %v1828, %v1868
  %v1870 = vpop.f32.mrf.mxu0
  %v1871 = vadd.f32 %v1830, %v1870
  %v1872 = vpop.f32.mrf.mxu0
  %v1873 = vpop.f32.mrf.mxu0
  %1874 = vdwg.mxu0
  %1875 = vmatprep.subr.bf16.mxu0 %v1324
  %1876 = vmatpush1.bf16.msra.mxu0 %v1323
  %1877 = vmatprep.subr.bf16.mxu0 %v1322
  %1878 = vmatpush1.bf16.msra.mxu0 %v1321
  %1879 = vmatprep.subr.bf16.mxu0 %v1320
  %1880 = vmatpush1.bf16.msra.mxu0 %v1319
  %1881 = vmatprep.subr.bf16.mxu0 %v1318
  %1882 = vmatpush1.bf16.msra.mxu0 %v1317
  %1883 = vmatprep.subr.bf16.mxu0 %v1316
  %1884 = vmatpush1.bf16.msra.mxu0 %v1315
  %1885 = vmatprep.subr.bf16.mxu0 %v1314
  %1886 = vmatpush1.bf16.msra.mxu0 %v1313
  %1887 = vmatprep.subr.bf16.mxu0 %v1312
  %1888 = vmatpush1.bf16.msra.mxu0 %v1311
  %1889 = vmatprep.subr.bf16.mxu0 %v1310
  %1890 = vmatpush1.bf16.msra.mxu0 %v1309
  %1891 = vmatprep.subr.bf16.mxu0 %v1340
  %1892 = vmatpush2.bf16.msra.mxu0 %v1339
  %1893 = vmatprep.subr.bf16.mxu0 %v1338
  %1894 = vmatpush2.bf16.msra.mxu0 %v1337
  %1895 = vmatprep.subr.bf16.mxu0 %v1336
  %1896 = vmatpush2.bf16.msra.mxu0 %v1335
  %1897 = vmatprep.subr.bf16.mxu0 %v1334
  %1898 = vmatpush2.bf16.msra.mxu0 %v1333
  %1899 = vmatprep.subr.bf16.mxu0 %v1332
  %1900 = vmatpush2.bf16.msra.mxu0 %v1331
  %1901 = vmatprep.subr.bf16.mxu0 %v1330
  %1902 = vmatpush2.bf16.msra.mxu0 %v1329
  %1903 = vmatprep.subr.bf16.mxu0 %v1328
  %1904 = vmatpush2.bf16.msra.mxu0 %v1327
  %1905 = vmatprep.subr.bf16.mxu0 %v1326
  %1906 = vmatpush2.bf16.msra.mxu0 %v1325
  %1907 = vmatprep.mubr.bf16.mxu0 %v330
  %1908 = vmatmul.mubr.bf16.gmra.mxu0 %v329
  %v1909 = vpop.f32.mrf.mxu0
  %v1910 = vadd.f32 %v1869, %v1909
  %v1911 = vpop.f32.mrf.mxu0
  %v1912 = vadd.f32 %v1871, %v1911
  %v1913 = vpop.f32.mrf.mxu0
  %v1914 = vpop.f32.mrf.mxu0
  %1915 = vdwg.mxu0
  %1916 = vmatprep.subr.bf16.mxu0 %v1356
  %1917 = vmatpush1.bf16.msra.mxu0 %v1355
  %1918 = vmatprep.subr.bf16.mxu0 %v1354
  %1919 = vmatpush1.bf16.msra.mxu0 %v1353
  %1920 = vmatprep.subr.bf16.mxu0 %v1352
  %1921 = vmatpush1.bf16.msra.mxu0 %v1351
  %1922 = vmatprep.subr.bf16.mxu0 %v1350
  %1923 = vmatpush1.bf16.msra.mxu0 %v1349
  %1924 = vmatprep.subr.bf16.mxu0 %v1348
  %1925 = vmatpush1.bf16.msra.mxu0 %v1347
  %1926 = vmatprep.subr.bf16.mxu0 %v1346
  %1927 = vmatpush1.bf16.msra.mxu0 %v1345
  %1928 = vmatprep.subr.bf16.mxu0 %v1344
  %1929 = vmatpush1.bf16.msra.mxu0 %v1343
  %1930 = vmatprep.subr.bf16.mxu0 %v1342
  %1931 = vmatpush1.bf16.msra.mxu0 %v1341
  %1932 = vmatprep.subr.bf16.mxu0 %v1372
  %1933 = vmatpush2.bf16.msra.mxu0 %v1371
  %1934 = vmatprep.subr.bf16.mxu0 %v1370
  %1935 = vmatpush2.bf16.msra.mxu0 %v1369
  %1936 = vmatprep.subr.bf16.mxu0 %v1368
  %1937 = vmatpush2.bf16.msra.mxu0 %v1367
  %1938 = vmatprep.subr.bf16.mxu0 %v1366
  %1939 = vmatpush2.bf16.msra.mxu0 %v1365
  %1940 = vmatprep.subr.bf16.mxu0 %v1364
  %1941 = vmatpush2.bf16.msra.mxu0 %v1363
  %1942 = vmatprep.subr.bf16.mxu0 %v1362
  %1943 = vmatpush2.bf16.msra.mxu0 %v1361
  %1944 = vmatprep.subr.bf16.mxu0 %v1360
  %1945 = vmatpush2.bf16.msra.mxu0 %v1359
  %1946 = vmatprep.subr.bf16.mxu0 %v1358
  %1947 = vmatpush2.bf16.msra.mxu0 %v1357
  %1948 = vmatprep.mubr.bf16.mxu0 %v332
  %1949 = vmatmul.mubr.bf16.gmra.mxu0 %v331
  %v1950 = vpop.f32.mrf.mxu0
  %v1951 = vadd.f32 %v1910, %v1950
  %v1952 = vpop.f32.mrf.mxu0
  %v1953 = vadd.f32 %v1912, %v1952
  %v1954 = vpop.f32.mrf.mxu0
  %v1955 = vpop.f32.mrf.mxu0
  %1956 = vdwg.mxu0
  %v1957 = vmul.f32 %v1951, 0.01
  %v1958 = vmul.f32 %v1953, 0.01
  %v1959 = vmax.f32 %v1951, %v1957
  %v1960 = vmax.f32 %v1953, %v1958
  %v1961 = vpack.c.bf16 %v1959, %v1959
  %v1962 = vpack.c.bf16 %v1960, %v1960
  %v1965 = vunpack.c.l.b16 %v1961
  %v1966 = vunpack.c.l.b16 %v1962
  %v1967 = vpack.c.b16 %v1966, %v1965
  %1969 = vst [vmem:[%s3] sm:$0xff] %v1967
  %v1970 = vrot.slane %v1959, 4
  %v1971 = vadd.f32 %v1959, %v1970
  %v1972 = vrot.slane %v1971, 2
  %v1973 = vadd.f32 %v1971, %v1972
  %v1974 = vrot.slane %v1973, 1
  %v1975 = vadd.f32 %v1973, %v1974
  %v1976 = vrot.slane %v1960, 4
  %v1977 = vadd.f32 %v1960, %v1976
  %v1978 = vrot.slane %v1977, 2
  %v1979 = vadd.f32 %v1977, %v1978
  %v1980 = vrot.slane %v1979, 1
  %v1981 = vadd.f32 %v1979, %v1980
  %v1984 = vcombine.low %v1975, %v1981
  %v1986 = vunpack.c.l.s4 1966171168
  %v1987 = vunpack.c.0.s8 %v1986
  %v1988 = vlaneseq
  %v1989 = vshrl.u32 %v1988, 7
  %v1990 = vsub.s32 %v1987, %v1989
  %v1991 = vrot.slane %v1984, %v1990
  %v1993 = vunpack.c.l.s4 1966171168
  %v1994 = vunpack.c.0.s8 %v1993
  %v1995 = vlaneseq
  %v1996 = vshrl.u32 %v1995, 7
  %v1997 = vsub.s32 %v1994, %v1996
  %v1998 = vrot.slane %v1991, %v1997
  %v2000 = vlaneseq
  %vm2001 = vcmp.ge.s32.totalorder %v2000, 0
  %vm2002 = vcmp.lt.s32.totalorder %v2000, 256
  %vm2003 = vmand %vm2001, %vm2002
  %2004 = vst.msk [vmem:[%s4] sm:$0x3] %vm2003, %v1998
  %v2005 = vmul.f32 %v1959, %v1959
  %v2006 = vmul.f32 %v1960, %v1960
  %v2007 = vrot.slane %v2005, 4
  %v2008 = vadd.f32 %v2005, %v2007
  %v2009 = vrot.slane %v2008, 2
  %v2010 = vadd.f32 %v2008, %v2009
  %v2011 = vrot.slane %v2010, 1
  %v2012 = vadd.f32 %v2010, %v2011
  %v2013 = vrot.slane %v2006, 4
  %v2014 = vadd.f32 %v2006, %v2013
  %v2015 = vrot.slane %v2014, 2
  %v2016 = vadd.f32 %v2014, %v2015
  %v2017 = vrot.slane %v2016, 1
  %v2018 = vadd.f32 %v2016, %v2017
  %v2021 = vcombine.low %v2012, %v2018
  %v2023 = vunpack.c.l.s4 1966171168
  %v2024 = vunpack.c.0.s8 %v2023
  %v2025 = vlaneseq
  %v2026 = vshrl.u32 %v2025, 7
  %v2027 = vsub.s32 %v2024, %v2026
  %v2028 = vrot.slane %v2021, %v2027
  %v2030 = vunpack.c.l.s4 1966171168
  %v2031 = vunpack.c.0.s8 %v2030
  %v2032 = vlaneseq
  %v2033 = vshrl.u32 %v2032, 7
  %v2034 = vsub.s32 %v2031, %v2033
  %v2035 = vrot.slane %v2028, %v2034
  %2037 = vst.msk [vmem:[%s5] sm:$0x3] %vm2003, %v2035
  // Predicated region
  $region14: #{featnet2d_forward.8} parent=0 // pred_check
    _
  $region15: #{featnet2d_forward.8} parent=0 // pred_check_branch
    %2039 = sbr.rel (0) target = $region17
  $region16: #{featnet2d_forward.8} parent=0 // pred_region
    _
  $region17: #{featnet2d_forward.8} parent=0 // pred_fallthru
    _
  // Predicated region
  $region18: #{featnet2d_forward.8} parent=0 // pred_check
    _
  $region19: #{featnet2d_forward.8} parent=0 // pred_check_branch
    %2041 = sbr.rel (0) target = $region21
  $region20: #{featnet2d_forward.8} parent=0 // pred_region
    _
  $region21: #{featnet2d_forward.8} parent=0 // pred_fallthru
    _
  // Predicated region
  $region22: #{featnet2d_forward.8} parent=0 // pred_check
    _
  $region23: #{featnet2d_forward.8} parent=0 // pred_check_branch
    %2043 = sbr.rel (0) target = $region25
  $region24: #{featnet2d_forward.8} parent=0 // pred_region
    _
  $region25: #{featnet2d_forward.8} parent=0 // pred_fallthru
    _
  // Predicated region
  $region26: #{featnet2d_forward.8} parent=0 // pred_check
    _
  $region27: #{featnet2d_forward.8} parent=0 // pred_check_branch
    %2045 = sbr.rel (0) target = $region29
  $region28: #{featnet2d_forward.8} parent=0 // pred_region
    _
  $region29: #{featnet2d_forward.8} parent=0 // pred_fallthru
    _
  // Predicated region
  $region30: #{featnet2d_forward.8} parent=0 // pred_check
    _
  $region31: #{featnet2d_forward.8} parent=0 // pred_check_branch
    %2047 = sbr.rel (0) target = $region33
  $region32: #{featnet2d_forward.8} parent=0 // pred_region
    _
  $region33: #{featnet2d_forward.8} parent=0 // pred_fallthru
    _
  // Predicated region
  $region34: #{featnet2d_forward.8} parent=0 // pred_check
    _
  $region35: #{featnet2d_forward.8} parent=0 // pred_check_branch
    %2049 = sbr.rel (0) target = $region37
  $region36: #{featnet2d_forward.8} parent=0 // pred_region
    _
  $region37: #{featnet2d_forward.8} parent=0 // pred_fallthru
    _

// kernel: featnet2d_forward.10
$region0: #{featnet2d_forward.10}
  #allocation0 [shape = 'u32[]', space=smem, size = 0x4, offset = 0x4, fixed_abs, tag = 'smem constant byte address 0x4 - core index']
  #allocation1 [shape = 'u32[144,128]{1,0:T(1,128)}', space=vmem, size = 0x12000, scoped, tag = 'internal scratch']
  %s0 = inlined_call_operand.vmem [shape: bf16[4,32,1536], index: 0, kind: input, shape index: {}]
  %s1 = inlined_call_operand.vmem [shape: bf16[4,1536,128], index: 1, kind: input, shape index: {}]
  %s2 = inlined_call_operand.vmem [shape: f32[1,128], index: 2, kind: input, shape index: {}]
  %s3 = inlined_call_operand.vmem [shape: bf16[4,32,128], index: 3, kind: output, shape index: {0}]
  %s4 = inlined_call_operand.vmem [shape: f32[4,1,1,128], index: 4, kind: output, shape index: {1}]
  %s5 = inlined_call_operand.vmem [shape: f32[4,1,1,128], index: 5, kind: output, shape index: {2}]
  %6 = xla_tuple %s3, %s4, %s5
  %s7 = sld [smem:[#allocation0]]
  $region61: #{featnet2d_forward.10} parent=0
    _
  %s9 = ssub.s32 1, %s7
  %s10 = scalar_select 0, %s9, %s7
  loop: start=0, step=1, limit=6
  $region2: #{featnet2d_forward.10} parent=0 // loop_pre_header
    _
  $region3: #{featnet2d_forward.10} parent=0 // loop_header
    %s12 = sphi 0, %s16
    %p13 = scmp.ge.s32.totalorder %s12, 6
    %s19 = sphi 0, %s31
    %s20 = sphi 0, %s27
    %s21 = sphi 0, %s19
    %s22 = sphi 0, %s20
    %s23 = sphi 0, %s21
    %s24 = sphi 0, %s22
    %s36 = sphi 0, %s38
    %s39 = sphi 0, %s36
    %s40 = sphi 0, %s39
    %s56 = sphi 0, %s40
    %s62 = sphi 0, %s64
    %s65 = sphi 0, %s62
    %s66 = sphi 0, %s65
    %s82 = sphi 0, %s66
    %s86 = sphi 0, %s86
    %s88 = sphi 0, %s86
    %s89 = sphi 0, %s88
    %s103 = sphi 0, %s89
    %s111 = sphi 0, %s113
    %s114 = sphi 0, %s111
    %s115 = sphi 0, %s114
    %s131 = sphi 0, %s115
    %s139 = sphi 0, %s141
    %s142 = sphi 0, %s139
    %s143 = sphi 0, %s142
    %s159 = sphi 0, %s143
    %s167 = sphi 0, %s169
    %s170 = sphi 0, %s167
    %s171 = sphi 0, %s170
    %s187 = sphi 0, %s171
  $region4: #{featnet2d_forward.10} parent=0 // loop_header_branch
    %15 = sbr.rel (%p13) target = $region8
  $region5: #{featnet2d_forward.10} parent=0 // loop_body
    %s17 = ssub.s32 %s12, 1
    %s18 = ssub.s32 %s12, 2
    %s25 = sadd.s32 1, %s20
    %p26 = scmp.ge.s32.totalorder %s25, 1
    %s27 = scalar_select %p26, 0, %s25
    %s28 = sadd.s32 1, %s19
    %s29 = scalar_select %p26, %s28, %s19
    %p30 = scmp.ge.s32.totalorder %s29, 4
    %s31 = scalar_select %p30, 0, %s29
    %s32 = ssub.s32 %s19, %s31
    %s33 = ssub.s32 %s20, %s27
    %s34 = sor.u32 %s32, %s33
    %p35 = scmp.eq.s32.totalorder %s34, 0
    %s37 = sadd.s32 %s36, 1
    %s38 = scalar_select %p35, %s36, %s37
    %p41 = pneg %p35
    %p42 = scmp.eq.s32.totalorder %s12, 3
    %p43 = por %p41, %p42
    %p44 = scmp.ne.s32.totalorder %s36, %s39
    %p45 = scmp.eq.s32.totalorder %s12, 0
    %p46 = por %p44, %p45
    %p47 = scmp.ne.s32.totalorder %s36, %s39
    %p48 = scmp.eq.s32.totalorder %s17, 3
    %p49 = por %p47, %p48
    %p50 = scmp.ne.s32.totalorder %s39, %s40
    %p51 = scmp.eq.s32.totalorder %s17, 0
    %p52 = por %p50, %p51
    %p53 = scmp.ne.s32.totalorder %s39, %s40
    %p54 = scmp.eq.s32.totalorder %s18, 3
    %p55 = por %p53, %p54
    %p57 = scmp.ne.s32.totalorder %s40, %s56
    %p58 = scmp.eq.s32.totalorder %s18, 0
    %p59 = por %p57, %p58
    %s60 = ssub.s32 %s19, %s31
    %p61 = scmp.eq.s32.totalorder %s60, 0
    %s63 = sadd.s32 %s62, 1
    %s64 = scalar_select %p61, %s62, %s63
    %p67 = pneg %p61
    %p68 = scmp.eq.s32.totalorder %s12, 3
    %p69 = por %p67, %p68
    %p70 = scmp.ne.s32.totalorder %s62, %s65
    %p71 = scmp.eq.s32.totalorder %s12, 0
    %p72 = por %p70, %p71
    %p73 = scmp.ne.s32.totalorder %s62, %s65
    %p74 = scmp.eq.s32.totalorder %s17, 3
    %p75 = por %p73, %p74
    %p76 = scmp.ne.s32.totalorder %s65, %s66
    %p77 = scmp.eq.s32.totalorder %s17, 0
    %p78 = por %p76, %p77
    %p79 = scmp.ne.s32.totalorder %s65, %s66
    %p80 = scmp.eq.s32.totalorder %s18, 3
    %p81 = por %p79, %p80
    %p83 = scmp.ne.s32.totalorder %s66, %s82
    %p84 = scmp.eq.s32.totalorder %s18, 0
    %p85 = por %p83, %p84
    %s87 = sadd.s32 %s86, 1
    %p90 = scmp.eq.s32.totalorder %s12, 3
    %p91 = scmp.ne.s32.totalorder %s86, %s88
    %p92 = scmp.eq.s32.totalorder %s12, 0
    %p93 = por %p91, %p92
    %p94 = scmp.ne.s32.totalorder %s86, %s88
    %p95 = scmp.eq.s32.totalorder %s17, 3
    %p96 = por %p94, %p95
    %p97 = scmp.ne.s32.totalorder %s88, %s89
    %p98 = scmp.eq.s32.totalorder %s17, 0
    %p99 = por %p97, %p98
    %p100 = scmp.ne.s32.totalorder %s88, %s89
    %p101 = scmp.eq.s32.totalorder %s18, 3
    %p102 = por %p100, %p101
    %p104 = scmp.ne.s32.totalorder %s89, %s103
    %p105 = scmp.eq.s32.totalorder %s18, 0
    %p106 = por %p104, %p105
    %s107 = ssub.s32 %s19, %s31
    %s108 = ssub.s32 %s20, %s27
    %s109 = sor.u32 %s107, %s108
    %p110 = scmp.eq.s32.totalorder %s109, 0
    %s112 = sadd.s32 %s111, 1
    %s113 = scalar_select %p110, %s111, %s112
    %p116 = pneg %p110
    %p117 = scmp.eq.s32.totalorder %s12, 3
    %p118 = por %p116, %p117
    %p119 = scmp.ne.s32.totalorder %s111, %s114
    %p120 = scmp.eq.s32.totalorder %s12, 0
    %p121 = por %p119, %p120
    %p122 = scmp.ne.s32.totalorder %s111, %s114
    %p123 = scmp.eq.s32.totalorder %s17, 3
    %p124 = por %p122, %p123
    %p125 = scmp.ne.s32.totalorder %s114, %s115
    %p126 = scmp.eq.s32.totalorder %s17, 0
    %p127 = por %p125, %p126
    %p128 = scmp.ne.s32.totalorder %s114, %s115
    %p129 = scmp.eq.s32.totalorder %s18, 3
    %p130 = por %p128, %p129
    %p132 = scmp.ne.s32.totalorder %s115, %s131
    %p133 = scmp.eq.s32.totalorder %s18, 0
    %p134 = por %p132, %p133
    %s135 = ssub.s32 %s19, %s31
    %s136 = ssub.s32 %s20, %s27
    %s137 = sor.u32 %s135, %s136
    %p138 = scmp.eq.s32.totalorder %s137, 0
    %s140 = sadd.s32 %s139, 1
    %s141 = scalar_select %p138, %s139, %s140
    %p144 = pneg %p138
    %p145 = scmp.eq.s32.totalorder %s12, 3
    %p146 = por %p144, %p145
    %p147 = scmp.ne.s32.totalorder %s139, %s142
    %p148 = scmp.eq.s32.totalorder %s12, 0
    %p149 = por %p147, %p148
    %p150 = scmp.ne.s32.totalorder %s139, %s142
    %p151 = scmp.eq.s32.totalorder %s17, 3
    %p152 = por %p150, %p151
    %p153 = scmp.ne.s32.totalorder %s142, %s143
    %p154 = scmp.eq.s32.totalorder %s17, 0
    %p155 = por %p153, %p154
    %p156 = scmp.ne.s32.totalorder %s142, %s143
    %p157 = scmp.eq.s32.totalorder %s18, 3
    %p158 = por %p156, %p157
    %p160 = scmp.ne.s32.totalorder %s143, %s159
    %p161 = scmp.eq.s32.totalorder %s18, 0
    %p162 = por %p160, %p161
    %s163 = ssub.s32 %s19, %s31
    %s164 = ssub.s32 %s20, %s27
    %s165 = sor.u32 %s163, %s164
    %p166 = scmp.eq.s32.totalorder %s165, 0
    %s168 = sadd.s32 %s167, 1
    %s169 = scalar_select %p166, %s167, %s168
    %p172 = pneg %p166
    %p173 = scmp.eq.s32.totalorder %s12, 3
    %p174 = por %p172, %p173
    %p175 = scmp.ne.s32.totalorder %s167, %s170
    %p176 = scmp.eq.s32.totalorder %s12, 0
    %p177 = por %p175, %p176
    %p178 = scmp.ne.s32.totalorder %s167, %s170
    %p179 = scmp.eq.s32.totalorder %s17, 3
    %p180 = por %p178, %p179
    %p181 = scmp.ne.s32.totalorder %s170, %s171
    %p182 = scmp.eq.s32.totalorder %s17, 0
    %p183 = por %p181, %p182
    %p184 = scmp.ne.s32.totalorder %s170, %s171
    %p185 = scmp.eq.s32.totalorder %s18, 3
    %p186 = por %p184, %p185
    %p188 = scmp.ne.s32.totalorder %s171, %s187
    %p189 = scmp.eq.s32.totalorder %s18, 0
    %p190 = por %p188, %p189
    %p191 = scmp.le.s32.totalorder 1, %s12
    %p192 = scmp.lt.s32.totalorder %s12, 5
    %p193 = pnand %p191, %p192
    %p194 = pneg %p193
    // Predicated region
    $region9: #{featnet2d_forward.10} parent=5 // pred_check
      _
    $region10: #{featnet2d_forward.10} parent=5 // pred_check_branch
      %196 = sbr.rel (%p193) target = $region12
    $region11: #{featnet2d_forward.10} parent=5 // pred_region
      %s197 = ssub.s32 %s12, 1
      // Predicated region
      $region13: #{featnet2d_forward.10} parent=11 // pred_check
        %p198 = pneg %p99
      $region14: #{featnet2d_forward.10} parent=11 // pred_check_branch
        %200 = sbr.rel (%p198) target = $region16
      $region15: #{featnet2d_forward.10} parent=11 // pred_region
        _
      $region16: #{featnet2d_forward.10} parent=11 // pred_fallthru
        _
    $region12: #{featnet2d_forward.10} parent=5 // pred_fallthru
      _
    %p201 = scmp.lt.s32.totalorder %s12, 4
    // Predicated region
    $region17: #{featnet2d_forward.10} parent=5 // pred_check
      %p202 = pneg %p201
    $region18: #{featnet2d_forward.10} parent=5 // pred_check_branch
      %204 = sbr.rel (%p202) target = $region20
    $region19: #{featnet2d_forward.10} parent=5 // pred_region
      // Predicated region
      $region21: #{featnet2d_forward.10} parent=19 // pred_check
        %p205 = pneg %p46
      $region22: #{featnet2d_forward.10} parent=19 // pred_check_branch
        %207 = sbr.rel (%p205) target = $region24
      $region23: #{featnet2d_forward.10} parent=19 // pred_region
        %s208 = smul.u32 4, %s20
        %p209 = scmp.lt.s32.totalorder %s19, 3
        %s210 = scalar_select %p209, %s19, 3
        %p211 = scmp.lt.s32.totalorder %s208, 3
        %s212 = scalar_select %p211, %s208, 3
        %s213 = smul.addr %s212, 12
        %s214 = smul.addr %s210, 48
        %s215 = sadd.s32 %s213, %s214
        %s216 = smul.addr %s215, 4
        %s217 = scalar_lea.vmem %s0, %s216
        %s218 = smul.u32 4, %s20
      $region24: #{featnet2d_forward.10} parent=19 // pred_fallthru
        _
      // Predicated region
      $region25: #{featnet2d_forward.10} parent=19 // pred_check
        %p219 = pneg %p72
      $region26: #{featnet2d_forward.10} parent=19 // pred_check_branch
        %221 = sbr.rel (%p219) target = $region28
      $region27: #{featnet2d_forward.10} parent=19 // pred_region
        %p222 = scmp.lt.s32.totalorder %s19, 3
        %s223 = scalar_select %p222, %s19, 3
        %s224 = smul.addr %s223, 192
        %s225 = smul.addr %s224, 4
        %s226 = scalar_lea.vmem %s1, %s225
      $region28: #{featnet2d_forward.10} parent=19 // pred_fallthru
        _
    $region20: #{featnet2d_forward.10} parent=5 // pred_fallthru
      _
    %p227 = scmp.le.s32.totalorder 1, %s12
    %p228 = scmp.lt.s32.totalorder %s12, 5
    %p229 = pnand %p227, %p228
    %p230 = pneg %p229
    // Predicated region
    $region29: #{featnet2d_forward.10} parent=5 // pred_check
      _
    $region30: #{featnet2d_forward.10} parent=5 // pred_check_branch
      %232 = sbr.rel (%p229) target = $region32
    $region31: #{featnet2d_forward.10} parent=5 // pred_region
      %s233 = ssub.s32 %s12, 1
      %s234 = smul.u32 4, %s22
      %p235 = scmp.lt.s32.totalorder %s21, 3
      %s236 = scalar_select %p235, %s21, 3
      %p237 = scmp.lt.s32.totalorder %s234, 3
      %s238 = scalar_select %p237, %s234, 3
      %s239 = smul.addr %s238, 12
      %s240 = smul.addr %s236, 48
      %s241 = sadd.s32 %s239, %s240
      %s242 = smul.addr %s241, 4
      %s243 = scalar_lea.vmem %s0, %s242
      %p244 = pneg %p52
      %p245 = pneg %p49
      %p246 = scmp.lt.s32.totalorder %s21, 3
      %s247 = scalar_select %p246, %s21, 3
      %s248 = smul.addr %s247, 192
      %s249 = smul.addr %s248, 4
      %s250 = scalar_lea.vmem %s1, %s249
      %p251 = pneg %p78
      %p252 = pneg %p75
      %p253 = pneg %p99
      %p254 = pneg %p96
      %p255 = pneg %p127
      %p256 = pneg %p124
      %s257 = smul.u32 4, %s22
      %p258 = scmp.lt.s32.totalorder %s21, 3
      %s259 = scalar_select %p258, %s21, 3
      %p260 = scmp.lt.s32.totalorder %s257, 3
      %s261 = scalar_select %p260, %s257, 3
      %s262 = smul.addr %s259, 4
      %s263 = sadd.s32 %s261, %s262
      %s264 = smul.addr %s263, 4
      %s265 = scalar_lea.vmem %s3, %s264
      %p266 = pneg %p155
      %p267 = pneg %p152
      %p268 = scmp.lt.s32.totalorder %s21, 3
      %s269 = scalar_select %p268, %s21, 3
      %p270 = scmp.lt.s32.totalorder %s22, 0
      %s271 = scalar_select %p270, %s22, 0
      %s272 = sadd.s32 %s271, %s269
      %s273 = scalar_lea.vmem %s4, %s272
      %p274 = pneg %p183
      %p275 = pneg %p180
      %p276 = scmp.lt.s32.totalorder %s21, 3
      %s277 = scalar_select %p276, %s21, 3
      %p278 = scmp.lt.s32.totalorder %s22, 0
      %s279 = scalar_select %p278, %s22, 0
      %s280 = sadd.s32 %s279, %s277
      %s281 = scalar_lea.vmem %s5, %s280
      %s282 = smul.u32 4, %s22
      %p283 = scmp.lt.s32.totalorder %s21, 3
      %s284 = scalar_select %p283, %s21, 3
      %p285 = scmp.lt.s32.totalorder %s282, 3
      %s286 = scalar_select %p285, %s282, 3
      %s287 = smul.addr %s286, 12
      %s288 = smul.addr %s284, 48
      %s289 = sadd.s32 %s287, %s288
      %s290 = smul.addr %s289, 4
      %s291 = scalar_lea.vmem %s0, %s290
      %s292 = smul.u32 4, %s22
      %p293 = scmp.lt.s32.totalorder %s21, 3
      %s294 = scalar_select %p293, %s21, 3
      %s295 = smul.addr %s294, 192
      %s296 = smul.addr %s295, 4
      %s297 = scalar_lea.vmem %s1, %s296
      %s298 = smul.u32 4, %s22
      %p299 = scmp.lt.s32.totalorder %s21, 3
      %s300 = scalar_select %p299, %s21, 3
      %p301 = scmp.lt.s32.totalorder %s298, 3
      %s302 = scalar_select %p301, %s298, 3
      %s303 = smul.addr %s300, 4
      %s304 = sadd.s32 %s302, %s303
      %s305 = smul.addr %s304, 4
      %s306 = scalar_lea.vmem %s3, %s305
      %s307 = smul.u32 4, %s22
      %p308 = scmp.lt.s32.totalorder %s21, 3
      %s309 = scalar_select %p308, %s21, 3
      %p310 = scmp.lt.s32.totalorder %s22, 0
      %s311 = scalar_select %p310, %s22, 0
      %s312 = sadd.s32 %s311, %s309
      %s313 = scalar_lea.vmem %s4, %s312
      %p314 = scmp.lt.s32.totalorder %s21, 3
      %s315 = scalar_select %p314, %s21, 3
      %p316 = scmp.lt.s32.totalorder %s22, 0
      %s317 = scalar_select %p316, %s22, 0
      %s318 = sadd.s32 %s317, %s315
      %s319 = scalar_lea.vmem %s5, %s318
      %v321 = vld [vmem:[%s291] sm:$0xff]
      %v322 = vld [vmem:[%s291 + $0x8] sm:$0xff]
      %v323 = vld [vmem:[%s291 + $0x10] sm:$0xff]
      %v324 = vld [vmem:[%s291 + $0x18] sm:$0xff]
      %v325 = vld [vmem:[%s291 + $0x20] sm:$0xff]
      %v326 = vld [vmem:[%s291 + $0x28] sm:$0xff]
      %v327 = vld [vmem:[%s291 + $0x30] sm:$0xff]
      %v328 = vld [vmem:[%s291 + $0x38] sm:$0xff]
      %v329 = vld [vmem:[%s291 + $0x40] sm:$0xff]
      %v330 = vld [vmem:[%s291 + $0x48] sm:$0xff]
      %v331 = vld [vmem:[%s291 + $0x50] sm:$0xff]
      %v332 = vld [vmem:[%s291 + $0x58] sm:$0xff]
      %v333 = vld [vmem:[%s291 + $0x60] sm:$0xff]
      %v334 = vld [vmem:[%s291 + $0x68] sm:$0xff]
      %v335 = vld [vmem:[%s291 + $0x70] sm:$0xff]
      %v336 = vld [vmem:[%s291 + $0x78] sm:$0xff]
      %v337 = vld [vmem:[%s291 + $0x80] sm:$0xff]
      %v338 = vld [vmem:[%s291 + $0x88] sm:$0xff]
      %v339 = vld [vmem:[%s291 + $0x90] sm:$0xff]
      %v340 = vld [vmem:[%s291 + $0x98] sm:$0xff]
      %v341 = vld [vmem:[%s291 + $0xa0] sm:$0xff]
      %v342 = vld [vmem:[%s291 + $0xa8] sm:$0xff]
      %v343 = vld [vmem:[%s291 + $0xb0] sm:$0xff]
      %v344 = vld [vmem:[%s291 + $0xb8] sm:$0xff]
      %v345 = vld [vmem:[%s297] sm:$0xf]
      %v346 = vld [vmem:[%s297 + $0x4] sm:$0xf]
      %v347 = vld [vmem:[%s297 + $0x8] sm:$0xf]
      %v348 = vld [vmem:[%s297 + $0xc] sm:$0xf]
      %v349 = vld [vmem:[%s297 + $0x10] sm:$0xf]
      %v350 = vld [vmem:[%s297 + $0x14] sm:$0xf]
      %v351 = vld [vmem:[%s297 + $0x18] sm:$0xf]
      %v352 = vld [vmem:[%s297 + $0x1c] sm:$0xf]
      %v353 = vld [vmem:[%s297 + $0x20] sm:$0xf]
      %v354 = vld [vmem:[%s297 + $0x24] sm:$0xf]
      %v355 = vld [vmem:[%s297 + $0x28] sm:$0xf]
      %v356 = vld [vmem:[%s297 + $0x2c] sm:$0xf]
      %v357 = vld [vmem:[%s297 + $0x30] sm:$0xf]
      %v358 = vld [vmem:[%s297 + $0x34] sm:$0xf]
      %v359 = vld [vmem:[%s297 + $0x38] sm:$0xf]
      %v360 = vld [vmem:[%s297 + $0x3c] sm:$0xf]
      %v361 = vld [vmem:[%s297 + $0x40] sm:$0xf]
      %v362 = vld [vmem:[%s297 + $0x44] sm:$0xf]
      %v363 = vld [vmem:[%s297 + $0x48] sm:$0xf]
      %v364 = vld [vmem:[%s297 + $0x4c] sm:$0xf]
      %v365 = vld [vmem:[%s297 + $0x50] sm:$0xf]
      %v366 = vld [vmem:[%s297 + $0x54] sm:$0xf]
      %v367 = vld [vmem:[%s297 + $0x58] sm:$0xf]
      %v368 = vld [vmem:[%s297 + $0x5c] sm:$0xf]
      %v369 = vld [vmem:[%s297 + $0x60] sm:$0xf]
      %v370 = vld [vmem:[%s297 + $0x64] sm:$0xf]
      %v371 = vld [vmem:[%s297 + $0x68] sm:$0xf]
      %v372 = vld [vmem:[%s297 + $0x6c] sm:$0xf]
      %v373 = vld [vmem:[%s297 + $0x70] sm:$0xf]
      %v374 = vld [vmem:[%s297 + $0x74] sm:$0xf]
      %v375 = vld [vmem:[%s297 + $0x78] sm:$0xf]
      %v376 = vld [vmem:[%s297 + $0x7c] sm:$0xf]
      %v377 = vld [vmem:[%s297 + $0x80] sm:$0xf]
      %v378 = vld [vmem:[%s297 + $0x84] sm:$0xf]
      %v379 = vld [vmem:[%s297 + $0x88] sm:$0xf]
      %v380 = vld [vmem:[%s297 + $0x8c] sm:$0xf]
      %v381 = vld [vmem:[%s297 + $0x90] sm:$0xf]
      %v382 = vld [vmem:[%s297 + $0x94] sm:$0xf]
      %v383 = vld [vmem:[%s297 + $0x98] sm:$0xf]
      %v384 = vld [vmem:[%s297 + $0x9c] sm:$0xf]
      %v385 = vld [vmem:[%s297 + $0xa0] sm:$0xf]
      %v386 = vld [vmem:[%s297 + $0xa4] sm:$0xf]
      %v387 = vld [vmem:[%s297 + $0xa8] sm:$0xf]
      %v388 = vld [vmem:[%s297 + $0xac] sm:$0xf]
      %v389 = vld [vmem:[%s297 + $0xb0] sm:$0xf]
      %v390 = vld [vmem:[%s297 + $0xb4] sm:$0xf]
      %v391 = vld [vmem:[%s297 + $0xb8] sm:$0xf]
      %v392 = vld [vmem:[%s297 + $0xbc] sm:$0xf]
      %v393 = vld [vmem:[%s297 + $0xc0] sm:$0xf]
      %v394 = vld [vmem:[%s297 + $0xc4] sm:$0xf]
      %v395 = vld [vmem:[%s297 + $0xc8] sm:$0xf]
      %v396 = vld [vmem:[%s297 + $0xcc] sm:$0xf]
      %v397 = vld [vmem:[%s297 + $0xd0] sm:$0xf]
      %v398 = vld [vmem:[%s297 + $0xd4] sm:$0xf]
      %v399 = vld [vmem:[%s297 + $0xd8] sm:$0xf]
      %v400 = vld [vmem:[%s297 + $0xdc] sm:$0xf]
      %v401 = vld [vmem:[%s297 + $0xe0] sm:$0xf]
      %v402 = vld [vmem:[%s297 + $0xe4] sm:$0xf]
      %v403 = vld [vmem:[%s297 + $0xe8] sm:$0xf]
      %v404 = vld [vmem:[%s297 + $0xec] sm:$0xf]
      %v405 = vld [vmem:[%s297 + $0xf0] sm:$0xf]
      %v406 = vld [vmem:[%s297 + $0xf4] sm:$0xf]
      %v407 = vld [vmem:[%s297 + $0xf8] sm:$0xf]
      %v408 = vld [vmem:[%s297 + $0xfc] sm:$0xf]
      %v409 = vld [vmem:[%s297 + $0x100] sm:$0xf]
      %v410 = vld [vmem:[%s297 + $0x104] sm:$0xf]
      %v411 = vld [vmem:[%s297 + $0x108] sm:$0xf]
      %v412 = vld [vmem:[%s297 + $0x10c] sm:$0xf]
      %v413 = vld [vmem:[%s297 + $0x110] sm:$0xf]
      %v414 = vld [vmem:[%s297 + $0x114] sm:$0xf]
      %v415 = vld [vmem:[%s297 + $0x118] sm:$0xf]
      %v416 = vld [vmem:[%s297 + $0x11c] sm:$0xf]
      %v417 = vld [vmem:[%s297 + $0x120] sm:$0xf]
      %v418 = vld [vmem:[%s297 + $0x124] sm:$0xf]
      %v419 = vld [vmem:[%s297 + $0x128] sm:$0xf]
      %v420 = vld [vmem:[%s297 + $0x12c] sm:$0xf]
      %v421 = vld [vmem:[%s297 + $0x130] sm:$0xf]
      %v422 = vld [vmem:[%s297 + $0x134] sm:$0xf]
      %v423 = vld [vmem:[%s297 + $0x138] sm:$0xf]
      %v424 = vld [vmem:[%s297 + $0x13c] sm:$0xf]
      %v425 = vld [vmem:[%s297 + $0x140] sm:$0xf]
      %v426 = vld [vmem:[%s297 + $0x144] sm:$0xf]
      %v427 = vld [vmem:[%s297 + $0x148] sm:$0xf]
      %v428 = vld [vmem:[%s297 + $0x14c] sm:$0xf]
      %v429 = vld [vmem:[%s297 + $0x150] sm:$0xf]
      %v430 = vld [vmem:[%s297 + $0x154] sm:$0xf]
      %v431 = vld [vmem:[%s297 + $0x158] sm:$0xf]
      %v432 = vld [vmem:[%s297 + $0x15c] sm:$0xf]
      %v433 = vld [vmem:[%s297 + $0x160] sm:$0xf]
      %v434 = vld [vmem:[%s297 + $0x164] sm:$0xf]
      %v435 = vld [vmem:[%s297 + $0x168] sm:$0xf]
      %v436 = vld [vmem:[%s297 + $0x16c] sm:$0xf]
      %v437 = vld [vmem:[%s297 + $0x170] sm:$0xf]
      %v438 = vld [vmem:[%s297 + $0x174] sm:$0xf]
      %v439 = vld [vmem:[%s297 + $0x178] sm:$0xf]
      %v440 = vld [vmem:[%s297 + $0x17c] sm:$0xf]
      %v441 = vld [vmem:[%s297 + $0x180] sm:$0xf]
      %v442 = vld [vmem:[%s297 + $0x184] sm:$0xf]
      %v443 = vld [vmem:[%s297 + $0x188] sm:$0xf]
      %v444 = vld [vmem:[%s297 + $0x18c] sm:$0xf]
      %v445 = vld [vmem:[%s297 + $0x190] sm:$0xf]
      %v446 = vld [vmem:[%s297 + $0x194] sm:$0xf]
      %v447 = vld [vmem:[%s297 + $0x198] sm:$0xf]
      %v448 = vld [vmem:[%s297 + $0x19c] sm:$0xf]
      %v449 = vld [vmem:[%s297 + $0x1a0] sm:$0xf]
      %v450 = vld [vmem:[%s297 + $0x1a4] sm:$0xf]
      %v451 = vld [vmem:[%s297 + $0x1a8] sm:$0xf]
      %v452 = vld [vmem:[%s297 + $0x1ac] sm:$0xf]
      %v453 = vld [vmem:[%s297 + $0x1b0] sm:$0xf]
      %v454 = vld [vmem:[%s297 + $0x1b4] sm:$0xf]
      %v455 = vld [vmem:[%s297 + $0x1b8] sm:$0xf]
      %v456 = vld [vmem:[%s297 + $0x1bc] sm:$0xf]
      %v457 = vld [vmem:[%s297 + $0x1c0] sm:$0xf]
      %v458 = vld [vmem:[%s297 + $0x1c4] sm:$0xf]
      %v459 = vld [vmem:[%s297 + $0x1c8] sm:$0xf]
      %v460 = vld [vmem:[%s297 + $0x1cc] sm:$0xf]
      %v461 = vld [vmem:[%s297 + $0x1d0] sm:$0xf]
      %v462 = vld [vmem:[%s297 + $0x1d4] sm:$0xf]
      %v463 = vld [vmem:[%s297 + $0x1d8] sm:$0xf]
      %v464 = vld [vmem:[%s297 + $0x1dc] sm:$0xf]
      %v465 = vld [vmem:[%s297 + $0x1e0] sm:$0xf]
      %v466 = vld [vmem:[%s297 + $0x1e4] sm:$0xf]
      %v467 = vld [vmem:[%s297 + $0x1e8] sm:$0xf]
      %v468 = vld [vmem:[%s297 + $0x1ec] sm:$0xf]
      %v469 = vld [vmem:[%s297 + $0x1f0] sm:$0xf]
      %v470 = vld [vmem:[%s297 + $0x1f4] sm:$0xf]
      %v471 = vld [vmem:[%s297 + $0x1f8] sm:$0xf]
      %v472 = vld [vmem:[%s297 + $0x1fc] sm:$0xf]
      %v473 = vld [vmem:[%s297 + $0x200] sm:$0xf]
      %v474 = vld [vmem:[%s297 + $0x204] sm:$0xf]
      %v475 = vld [vmem:[%s297 + $0x208] sm:$0xf]
      %v476 = vld [vmem:[%s297 + $0x20c] sm:$0xf]
      %v477 = vld [vmem:[%s297 + $0x210] sm:$0xf]
      %v478 = vld [vmem:[%s297 + $0x214] sm:$0xf]
      %v479 = vld [vmem:[%s297 + $0x218] sm:$0xf]
      %v480 = vld [vmem:[%s297 + $0x21c] sm:$0xf]
      %v481 = vld [vmem:[%s297 + $0x220] sm:$0xf]
      %v482 = vld [vmem:[%s297 + $0x224] sm:$0xf]
      %v483 = vld [vmem:[%s297 + $0x228] sm:$0xf]
      %v484 = vld [vmem:[%s297 + $0x22c] sm:$0xf]
      %v485 = vld [vmem:[%s297 + $0x230] sm:$0xf]
      %v486 = vld [vmem:[%s297 + $0x234] sm:$0xf]
      %v487 = vld [vmem:[%s297 + $0x238] sm:$0xf]
      %v488 = vld [vmem:[%s297 + $0x23c] sm:$0xf]
      %v489 = vld [vmem:[%s297 + $0x240] sm:$0xf]
      %v490 = vld [vmem:[%s297 + $0x244] sm:$0xf]
      %v491 = vld [vmem:[%s297 + $0x248] sm:$0xf]
      %v492 = vld [vmem:[%s297 + $0x24c] sm:$0xf]
      %v493 = vld [vmem:[%s297 + $0x250] sm:$0xf]
      %v494 = vld [vmem:[%s297 + $0x254] sm:$0xf]
      %v495 = vld [vmem:[%s297 + $0x258] sm:$0xf]
      %v496 = vld [vmem:[%s297 + $0x25c] sm:$0xf]
      %v497 = vld [vmem:[%s297 + $0x260] sm:$0xf]
      %v498 = vld [vmem:[%s297 + $0x264] sm:$0xf]
      %v499 = vld [vmem:[%s297 + $0x268] sm:$0xf]
      %v500 = vld [vmem:[%s297 + $0x26c] sm:$0xf]
      %v501 = vld [vmem:[%s297 + $0x270] sm:$0xf]
      %v502 = vld [vmem:[%s297 + $0x274] sm:$0xf]
      %v503 = vld [vmem:[%s297 + $0x278] sm:$0xf]
      %v504 = vld [vmem:[%s297 + $0x27c] sm:$0xf]
      %v505 = vld [vmem:[%s297 + $0x280] sm:$0xf]
      %v506 = vld [vmem:[%s297 + $0x284] sm:$0xf]
      %v507 = vld [vmem:[%s297 + $0x288] sm:$0xf]
      %v508 = vld [vmem:[%s297 + $0x28c] sm:$0xf]
      %v509 = vld [vmem:[%s297 + $0x290] sm:$0xf]
      %v510 = vld [vmem:[%s297 + $0x294] sm:$0xf]
      %v511 = vld [vmem:[%s297 + $0x298] sm:$0xf]
      %v512 = vld [vmem:[%s297 + $0x29c] sm:$0xf]
      %v513 = vld [vmem:[%s297 + $0x2a0] sm:$0xf]
      %v514 = vld [vmem:[%s297 + $0x2a4] sm:$0xf]
      %v515 = vld [vmem:[%s297 + $0x2a8] sm:$0xf]
      %v516 = vld [vmem:[%s297 + $0x2ac] sm:$0xf]
      %v517 = vld [vmem:[%s297 + $0x2b0] sm:$0xf]
      %v518 = vld [vmem:[%s297 + $0x2b4] sm:$0xf]
      %v519 = vld [vmem:[%s297 + $0x2b8] sm:$0xf]
      %v520 = vld [vmem:[%s297 + $0x2bc] sm:$0xf]
      %v521 = vld [vmem:[%s297 + $0x2c0] sm:$0xf]
      %v522 = vld [vmem:[%s297 + $0x2c4] sm:$0xf]
      %v523 = vld [vmem:[%s297 + $0x2c8] sm:$0xf]
      %v524 = vld [vmem:[%s297 + $0x2cc] sm:$0xf]
      %v525 = vld [vmem:[%s297 + $0x2d0] sm:$0xf]
      %v526 = vld [vmem:[%s297 + $0x2d4] sm:$0xf]
      %v527 = vld [vmem:[%s297 + $0x2d8] sm:$0xf]
      %v528 = vld [vmem:[%s297 + $0x2dc] sm:$0xf]
      %v529 = vld [vmem:[%s297 + $0x2e0] sm:$0xf]
      %v530 = vld [vmem:[%s297 + $0x2e4] sm:$0xf]
      %v531 = vld [vmem:[%s297 + $0x2e8] sm:$0xf]
      %v532 = vld [vmem:[%s297 + $0x2ec] sm:$0xf]
      %v533 = vld [vmem:[%s297 + $0x2f0] sm:$0xf]
      %v534 = vld [vmem:[%s297 + $0x2f4] sm:$0xf]
      %v535 = vld [vmem:[%s297 + $0x2f8] sm:$0xf]
      %v536 = vld [vmem:[%s297 + $0x2fc] sm:$0xf]
      %v537 = vld [vmem:[%s2] sm:$0x1]
      %v539 = vlaneseq
      %v540 = vshrl.u32 %v539, 7
      %v541 = vsub.s32 0, %v540
      %v542 = vrot.slane %v537, %v541
      %v568 = vunpack.c.l.b16 %v321
      %v569 = vunpack.c.h.b16 %v321
      %v570 = vunpack.c.l.b16 %v322
      %v571 = vunpack.c.h.b16 %v322
      %v572 = vunpack.c.l.b16 %v323
      %v573 = vunpack.c.h.b16 %v323
      %v574 = vunpack.c.l.b16 %v324
      %v575 = vunpack.c.h.b16 %v324
      %v576 = vunpack.c.l.b16 %v325
      %v577 = vunpack.c.h.b16 %v325
      %v578 = vunpack.c.l.b16 %v326
      %v579 = vunpack.c.h.b16 %v326
      %v580 = vunpack.c.l.b16 %v327
      %v581 = vunpack.c.h.b16 %v327
      %v582 = vunpack.c.l.b16 %v328
      %v583 = vunpack.c.h.b16 %v328
      %v584 = vunpack.c.l.b16 %v329
      %v585 = vunpack.c.h.b16 %v329
      %v586 = vunpack.c.l.b16 %v330
      %v587 = vunpack.c.h.b16 %v330
      %v588 = vunpack.c.l.b16 %v331
      %v589 = vunpack.c.h.b16 %v331
      %v590 = vunpack.c.l.b16 %v332
      %v591 = vunpack.c.h.b16 %v332
      %v592 = vunpack.c.l.b16 %v333
      %v593 = vunpack.c.h.b16 %v333
      %v594 = vunpack.c.l.b16 %v334
      %v595 = vunpack.c.h.b16 %v334
      %v596 = vunpack.c.l.b16 %v335
      %v597 = vunpack.c.h.b16 %v335
      %v598 = vunpack.c.l.b16 %v336
      %v599 = vunpack.c.h.b16 %v336
      %v600 = vunpack.c.l.b16 %v337
      %v601 = vunpack.c.h.b16 %v337
      %v602 = vunpack.c.l.b16 %v338
      %v603 = vunpack.c.h.b16 %v338
      %v604 = vunpack.c.l.b16 %v339
      %v605 = vunpack.c.h.b16 %v339
      %v606 = vunpack.c.l.b16 %v340
      %v607 = vunpack.c.h.b16 %v340
      %v608 = vunpack.c.l.b16 %v341
      %v609 = vunpack.c.h.b16 %v341
      %v610 = vunpack.c.l.b16 %v342
      %v611 = vunpack.c.h.b16 %v342
      %v612 = vunpack.c.l.b16 %v343
      %v613 = vunpack.c.h.b16 %v343
      %v614 = vunpack.c.l.b16 %v344
      %v615 = vunpack.c.h.b16 %v344
      %v616 = vpack.c.b16 %v580, %v568
      %v617 = vpack.c.b16 %v581, %v569
      %v618 = vpack.c.b16 %v582, %v570
      %v619 = vpack.c.b16 %v583, %v571
      %v620 = vpack.c.b16 %v584, %v572
      %v621 = vpack.c.b16 %v585, %v573
      %v622 = vpack.c.b16 %v586, %v574
      %v623 = vpack.c.b16 %v587, %v575
      %v624 = vpack.c.b16 %v588, %v576
      %v625 = vpack.c.b16 %v589, %v577
      %v626 = vpack.c.b16 %v590, %v578
      %v627 = vpack.c.b16 %v591, %v579
      %v628 = vpack.c.b16 %v604, %v592
      %v629 = vpack.c.b16 %v605, %v593
      %v630 = vpack.c.b16 %v606, %v594
      %v631 = vpack.c.b16 %v607, %v595
      %v632 = vpack.c.b16 %v608, %v596
      %v633 = vpack.c.b16 %v609, %v597
      %v634 = vpack.c.b16 %v610, %v598
      %v635 = vpack.c.b16 %v611, %v599
      %v636 = vpack.c.b16 %v612, %v600
      %v637 = vpack.c.b16 %v613, %v601
      %v638 = vpack.c.b16 %v614, %v602
      %v639 = vpack.c.b16 %v615, %v603
      %v856 = vunpack.c.l.b16 %v345
      %v857 = vunpack.c.l.b16 %v346
      %v858 = vunpack.c.l.b16 %v347
      %v859 = vunpack.c.l.b16 %v348
      %v860 = vunpack.c.l.b16 %v349
      %v861 = vunpack.c.l.b16 %v350
      %v862 = vunpack.c.l.b16 %v351
      %v863 = vunpack.c.l.b16 %v352
      %v864 = vunpack.c.l.b16 %v353
      %v865 = vunpack.c.l.b16 %v354
      %v866 = vunpack.c.l.b16 %v355
      %v867 = vunpack.c.l.b16 %v356
      %v868 = vunpack.c.l.b16 %v357
      %v869 = vunpack.c.l.b16 %v358
      %v870 = vunpack.c.l.b16 %v359
      %v871 = vunpack.c.l.b16 %v360
      %v872 = vunpack.c.l.b16 %v361
      %v873 = vunpack.c.l.b16 %v362
      %v874 = vunpack.c.l.b16 %v363
      %v875 = vunpack.c.l.b16 %v364
      %v876 = vunpack.c.l.b16 %v365
      %v877 = vunpack.c.l.b16 %v366
      %v878 = vunpack.c.l.b16 %v367
      %v879 = vunpack.c.l.b16 %v368
      %v880 = vunpack.c.l.b16 %v369
      %v881 = vunpack.c.l.b16 %v370
      %v882 = vunpack.c.l.b16 %v371
      %v883 = vunpack.c.l.b16 %v372
      %v884 = vunpack.c.l.b16 %v373
      %v885 = vunpack.c.l.b16 %v374
      %v886 = vunpack.c.l.b16 %v375
      %v887 = vunpack.c.l.b16 %v376
      %v888 = vunpack.c.l.b16 %v377
      %v889 = vunpack.c.l.b16 %v378
      %v890 = vunpack.c.l.b16 %v379
      %v891 = vunpack.c.l.b16 %v380
      %v892 = vunpack.c.l.b16 %v381
      %v893 = vunpack.c.l.b16 %v382
      %v894 = vunpack.c.l.b16 %v383
      %v895 = vunpack.c.l.b16 %v384
      %v896 = vunpack.c.l.b16 %v385
      %v897 = vunpack.c.l.b16 %v386
      %v898 = vunpack.c.l.b16 %v387
      %v899 = vunpack.c.l.b16 %v388
      %v900 = vunpack.c.l.b16 %v389
      %v901 = vunpack.c.l.b16 %v390
      %v902 = vunpack.c.l.b16 %v391
      %v903 = vunpack.c.l.b16 %v392
      %v904 = vunpack.c.l.b16 %v393
      %v905 = vunpack.c.l.b16 %v394
      %v906 = vunpack.c.l.b16 %v395
      %v907 = vunpack.c.l.b16 %v396
      %v908 = vunpack.c.l.b16 %v397
      %v909 = vunpack.c.l.b16 %v398
      %v910 = vunpack.c.l.b16 %v399
      %v911 = vunpack.c.l.b16 %v400
      %v912 = vunpack.c.l.b16 %v401
      %v913 = vunpack.c.l.b16 %v402
      %v914 = vunpack.c.l.b16 %v403
      %v915 = vunpack.c.l.b16 %v404
      %v916 = vunpack.c.l.b16 %v405
      %v917 = vunpack.c.l.b16 %v406
      %v918 = vunpack.c.l.b16 %v407
      %v919 = vunpack.c.l.b16 %v408
      %v920 = vunpack.c.l.b16 %v409
      %v921 = vunpack.c.l.b16 %v410
      %v922 = vunpack.c.l.b16 %v411
      %v923 = vunpack.c.l.b16 %v412
      %v924 = vunpack.c.l.b16 %v413
      %v925 = vunpack.c.l.b16 %v414
      %v926 = vunpack.c.l.b16 %v415
      %v927 = vunpack.c.l.b16 %v416
      %v928 = vunpack.c.l.b16 %v417
      %v929 = vunpack.c.l.b16 %v418
      %v930 = vunpack.c.l.b16 %v419
      %v931 = vunpack.c.l.b16 %v420
      %v932 = vunpack.c.l.b16 %v421
      %v933 = vunpack.c.l.b16 %v422
      %v934 = vunpack.c.l.b16 %v423
      %v935 = vunpack.c.l.b16 %v424
      %v936 = vunpack.c.l.b16 %v425
      %v937 = vunpack.c.l.b16 %v426
      %v938 = vunpack.c.l.b16 %v427
      %v939 = vunpack.c.l.b16 %v428
      %v940 = vunpack.c.l.b16 %v429
      %v941 = vunpack.c.l.b16 %v430
      %v942 = vunpack.c.l.b16 %v431
      %v943 = vunpack.c.l.b16 %v432
      %v944 = vunpack.c.l.b16 %v433
      %v945 = vunpack.c.l.b16 %v434
      %v946 = vunpack.c.l.b16 %v435
      %v947 = vunpack.c.l.b16 %v436
      %v948 = vunpack.c.l.b16 %v437
      %v949 = vunpack.c.l.b16 %v438
      %v950 = vunpack.c.l.b16 %v439
      %v951 = vunpack.c.l.b16 %v440
      %v952 = vunpack.c.l.b16 %v441
      %v953 = vunpack.c.l.b16 %v442
      %v954 = vunpack.c.l.b16 %v443
      %v955 = vunpack.c.l.b16 %v444
      %v956 = vunpack.c.l.b16 %v445
      %v957 = vunpack.c.l.b16 %v446
      %v958 = vunpack.c.l.b16 %v447
      %v959 = vunpack.c.l.b16 %v448
      %v960 = vunpack.c.l.b16 %v449
      %v961 = vunpack.c.l.b16 %v450
      %v962 = vunpack.c.l.b16 %v451
      %v963 = vunpack.c.l.b16 %v452
      %v964 = vunpack.c.l.b16 %v453
      %v965 = vunpack.c.l.b16 %v454
      %v966 = vunpack.c.l.b16 %v455
      %v967 = vunpack.c.l.b16 %v456
      %v968 = vunpack.c.l.b16 %v457
      %v969 = vunpack.c.l.b16 %v458
      %v970 = vunpack.c.l.b16 %v459
      %v971 = vunpack.c.l.b16 %v460
      %v972 = vunpack.c.l.b16 %v461
      %v973 = vunpack.c.l.b16 %v462
      %v974 = vunpack.c.l.b16 %v463
      %v975 = vunpack.c.l.b16 %v464
      %v976 = vunpack.c.l.b16 %v465
      %v977 = vunpack.c.l.b16 %v466
      %v978 = vunpack.c.l.b16 %v467
      %v979 = vunpack.c.l.b16 %v468
      %v980 = vunpack.c.l.b16 %v469
      %v981 = vunpack.c.l.b16 %v470
      %v982 = vunpack.c.l.b16 %v471
      %v983 = vunpack.c.l.b16 %v472
      %v984 = vunpack.c.l.b16 %v473
      %v985 = vunpack.c.l.b16 %v474
      %v986 = vunpack.c.l.b16 %v475
      %v987 = vunpack.c.l.b16 %v476
      %v988 = vunpack.c.l.b16 %v477
      %v989 = vunpack.c.l.b16 %v478
      %v990 = vunpack.c.l.b16 %v479
      %v991 = vunpack.c.l.b16 %v480
      %v992 = vunpack.c.l.b16 %v481
      %v993 = vunpack.c.l.b16 %v482
      %v994 = vunpack.c.l.b16 %v483
      %v995 = vunpack.c.l.b16 %v484
      %v996 = vunpack.c.l.b16 %v485
      %v997 = vunpack.c.l.b16 %v486
      %v998 = vunpack.c.l.b16 %v487
      %v999 = vunpack.c.l.b16 %v488
      %v1000 = vunpack.c.l.b16 %v489
      %v1001 = vunpack.c.l.b16 %v490
      %v1002 = vunpack.c.l.b16 %v491
      %v1003 = vunpack.c.l.b16 %v492
      %v1004 = vunpack.c.l.b16 %v493
      %v1005 = vunpack.c.l.b16 %v494
      %v1006 = vunpack.c.l.b16 %v495
      %v1007 = vunpack.c.l.b16 %v496
      %v1008 = vunpack.c.l.b16 %v497
      %v1009 = vunpack.c.l.b16 %v498
      %v1010 = vunpack.c.l.b16 %v499
      %v1011 = vunpack.c.l.b16 %v500
      %v1012 = vunpack.c.l.b16 %v501
      %v1013 = vunpack.c.l.b16 %v502
      %v1014 = vunpack.c.l.b16 %v503
      %v1015 = vunpack.c.l.b16 %v504
      %v1016 = vunpack.c.l.b16 %v505
      %v1017 = vunpack.c.l.b16 %v506
      %v1018 = vunpack.c.l.b16 %v507
      %v1019 = vunpack.c.l.b16 %v508
      %v1020 = vunpack.c.l.b16 %v509
      %v1021 = vunpack.c.l.b16 %v510
      %v1022 = vunpack.c.l.b16 %v511
      %v1023 = vunpack.c.l.b16 %v512
      %v1024 = vunpack.c.l.b16 %v513
      %v1025 = vunpack.c.l.b16 %v514
      %v1026 = vunpack.c.l.b16 %v515
      %v1027 = vunpack.c.l.b16 %v516
      %v1028 = vunpack.c.l.b16 %v517
      %v1029 = vunpack.c.l.b16 %v518
      %v1030 = vunpack.c.l.b16 %v519
      %v1031 = vunpack.c.l.b16 %v520
      %v1032 = vunpack.c.l.b16 %v521
      %v1033 = vunpack.c.l.b16 %v522
      %v1034 = vunpack.c.l.b16 %v523
      %v1035 = vunpack.c.l.b16 %v524
      %v1036 = vunpack.c.l.b16 %v525
      %v1037 = vunpack.c.l.b16 %v526
      %v1038 = vunpack.c.l.b16 %v527
      %v1039 = vunpack.c.l.b16 %v528
      %v1040 = vunpack.c.l.b16 %v529
      %v1041 = vunpack.c.l.b16 %v530
      %v1042 = vunpack.c.l.b16 %v531
      %v1043 = vunpack.c.l.b16 %v532
      %v1044 = vunpack.c.l.b16 %v533
      %v1045 = vunpack.c.l.b16 %v534
      %v1046 = vunpack.c.l.b16 %v535
      %v1047 = vunpack.c.l.b16 %v536
      %v1048 = vpack.c.b16 %v857, %v856
      %v1049 = vpack.c.b16 %v859, %v858
      %v1050 = vpack.c.b16 %v861, %v860
      %v1051 = vpack.c.b16 %v863, %v862
      %v1052 = vpack.c.b16 %v865, %v864
      %v1053 = vpack.c.b16 %v867, %v866
      %v1054 = vpack.c.b16 %v869, %v868
      %v1055 = vpack.c.b16 %v871, %v870
      %v1056 = vpack.c.b16 %v873, %v872
      %v1057 = vpack.c.b16 %v875, %v874
      %v1058 = vpack.c.b16 %v877, %v876
      %v1059 = vpack.c.b16 %v879, %v878
      %v1060 = vpack.c.b16 %v881, %v880
      %v1061 = vpack.c.b16 %v883, %v882
      %v1062 = vpack.c.b16 %v885, %v884
      %v1063 = vpack.c.b16 %v887, %v886
      %v1064 = vpack.c.b16 %v889, %v888
      %v1065 = vpack.c.b16 %v891, %v890
      %v1066 = vpack.c.b16 %v893, %v892
      %v1067 = vpack.c.b16 %v895, %v894
      %v1068 = vpack.c.b16 %v897, %v896
      %v1069 = vpack.c.b16 %v899, %v898
      %v1070 = vpack.c.b16 %v901, %v900
      %v1071 = vpack.c.b16 %v903, %v902
      %v1072 = vpack.c.b16 %v905, %v904
      %v1073 = vpack.c.b16 %v907, %v906
      %v1074 = vpack.c.b16 %v909, %v908
      %v1075 = vpack.c.b16 %v911, %v910
      %v1076 = vpack.c.b16 %v913, %v912
      %v1077 = vpack.c.b16 %v915, %v914
      %v1078 = vpack.c.b16 %v917, %v916
      %v1079 = vpack.c.b16 %v919, %v918
      %v1080 = vpack.c.b16 %v921, %v920
      %v1081 = vpack.c.b16 %v923, %v922
      %v1082 = vpack.c.b16 %v925, %v924
      %v1083 = vpack.c.b16 %v927, %v926
      %v1084 = vpack.c.b16 %v929, %v928
      %v1085 = vpack.c.b16 %v931, %v930
      %v1086 = vpack.c.b16 %v933, %v932
      %v1087 = vpack.c.b16 %v935, %v934
      %v1088 = vpack.c.b16 %v937, %v936
      %v1089 = vpack.c.b16 %v939, %v938
      %v1090 = vpack.c.b16 %v941, %v940
      %v1091 = vpack.c.b16 %v943, %v942
      %v1092 = vpack.c.b16 %v945, %v944
      %v1093 = vpack.c.b16 %v947, %v946
      %v1094 = vpack.c.b16 %v949, %v948
      %v1095 = vpack.c.b16 %v951, %v950
      %v1096 = vpack.c.b16 %v953, %v952
      %v1097 = vpack.c.b16 %v955, %v954
      %v1098 = vpack.c.b16 %v957, %v956
      %v1099 = vpack.c.b16 %v959, %v958
      %v1100 = vpack.c.b16 %v961, %v960
      %v1101 = vpack.c.b16 %v963, %v962
      %v1102 = vpack.c.b16 %v965, %v964
      %v1103 = vpack.c.b16 %v967, %v966
      %v1104 = vpack.c.b16 %v969, %v968
      %v1105 = vpack.c.b16 %v971, %v970
      %v1106 = vpack.c.b16 %v973, %v972
      %v1107 = vpack.c.b16 %v975, %v974
      %v1108 = vpack.c.b16 %v977, %v976
      %v1109 = vpack.c.b16 %v979, %v978
      %v1110 = vpack.c.b16 %v981, %v980
      %v1111 = vpack.c.b16 %v983, %v982
      %v1112 = vpack.c.b16 %v985, %v984
      %v1113 = vpack.c.b16 %v987, %v986
      %v1114 = vpack.c.b16 %v989, %v988
      %v1115 = vpack.c.b16 %v991, %v990
      %v1116 = vpack.c.b16 %v993, %v992
      %v1117 = vpack.c.b16 %v995, %v994
      %v1118 = vpack.c.b16 %v997, %v996
      %v1119 = vpack.c.b16 %v999, %v998
      %v1120 = vpack.c.b16 %v1001, %v1000
      %v1121 = vpack.c.b16 %v1003, %v1002
      %v1122 = vpack.c.b16 %v1005, %v1004
      %v1123 = vpack.c.b16 %v1007, %v1006
      %v1124 = vpack.c.b16 %v1009, %v1008
      %v1125 = vpack.c.b16 %v1011, %v1010
      %v1126 = vpack.c.b16 %v1013, %v1012
      %v1127 = vpack.c.b16 %v1015, %v1014
      %v1128 = vpack.c.b16 %v1017, %v1016
      %v1129 = vpack.c.b16 %v1019, %v1018
      %v1130 = vpack.c.b16 %v1021, %v1020
      %v1131 = vpack.c.b16 %v1023, %v1022
      %v1132 = vpack.c.b16 %v1025, %v1024
      %v1133 = vpack.c.b16 %v1027, %v1026
      %v1134 = vpack.c.b16 %v1029, %v1028
      %v1135 = vpack.c.b16 %v1031, %v1030
      %v1136 = vpack.c.b16 %v1033, %v1032
      %v1137 = vpack.c.b16 %v1035, %v1034
      %v1138 = vpack.c.b16 %v1037, %v1036
      %v1139 = vpack.c.b16 %v1039, %v1038
      %v1140 = vpack.c.b16 %v1041, %v1040
      %v1141 = vpack.c.b16 %v1043, %v1042
      %v1142 = vpack.c.b16 %v1045, %v1044
      %v1143 = vpack.c.b16 %v1047, %v1046
      %1240 = vmatprep.subr.bf16.mxu0 0
      %1241 = vmatpush1.bf16.msra.mxu0 %v1055
      %1242 = vmatprep.subr.bf16.mxu0 0
      %1243 = vmatpush1.bf16.msra.mxu0 %v1054
      %1244 = vmatprep.subr.bf16.mxu0 0
      %1245 = vmatpush1.bf16.msra.mxu0 %v1053
      %1246 = vmatprep.subr.bf16.mxu0 0
      %1247 = vmatpush1.bf16.msra.mxu0 %v1052
      %1248 = vmatprep.subr.bf16.mxu0 0
      %1249 = vmatpush1.bf16.msra.mxu0 %v1051
      %1250 = vmatprep.subr.bf16.mxu0 0
      %1251 = vmatpush1.bf16.msra.mxu0 %v1050
      %1252 = vmatprep.subr.bf16.mxu0 0
      %1253 = vmatpush1.bf16.msra.mxu0 %v1049
      %1254 = vmatprep.subr.bf16.mxu0 0
      %1255 = vmatpush1.bf16.msra.mxu0 %v1048
      %1256 = vmatprep.subr.bf16.mxu0 0
      %1257 = vmatpush2.bf16.msra.mxu0 %v1063
      %1258 = vmatprep.subr.bf16.mxu0 0
      %1259 = vmatpush2.bf16.msra.mxu0 %v1062
      %1260 = vmatprep.subr.bf16.mxu0 0
      %1261 = vmatpush2.bf16.msra.mxu0 %v1061
      %1262 = vmatprep.subr.bf16.mxu0 0
      %1263 = vmatpush2.bf16.msra.mxu0 %v1060
      %1264 = vmatprep.subr.bf16.mxu0 0
      %1265 = vmatpush2.bf16.msra.mxu0 %v1059
      %1266 = vmatprep.subr.bf16.mxu0 0
      %1267 = vmatpush2.bf16.msra.mxu0 %v1058
      %1268 = vmatprep.subr.bf16.mxu0 0
      %1269 = vmatpush2.bf16.msra.mxu0 %v1057
      %1270 = vmatprep.subr.bf16.mxu0 0
      %1271 = vmatpush2.bf16.msra.mxu0 %v1056
      %1272 = vmatprep.mubr.bf16.mxu0 %v617
      %1273 = vmatmul.mubr.bf16.gmra.mxu0 %v616
      %v1274 = vpop.f32.mrf.mxu0
      %v1275 = vadd.f32 %v542, %v1274
      %v1276 = vpop.f32.mrf.mxu0
      %v1277 = vpop.f32.mrf.mxu0
      %v1278 = vadd.f32 %v542, %v1277
      %v1279 = vpop.f32.mrf.mxu0
      %1280 = vmatprep.mubr.bf16.mxu0 %v629
      %1281 = vmatmul.mubr.bf16.gmra.mxu0 %v628
      %v1282 = vpop.f32.mrf.mxu0
      %v1283 = vadd.f32 %v542, %v1282
      %v1284 = vpop.f32.mrf.mxu0
      %v1285 = vpop.f32.mrf.mxu0
      %v1286 = vadd.f32 %v542, %v1285
      %v1287 = vpop.f32.mrf.mxu0
      %1288 = vdwg.mxu0
      %1289 = vmatprep.subr.bf16.mxu0 0
      %1290 = vmatpush1.bf16.msra.mxu0 %v1071
      %1291 = vmatprep.subr.bf16.mxu0 0
      %1292 = vmatpush1.bf16.msra.mxu0 %v1070
      %1293 = vmatprep.subr.bf16.mxu0 0
      %1294 = vmatpush1.bf16.msra.mxu0 %v1069
      %1295 = vmatprep.subr.bf16.mxu0 0
      %1296 = vmatpush1.bf16.msra.mxu0 %v1068
      %1297 = vmatprep.subr.bf16.mxu0 0
      %1298 = vmatpush1.bf16.msra.mxu0 %v1067
      %1299 = vmatprep.subr.bf16.mxu0 0
      %1300 = vmatpush1.bf16.msra.mxu0 %v1066
      %1301 = vmatprep.subr.bf16.mxu0 0
      %1302 = vmatpush1.bf16.msra.mxu0 %v1065
      %1303 = vmatprep.subr.bf16.mxu0 0
      %1304 = vmatpush1.bf16.msra.mxu0 %v1064
      %1305 = vmatprep.subr.bf16.mxu0 0
      %1306 = vmatpush2.bf16.msra.mxu0 %v1079
      %1307 = vmatprep.subr.bf16.mxu0 0
      %1308 = vmatpush2.bf16.msra.mxu0 %v1078
      %1309 = vmatprep.subr.bf16.mxu0 0
      %1310 = vmatpush2.bf16.msra.mxu0 %v1077
      %1311 = vmatprep.subr.bf16.mxu0 0
      %1312 = vmatpush2.bf16.msra.mxu0 %v1076
      %1313 = vmatprep.subr.bf16.mxu0 0
      %1314 = vmatpush2.bf16.msra.mxu0 %v1075
      %1315 = vmatprep.subr.bf16.mxu0 0
      %1316 = vmatpush2.bf16.msra.mxu0 %v1074
      %1317 = vmatprep.subr.bf16.mxu0 0
      %1318 = vmatpush2.bf16.msra.mxu0 %v1073
      %1319 = vmatprep.subr.bf16.mxu0 0
      %1320 = vmatpush2.bf16.msra.mxu0 %v1072
      %1321 = vmatprep.mubr.bf16.mxu0 %v619
      %1322 = vmatmul.mubr.bf16.gmra.mxu0 %v618
      %v1323 = vpop.f32.mrf.mxu0
      %v1324 = vadd.f32 %v1275, %v1323
      %v1325 = vpop.f32.mrf.mxu0
      %v1326 = vpop.f32.mrf.mxu0
      %v1327 = vadd.f32 %v1278, %v1326
      %v1328 = vpop.f32.mrf.mxu0
      %1329 = vmatprep.mubr.bf16.mxu0 %v631
      %1330 = vmatmul.mubr.bf16.gmra.mxu0 %v630
      %v1331 = vpop.f32.mrf.mxu0
      %v1332 = vadd.f32 %v1283, %v1331
      %v1333 = vpop.f32.mrf.mxu0
      %v1334 = vpop.f32.mrf.mxu0
      %v1335 = vadd.f32 %v1286, %v1334
      %v1336 = vpop.f32.mrf.mxu0
      %1337 = vdwg.mxu0
      %1338 = vmatprep.subr.bf16.mxu0 0
      %1339 = vmatpush1.bf16.msra.mxu0 %v1087
      %1340 = vmatprep.subr.bf16.mxu0 0
      %1341 = vmatpush1.bf16.msra.mxu0 %v1086
      %1342 = vmatprep.subr.bf16.mxu0 0
      %1343 = vmatpush1.bf16.msra.mxu0 %v1085
      %1344 = vmatprep.subr.bf16.mxu0 0
      %1345 = vmatpush1.bf16.msra.mxu0 %v1084
      %1346 = vmatprep.subr.bf16.mxu0 0
      %1347 = vmatpush1.bf16.msra.mxu0 %v1083
      %1348 = vmatprep.subr.bf16.mxu0 0
      %1349 = vmatpush1.bf16.msra.mxu0 %v1082
      %1350 = vmatprep.subr.bf16.mxu0 0
      %1351 = vmatpush1.bf16.msra.mxu0 %v1081
      %1352 = vmatprep.subr.bf16.mxu0 0
      %1353 = vmatpush1.bf16.msra.mxu0 %v1080
      %1354 = vmatprep.subr.bf16.mxu0 0
      %1355 = vmatpush2.bf16.msra.mxu0 %v1095
      %1356 = vmatprep.subr.bf16.mxu0 0
      %1357 = vmatpush2.bf16.msra.mxu0 %v1094
      %1358 = vmatprep.subr.bf16.mxu0 0
      %1359 = vmatpush2.bf16.msra.mxu0 %v1093
      %1360 = vmatprep.subr.bf16.mxu0 0
      %1361 = vmatpush2.bf16.msra.mxu0 %v1092
      %1362 = vmatprep.subr.bf16.mxu0 0
      %1363 = vmatpush2.bf16.msra.mxu0 %v1091
      %1364 = vmatprep.subr.bf16.mxu0 0
      %1365 = vmatpush2.bf16.msra.mxu0 %v1090
      %1366 = vmatprep.subr.bf16.mxu0 0
      %1367 = vmatpush2.bf16.msra.mxu0 %v1089
      %1368 = vmatprep.subr.bf16.mxu0 0
      %1369 = vmatpush2.bf16.msra.mxu0 %v1088
      %1370 = vmatprep.mubr.bf16.mxu0 %v621
      %1371 = vmatmul.mubr.bf16.gmra.mxu0 %v620
      %v1372 = vpop.f32.mrf.mxu0
      %v1373 = vadd.f32 %v1324, %v1372
      %v1374 = vpop.f32.mrf.mxu0
      %v1375 = vpop.f32.mrf.mxu0
      %v1376 = vadd.f32 %v1327, %v1375
      %v1377 = vpop.f32.mrf.mxu0
      %1378 = vmatprep.mubr.bf16.mxu0 %v633
      %1379 = vmatmul.mubr.bf16.gmra.mxu0 %v632
      %v1380 = vpop.f32.mrf.mxu0
      %v1381 = vadd.f32 %v1332, %v1380
      %v1382 = vpop.f32.mrf.mxu0
      %v1383 = vpop.f32.mrf.mxu0
      %v1384 = vadd.f32 %v1335, %v1383
      %v1385 = vpop.f32.mrf.mxu0
      %1386 = vdwg.mxu0
      %1387 = vmatprep.subr.bf16.mxu0 0
      %1388 = vmatpush1.bf16.msra.mxu0 %v1103
      %1389 = vmatprep.subr.bf16.mxu0 0
      %1390 = vmatpush1.bf16.msra.mxu0 %v1102
      %1391 = vmatprep.subr.bf16.mxu0 0
      %1392 = vmatpush1.bf16.msra.mxu0 %v1101
      %1393 = vmatprep.subr.bf16.mxu0 0
      %1394 = vmatpush1.bf16.msra.mxu0 %v1100
      %1395 = vmatprep.subr.bf16.mxu0 0
      %1396 = vmatpush1.bf16.msra.mxu0 %v1099
      %1397 = vmatprep.subr.bf16.mxu0 0
      %1398 = vmatpush1.bf16.msra.mxu0 %v1098
      %1399 = vmatprep.subr.bf16.mxu0 0
      %1400 = vmatpush1.bf16.msra.mxu0 %v1097
      %1401 = vmatprep.subr.bf16.mxu0 0
      %1402 = vmatpush1.bf16.msra.mxu0 %v1096
      %1403 = vmatprep.subr.bf16.mxu0 0
      %1404 = vmatpush2.bf16.msra.mxu0 %v1111
      %1405 = vmatprep.subr.bf16.mxu0 0
      %1406 = vmatpush2.bf16.msra.mxu0 %v1110
      %1407 = vmatprep.subr.bf16.mxu0 0
      %1408 = vmatpush2.bf16.msra.mxu0 %v1109
      %1409 = vmatprep.subr.bf16.mxu0 0
      %1410 = vmatpush2.bf16.msra.mxu0 %v1108
      %1411 = vmatprep.subr.bf16.mxu0 0
      %1412 = vmatpush2.bf16.msra.mxu0 %v1107
      %1413 = vmatprep.subr.bf16.mxu0 0
      %1414 = vmatpush2.bf16.msra.mxu0 %v1106
      %1415 = vmatprep.subr.bf16.mxu0 0
      %1416 = vmatpush2.bf16.msra.mxu0 %v1105
      %1417 = vmatprep.subr.bf16.mxu0 0
      %1418 = vmatpush2.bf16.msra.mxu0 %v1104
      %1419 = vmatprep.mubr.bf16.mxu0 %v623
      %1420 = vmatmul.mubr.bf16.gmra.mxu0 %v622
      %v1421 = vpop.f32.mrf.mxu0
      %v1422 = vadd.f32 %v1373, %v1421
      %v1423 = vpop.f32.mrf.mxu0
      %v1424 = vpop.f32.mrf.mxu0
      %v1425 = vadd.f32 %v1376, %v1424
      %v1426 = vpop.f32.mrf.mxu0
      %1427 = vmatprep.mubr.bf16.mxu0 %v635
      %1428 = vmatmul.mubr.bf16.gmra.mxu0 %v634
      %v1429 = vpop.f32.mrf.mxu0
      %v1430 = vadd.f32 %v1381, %v1429
      %v1431 = vpop.f32.mrf.mxu0
      %v1432 = vpop.f32.mrf.mxu0
      %v1433 = vadd.f32 %v1384, %v1432
      %v1434 = vpop.f32.mrf.mxu0
      %1435 = vdwg.mxu0
      %1436 = vmatprep.subr.bf16.mxu0 0
      %1437 = vmatpush1.bf16.msra.mxu0 %v1119
      %1438 = vmatprep.subr.bf16.mxu0 0
      %1439 = vmatpush1.bf16.msra.mxu0 %v1118
      %1440 = vmatprep.subr.bf16.mxu0 0
      %1441 = vmatpush1.bf16.msra.mxu0 %v1117
      %1442 = vmatprep.subr.bf16.mxu0 0
      %1443 = vmatpush1.bf16.msra.mxu0 %v1116
      %1444 = vmatprep.subr.bf16.mxu0 0
      %1445 = vmatpush1.bf16.msra.mxu0 %v1115
      %1446 = vmatprep.subr.bf16.mxu0 0
      %1447 = vmatpush1.bf16.msra.mxu0 %v1114
      %1448 = vmatprep.subr.bf16.mxu0 0
      %1449 = vmatpush1.bf16.msra.mxu0 %v1113
      %1450 = vmatprep.subr.bf16.mxu0 0
      %1451 = vmatpush1.bf16.msra.mxu0 %v1112
      %1452 = vmatprep.subr.bf16.mxu0 0
      %1453 = vmatpush2.bf16.msra.mxu0 %v1127
      %1454 = vmatprep.subr.bf16.mxu0 0
      %1455 = vmatpush2.bf16.msra.mxu0 %v1126
      %1456 = vmatprep.subr.bf16.mxu0 0
      %1457 = vmatpush2.bf16.msra.mxu0 %v1125
      %1458 = vmatprep.subr.bf16.mxu0 0
      %1459 = vmatpush2.bf16.msra.mxu0 %v1124
      %1460 = vmatprep.subr.bf16.mxu0 0
      %1461 = vmatpush2.bf16.msra.mxu0 %v1123
      %1462 = vmatprep.subr.bf16.mxu0 0
      %1463 = vmatpush2.bf16.msra.mxu0 %v1122
      %1464 = vmatprep.subr.bf16.mxu0 0
      %1465 = vmatpush2.bf16.msra.mxu0 %v1121
      %1466 = vmatprep.subr.bf16.mxu0 0
      %1467 = vmatpush2.bf16.msra.mxu0 %v1120
      %1468 = vmatprep.mubr.bf16.mxu0 %v625
      %1469 = vmatmul.mubr.bf16.gmra.mxu0 %v624
      %v1470 = vpop.f32.mrf.mxu0
      %v1471 = vadd.f32 %v1422, %v1470
      %v1472 = vpop.f32.mrf.mxu0
      %v1473 = vpop.f32.mrf.mxu0
      %v1474 = vadd.f32 %v1425, %v1473
      %v1475 = vpop.f32.mrf.mxu0
      %1476 = vmatprep.mubr.bf16.mxu0 %v637
      %1477 = vmatmul.mubr.bf16.gmra.mxu0 %v636
      %v1478 = vpop.f32.mrf.mxu0
      %v1479 = vadd.f32 %v1430, %v1478
      %v1480 = vpop.f32.mrf.mxu0
      %v1481 = vpop.f32.mrf.mxu0
      %v1482 = vadd.f32 %v1433, %v1481
      %v1483 = vpop.f32.mrf.mxu0
      %1484 = vdwg.mxu0
      %1485 = vmatprep.subr.bf16.mxu0 0
      %1486 = vmatpush1.bf16.msra.mxu0 %v1135
      %1487 = vmatprep.subr.bf16.mxu0 0
      %1488 = vmatpush1.bf16.msra.mxu0 %v1134
      %1489 = vmatprep.subr.bf16.mxu0 0
      %1490 = vmatpush1.bf16.msra.mxu0 %v1133
      %1491 = vmatprep.subr.bf16.mxu0 0
      %1492 = vmatpush1.bf16.msra.mxu0 %v1132
      %1493 = vmatprep.subr.bf16.mxu0 0
      %1494 = vmatpush1.bf16.msra.mxu0 %v1131
      %1495 = vmatprep.subr.bf16.mxu0 0
      %1496 = vmatpush1.bf16.msra.mxu0 %v1130
      %1497 = vmatprep.subr.bf16.mxu0 0
      %1498 = vmatpush1.bf16.msra.mxu0 %v1129
      %1499 = vmatprep.subr.bf16.mxu0 0
      %1500 = vmatpush1.bf16.msra.mxu0 %v1128
      %1501 = vmatprep.subr.bf16.mxu0 0
      %1502 = vmatpush2.bf16.msra.mxu0 %v1143
      %1503 = vmatprep.subr.bf16.mxu0 0
      %1504 = vmatpush2.bf16.msra.mxu0 %v1142
      %1505 = vmatprep.subr.bf16.mxu0 0
      %1506 = vmatpush2.bf16.msra.mxu0 %v1141
      %1507 = vmatprep.subr.bf16.mxu0 0
      %1508 = vmatpush2.bf16.msra.mxu0 %v1140
      %1509 = vmatprep.subr.bf16.mxu0 0
      %1510 = vmatpush2.bf16.msra.mxu0 %v1139
      %1511 = vmatprep.subr.bf16.mxu0 0
      %1512 = vmatpush2.bf16.msra.mxu0 %v1138
      %1513 = vmatprep.subr.bf16.mxu0 0
      %1514 = vmatpush2.bf16.msra.mxu0 %v1137
      %1515 = vmatprep.subr.bf16.mxu0 0
      %1516 = vmatpush2.bf16.msra.mxu0 %v1136
      %1517 = vmatprep.mubr.bf16.mxu0 %v627
      %1518 = vmatmul.mubr.bf16.gmra.mxu0 %v626
      %v1519 = vpop.f32.mrf.mxu0
      %v1520 = vadd.f32 %v1471, %v1519
      %v1521 = vpop.f32.mrf.mxu0
      %v1522 = vpop.f32.mrf.mxu0
      %v1523 = vadd.f32 %v1474, %v1522
      %v1524 = vpop.f32.mrf.mxu0
      %1525 = vmatprep.mubr.bf16.mxu0 %v639
      %1526 = vmatmul.mubr.bf16.gmra.mxu0 %v638
      %v1527 = vpop.f32.mrf.mxu0
      %v1528 = vadd.f32 %v1479, %v1527
      %v1529 = vpop.f32.mrf.mxu0
      %v1530 = vpop.f32.mrf.mxu0
      %v1531 = vadd.f32 %v1482, %v1530
      %v1532 = vpop.f32.mrf.mxu0
      %1533 = vdwg.mxu0
      %v1534 = vmul.f32 %v1520, 0.01
      %v1535 = vmul.f32 %v1523, 0.01
      %v1536 = vmul.f32 %v1528, 0.01
      %v1537 = vmul.f32 %v1531, 0.01
      %v1538 = vmax.f32 %v1520, %v1534
      %v1539 = vmax.f32 %v1523, %v1535
      %v1540 = vmax.f32 %v1528, %v1536
      %v1541 = vmax.f32 %v1531, %v1537
      %v1542 = vpack.c.bf16 %v1539, %v1538
      %v1543 = vpack.c.bf16 %v1541, %v1540
      %v1546 = vunpack.c.l.b16 %v1542
      %v1547 = vunpack.c.h.b16 %v1542
      %v1548 = vunpack.c.l.b16 %v1543
      %v1549 = vunpack.c.h.b16 %v1543
      %v1550 = vpack.c.b16 %v1546, %v1546
      %v1551 = vpack.c.b16 %v1547, %v1547
      %v1552 = vpack.c.b16 %v1548, %v1548
      %v1553 = vpack.c.b16 %v1549, %v1549
      %1558 = vst [vmem:[%s306] sm:$0xf] %v1550
      %1559 = vst [vmem:[%s306 + $0x4] sm:$0xf] %v1551
      %1560 = vst [vmem:[%s306 + $0x8] sm:$0xf] %v1552
      %1561 = vst [vmem:[%s306 + $0xc] sm:$0xf] %v1553
      %v1562 = vadd.f32 %v1538, %v1539
      %v1563 = vadd.f32 %v1562, %v1540
      %v1564 = vadd.f32 %v1563, %v1541
      %v1565 = vrot.slane %v1564, 4
      %v1566 = vadd.f32 %v1564, %v1565
      %v1567 = vrot.slane %v1566, 2
      %v1568 = vadd.f32 %v1566, %v1567
      %v1569 = vrot.slane %v1568, 1
      %v1570 = vadd.f32 %v1568, %v1569
      %1571 = vst [vmem:[%s313] sm:$0x1] %v1570
      %v1572 = vmul.f32 %v1538, %v1538
      %v1573 = vmul.f32 %v1539, %v1539
      %v1574 = vmul.f32 %v1540, %v1540
      %v1575 = vmul.f32 %v1541, %v1541
      %v1576 = vadd.f32 %v1572, %v1573
      %v1577 = vadd.f32 %v1576, %v1574
      %v1578 = vadd.f32 %v1577, %v1575
      %v1579 = vrot.slane %v1578, 4
      %v1580 = vadd.f32 %v1578, %v1579
      %v1581 = vrot.slane %v1580, 2
      %v1582 = vadd.f32 %v1580, %v1581
      %v1583 = vrot.slane %v1582, 1
      %v1584 = vadd.f32 %v1582, %v1583
      %1585 = vst [vmem:[%s319] sm:$0x1] %v1584
      %s1586 = smul.u32 4, %s22
      %p1587 = scmp.lt.s32.totalorder %s21, 3
      %s1588 = scalar_select %p1587, %s21, 3
      %p1589 = scmp.lt.s32.totalorder %s1586, 3
      %s1590 = scalar_select %p1589, %s1586, 3
      %s1591 = smul.addr %s1588, 4
      %s1592 = sadd.s32 %s1590, %s1591
      %s1593 = smul.addr %s1592, 4
      %s1594 = scalar_lea.vmem %s3, %s1593
      %p1595 = scmp.lt.s32.totalorder %s21, 3
      %s1596 = scalar_select %p1595, %s21, 3
      %p1597 = scmp.lt.s32.totalorder %s22, 0
      %s1598 = scalar_select %p1597, %s22, 0
      %s1599 = sadd.s32 %s1598, %s1596
      %s1600 = scalar_lea.vmem %s4, %s1599
      %p1601 = scmp.lt.s32.totalorder %s21, 3
      %s1602 = scalar_select %p1601, %s21, 3
      %p1603 = scmp.lt.s32.totalorder %s22, 0
      %s1604 = scalar_select %p1603, %s22, 0
      %s1605 = sadd.s32 %s1604, %s1602
      %s1606 = scalar_lea.vmem %s5, %s1605
      // Predicated region
      $region33: #{featnet2d_forward.10} parent=31 // pred_check
        %p1607 = pneg %p124
      $region34: #{featnet2d_forward.10} parent=31 // pred_check_branch
        %1609 = sbr.rel (%p1607) target = $region36
      $region35: #{featnet2d_forward.10} parent=31 // pred_region
        %s1610 = smul.u32 4, %s22
      $region36: #{featnet2d_forward.10} parent=31 // pred_fallthru
        _
      // Predicated region
      $region37: #{featnet2d_forward.10} parent=31 // pred_check
        %p1611 = pneg %p152
      $region38: #{featnet2d_forward.10} parent=31 // pred_check_branch
        %1613 = sbr.rel (%p1611) target = $region40
      $region39: #{featnet2d_forward.10} parent=31 // pred_region
        _
      $region40: #{featnet2d_forward.10} parent=31 // pred_fallthru
        _
      // Predicated region
      $region41: #{featnet2d_forward.10} parent=31 // pred_check
        %p1614 = pneg %p180
      $region42: #{featnet2d_forward.10} parent=31 // pred_check_branch
        %1616 = sbr.rel (%p1614) target = $region44
      $region43: #{featnet2d_forward.10} parent=31 // pred_region
        _
      $region44: #{featnet2d_forward.10} parent=31 // pred_fallthru
        _
    $region32: #{featnet2d_forward.10} parent=5 // pred_fallthru
      _
    %p1617 = scmp.le.s32.totalorder 2, %s12
    // Predicated region
    $region45: #{featnet2d_forward.10} parent=5 // pred_check
      %p1618 = pneg %p1617
    $region46: #{featnet2d_forward.10} parent=5 // pred_check_branch
      %1620 = sbr.rel (%p1618) target = $region48
    $region47: #{featnet2d_forward.10} parent=5 // pred_region
      %s1621 = ssub.s32 %s12, 2
      // Predicated region
      $region49: #{featnet2d_forward.10} parent=47 // pred_check
        %p1622 = pneg %p130
      $region50: #{featnet2d_forward.10} parent=47 // pred_check_branch
        %1624 = sbr.rel (%p1622) target = $region52
      $region51: #{featnet2d_forward.10} parent=47 // pred_region
        %s1625 = smul.u32 4, %s24
        %p1626 = scmp.lt.s32.totalorder %s23, 3
        %s1627 = scalar_select %p1626, %s23, 3
        %p1628 = scmp.lt.s32.totalorder %s1625, 3
        %s1629 = scalar_select %p1628, %s1625, 3
        %s1630 = smul.addr %s1627, 4
        %s1631 = sadd.s32 %s1629, %s1630
        %s1632 = smul.addr %s1631, 4
        %s1633 = scalar_lea.vmem %s3, %s1632
      $region52: #{featnet2d_forward.10} parent=47 // pred_fallthru
        _
      // Predicated region
      $region53: #{featnet2d_forward.10} parent=47 // pred_check
        %p1634 = pneg %p158
      $region54: #{featnet2d_forward.10} parent=47 // pred_check_branch
        %1636 = sbr.rel (%p1634) target = $region56
      $region55: #{featnet2d_forward.10} parent=47 // pred_region
        %p1637 = scmp.lt.s32.totalorder %s23, 3
        %s1638 = scalar_select %p1637, %s23, 3
        %p1639 = scmp.lt.s32.totalorder %s24, 0
        %s1640 = scalar_select %p1639, %s24, 0
        %s1641 = sadd.s32 %s1640, %s1638
        %s1642 = scalar_lea.vmem %s4, %s1641
      $region56: #{featnet2d_forward.10} parent=47 // pred_fallthru
        _
      // Predicated region
      $region57: #{featnet2d_forward.10} parent=47 // pred_check
        %p1643 = pneg %p186
      $region58: #{featnet2d_forward.10} parent=47 // pred_check_branch
        %1645 = sbr.rel (%p1643) target = $region60
      $region59: #{featnet2d_forward.10} parent=47 // pred_region
        %p1646 = scmp.lt.s32.totalorder %s23, 3
        %s1647 = scalar_select %p1646, %s23, 3
        %p1648 = scmp.lt.s32.totalorder %s24, 0
        %s1649 = scalar_select %p1648, %s24, 0
        %s1650 = sadd.s32 %s1649, %s1647
        %s1651 = scalar_lea.vmem %s5, %s1650
      $region60: #{featnet2d_forward.10} parent=47 // pred_fallthru
        _
    $region48: #{featnet2d_forward.10} parent=5 // pred_fallthru
      _
  $region6: #{featnet2d_forward.10} parent=0 // loop_footer
    %s16 = sadd.s32 1, %s12
  $region7: #{featnet2d_forward.10} parent=0 // loop_footer_branch
    %11 = sbr.rel target = $region3
  $region8: #{featnet2d_forward.10} parent=0 // loop_exit
    _

// kernel: featnet2d_forward.11
$region0: #{featnet2d_forward.11}
  #allocation0 [shape = 'u32[]', space=smem, size = 0x4, offset = 0x4, fixed_abs, tag = 'smem constant byte address 0x4 - core index']
  #allocation1 [shape = 'u32[144,128]{1,0:T(1,128)}', space=vmem, size = 0x12000, scoped, tag = 'internal scratch']
  %s0 = inlined_call_operand.vmem [shape: bf16[2,64,192], index: 0, kind: input, shape index: {}]
  %s1 = inlined_call_operand.vmem [shape: bf16[192,32], index: 1, kind: input, shape index: {}]
  %s2 = inlined_call_operand.vmem [shape: f32[1,32], index: 2, kind: input, shape index: {}]
  %s3 = inlined_call_operand.hbm [shape: f32[1,1], index: 3, kind: output, shape index: {0}]
  %s4 = inlined_call_operand.hbm [shape: f32[2,8,8,32], index: 4, kind: output, shape index: {1}]
  %5 = xla_tuple %s3, %s4
  %s6 = sld [smem:[#allocation0]]
  $region57: #{featnet2d_forward.11} parent=0
    _
  %s8 = ssub.s32 1, %s6
  %s9 = scalar_select 0, %s8, %s6
  $region1: #{featnet2d_forward.11} parent=0
    #allocation2 [shape = 'u8[512]{0}', space=smem, size = 0x200, scoped, tag = 'output window, operand 0, single buffered']
    #allocation3 [shape = 's32[2]{0}', space=sflag, size = 0x8, scoped, tag = 'scoped memory for featnet2d_forward.11']
    #allocation4 [shape = 's32[2]{0}', space=sflag, size = 0x8, scoped, tag = 'scoped memory for featnet2d_forward.11']
    #allocation5 [shape = 'u8[65536]{0}', space=vmem, size = 0x10000, scoped, tag = 'output window, operand 1']
    %10 = vsyncpa [#allocation4], 0
    %11 = vsyncpa [#allocation3], 0
    %s12 = scalar_lea.sflag [#allocation3], 1
    %13 = vsyncpa %s12, 0
    loop: start=0, step=1, limit=4
    $region2: #{featnet2d_forward.11} parent=1 // loop_pre_header
      _
    $region3: #{featnet2d_forward.11} parent=1 // loop_header
      %s15 = sphi 0, %s19
      %p16 = scmp.ge.s32.totalorder %s15, 4
      %s25 = sphi 0, %s27
      %s28 = sphi 0, %s25
      %s29 = sphi 0, %s28
      %s45 = sphi 0, %s29
      %s49 = sphi 0, %s49
      %s51 = sphi 0, %s49
      %s52 = sphi 0, %s51
      %s66 = sphi 0, %s52
      %s70 = sphi 0, %s70
      %s72 = sphi 0, %s70
      %s73 = sphi 0, %s72
      %s87 = sphi 0, %s73
      %s91 = sphi 0, %s91
      %s93 = sphi 0, %s91
      %s94 = sphi 0, %s93
      %s108 = sphi 0, %s94
      %s114 = sphi 0, %s116
      %s117 = sphi 0, %s114
      %s118 = sphi 0, %s117
      %s134 = sphi 0, %s118
    $region4: #{featnet2d_forward.11} parent=1 // loop_header_branch
      %18 = sbr.rel (%p16) target = $region8
    $region5: #{featnet2d_forward.11} parent=1 // loop_body
      %s20 = ssub.s32 %s15, 1
      %s21 = ssub.s32 %s15, 2
      %s22 = sadd.s32 %s15, 1
      %s23 = ssub.s32 %s15, %s22
      %p24 = scmp.eq.s32.totalorder %s23, 0
      %s26 = sadd.s32 %s25, 1
      %s27 = scalar_select %p24, %s25, %s26
      %p30 = pneg %p24
      %p31 = scmp.eq.s32.totalorder %s15, 1
      %p32 = por %p30, %p31
      %p33 = scmp.ne.s32.totalorder %s25, %s28
      %p34 = scmp.eq.s32.totalorder %s15, 0
      %p35 = por %p33, %p34
      %p36 = scmp.ne.s32.totalorder %s25, %s28
      %p37 = scmp.eq.s32.totalorder %s20, 1
      %p38 = por %p36, %p37
      %p39 = scmp.ne.s32.totalorder %s28, %s29
      %p40 = scmp.eq.s32.totalorder %s20, 0
      %p41 = por %p39, %p40
      %p42 = scmp.ne.s32.totalorder %s28, %s29
      %p43 = scmp.eq.s32.totalorder %s21, 1
      %p44 = por %p42, %p43
      %p46 = scmp.ne.s32.totalorder %s29, %s45
      %p47 = scmp.eq.s32.totalorder %s21, 0
      %p48 = por %p46, %p47
      %s50 = sadd.s32 %s49, 1
      %p53 = scmp.eq.s32.totalorder %s15, 1
      %p54 = scmp.ne.s32.totalorder %s49, %s51
      %p55 = scmp.eq.s32.totalorder %s15, 0
      %p56 = por %p54, %p55
      %p57 = scmp.ne.s32.totalorder %s49, %s51
      %p58 = scmp.eq.s32.totalorder %s20, 1
      %p59 = por %p57, %p58
      %p60 = scmp.ne.s32.totalorder %s51, %s52
      %p61 = scmp.eq.s32.totalorder %s20, 0
      %p62 = por %p60, %p61
      %p63 = scmp.ne.s32.totalorder %s51, %s52
      %p64 = scmp.eq.s32.totalorder %s21, 1
      %p65 = por %p63, %p64
      %p67 = scmp.ne.s32.totalorder %s52, %s66
      %p68 = scmp.eq.s32.totalorder %s21, 0
      %p69 = por %p67, %p68
      %s71 = sadd.s32 %s70, 1
      %p74 = scmp.eq.s32.totalorder %s15, 1
      %p75 = scmp.ne.s32.totalorder %s70, %s72
      %p76 = scmp.eq.s32.totalorder %s15, 0
      %p77 = por %p75, %p76
      %p78 = scmp.ne.s32.totalorder %s70, %s72
      %p79 = scmp.eq.s32.totalorder %s20, 1
      %p80 = por %p78, %p79
      %p81 = scmp.ne.s32.totalorder %s72, %s73
      %p82 = scmp.eq.s32.totalorder %s20, 0
      %p83 = por %p81, %p82
      %p84 = scmp.ne.s32.totalorder %s72, %s73
      %p85 = scmp.eq.s32.totalorder %s21, 1
      %p86 = por %p84, %p85
      %p88 = scmp.ne.s32.totalorder %s73, %s87
      %p89 = scmp.eq.s32.totalorder %s21, 0
      %p90 = por %p88, %p89
      %s92 = sadd.s32 %s91, 1
      %p95 = scmp.eq.s32.totalorder %s15, 1
      %p96 = scmp.ne.s32.totalorder %s91, %s93
      %p97 = scmp.eq.s32.totalorder %s15, 0
      %p98 = por %p96, %p97
      %p99 = scmp.ne.s32.totalorder %s91, %s93
      %p100 = scmp.eq.s32.totalorder %s20, 1
      %p101 = por %p99, %p100
      %p102 = scmp.ne.s32.totalorder %s93, %s94
      %p103 = scmp.eq.s32.totalorder %s20, 0
      %p104 = por %p102, %p103
      %p105 = scmp.ne.s32.totalorder %s93, %s94
      %p106 = scmp.eq.s32.totalorder %s21, 1
      %p107 = por %p105, %p106
      %p109 = scmp.ne.s32.totalorder %s94, %s108
      %p110 = scmp.eq.s32.totalorder %s21, 0
      %p111 = por %p109, %p110
      %s112 = ssub.s32 %s15, %s22
      %p113 = scmp.eq.s32.totalorder %s112, 0
      %s115 = sadd.s32 %s114, 1
      %s116 = scalar_select %p113, %s114, %s115
      %p119 = pneg %p113
      %p120 = scmp.eq.s32.totalorder %s15, 1
      %p121 = por %p119, %p120
      %p122 = scmp.ne.s32.totalorder %s114, %s117
      %p123 = scmp.eq.s32.totalorder %s15, 0
      %p124 = por %p122, %p123
      %p125 = scmp.ne.s32.totalorder %s114, %s117
      %p126 = scmp.eq.s32.totalorder %s20, 1
      %p127 = por %p125, %p126
      %p128 = scmp.ne.s32.totalorder %s117, %s118
      %p129 = scmp.eq.s32.totalorder %s20, 0
      %p130 = por %p128, %p129
      %p131 = scmp.ne.s32.totalorder %s117, %s118
      %p132 = scmp.eq.s32.totalorder %s21, 1
      %p133 = por %p131, %p132
      %p135 = scmp.ne.s32.totalorder %s118, %s134
      %p136 = scmp.eq.s32.totalorder %s21, 0
      %p137 = por %p135, %p136
      %p138 = scmp.le.s32.totalorder 1, %s15
      %p139 = scmp.lt.s32.totalorder %s15, 3
      %p140 = pnand %p138, %p139
      %p141 = pneg %p140
      // Predicated region
      $region9: #{featnet2d_forward.11} parent=5 // pred_check
        _
      $region10: #{featnet2d_forward.11} parent=5 // pred_check_branch
        %143 = sbr.rel (%p140) target = $region12
      $region11: #{featnet2d_forward.11} parent=5 // pred_region
        %s144 = ssub.s32 %s15, 1
        // Predicated region
        $region13: #{featnet2d_forward.11} parent=11 // pred_check
          %p145 = pneg %p62
        $region14: #{featnet2d_forward.11} parent=11 // pred_check_branch
          %147 = sbr.rel (%p145) target = $region16
        $region15: #{featnet2d_forward.11} parent=11 // pred_region
          _
        $region16: #{featnet2d_forward.11} parent=11 // pred_fallthru
          _
        // Predicated region
        $region17: #{featnet2d_forward.11} parent=11 // pred_check
          %p148 = pneg %p83
        $region18: #{featnet2d_forward.11} parent=11 // pred_check_branch
          %150 = sbr.rel (%p148) target = $region20
        $region19: #{featnet2d_forward.11} parent=11 // pred_region
          _
        $region20: #{featnet2d_forward.11} parent=11 // pred_fallthru
          _
      $region12: #{featnet2d_forward.11} parent=5 // pred_fallthru
        _
      %p151 = scmp.lt.s32.totalorder %s15, 2
      // Predicated region
      $region21: #{featnet2d_forward.11} parent=5 // pred_check
        %p152 = pneg %p151
      $region22: #{featnet2d_forward.11} parent=5 // pred_check_branch
        %154 = sbr.rel (%p152) target = $region24
      $region23: #{featnet2d_forward.11} parent=5 // pred_region
        // Predicated region
        $region25: #{featnet2d_forward.11} parent=23 // pred_check
          %p155 = pneg %p35
        $region26: #{featnet2d_forward.11} parent=23 // pred_check_branch
          %157 = sbr.rel (%p155) target = $region28
        $region27: #{featnet2d_forward.11} parent=23 // pred_region
          %p158 = scmp.lt.s32.totalorder %s15, 1
          %s159 = scalar_select %p158, %s15, 1
          %s160 = smul.addr %s159, 16
          %s161 = smul.addr %s160, 4
          %s162 = scalar_lea.vmem %s0, %s161
        $region28: #{featnet2d_forward.11} parent=23 // pred_fallthru
          _
      $region24: #{featnet2d_forward.11} parent=5 // pred_fallthru
        _
      %p163 = scmp.le.s32.totalorder 1, %s15
      %p164 = scmp.lt.s32.totalorder %s15, 3
      %p165 = pnand %p163, %p164
      %p166 = pneg %p165
      // Predicated region
      $region29: #{featnet2d_forward.11} parent=5 // pred_check
        _
      $region30: #{featnet2d_forward.11} parent=5 // pred_check_branch
        %168 = sbr.rel (%p165) target = $region32
      $region31: #{featnet2d_forward.11} parent=5 // pred_region
        %s169 = ssub.s32 %s15, 1
        %p170 = scmp.lt.s32.totalorder %s20, 1
        %s171 = scalar_select %p170, %s20, 1
        %s172 = smul.addr %s171, 16
        %s173 = smul.addr %s172, 4
        %s174 = scalar_lea.vmem %s0, %s173
        %p175 = pneg %p41
        %p176 = pneg %p38
        %p177 = pneg %p62
        %p178 = pneg %p59
        %p179 = pneg %p83
        %p180 = pneg %p80
        %p181 = pneg %p104
        %p182 = pneg %p101
        %p183 = pneg %p130
        %p184 = pneg %p127
        %s185 = sand.u32 %s117, 1
        %s186 = scalar_lea.sflag [#allocation3], %s185
        %s187 = sand.u32 %s117, 1
        %s188 = smul.addr %s187, 64
        %s189 = scalar_lea.vmem [#allocation5], %s188
        %p190 = scmp.lt.s32.totalorder %s20, 1
        %s191 = scalar_select %p190, %s20, 1
        %s192 = smul.addr %s191, 16
        %s193 = smul.addr %s192, 4
        %s194 = scalar_lea.vmem %s0, %s193
        %v196 = vld [vmem:[%s194] sm:$0xff]
        %v197 = vld [vmem:[%s194 + $0x8] sm:$0xff]
        %v198 = vld [vmem:[%s194 + $0x10] sm:$0xff]
        %v199 = vld [vmem:[%s194 + $0x18] sm:$0xff]
        %v200 = vld [vmem:[%s194 + $0x20] sm:$0xff]
        %v201 = vld [vmem:[%s194 + $0x28] sm:$0xff]
        %v202 = vld [vmem:[%s194 + $0x30] sm:$0xff]
        %v203 = vld [vmem:[%s194 + $0x38] sm:$0xff]
        %v204 = vld [vmem:[%s1] sm:$0xf]
        %v205 = vld [vmem:[%s1 + $0x4] sm:$0xf]
        %v206 = vld [vmem:[%s1 + $0x8] sm:$0xf]
        %v207 = vld [vmem:[%s1 + $0xc] sm:$0xf]
        %v208 = vld [vmem:[%s1 + $0x10] sm:$0xf]
        %v209 = vld [vmem:[%s1 + $0x14] sm:$0xf]
        %v210 = vld [vmem:[%s1 + $0x18] sm:$0xf]
        %v211 = vld [vmem:[%s1 + $0x1c] sm:$0xf]
        %v212 = vld [vmem:[%s1 + $0x20] sm:$0xf]
        %v213 = vld [vmem:[%s1 + $0x24] sm:$0xf]
        %v214 = vld [vmem:[%s1 + $0x28] sm:$0xf]
        %v215 = vld [vmem:[%s1 + $0x2c] sm:$0xf]
        %v216 = vld [vmem:[%s1 + $0x30] sm:$0xf]
        %v217 = vld [vmem:[%s1 + $0x34] sm:$0xf]
        %v218 = vld [vmem:[%s1 + $0x38] sm:$0xf]
        %v219 = vld [vmem:[%s1 + $0x3c] sm:$0xf]
        %v220 = vld [vmem:[%s1 + $0x40] sm:$0xf]
        %v221 = vld [vmem:[%s1 + $0x44] sm:$0xf]
        %v222 = vld [vmem:[%s1 + $0x48] sm:$0xf]
        %v223 = vld [vmem:[%s1 + $0x4c] sm:$0xf]
        %v224 = vld [vmem:[%s1 + $0x50] sm:$0xf]
        %v225 = vld [vmem:[%s1 + $0x54] sm:$0xf]
        %v226 = vld [vmem:[%s1 + $0x58] sm:$0xf]
        %v227 = vld [vmem:[%s1 + $0x5c] sm:$0xf]
        %v228 = vld [vmem:[%s2] sm:$0x1]
        %v230 = vlaneseq
        %v231 = vshrl.u32 %v230, 7
        %v232 = vsub.s32 0, %v231
        %v233 = vrot.slane %v228, %v232
        %v243 = vunpack.c.l.b16 %v196
        %v244 = vunpack.c.h.b16 %v196
        %v245 = vunpack.c.l.b16 %v197
        %v246 = vunpack.c.h.b16 %v197
        %v247 = vunpack.c.l.b16 %v198
        %v248 = vunpack.c.h.b16 %v198
        %v249 = vunpack.c.l.b16 %v199
        %v250 = vunpack.c.h.b16 %v199
        %v251 = vunpack.c.l.b16 %v200
        %v252 = vunpack.c.h.b16 %v200
        %v253 = vunpack.c.l.b16 %v201
        %v254 = vunpack.c.h.b16 %v201
        %v255 = vunpack.c.l.b16 %v202
        %v256 = vunpack.c.h.b16 %v202
        %v257 = vunpack.c.l.b16 %v203
        %v258 = vunpack.c.h.b16 %v203
        %v259 = vpack.c.b16 %v245, %v243
        %v260 = vpack.c.b16 %v246, %v244
        %v261 = vpack.c.b16 %v249, %v247
        %v262 = vpack.c.b16 %v250, %v248
        %v263 = vpack.c.b16 %v253, %v251
        %v264 = vpack.c.b16 %v254, %v252
        %v265 = vpack.c.b16 %v257, %v255
        %v266 = vpack.c.b16 %v258, %v256
        %v295 = vunpack.c.l.b16 %v204
        %v296 = vunpack.c.l.b16 %v205
        %v297 = vunpack.c.l.b16 %v206
        %v298 = vunpack.c.l.b16 %v207
        %v299 = vunpack.c.l.b16 %v208
        %v300 = vunpack.c.l.b16 %v209
        %v301 = vunpack.c.l.b16 %v210
        %v302 = vunpack.c.l.b16 %v211
        %v303 = vunpack.c.l.b16 %v212
        %v304 = vunpack.c.l.b16 %v213
        %v305 = vunpack.c.l.b16 %v214
        %v306 = vunpack.c.l.b16 %v215
        %v307 = vunpack.c.l.b16 %v216
        %v308 = vunpack.c.l.b16 %v217
        %v309 = vunpack.c.l.b16 %v218
        %v310 = vunpack.c.l.b16 %v219
        %v311 = vunpack.c.l.b16 %v220
        %v312 = vunpack.c.l.b16 %v221
        %v313 = vunpack.c.l.b16 %v222
        %v314 = vunpack.c.l.b16 %v223
        %v315 = vunpack.c.l.b16 %v224
        %v316 = vunpack.c.l.b16 %v225
        %v317 = vunpack.c.l.b16 %v226
        %v318 = vunpack.c.l.b16 %v227
        %v319 = vpack.c.b16 %v296, %v295
        %v320 = vpack.c.b16 %v298, %v297
        %v321 = vpack.c.b16 %v300, %v299
        %v322 = vpack.c.b16 %v302, %v301
        %v323 = vpack.c.b16 %v304, %v303
        %v324 = vpack.c.b16 %v306, %v305
        %v325 = vpack.c.b16 %v308, %v307
        %v326 = vpack.c.b16 %v310, %v309
        %v327 = vpack.c.b16 %v312, %v311
        %v328 = vpack.c.b16 %v314, %v313
        %v329 = vpack.c.b16 %v316, %v315
        %v330 = vpack.c.b16 %v318, %v317
        %vm343 = vcmask 523264
        %v345 = vsel %vm343, %v260, 0
        %v348 = vsel %vm343, %v262, 0
        %v351 = vsel %vm343, %v264, 0
        %v354 = vsel %vm343, %v266, 0
        %356 = vmatprep.subr.bf16.mxu0 0
        %357 = vmatpush1.bf16.msra.mxu0 %v326
        %358 = vmatprep.subr.bf16.mxu0 0
        %359 = vmatpush1.bf16.msra.mxu0 %v325
        %360 = vmatprep.subr.bf16.mxu0 0
        %361 = vmatpush1.bf16.msra.mxu0 %v324
        %362 = vmatprep.subr.bf16.mxu0 0
        %363 = vmatpush1.bf16.msra.mxu0 %v323
        %364 = vmatprep.subr.bf16.mxu0 0
        %365 = vmatpush1.bf16.msra.mxu0 %v322
        %366 = vmatprep.subr.bf16.mxu0 0
        %367 = vmatpush1.bf16.msra.mxu0 %v321
        %368 = vmatprep.subr.bf16.mxu0 0
        %369 = vmatpush1.bf16.msra.mxu0 %v320
        %370 = vmatprep.subr.bf16.mxu0 0
        %371 = vmatpush1.bf16.msra.mxu0 %v319
        %372 = vmatprep.subr.bf16.mxu0 0
        %373 = vmatpush2.bf16.msra.mxu0 0
        %374 = vmatprep.subr.bf16.mxu0 0
        %375 = vmatpush2.bf16.msra.mxu0 0
        %376 = vmatprep.subr.bf16.mxu0 0
        %377 = vmatpush2.bf16.msra.mxu0 0
        %378 = vmatprep.subr.bf16.mxu0 0
        %379 = vmatpush2.bf16.msra.mxu0 0
        %380 = vmatprep.subr.bf16.mxu0 0
        %381 = vmatpush2.bf16.msra.mxu0 %v330
        %382 = vmatprep.subr.bf16.mxu0 0
        %383 = vmatpush2.bf16.msra.mxu0 %v329
        %384 = vmatprep.subr.bf16.mxu0 0
        %385 = vmatpush2.bf16.msra.mxu0 %v328
        %386 = vmatprep.subr.bf16.mxu0 0
        %387 = vmatpush2.bf16.msra.mxu0 %v327
        %388 = vmatprep.mubr.bf16.mxu0 %v345
        %389 = vmatmul.mubr.bf16.gmra.mxu0 %v259
        %v390 = vpop.f32.mrf.mxu0
        %v391 = vadd.f32 %v233, %v390
        %v392 = vpop.f32.mrf.mxu0
        %v393 = vpop.f32.mrf.mxu0
        %v394 = vadd.f32 %v233, %v393
        %v395 = vpop.f32.mrf.mxu0
        %396 = vmatprep.mubr.bf16.mxu0 %v348
        %397 = vmatmul.mubr.bf16.gmra.mxu0 %v261
        %v398 = vpop.f32.mrf.mxu0
        %v399 = vadd.f32 %v233, %v398
        %v400 = vpop.f32.mrf.mxu0
        %v401 = vpop.f32.mrf.mxu0
        %v402 = vadd.f32 %v233, %v401
        %v403 = vpop.f32.mrf.mxu0
        %404 = vmatprep.mubr.bf16.mxu0 %v351
        %405 = vmatmul.mubr.bf16.gmra.mxu0 %v263
        %v406 = vpop.f32.mrf.mxu0
        %v407 = vadd.f32 %v233, %v406
        %v408 = vpop.f32.mrf.mxu0
        %v409 = vpop.f32.mrf.mxu0
        %v410 = vadd.f32 %v233, %v409
        %v411 = vpop.f32.mrf.mxu0
        %412 = vmatprep.mubr.bf16.mxu0 %v354
        %413 = vmatmul.mubr.bf16.gmra.mxu0 %v265
        %v414 = vpop.f32.mrf.mxu0
        %v415 = vadd.f32 %v233, %v414
        %v416 = vpop.f32.mrf.mxu0
        %v417 = vpop.f32.mrf.mxu0
        %v418 = vadd.f32 %v233, %v417
        %v419 = vpop.f32.mrf.mxu0
        %420 = vdwg.mxu0
        %v421 = vsub.f32 %v394, %v391
        %v422 = vsub.f32 %v399, %v394
        %v423 = vsub.f32 %v402, %v399
        %v424 = vsub.f32 %v407, %v402
        %v425 = vsub.f32 %v410, %v407
        %v426 = vsub.f32 %v415, %v410
        %v427 = vsub.f32 %v418, %v415
        %v428 = vand.u32 2147483647, %v421
        %v429 = vand.u32 2147483647, %v422
        %v430 = vand.u32 2147483647, %v423
        %v431 = vand.u32 2147483647, %v424
        %v432 = vand.u32 2147483647, %v425
        %v433 = vand.u32 2147483647, %v426
        %v434 = vand.u32 2147483647, %v427
        %v443 = vrot.slane %v391, 7
        %v444 = vrot.slane %v394, 7
        %v445 = vrot.slane %v399, 7
        %v446 = vrot.slane %v402, 7
        %v447 = vrot.slane %v407, 7
        %v448 = vrot.slane %v410, 7
        %v449 = vrot.slane %v415, 7
        %v450 = vrot.slane %v418, 7
        %v459 = vsub.f32 %v391, %v443
        %v460 = vsub.f32 %v394, %v444
        %v461 = vsub.f32 %v399, %v445
        %v462 = vsub.f32 %v402, %v446
        %v463 = vsub.f32 %v407, %v447
        %v464 = vsub.f32 %v410, %v448
        %v465 = vsub.f32 %v415, %v449
        %v466 = vsub.f32 %v418, %v450
        %v467 = vand.u32 2147483647, %v459
        %v468 = vand.u32 2147483647, %v460
        %v469 = vand.u32 2147483647, %v461
        %v470 = vand.u32 2147483647, %v462
        %v471 = vand.u32 2147483647, %v463
        %v472 = vand.u32 2147483647, %v464
        %v473 = vand.u32 2147483647, %v465
        %v474 = vand.u32 2147483647, %v466
        %vm475 = vcmask 261120
        %v476 = vsel %vm475, %v428, 0.0
        %v477 = vsel %vm475, %v429, 0.0
        %v478 = vadd.f32 %v476, %v477
        %v479 = vsel %vm475, %v430, 0.0
        %v480 = vadd.f32 %v478, %v479
        %v481 = vsel %vm475, %v431, 0.0
        %v482 = vadd.f32 %v480, %v481
        %v483 = vsel %vm475, %v432, 0.0
        %v484 = vadd.f32 %v482, %v483
        %v485 = vsel %vm475, %v433, 0.0
        %v486 = vadd.f32 %v484, %v485
        %v487 = vsel %vm475, %v434, 0.0
        %v488 = vadd.f32 %v486, %v487
        %489 = vadd.xlane.f32.xlu0 %v488
        %v490 = vpop.xlane.xlu0 %489
        %v491 = vrot.slane %v490, 4
        %v492 = vadd.f32 %v490, %v491
        %v493 = vrot.slane %v492, 2
        %v494 = vadd.f32 %v492, %v493
        %v495 = vrot.slane %v494, 1
        %v496 = vadd.f32 %v494, %v495
        %s497 = vtos %v496
        %v506 = vrot.slane %v467, 1
        %v507 = vrot.slane %v468, 1
        %v508 = vrot.slane %v469, 1
        %v509 = vrot.slane %v470, 1
        %v510 = vrot.slane %v471, 1
        %v511 = vrot.slane %v472, 1
        %v512 = vrot.slane %v473, 1
        %v513 = vrot.slane %v474, 1
        %vm522 = vcmask 260096
        %v523 = vsel %vm522, %v506, 0.0
        %v524 = vsel %vm522, %v507, 0.0
        %v525 = vadd.f32 %v523, %v524
        %v526 = vsel %vm522, %v508, 0.0
        %v527 = vadd.f32 %v525, %v526
        %v528 = vsel %vm522, %v509, 0.0
        %v529 = vadd.f32 %v527, %v528
        %v530 = vsel %vm522, %v510, 0.0
        %v531 = vadd.f32 %v529, %v530
        %v532 = vsel %vm522, %v511, 0.0
        %v533 = vadd.f32 %v531, %v532
        %v534 = vsel %vm522, %v512, 0.0
        %v535 = vadd.f32 %v533, %v534
        %v536 = vsel %vm522, %v513, 0.0
        %v537 = vadd.f32 %v535, %v536
        %538 = vadd.xlane.f32.xlu0 %v537
        %v539 = vpop.xlane.xlu0 %538
        %v540 = vrot.slane %v539, 4
        %v541 = vadd.f32 %v539, %v540
        %v542 = vrot.slane %v541, 2
        %v543 = vadd.f32 %v541, %v542
        %v544 = vrot.slane %v543, 1
        %v545 = vadd.f32 %v543, %v544
        %s546 = vtos %v545
        %s547 = sadd.f32 %s497, %s546
        %s548 = smul.f32 %s547, 2.4414062e-06
        %p549 = scmp.eq.s32.totalorder %s20, 0
        // Predicated region
        $region33: #{featnet2d_forward.11} parent=31 // pred_check
          %p550 = pneg %p549
        $region34: #{featnet2d_forward.11} parent=31 // pred_check_branch
          %552 = sbr.rel (%p550) target = $region36
        $region35: #{featnet2d_forward.11} parent=31 // pred_region
          %s553 = scalar_lea.smem [#allocation2], 0
          %554 = sst [smem:[%s553]] 0.0
        $region36: #{featnet2d_forward.11} parent=31 // pred_fallthru
          _
        %s555 = sld [smem:[#allocation2]]
        %s556 = sadd.f32 %s555, %s548
        %s557 = scalar_lea.smem [#allocation2], 0
        %558 = sst [smem:[%s557]] %s556
        %v559 = vmul.f32 %v391, %v391
        %v560 = vmul.f32 %v394, %v394
        %v561 = vmul.f32 %v399, %v399
        %v562 = vmul.f32 %v402, %v402
        %v563 = vmul.f32 %v407, %v407
        %v564 = vmul.f32 %v410, %v410
        %v565 = vmul.f32 %v415, %v415
        %v566 = vmul.f32 %v418, %v418
        %v567 = vsel %vm475, %v559, 0.0
        %568 = vadd.xlane.f32.xlu0 %v567
        %v569 = vpop.xlane.xlu0 %568
        %v570 = vsel %vm475, %v560, 0.0
        %571 = vadd.xlane.f32.xlu0 %v570
        %v572 = vpop.xlane.xlu0 %571
        %v573 = vsel %vm475, %v561, 0.0
        %574 = vadd.xlane.f32.xlu0 %v573
        %v575 = vpop.xlane.xlu0 %574
        %v576 = vsel %vm475, %v562, 0.0
        %577 = vadd.xlane.f32.xlu0 %v576
        %v578 = vpop.xlane.xlu0 %577
        %v579 = vsel %vm475, %v563, 0.0
        %580 = vadd.xlane.f32.xlu0 %v579
        %v581 = vpop.xlane.xlu0 %580
        %v582 = vsel %vm475, %v564, 0.0
        %583 = vadd.xlane.f32.xlu0 %v582
        %v584 = vpop.xlane.xlu0 %583
        %v585 = vsel %vm475, %v565, 0.0
        %586 = vadd.xlane.f32.xlu0 %v585
        %v587 = vpop.xlane.xlu0 %586
        %v588 = vsel %vm475, %v566, 0.0
        %589 = vadd.xlane.f32.xlu0 %v588
        %v590 = vpop.xlane.xlu0 %589
        %v591 = vrsqrt.pop %v569
        %v592 = vmul.f32 %v569, %v591
        %vm593 = vcmp.eq.f32.partialorder %v569, inf
        %v594 = vsel %vm593, %v569, %v592
        %vm595 = vcmp.eq.f32.partialorder %v569, 0.0
        %v596 = vand.u32 %v569, 2147483648
        %v597 = vsel %vm595, %v596, %v594
        %v598 = vrsqrt.pop %v572
        %v599 = vmul.f32 %v572, %v598
        %vm600 = vcmp.eq.f32.partialorder %v572, inf
        %v601 = vsel %vm600, %v572, %v599
        %vm602 = vcmp.eq.f32.partialorder %v572, 0.0
        %v603 = vand.u32 %v572, 2147483648
        %v604 = vsel %vm602, %v603, %v601
        %v605 = vrsqrt.pop %v575
        %v606 = vmul.f32 %v575, %v605
        %vm607 = vcmp.eq.f32.partialorder %v575, inf
        %v608 = vsel %vm607, %v575, %v606
        %vm609 = vcmp.eq.f32.partialorder %v575, 0.0
        %v610 = vand.u32 %v575, 2147483648
        %v611 = vsel %vm609, %v610, %v608
        %v612 = vrsqrt.pop %v578
        %v613 = vmul.f32 %v578, %v612
        %vm614 = vcmp.eq.f32.partialorder %v578, inf
        %v615 = vsel %vm614, %v578, %v613
        %vm616 = vcmp.eq.f32.partialorder %v578, 0.0
        %v617 = vand.u32 %v578, 2147483648
        %v618 = vsel %vm616, %v617, %v615
        %v619 = vrsqrt.pop %v581
        %v620 = vmul.f32 %v581, %v619
        %vm621 = vcmp.eq.f32.partialorder %v581, inf
        %v622 = vsel %vm621, %v581, %v620
        %vm623 = vcmp.eq.f32.partialorder %v581, 0.0
        %v624 = vand.u32 %v581, 2147483648
        %v625 = vsel %vm623, %v624, %v622
        %v626 = vrsqrt.pop %v584
        %v627 = vmul.f32 %v584, %v626
        %vm628 = vcmp.eq.f32.partialorder %v584, inf
        %v629 = vsel %vm628, %v584, %v627
        %vm630 = vcmp.eq.f32.partialorder %v584, 0.0
        %v631 = vand.u32 %v584, 2147483648
        %v632 = vsel %vm630, %v631, %v629
        %v633 = vrsqrt.pop %v587
        %v634 = vmul.f32 %v587, %v633
        %vm635 = vcmp.eq.f32.partialorder %v587, inf
        %v636 = vsel %vm635, %v587, %v634
        %vm637 = vcmp.eq.f32.partialorder %v587, 0.0
        %v638 = vand.u32 %v587, 2147483648
        %v639 = vsel %vm637, %v638, %v636
        %v640 = vrsqrt.pop %v590
        %v641 = vmul.f32 %v590, %v640
        %vm642 = vcmp.eq.f32.partialorder %v590, inf
        %v643 = vsel %vm642, %v590, %v641
        %vm644 = vcmp.eq.f32.partialorder %v590, 0.0
        %v645 = vand.u32 %v590, 2147483648
        %v646 = vsel %vm644, %v645, %v643
        %v647 = vmax.f32 %v597, 1e-12
        %v648 = vmax.f32 %v604, 1e-12
        %v649 = vmax.f32 %v611, 1e-12
        %v650 = vmax.f32 %v618, 1e-12
        %v651 = vmax.f32 %v625, 1e-12
        %v652 = vmax.f32 %v632, 1e-12
        %v653 = vmax.f32 %v639, 1e-12
        %v654 = vmax.f32 %v646, 1e-12
        %v655 = vrcp.pop %v647
        %v656 = vmul.f32 %v391, %v655
        %v657 = vrcp.pop %v648
        %v658 = vmul.f32 %v394, %v657
        %v659 = vrcp.pop %v649
        %v660 = vmul.f32 %v399, %v659
        %v661 = vrcp.pop %v650
        %v662 = vmul.f32 %v402, %v661
        %v663 = vrcp.pop %v651
        %v664 = vmul.f32 %v407, %v663
        %v665 = vrcp.pop %v652
        %v666 = vmul.f32 %v410, %v665
        %v667 = vrcp.pop %v653
        %v668 = vmul.f32 %v415, %v667
        %v669 = vrcp.pop %v654
        %v670 = vmul.f32 %v418, %v669
        %671 = vst.msk [vmem:[%s189] sm:$0xff] %vm475, %v656
        %672 = vst.msk [vmem:[%s189 + $0x8] sm:$0xff] %vm475, %v658
        %673 = vst.msk [vmem:[%s189 + $0x10] sm:$0xff] %vm475, %v660
        %674 = vst.msk [vmem:[%s189 + $0x18] sm:$0xff] %vm475, %v662
        %675 = vst.msk [vmem:[%s189 + $0x20] sm:$0xff] %vm475, %v664
        %676 = vst.msk [vmem:[%s189 + $0x28] sm:$0xff] %vm475, %v666
        %677 = vst.msk [vmem:[%s189 + $0x30] sm:$0xff] %vm475, %v668
        %678 = vst.msk [vmem:[%s189 + $0x38] sm:$0xff] %vm475, %v670
        %s679 = sand.u32 %s117, 1
        %s680 = scalar_lea.sflag [#allocation3], %s679
        %s681 = sand.u32 %s117, 1
        %s682 = smul.addr %s681, 64
        %s683 = scalar_lea.vmem [#allocation5], %s682
        // Predicated region
        $region37: #{featnet2d_forward.11} parent=31 // pred_check
          %p684 = pneg %p101
        $region38: #{featnet2d_forward.11} parent=31 // pred_check_branch
          %686 = sbr.rel (%p684) target = $region40
        $region39: #{featnet2d_forward.11} parent=31 // pred_region
          %s688 = ssub.s32 16, 16
          %689 = vsyncadd [#allocation4], %s688
          %692 = dma.smem_to_hbm [#allocation2], 16, %s3, [#allocation4]
        $region40: #{featnet2d_forward.11} parent=31 // pred_fallthru
          _
        // Predicated region
        $region41: #{featnet2d_forward.11} parent=31 // pred_check
          %p693 = pneg %p127
        $region42: #{featnet2d_forward.11} parent=31 // pred_check_branch
          %695 = sbr.rel (%p693) target = $region44
        $region43: #{featnet2d_forward.11} parent=31 // pred_region
          %s697 = ssub.s32 1024, 1024
          %698 = vsyncadd %s680, %s697
          %s699 = smul.addr %s20, 8
          %s700 = smul.addr %s699, 128
          %s701 = scalar_lea.hbm %s4, %s700
          %s702 = sshll.u32 %s683, 4
          %s703 = int_to_ptr.vmem [resolvable:$true] %s702
          %708 = dma.vmem_to_hbm [thread:$0]  %s703, 1024, %s701, %s680, 128, 128, 8
        $region44: #{featnet2d_forward.11} parent=31 // pred_fallthru
          _
        // Predicated region
        $region45: #{featnet2d_forward.11} parent=31 // pred_check
          %p709 = pneg %p101
        $region46: #{featnet2d_forward.11} parent=31 // pred_check_branch
          %711 = sbr.rel (%p709) target = $region48
        $region47: #{featnet2d_forward.11} parent=31 // pred_region
          %712 = dma.done [#allocation4], 16
        $region48: #{featnet2d_forward.11} parent=31 // pred_fallthru
          _
        %713 = sfence
      $region32: #{featnet2d_forward.11} parent=5 // pred_fallthru
        _
      %p714 = scmp.le.s32.totalorder 2, %s15
      // Predicated region
      $region49: #{featnet2d_forward.11} parent=5 // pred_check
        %p715 = pneg %p714
      $region50: #{featnet2d_forward.11} parent=5 // pred_check_branch
        %717 = sbr.rel (%p715) target = $region52
      $region51: #{featnet2d_forward.11} parent=5 // pred_region
        %s718 = ssub.s32 %s15, 2
        // Predicated region
        $region53: #{featnet2d_forward.11} parent=51 // pred_check
          %p719 = pneg %p133
        $region54: #{featnet2d_forward.11} parent=51 // pred_check_branch
          %721 = sbr.rel (%p719) target = $region56
        $region55: #{featnet2d_forward.11} parent=51 // pred_region
          %s722 = sand.u32 %s118, 1
          %s723 = scalar_lea.sflag [#allocation3], %s722
          %s724 = sand.u32 %s118, 1
          %s725 = smul.addr %s724, 64
          %s726 = scalar_lea.vmem [#allocation5], %s725
          %727 = dma.done %s723, 1024
        $region56: #{featnet2d_forward.11} parent=51 // pred_fallthru
          _
      $region52: #{featnet2d_forward.11} parent=5 // pred_fallthru
        _
    $region6: #{featnet2d_forward.11} parent=1 // loop_footer
      %s19 = sadd.s32 1, %s15
    $region7: #{featnet2d_forward.11} parent=1 // loop_footer_branch
      %14 = sbr.rel target = $region3
    $region8: #{featnet2d_forward.11} parent=1 // loop_exit
      _
    %728 = vsyncpa [#allocation3], 1
    %s729 = scalar_lea.sflag [#allocation3], 1
    %730 = vsyncpa %s729, 1
    %731 = vsyncpa [#allocation4], 1
    %s732 = scalar_lea.sflag [#allocation4], 1
    %733 = vsyncpa %s732, 1

</llo_original>
